<compile_context>
chip_gen: v7x
topology: tpu7x:2x2x1
jax: 0.10.0
libtpu: 0.0.40
codegen_flags: <defaults>
</compile_context>

<pallas_src>
import functools

import jax
import jax.numpy as jnp
import numpy as np
from jax import lax
from jax.experimental import pallas as pl
from jax.experimental.pallas import tpu as pltpu

# Architecture constants (fixed by the WEITCNN body used here).
NC_PER_TASK = 5
N_OUTPUTS = 20
KSIZE = 3
CONV1_STRIDE, CONV1_PAD = 1, 1
CONV2_STRIDE, CONV2_PAD = 2, 1

_VMEM = pl.BlockSpec(memory_space=pltpu.MemorySpace.VMEM)
_SMEM = pl.BlockSpec(memory_space=pltpu.MemorySpace.SMEM)


# -----------------------------------------------------------------------------
# The single fused Pallas kernel
# -----------------------------------------------------------------------------
def _weitcnn_kernel(
    at1_ref, at2_ref, at3_ref,                        # SMEM attention scalars
    p1_ref, s2_ref, rsel_ref, ssel_ref, blk_ref,      # patches + selection consts
    c1_sw, c1_mk, c1_aw, c1_kb, c1_b,                 # conv1 decomposed params
    c2_sw, c2_mk, c2_aw, c2_kb, c2_b,                 # conv2 decomposed params
    f1_sw, f1_mk, f1_aw, f1_kb, f1_b,                 # fc1 decomposed params
    lw_ref, lb_ref,                                   # classifier ("last")
    out_ref, *, n_kb, off1, off2, apply_mask):
  f32, bf16 = jnp.float32, jnp.bfloat16

  def compose(sw, mk, aw, kb, at):
    # FedWeIT weight composition in f32 (VPU/EUP), done once per layer.
    w = sw[...] * (1.0 / (1.0 + jnp.exp(-mk[...]))) + aw[...]
    for i in range(n_kb):
      w = w + at[i] * kb[i]
    return w

  # ---- conv1 : single im2col GEMM, output [C1, N*H*W] (lane dense) ----
  w1 = compose(c1_sw, c1_mk, c1_aw, c1_kb, at1_ref)          # [C1, 9*Cin]
  h1 = jnp.dot(w1.astype(bf16), p1_ref[...],
               preferred_element_type=f32)                   # [C1, M1]
  h1 = jnp.maximum(h1 + c1_b[...], 0.0).astype(bf16)

  # ---- conv2 : stride-2/pad-1 window gather via constant 0/1 matmuls ----
  w2 = compose(c2_sw, c2_mk, c2_aw, c2_kb, at2_ref)          # [9, C2, C1]
  c2 = c2_sw.shape[1]
  m2 = s2_ref.shape[2]
  acc2 = jnp.zeros((c2, m2), f32)
  for k in range(KSIZE * KSIZE):
    pk = jnp.dot(h1, s2_ref[k], preferred_element_type=f32).astype(bf16)  # [C1, M2]
    acc2 = acc2 + jnp.dot(w2[k].astype(bf16), pk, preferred_element_type=f32)
  h2 = jnp.maximum(acc2 + c2_b[...], 0.0)                     # [C2, M2]

  # ---- flatten to torch's NCHW .view(N, -1) order via selection matmuls ----
  g = jnp.dot(rsel_ref[...], h2.astype(bf16),
              preferred_element_type=f32)                     # [C2*S, M2]
  gm = (g * ssel_ref[...]).astype(bf16)
  h2f = lax.dot_general(blk_ref[...], gm, (((1,), (1,)), ((), ())),
                        preferred_element_type=f32)           # [N, C2*S]

  # ---- fc1 ----
  wf = compose(f1_sw, f1_mk, f1_aw, f1_kb, at3_ref)          # [F1, C2*S]
  f = lax.dot_general(h2f.astype(bf16), wf.astype(bf16),
                      (((1,), (1,)), ((), ())), preferred_element_type=f32)
  f = jnp.maximum(f + f1_b[...], 0.0)                         # [N, F1]

  # ---- last + task-offset masking (is_con semantics) ----
  o = lax.dot_general(f.astype(bf16), lw_ref[...].astype(bf16),
                      (((1,), (1,)), ((), ())), preferred_element_type=f32)
  o = o + lb_ref[...]
  if apply_mask:
    col = lax.broadcasted_iota(jnp.int32, o.shape, 1)
    o = jnp.where((col < off1) | (col >= off2), -100000000000.0, o)
  out_ref[...] = o


# -----------------------------------------------------------------------------
# Trace-time constant builders (numpy -> baked constants)
# -----------------------------------------------------------------------------
def _conv_selection_np(n, h_in, w_in, ksize, stride, pad):
  """0/1 matrix S[k, m_in, m_out]: in-kernel patches = H_prev @ S[k]."""
  oh = (h_in + 2 * pad - ksize) // stride + 1
  ow = (w_in + 2 * pad - ksize) // stride + 1
  sel = np.zeros((ksize * ksize, n * h_in * w_in, n * oh * ow), np.float32)
  for dh in range(ksize):
    for dw in range(ksize):
      ki = dh * ksize + dw
      for b in range(n):
        for y2 in range(oh):
          y1 = y2 * stride + dh - pad
          if y1 < 0 or y1 >= h_in:
            continue
          for x2 in range(ow):
            x1 = x2 * stride + dw - pad
            if x1 < 0 or x1 >= w_in:
              continue
            sel[ki, b * h_in * w_in + y1 * w_in + x1,
                b * oh * ow + y2 * ow + x2] = 1.0
  return sel, oh, ow


def _flatten_selection_np(n, c, s):
  """Constants turning H2[C2, N*S] into torch's view(N, C2*S) via matmuls."""
  j = np.arange(c * s)
  m = np.arange(n * s)
  rsel = ((j[:, None] // s) == np.arange(c)[None, :]).astype(np.float32)   # [C2*S, C2]
  ssel = ((j[:, None] % s) == (m[None, :] % s)).astype(np.float32)         # [C2*S, N*S]
  blk = ((m[None, :] // s) == np.arange(n)[:, None]).astype(np.float32)    # [N, N*S]
  return rsel, ssel, blk


def _flat_conv_w(w):        # [Cout, Cin, k, k] -> [Cout, k*k*Cin]
  cout, cin, kh, kw = w.shape
  return jnp.transpose(w, (0, 2, 3, 1)).reshape(cout, kh * kw * cin)


def _flat_conv_w_kb(w):     # [n_kb, Cout, Cin, k, k] -> [n_kb, Cout, k*k*Cin]
  nkb, cout, cin, kh, kw = w.shape
  return jnp.transpose(w, (0, 1, 3, 4, 2)).reshape(nkb, cout, kh * kw * cin)


def _perm_conv_w(w):        # [Cout, Cin, k, k] -> [k*k, Cout, Cin]
  cout, cin = w.shape[0], w.shape[1]
  return jnp.transpose(w.reshape(cout, cin, -1), (2, 0, 1))


def _perm_conv_w_kb(w):     # [n_kb, Cout, Cin, k, k] -> [n_kb, k*k, Cout, Cin]
  nkb, cout, cin = w.shape[0], w.shape[1], w.shape[2]
  return jnp.transpose(w.reshape(nkb, cout, cin, -1), (0, 3, 1, 2))


# -----------------------------------------------------------------------------
# WEITCNN forward (single fused pallas_call)
# -----------------------------------------------------------------------------
@functools.partial(jax.jit, static_argnames=("t", "pre", "is_con"))
def weit_cnn_forward(x, params, t, pre=False, is_con=False):
  n, cin, h, w = x.shape
  p1p, p2p, pfp, plp = params["conv1"], params["conv2"], params["fc1"], params["last"]
  c1 = p1p["sw"].shape[0]
  c2 = p2p["sw"].shape[0]
  f1 = pfp["sw"].shape[0]
  nout = plp["w"].shape[0]
  n_kb = p1p["atten"].shape[0]

  oh1, ow1 = h, w                      # conv1: k=3, s=1, p=1
  m1 = n * oh1 * ow1

  # im2col patches of the (tiny) network input: [k*k*Cin, N*H*W], bf16.
  xp = jnp.pad(x, ((0, 0), (0, 0), (CONV1_PAD, CONV1_PAD), (CONV1_PAD, CONV1_PAD)))
  p1 = jnp.concatenate([
      jnp.transpose(xp[:, :, kh:kh + oh1, kw:kw + ow1], (1, 0, 2, 3)).reshape(cin, m1)
      for kh in range(KSIZE) for kw in range(KSIZE)
  ], axis=0).astype(jnp.bfloat16)

  # Constant 0/1 selection matrices (baked at trace time).
  s2_np, oh2, ow2 = _conv_selection_np(n, oh1, ow1, KSIZE, CONV2_STRIDE, CONV2_PAD)
  sp2 = oh2 * ow2
  m2 = n * sp2
  rsel_np, ssel_np, blk_np = _flatten_selection_np(n, c2, sp2)
  s2 = jnp.asarray(s2_np, jnp.bfloat16)
  rsel = jnp.asarray(rsel_np, jnp.bfloat16)
  ssel = jnp.asarray(ssel_np, jnp.float32)
  blk = jnp.asarray(blk_np, jnp.bfloat16)

  # Task-offset mask bounds (WEITCNN.forward is_con / pre semantics), static.
  if is_con:
    if pre:
      off1, off2 = 0, int(t * NC_PER_TASK)
    else:
      off1, off2 = int(t * NC_PER_TASK), int((t + 1) * NC_PER_TASK)
  else:
    off1, off2 = 0, int(nout)

  kdim = c2 * sp2
  flops = 2 * (c1 * (KSIZE * KSIZE * cin) * m1
               + KSIZE * KSIZE * (c1 * m1 * m2 + c2 * c1 * m2)
               + kdim * c2 * m2 + n * m2 * kdim + n * kdim * f1 + n * f1 * nout)
  transcendentals = KSIZE * KSIZE * (c1 * cin + c2 * c1) + f1 * kdim
  bytes_accessed = int(
      sum(int(np.prod(a.shape)) * a.dtype.itemsize for a in (p1, s2, rsel, ssel, blk))
      + sum(int(v.size) * 4 for lp in (p1p, p2p, pfp) for v in lp.values())
      + int(plp["w"].size) * 4 + int(plp["bias"].size) * 4 + n * nout * 4)

  kernel = functools.partial(_weitcnn_kernel, n_kb=int(n_kb),
                             off1=off1, off2=off2, apply_mask=bool(is_con))
  return pl.pallas_call(
      kernel,
      out_shape=jax.ShapeDtypeStruct((n, nout), jnp.float32),
      in_specs=[_SMEM] * 3 + [_VMEM] * 22,
      out_specs=_VMEM,
      cost_estimate=pl.CostEstimate(flops=int(flops),
                                    transcendentals=int(transcendentals),
                                    bytes_accessed=bytes_accessed),
  )(
      p1p["atten"], p2p["atten"], pfp["atten"],
      p1, s2, rsel, ssel, blk,
      _flat_conv_w(p1p["sw"]), _flat_conv_w(p1p["mask"]), _flat_conv_w(p1p["aw"]),
      _flat_conv_w_kb(p1p["aw_kb"]), p1p["bias"].reshape(c1, 1),
      _perm_conv_w(p2p["sw"]), _perm_conv_w(p2p["mask"]), _perm_conv_w(p2p["aw"]),
      _perm_conv_w_kb(p2p["aw_kb"]), p2p["bias"].reshape(c2, 1),
      pfp["sw"], pfp["mask"], pfp["aw"], pfp["aw_kb"], pfp["bias"].reshape(1, f1),
      plp["w"], plp["bias"].reshape(1, nout),
  )


# -----------------------------------------------------------------------------
# Pure-JAX f32 reference (correctness check)
# -----------------------------------------------------------------------------
def _compose_ref(p):
  w = p["sw"] * jax.nn.sigmoid(p["mask"]) + p["aw"]
  return w + jnp.einsum("k...,k->...", p["aw_kb"], p["atten"])


def ref_forward(x, params, t, pre=False, is_con=False):
  h = x
  for name, stride, pad in (("conv1", CONV1_STRIDE, CONV1_PAD),
                            ("conv2", CONV2_STRIDE, CONV2_PAD)):
    p = params[name]
    w4 = _compose_ref(p)
    h = lax.conv_general_dilated(h, w4, (stride, stride), [(pad, pad)] * 2)
    h = jnp.maximum(h + p["bias"][None, :, None, None], 0.0)
  h = h.reshape(h.shape[0], -1)
  p = params["fc1"]
  h = jnp.maximum(h @ _compose_ref(p).T + p["bias"], 0.0)
  out = h @ params["last"]["w"].T + params["last"]["bias"]
  if is_con:
    if pre:
      o1, o2 = 0, int(t * NC_PER_TASK)
    else:
      o1, o2 = int(t * NC_PER_TASK), int((t + 1) * NC_PER_TASK)
    col = jnp.arange(N_OUTPUTS)[None, :]
    out = jnp.where((col < o1) | (col >= o2), -100000000000.0, out)
  return out


# -----------------------------------------------------------------------------
# Deterministic parameter construction (PyTorch-canonical layouts)
# -----------------------------------------------------------------------------
def _make_decomposed(key, shape, n_kb, cout):
  ks = jax.random.split(key, 6)
  return {
      "sw": 0.1 * jax.random.normal(ks[0], shape, jnp.float32),
      "mask": 0.5 * jax.random.normal(ks[1], shape, jnp.float32),
      "aw": 0.05 * jax.random.normal(ks[2], shape, jnp.float32),
      "aw_kb": 0.05 * jax.random.normal(ks[3], (n_kb,) + shape, jnp.float32),
      "atten": jax.random.uniform(ks[4], (n_kb,), jnp.float32),
      "bias": 0.1 * jax.random.normal(ks[5], (cout,), jnp.float32),
  }


def make_params(key, n_kb=3):
  k1, k2, k3, k4 = jax.random.split(key, 4)
  params = {
      "conv1": _make_decomposed(k1, (8, 4, KSIZE, KSIZE), n_kb, 8),
      "conv2": _make_decomposed(k2, (16, 8, KSIZE, KSIZE), n_kb, 16),
      "fc1": _make_decomposed(k3, (32, 16 * 8 * 8), n_kb, 32),
  }
  kw_, kb_ = jax.random.split(k4)
  params["last"] = {
      "w": 0.1 * jax.random.normal(kw_, (N_OUTPUTS, 32), jnp.float32),
      "bias": 0.1 * jax.random.normal(kb_, (N_OUTPUTS,), jnp.float32),
  }
  return params


# -----------------------------------------------------------------------------
if __name__ == "__main__":
  key = jax.random.PRNGKey(0)
  kx, kp = jax.random.split(key)
  x = jax.random.normal(kx, (2, 4, 16, 16), jnp.float32)   # NCHW, like PyTorch
  params = make_params(kp, n_kb=3)

  t = 1
  out = weit_cnn_forward(x, params, t=t, pre=False, is_con=True)
  out = jax.block_until_ready(out)
  assert out.shape == (2, N_OUTPUTS)

  ref = ref_forward(x, params, t=t, pre=False, is_con=True)
  np.testing.assert_allclose(np.asarray(out), np.asarray(ref),
                             rtol=2e-2, atol=2e-2)

  print("KERNEL_OK")
</pallas_src>

<mosaic_0001>
module attributes {stable_mosaic.version = 11 : i64} {
  func.func @_weitcnn_kernel(%arg0: memref<3xf32, #tpu.memory_space<smem>>, %arg1: memref<3xf32, #tpu.memory_space<smem>>, %arg2: memref<3xf32, #tpu.memory_space<smem>>, %arg3: memref<36x512xbf16, #tpu.memory_space<vmem>>, %arg4: memref<9x512x128xbf16, #tpu.memory_space<vmem>>, %arg5: memref<1024x16xbf16, #tpu.memory_space<vmem>>, %arg6: memref<1024x128xf32, #tpu.memory_space<vmem>>, %arg7: memref<2x128xbf16, #tpu.memory_space<vmem>>, %arg8: memref<8x36xf32, #tpu.memory_space<vmem>>, %arg9: memref<8x36xf32, #tpu.memory_space<vmem>>, %arg10: memref<8x36xf32, #tpu.memory_space<vmem>>, %arg11: memref<3x8x36xf32, #tpu.memory_space<vmem>>, %arg12: memref<8x1xf32, #tpu.memory_space<vmem>>, %arg13: memref<9x16x8xf32, #tpu.memory_space<vmem>>, %arg14: memref<9x16x8xf32, #tpu.memory_space<vmem>>, %arg15: memref<9x16x8xf32, #tpu.memory_space<vmem>>, %arg16: memref<3x9x16x8xf32, #tpu.memory_space<vmem>>, %arg17: memref<16x1xf32, #tpu.memory_space<vmem>>, %arg18: memref<32x1024xf32, #tpu.memory_space<vmem>>, %arg19: memref<32x1024xf32, #tpu.memory_space<vmem>>, %arg20: memref<32x1024xf32, #tpu.memory_space<vmem>>, %arg21: memref<3x32x1024xf32, #tpu.memory_space<vmem>>, %arg22: memref<1x32xf32, #tpu.memory_space<vmem>>, %arg23: memref<20x32xf32, #tpu.memory_space<vmem>>, %arg24: memref<1x20xf32, #tpu.memory_space<vmem>>, %arg25: memref<2x20xf32, #tpu.memory_space<vmem>>) attributes {dimension_semantics = [], scalar_prefetch = 0 : i64, scratch_operands = 0 : i64, tpu.core_type = #tpu.core_type<tc>} {
    %c0 = arith.constant 0 : index
    %c0_0 = arith.constant 0 : index
    %0 = vector.load %arg8[%c0, %c0_0] : memref<8x36xf32, #tpu.memory_space<vmem>>, vector<8x36xf32>
    %c0_1 = arith.constant 0 : index
    %c0_2 = arith.constant 0 : index
    %1 = vector.load %arg9[%c0_1, %c0_2] : memref<8x36xf32, #tpu.memory_space<vmem>>, vector<8x36xf32>
    %cst = arith.constant 0.000000e+00 : f32
    %2 = vector.broadcast %cst : f32 to vector<8x36xf32>
    %3 = arith.subf %2, %1 : vector<8x36xf32>
    %4 = math.exp %3 : vector<8x36xf32>
    %cst_3 = arith.constant 1.000000e+00 : f32
    %5 = vector.broadcast %cst_3 : f32 to vector<8x36xf32>
    %6 = arith.addf %5, %4 : vector<8x36xf32>
    %cst_4 = arith.constant 1.000000e+00 : f32
    %7 = vector.broadcast %cst_4 : f32 to vector<8x36xf32>
    %8 = arith.divf %7, %6 : vector<8x36xf32>
    %9 = arith.mulf %0, %8 : vector<8x36xf32>
    %c0_5 = arith.constant 0 : index
    %c0_6 = arith.constant 0 : index
    %10 = vector.load %arg10[%c0_5, %c0_6] : memref<8x36xf32, #tpu.memory_space<vmem>>, vector<8x36xf32>
    %11 = arith.addf %9, %10 : vector<8x36xf32>
    %c0_7 = arith.constant 0 : index
    %12 = memref.load %arg0[%c0_7] : memref<3xf32, #tpu.memory_space<smem>>
    %c0_8 = arith.constant 0 : index
    %c0_9 = arith.constant 0 : index
    %c0_10 = arith.constant 0 : index
    %13 = vector.load %arg11[%c0_8, %c0_9, %c0_10] : memref<3x8x36xf32, #tpu.memory_space<vmem>>, vector<1x8x36xf32>
    %14 = vector.shape_cast %13 : vector<1x8x36xf32> to vector<8x36xf32>
    %15 = vector.broadcast %12 : f32 to vector<8x36xf32>
    %16 = arith.mulf %15, %14 : vector<8x36xf32>
    %17 = arith.addf %11, %16 : vector<8x36xf32>
    %c1 = arith.constant 1 : index
    %18 = memref.load %arg0[%c1] : memref<3xf32, #tpu.memory_space<smem>>
    %c1_11 = arith.constant 1 : index
    %c0_12 = arith.constant 0 : index
    %c0_13 = arith.constant 0 : index
    %19 = vector.load %arg11[%c1_11, %c0_12, %c0_13] : memref<3x8x36xf32, #tpu.memory_space<vmem>>, vector<1x8x36xf32>
    %20 = vector.shape_cast %19 : vector<1x8x36xf32> to vector<8x36xf32>
    %21 = vector.broadcast %18 : f32 to vector<8x36xf32>
    %22 = arith.mulf %21, %20 : vector<8x36xf32>
    %23 = arith.addf %17, %22 : vector<8x36xf32>
    %c2 = arith.constant 2 : index
    %24 = memref.load %arg0[%c2] : memref<3xf32, #tpu.memory_space<smem>>
    %c2_14 = arith.constant 2 : index
    %c0_15 = arith.constant 0 : index
    %c0_16 = arith.constant 0 : index
    %25 = vector.load %arg11[%c2_14, %c0_15, %c0_16] : memref<3x8x36xf32, #tpu.memory_space<vmem>>, vector<1x8x36xf32>
    %26 = vector.shape_cast %25 : vector<1x8x36xf32> to vector<8x36xf32>
    %27 = vector.broadcast %24 : f32 to vector<8x36xf32>
    %28 = arith.mulf %27, %26 : vector<8x36xf32>
    %29 = arith.addf %23, %28 : vector<8x36xf32>
    %30 = arith.truncf %29 : vector<8x36xf32> to vector<8x36xbf16>
    %c0_17 = arith.constant 0 : index
    %c0_18 = arith.constant 0 : index
    %31 = vector.load %arg3[%c0_17, %c0_18] : memref<36x512xbf16, #tpu.memory_space<vmem>>, vector<36x512xbf16>
    %cst_19 = arith.constant dense<0.000000e+00> : vector<8x512xf32>
    %32 = tpu.matmul %30, %31, %cst_19 {dimension_numbers = #tpu.dot_dimension_numbers<[1], [0], [0], [1], [0, 0, 1, 1], [], []>} : vector<8x36xbf16>, vector<36x512xbf16>, vector<8x512xf32> -> vector<8x512xf32>
    %c0_20 = arith.constant 0 : index
    %c0_21 = arith.constant 0 : index
    %33 = vector.load %arg12[%c0_20, %c0_21] : memref<8x1xf32, #tpu.memory_space<vmem>>, vector<8x1xf32>
    %34 = vector.broadcast %33 : vector<8x1xf32> to vector<8x512xf32>
    %35 = arith.addf %32, %34 : vector<8x512xf32>
    %cst_22 = arith.constant 0.000000e+00 : f32
    %36 = vector.broadcast %cst_22 : f32 to vector<8x512xf32>
    %37 = arith.maximumf %35, %36 : vector<8x512xf32>
    %38 = arith.truncf %37 : vector<8x512xf32> to vector<8x512xbf16>
    %c0_23 = arith.constant 0 : index
    %c0_24 = arith.constant 0 : index
    %c0_25 = arith.constant 0 : index
    %39 = vector.load %arg13[%c0_23, %c0_24, %c0_25] : memref<9x16x8xf32, #tpu.memory_space<vmem>>, vector<9x16x8xf32>
    %c0_26 = arith.constant 0 : index
    %c0_27 = arith.constant 0 : index
    %c0_28 = arith.constant 0 : index
    %40 = vector.load %arg14[%c0_26, %c0_27, %c0_28] : memref<9x16x8xf32, #tpu.memory_space<vmem>>, vector<9x16x8xf32>
    %cst_29 = arith.constant 0.000000e+00 : f32
    %41 = vector.broadcast %cst_29 : f32 to vector<9x16x8xf32>
    %42 = arith.subf %41, %40 : vector<9x16x8xf32>
    %43 = math.exp %42 : vector<9x16x8xf32>
    %cst_30 = arith.constant 1.000000e+00 : f32
    %44 = vector.broadcast %cst_30 : f32 to vector<9x16x8xf32>
    %45 = arith.addf %44, %43 : vector<9x16x8xf32>
    %cst_31 = arith.constant 1.000000e+00 : f32
    %46 = vector.broadcast %cst_31 : f32 to vector<9x16x8xf32>
    %47 = arith.divf %46, %45 : vector<9x16x8xf32>
    %48 = arith.mulf %39, %47 : vector<9x16x8xf32>
    %c0_32 = arith.constant 0 : index
    %c0_33 = arith.constant 0 : index
    %c0_34 = arith.constant 0 : index
    %49 = vector.load %arg15[%c0_32, %c0_33, %c0_34] : memref<9x16x8xf32, #tpu.memory_space<vmem>>, vector<9x16x8xf32>
    %50 = arith.addf %48, %49 : vector<9x16x8xf32>
    %c0_35 = arith.constant 0 : index
    %51 = memref.load %arg1[%c0_35] : memref<3xf32, #tpu.memory_space<smem>>
    %c0_36 = arith.constant 0 : index
    %c0_37 = arith.constant 0 : index
    %c0_38 = arith.constant 0 : index
    %c0_39 = arith.constant 0 : index
    %52 = vector.load %arg16[%c0_36, %c0_37, %c0_38, %c0_39] : memref<3x9x16x8xf32, #tpu.memory_space<vmem>>, vector<1x9x16x8xf32>
    %53 = vector.shape_cast %52 : vector<1x9x16x8xf32> to vector<9x16x8xf32>
    %54 = vector.broadcast %51 : f32 to vector<9x16x8xf32>
    %55 = arith.mulf %54, %53 : vector<9x16x8xf32>
    %56 = arith.addf %50, %55 : vector<9x16x8xf32>
    %c1_40 = arith.constant 1 : index
    %57 = memref.load %arg1[%c1_40] : memref<3xf32, #tpu.memory_space<smem>>
    %c1_41 = arith.constant 1 : index
    %c0_42 = arith.constant 0 : index
    %c0_43 = arith.constant 0 : index
    %c0_44 = arith.constant 0 : index
    %58 = vector.load %arg16[%c1_41, %c0_42, %c0_43, %c0_44] : memref<3x9x16x8xf32, #tpu.memory_space<vmem>>, vector<1x9x16x8xf32>
    %59 = vector.shape_cast %58 : vector<1x9x16x8xf32> to vector<9x16x8xf32>
    %60 = vector.broadcast %57 : f32 to vector<9x16x8xf32>
    %61 = arith.mulf %60, %59 : vector<9x16x8xf32>
    %62 = arith.addf %56, %61 : vector<9x16x8xf32>
    %c2_45 = arith.constant 2 : index
    %63 = memref.load %arg1[%c2_45] : memref<3xf32, #tpu.memory_space<smem>>
    %c2_46 = arith.constant 2 : index
    %c0_47 = arith.constant 0 : index
    %c0_48 = arith.constant 0 : index
    %c0_49 = arith.constant 0 : index
    %64 = vector.load %arg16[%c2_46, %c0_47, %c0_48, %c0_49] : memref<3x9x16x8xf32, #tpu.memory_space<vmem>>, vector<1x9x16x8xf32>
    %65 = vector.shape_cast %64 : vector<1x9x16x8xf32> to vector<9x16x8xf32>
    %66 = vector.broadcast %63 : f32 to vector<9x16x8xf32>
    %67 = arith.mulf %66, %65 : vector<9x16x8xf32>
    %68 = arith.addf %62, %67 : vector<9x16x8xf32>
    %cst_50 = arith.constant 0.000000e+00 : f32
    %69 = vector.broadcast %cst_50 : f32 to vector<16x128xf32>
    %c0_51 = arith.constant 0 : index
    %c0_52 = arith.constant 0 : index
    %c0_53 = arith.constant 0 : index
    %70 = vector.load %arg4[%c0_51, %c0_52, %c0_53] : memref<9x512x128xbf16, #tpu.memory_space<vmem>>, vector<1x512x128xbf16>
    %71 = vector.shape_cast %70 : vector<1x512x128xbf16> to vector<512x128xbf16>
    %cst_54 = arith.constant dense<0.000000e+00> : vector<8x128xf32>
    %72 = tpu.matmul %38, %71, %cst_54 {dimension_numbers = #tpu.dot_dimension_numbers<[1], [0], [0], [1], [0, 0, 1, 1], [], []>} : vector<8x512xbf16>, vector<512x128xbf16>, vector<8x128xf32> -> vector<8x128xf32>
    %73 = arith.truncf %72 : vector<8x128xf32> to vector<8x128xbf16>
    %74 = vector.extract_strided_slice %68 {offsets = [0, 0, 0], sizes = [1, 16, 8], strides = [1, 1, 1]} : vector<9x16x8xf32> to vector<1x16x8xf32>
    %75 = vector.shape_cast %74 : vector<1x16x8xf32> to vector<16x8xf32>
    %76 = arith.truncf %75 : vector<16x8xf32> to vector<16x8xbf16>
    %cst_55 = arith.constant dense<0.000000e+00> : vector<16x128xf32>
    %77 = tpu.matmul %76, %73, %cst_55 {dimension_numbers = #tpu.dot_dimension_numbers<[1], [0], [0], [1], [0, 0, 1, 1], [], []>} : vector<16x8xbf16>, vector<8x128xbf16>, vector<16x128xf32> -> vector<16x128xf32>
    %78 = arith.addf %69, %77 : vector<16x128xf32>
    %c1_56 = arith.constant 1 : index
    %c0_57 = arith.constant 0 : index
    %c0_58 = arith.constant 0 : index
    %79 = vector.load %arg4[%c1_56, %c0_57, %c0_58] : memref<9x512x128xbf16, #tpu.memory_space<vmem>>, vector<1x512x128xbf16>
    %80 = vector.shape_cast %79 : vector<1x512x128xbf16> to vector<512x128xbf16>
    %cst_59 = arith.constant dense<0.000000e+00> : vector<8x128xf32>
    %81 = tpu.matmul %38, %80, %cst_59 {dimension_numbers = #tpu.dot_dimension_numbers<[1], [0], [0], [1], [0, 0, 1, 1], [], []>} : vector<8x512xbf16>, vector<512x128xbf16>, vector<8x128xf32> -> vector<8x128xf32>
    %82 = arith.truncf %81 : vector<8x128xf32> to vector<8x128xbf16>
    %83 = vector.extract_strided_slice %68 {offsets = [1, 0, 0], sizes = [1, 16, 8], strides = [1, 1, 1]} : vector<9x16x8xf32> to vector<1x16x8xf32>
    %84 = vector.shape_cast %83 : vector<1x16x8xf32> to vector<16x8xf32>
    %85 = arith.truncf %84 : vector<16x8xf32> to vector<16x8xbf16>
    %cst_60 = arith.constant dense<0.000000e+00> : vector<16x128xf32>
    %86 = tpu.matmul %85, %82, %cst_60 {dimension_numbers = #tpu.dot_dimension_numbers<[1], [0], [0], [1], [0, 0, 1, 1], [], []>} : vector<16x8xbf16>, vector<8x128xbf16>, vector<16x128xf32> -> vector<16x128xf32>
    %87 = arith.addf %78, %86 : vector<16x128xf32>
    %c2_61 = arith.constant 2 : index
    %c0_62 = arith.constant 0 : index
    %c0_63 = arith.constant 0 : index
    %88 = vector.load %arg4[%c2_61, %c0_62, %c0_63] : memref<9x512x128xbf16, #tpu.memory_space<vmem>>, vector<1x512x128xbf16>
    %89 = vector.shape_cast %88 : vector<1x512x128xbf16> to vector<512x128xbf16>
    %cst_64 = arith.constant dense<0.000000e+00> : vector<8x128xf32>
    %90 = tpu.matmul %38, %89, %cst_64 {dimension_numbers = #tpu.dot_dimension_numbers<[1], [0], [0], [1], [0, 0, 1, 1], [], []>} : vector<8x512xbf16>, vector<512x128xbf16>, vector<8x128xf32> -> vector<8x128xf32>
    %91 = arith.truncf %90 : vector<8x128xf32> to vector<8x128xbf16>
    %92 = vector.extract_strided_slice %68 {offsets = [2, 0, 0], sizes = [1, 16, 8], strides = [1, 1, 1]} : vector<9x16x8xf32> to vector<1x16x8xf32>
    %93 = vector.shape_cast %92 : vector<1x16x8xf32> to vector<16x8xf32>
    %94 = arith.truncf %93 : vector<16x8xf32> to vector<16x8xbf16>
    %cst_65 = arith.constant dense<0.000000e+00> : vector<16x128xf32>
    %95 = tpu.matmul %94, %91, %cst_65 {dimension_numbers = #tpu.dot_dimension_numbers<[1], [0], [0], [1], [0, 0, 1, 1], [], []>} : vector<16x8xbf16>, vector<8x128xbf16>, vector<16x128xf32> -> vector<16x128xf32>
    %96 = arith.addf %87, %95 : vector<16x128xf32>
    %c3 = arith.constant 3 : index
    %c0_66 = arith.constant 0 : index
    %c0_67 = arith.constant 0 : index
    %97 = vector.load %arg4[%c3, %c0_66, %c0_67] : memref<9x512x128xbf16, #tpu.memory_space<vmem>>, vector<1x512x128xbf16>
    %98 = vector.shape_cast %97 : vector<1x512x128xbf16> to vector<512x128xbf16>
    %cst_68 = arith.constant dense<0.000000e+00> : vector<8x128xf32>
    %99 = tpu.matmul %38, %98, %cst_68 {dimension_numbers = #tpu.dot_dimension_numbers<[1], [0], [0], [1], [0, 0, 1, 1], [], []>} : vector<8x512xbf16>, vector<512x128xbf16>, vector<8x128xf32> -> vector<8x128xf32>
    %100 = arith.truncf %99 : vector<8x128xf32> to vector<8x128xbf16>
    %101 = vector.extract_strided_slice %68 {offsets = [3, 0, 0], sizes = [1, 16, 8], strides = [1, 1, 1]} : vector<9x16x8xf32> to vector<1x16x8xf32>
    %102 = vector.shape_cast %101 : vector<1x16x8xf32> to vector<16x8xf32>
    %103 = arith.truncf %102 : vector<16x8xf32> to vector<16x8xbf16>
    %cst_69 = arith.constant dense<0.000000e+00> : vector<16x128xf32>
    %104 = tpu.matmul %103, %100, %cst_69 {dimension_numbers = #tpu.dot_dimension_numbers<[1], [0], [0], [1], [0, 0, 1, 1], [], []>} : vector<16x8xbf16>, vector<8x128xbf16>, vector<16x128xf32> -> vector<16x128xf32>
    %105 = arith.addf %96, %104 : vector<16x128xf32>
    %c4 = arith.constant 4 : index
    %c0_70 = arith.constant 0 : index
    %c0_71 = arith.constant 0 : index
    %106 = vector.load %arg4[%c4, %c0_70, %c0_71] : memref<9x512x128xbf16, #tpu.memory_space<vmem>>, vector<1x512x128xbf16>
    %107 = vector.shape_cast %106 : vector<1x512x128xbf16> to vector<512x128xbf16>
    %cst_72 = arith.constant dense<0.000000e+00> : vector<8x128xf32>
    %108 = tpu.matmul %38, %107, %cst_72 {dimension_numbers = #tpu.dot_dimension_numbers<[1], [0], [0], [1], [0, 0, 1, 1], [], []>} : vector<8x512xbf16>, vector<512x128xbf16>, vector<8x128xf32> -> vector<8x128xf32>
    %109 = arith.truncf %108 : vector<8x128xf32> to vector<8x128xbf16>
    %110 = vector.extract_strided_slice %68 {offsets = [4, 0, 0], sizes = [1, 16, 8], strides = [1, 1, 1]} : vector<9x16x8xf32> to vector<1x16x8xf32>
    %111 = vector.shape_cast %110 : vector<1x16x8xf32> to vector<16x8xf32>
    %112 = arith.truncf %111 : vector<16x8xf32> to vector<16x8xbf16>
    %cst_73 = arith.constant dense<0.000000e+00> : vector<16x128xf32>
    %113 = tpu.matmul %112, %109, %cst_73 {dimension_numbers = #tpu.dot_dimension_numbers<[1], [0], [0], [1], [0, 0, 1, 1], [], []>} : vector<16x8xbf16>, vector<8x128xbf16>, vector<16x128xf32> -> vector<16x128xf32>
    %114 = arith.addf %105, %113 : vector<16x128xf32>
    %c5 = arith.constant 5 : index
    %c0_74 = arith.constant 0 : index
    %c0_75 = arith.constant 0 : index
    %115 = vector.load %arg4[%c5, %c0_74, %c0_75] : memref<9x512x128xbf16, #tpu.memory_space<vmem>>, vector<1x512x128xbf16>
    %116 = vector.shape_cast %115 : vector<1x512x128xbf16> to vector<512x128xbf16>
    %cst_76 = arith.constant dense<0.000000e+00> : vector<8x128xf32>
    %117 = tpu.matmul %38, %116, %cst_76 {dimension_numbers = #tpu.dot_dimension_numbers<[1], [0], [0], [1], [0, 0, 1, 1], [], []>} : vector<8x512xbf16>, vector<512x128xbf16>, vector<8x128xf32> -> vector<8x128xf32>
    %118 = arith.truncf %117 : vector<8x128xf32> to vector<8x128xbf16>
    %119 = vector.extract_strided_slice %68 {offsets = [5, 0, 0], sizes = [1, 16, 8], strides = [1, 1, 1]} : vector<9x16x8xf32> to vector<1x16x8xf32>
    %120 = vector.shape_cast %119 : vector<1x16x8xf32> to vector<16x8xf32>
    %121 = arith.truncf %120 : vector<16x8xf32> to vector<16x8xbf16>
    %cst_77 = arith.constant dense<0.000000e+00> : vector<16x128xf32>
    %122 = tpu.matmul %121, %118, %cst_77 {dimension_numbers = #tpu.dot_dimension_numbers<[1], [0], [0], [1], [0, 0, 1, 1], [], []>} : vector<16x8xbf16>, vector<8x128xbf16>, vector<16x128xf32> -> vector<16x128xf32>
    %123 = arith.addf %114, %122 : vector<16x128xf32>
    %c6 = arith.constant 6 : index
    %c0_78 = arith.constant 0 : index
    %c0_79 = arith.constant 0 : index
    %124 = vector.load %arg4[%c6, %c0_78, %c0_79] : memref<9x512x128xbf16, #tpu.memory_space<vmem>>, vector<1x512x128xbf16>
    %125 = vector.shape_cast %124 : vector<1x512x128xbf16> to vector<512x128xbf16>
    %cst_80 = arith.constant dense<0.000000e+00> : vector<8x128xf32>
    %126 = tpu.matmul %38, %125, %cst_80 {dimension_numbers = #tpu.dot_dimension_numbers<[1], [0], [0], [1], [0, 0, 1, 1], [], []>} : vector<8x512xbf16>, vector<512x128xbf16>, vector<8x128xf32> -> vector<8x128xf32>
    %127 = arith.truncf %126 : vector<8x128xf32> to vector<8x128xbf16>
    %128 = vector.extract_strided_slice %68 {offsets = [6, 0, 0], sizes = [1, 16, 8], strides = [1, 1, 1]} : vector<9x16x8xf32> to vector<1x16x8xf32>
    %129 = vector.shape_cast %128 : vector<1x16x8xf32> to vector<16x8xf32>
    %130 = arith.truncf %129 : vector<16x8xf32> to vector<16x8xbf16>
    %cst_81 = arith.constant dense<0.000000e+00> : vector<16x128xf32>
    %131 = tpu.matmul %130, %127, %cst_81 {dimension_numbers = #tpu.dot_dimension_numbers<[1], [0], [0], [1], [0, 0, 1, 1], [], []>} : vector<16x8xbf16>, vector<8x128xbf16>, vector<16x128xf32> -> vector<16x128xf32>
    %132 = arith.addf %123, %131 : vector<16x128xf32>
    %c7 = arith.constant 7 : index
    %c0_82 = arith.constant 0 : index
    %c0_83 = arith.constant 0 : index
    %133 = vector.load %arg4[%c7, %c0_82, %c0_83] : memref<9x512x128xbf16, #tpu.memory_space<vmem>>, vector<1x512x128xbf16>
    %134 = vector.shape_cast %133 : vector<1x512x128xbf16> to vector<512x128xbf16>
    %cst_84 = arith.constant dense<0.000000e+00> : vector<8x128xf32>
    %135 = tpu.matmul %38, %134, %cst_84 {dimension_numbers = #tpu.dot_dimension_numbers<[1], [0], [0], [1], [0, 0, 1, 1], [], []>} : vector<8x512xbf16>, vector<512x128xbf16>, vector<8x128xf32> -> vector<8x128xf32>
    %136 = arith.truncf %135 : vector<8x128xf32> to vector<8x128xbf16>
    %137 = vector.extract_strided_slice %68 {offsets = [7, 0, 0], sizes = [1, 16, 8], strides = [1, 1, 1]} : vector<9x16x8xf32> to vector<1x16x8xf32>
    %138 = vector.shape_cast %137 : vector<1x16x8xf32> to vector<16x8xf32>
    %139 = arith.truncf %138 : vector<16x8xf32> to vector<16x8xbf16>
    %cst_85 = arith.constant dense<0.000000e+00> : vector<16x128xf32>
    %140 = tpu.matmul %139, %136, %cst_85 {dimension_numbers = #tpu.dot_dimension_numbers<[1], [0], [0], [1], [0, 0, 1, 1], [], []>} : vector<16x8xbf16>, vector<8x128xbf16>, vector<16x128xf32> -> vector<16x128xf32>
    %141 = arith.addf %132, %140 : vector<16x128xf32>
    %c8 = arith.constant 8 : index
    %c0_86 = arith.constant 0 : index
    %c0_87 = arith.constant 0 : index
    %142 = vector.load %arg4[%c8, %c0_86, %c0_87] : memref<9x512x128xbf16, #tpu.memory_space<vmem>>, vector<1x512x128xbf16>
    %143 = vector.shape_cast %142 : vector<1x512x128xbf16> to vector<512x128xbf16>
    %cst_88 = arith.constant dense<0.000000e+00> : vector<8x128xf32>
    %144 = tpu.matmul %38, %143, %cst_88 {dimension_numbers = #tpu.dot_dimension_numbers<[1], [0], [0], [1], [0, 0, 1, 1], [], []>} : vector<8x512xbf16>, vector<512x128xbf16>, vector<8x128xf32> -> vector<8x128xf32>
    %145 = arith.truncf %144 : vector<8x128xf32> to vector<8x128xbf16>
    %146 = vector.extract_strided_slice %68 {offsets = [8, 0, 0], sizes = [1, 16, 8], strides = [1, 1, 1]} : vector<9x16x8xf32> to vector<1x16x8xf32>
    %147 = vector.shape_cast %146 : vector<1x16x8xf32> to vector<16x8xf32>
    %148 = arith.truncf %147 : vector<16x8xf32> to vector<16x8xbf16>
    %cst_89 = arith.constant dense<0.000000e+00> : vector<16x128xf32>
    %149 = tpu.matmul %148, %145, %cst_89 {dimension_numbers = #tpu.dot_dimension_numbers<[1], [0], [0], [1], [0, 0, 1, 1], [], []>} : vector<16x8xbf16>, vector<8x128xbf16>, vector<16x128xf32> -> vector<16x128xf32>
    %150 = arith.addf %141, %149 : vector<16x128xf32>
    %c0_90 = arith.constant 0 : index
    %c0_91 = arith.constant 0 : index
    %151 = vector.load %arg17[%c0_90, %c0_91] : memref<16x1xf32, #tpu.memory_space<vmem>>, vector<16x1xf32>
    %152 = vector.broadcast %151 : vector<16x1xf32> to vector<16x128xf32>
    %153 = arith.addf %150, %152 : vector<16x128xf32>
    %cst_92 = arith.constant 0.000000e+00 : f32
    %154 = vector.broadcast %cst_92 : f32 to vector<16x128xf32>
    %155 = arith.maximumf %153, %154 : vector<16x128xf32>
    %c0_93 = arith.constant 0 : index
    %c0_94 = arith.constant 0 : index
    %156 = vector.load %arg5[%c0_93, %c0_94] : memref<1024x16xbf16, #tpu.memory_space<vmem>>, vector<1024x16xbf16>
    %157 = arith.truncf %155 : vector<16x128xf32> to vector<16x128xbf16>
    %cst_95 = arith.constant dense<0.000000e+00> : vector<1024x128xf32>
    %158 = tpu.matmul %156, %157, %cst_95 {dimension_numbers = #tpu.dot_dimension_numbers<[1], [0], [0], [1], [0, 0, 1, 1], [], []>} : vector<1024x16xbf16>, vector<16x128xbf16>, vector<1024x128xf32> -> vector<1024x128xf32>
    %c0_96 = arith.constant 0 : index
    %c0_97 = arith.constant 0 : index
    %159 = vector.load %arg6[%c0_96, %c0_97] : memref<1024x128xf32, #tpu.memory_space<vmem>>, vector<1024x128xf32>
    %160 = arith.mulf %158, %159 : vector<1024x128xf32>
    %161 = arith.truncf %160 : vector<1024x128xf32> to vector<1024x128xbf16>
    %c0_98 = arith.constant 0 : index
    %c0_99 = arith.constant 0 : index
    %162 = vector.load %arg7[%c0_98, %c0_99] : memref<2x128xbf16, #tpu.memory_space<vmem>>, vector<2x128xbf16>
    %cst_100 = arith.constant dense<0.000000e+00> : vector<2x1024xf32>
    %163 = tpu.matmul %162, %161, %cst_100 {dimension_numbers = #tpu.dot_dimension_numbers<[1], [1], [0], [0], [0, 0, 1, 0], [], []>} : vector<2x128xbf16>, vector<1024x128xbf16>, vector<2x1024xf32> -> vector<2x1024xf32>
    %c0_101 = arith.constant 0 : index
    %c0_102 = arith.constant 0 : index
    %164 = vector.load %arg18[%c0_101, %c0_102] : memref<32x1024xf32, #tpu.memory_space<vmem>>, vector<32x1024xf32>
    %c0_103 = arith.constant 0 : index
    %c0_104 = arith.constant 0 : index
    %165 = vector.load %arg19[%c0_103, %c0_104] : memref<32x1024xf32, #tpu.memory_space<vmem>>, vector<32x1024xf32>
    %cst_105 = arith.constant 0.000000e+00 : f32
    %166 = vector.broadcast %cst_105 : f32 to vector<32x1024xf32>
    %167 = arith.subf %166, %165 : vector<32x1024xf32>
    %168 = math.exp %167 : vector<32x1024xf32>
    %cst_106 = arith.constant 1.000000e+00 : f32
    %169 = vector.broadcast %cst_106 : f32 to vector<32x1024xf32>
    %170 = arith.addf %169, %168 : vector<32x1024xf32>
    %cst_107 = arith.constant 1.000000e+00 : f32
    %171 = vector.broadcast %cst_107 : f32 to vector<32x1024xf32>
    %172 = arith.divf %171, %170 : vector<32x1024xf32>
    %173 = arith.mulf %164, %172 : vector<32x1024xf32>
    %c0_108 = arith.constant 0 : index
    %c0_109 = arith.constant 0 : index
    %174 = vector.load %arg20[%c0_108, %c0_109] : memref<32x1024xf32, #tpu.memory_space<vmem>>, vector<32x1024xf32>
    %175 = arith.addf %173, %174 : vector<32x1024xf32>
    %c0_110 = arith.constant 0 : index
    %176 = memref.load %arg2[%c0_110] : memref<3xf32, #tpu.memory_space<smem>>
    %c0_111 = arith.constant 0 : index
    %c0_112 = arith.constant 0 : index
    %c0_113 = arith.constant 0 : index
    %177 = vector.load %arg21[%c0_111, %c0_112, %c0_113] : memref<3x32x1024xf32, #tpu.memory_space<vmem>>, vector<1x32x1024xf32>
    %178 = vector.shape_cast %177 : vector<1x32x1024xf32> to vector<32x1024xf32>
    %179 = vector.broadcast %176 : f32 to vector<32x1024xf32>
    %180 = arith.mulf %179, %178 : vector<32x1024xf32>
    %181 = arith.addf %175, %180 : vector<32x1024xf32>
    %c1_114 = arith.constant 1 : index
    %182 = memref.load %arg2[%c1_114] : memref<3xf32, #tpu.memory_space<smem>>
    %c1_115 = arith.constant 1 : index
    %c0_116 = arith.constant 0 : index
    %c0_117 = arith.constant 0 : index
    %183 = vector.load %arg21[%c1_115, %c0_116, %c0_117] : memref<3x32x1024xf32, #tpu.memory_space<vmem>>, vector<1x32x1024xf32>
    %184 = vector.shape_cast %183 : vector<1x32x1024xf32> to vector<32x1024xf32>
    %185 = vector.broadcast %182 : f32 to vector<32x1024xf32>
    %186 = arith.mulf %185, %184 : vector<32x1024xf32>
    %187 = arith.addf %181, %186 : vector<32x1024xf32>
    %c2_118 = arith.constant 2 : index
    %188 = memref.load %arg2[%c2_118] : memref<3xf32, #tpu.memory_space<smem>>
    %c2_119 = arith.constant 2 : index
    %c0_120 = arith.constant 0 : index
    %c0_121 = arith.constant 0 : index
    %189 = vector.load %arg21[%c2_119, %c0_120, %c0_121] : memref<3x32x1024xf32, #tpu.memory_space<vmem>>, vector<1x32x1024xf32>
    %190 = vector.shape_cast %189 : vector<1x32x1024xf32> to vector<32x1024xf32>
    %191 = vector.broadcast %188 : f32 to vector<32x1024xf32>
    %192 = arith.mulf %191, %190 : vector<32x1024xf32>
    %193 = arith.addf %187, %192 : vector<32x1024xf32>
    %194 = arith.truncf %163 : vector<2x1024xf32> to vector<2x1024xbf16>
    %195 = arith.truncf %193 : vector<32x1024xf32> to vector<32x1024xbf16>
    %cst_122 = arith.constant dense<0.000000e+00> : vector<2x32xf32>
    %196 = tpu.matmul %194, %195, %cst_122 {dimension_numbers = #tpu.dot_dimension_numbers<[1], [1], [0], [0], [0, 0, 1, 0], [], []>} : vector<2x1024xbf16>, vector<32x1024xbf16>, vector<2x32xf32> -> vector<2x32xf32>
    %c0_123 = arith.constant 0 : index
    %c0_124 = arith.constant 0 : index
    %197 = vector.load %arg22[%c0_123, %c0_124] : memref<1x32xf32, #tpu.memory_space<vmem>>, vector<1x32xf32>
    %198 = vector.broadcast %197 : vector<1x32xf32> to vector<2x32xf32>
    %199 = arith.addf %196, %198 : vector<2x32xf32>
    %cst_125 = arith.constant 0.000000e+00 : f32
    %200 = vector.broadcast %cst_125 : f32 to vector<2x32xf32>
    %201 = arith.maximumf %199, %200 : vector<2x32xf32>
    %202 = arith.truncf %201 : vector<2x32xf32> to vector<2x32xbf16>
    %c0_126 = arith.constant 0 : index
    %c0_127 = arith.constant 0 : index
    %203 = vector.load %arg23[%c0_126, %c0_127] : memref<20x32xf32, #tpu.memory_space<vmem>>, vector<20x32xf32>
    %204 = arith.truncf %203 : vector<20x32xf32> to vector<20x32xbf16>
    %cst_128 = arith.constant dense<0.000000e+00> : vector<2x20xf32>
    %205 = tpu.matmul %202, %204, %cst_128 {dimension_numbers = #tpu.dot_dimension_numbers<[1], [1], [0], [0], [0, 0, 1, 0], [], []>} : vector<2x32xbf16>, vector<20x32xbf16>, vector<2x20xf32> -> vector<2x20xf32>
    %c0_129 = arith.constant 0 : index
    %c0_130 = arith.constant 0 : index
    %206 = vector.load %arg24[%c0_129, %c0_130] : memref<1x20xf32, #tpu.memory_space<vmem>>, vector<1x20xf32>
    %207 = vector.broadcast %206 : vector<1x20xf32> to vector<2x20xf32>
    %208 = arith.addf %205, %207 : vector<2x20xf32>
    %209 = tpu.iota {dimensions = array<i32: 1>} : vector<2x20xi32>
    %c5_i32 = arith.constant 5 : i32
    %210 = vector.broadcast %c5_i32 : i32 to vector<2x20xi32>
    %211 = arith.cmpi slt, %209, %210 : vector<2x20xi32>
    %c10_i32 = arith.constant 10 : i32
    %212 = vector.broadcast %c10_i32 : i32 to vector<2x20xi32>
    %213 = arith.cmpi sge, %209, %212 : vector<2x20xi32>
    %214 = arith.ori %211, %213 : vector<2x20xi1>
    %cst_131 = arith.constant -9.99999979E+10 : f32
    %215 = vector.broadcast %cst_131 : f32 to vector<2x20xf32>
    %216 = arith.select %214, %215, %208 : vector<2x20xi1>, vector<2x20xf32>
    %c0_132 = arith.constant 0 : index
    %c0_133 = arith.constant 0 : index
    %217 = vector.load %arg25[%c0_132, %c0_133] : memref<2x20xf32, #tpu.memory_space<vmem>>, vector<2x20xf32>
    tpu.vector_store %arg25[%c0_132, %c0_133], %216 {strides = array<i32>} : memref<2x20xf32, #tpu.memory_space<vmem>>, vector<2x20xf32>,
    return
  }
}

</mosaic_0001>

<llo_original>
// kernel: weit_cnn_forward.1
$region0: #{weit_cnn_forward.1}
  #allocation0 [shape = 'u32[]', space=smem, size = 0x4, offset = 0x4, fixed_abs, tag = 'smem constant byte address 0x4 - core index']
  #allocation1 [shape = 'u32[144,128]{1,0:T(1,128)}', space=vmem, size = 0x12000, scoped, tag = 'internal scratch']
  %s0 = inlined_call_operand.vmem [shape: f32[3], index: 0, kind: input, shape index: {}]
  %s1 = inlined_call_operand.vmem [shape: f32[3], index: 1, kind: input, shape index: {}]
  %s2 = inlined_call_operand.vmem [shape: f32[3], index: 2, kind: input, shape index: {}]
  %s3 = inlined_call_operand.vmem [shape: bf16[36,512], index: 3, kind: input, shape index: {}]
  %s4 = inlined_call_operand.vmem [shape: bf16[9,512,128], index: 4, kind: input, shape index: {}]
  %s5 = inlined_call_operand.vmem [shape: bf16[1024,16], index: 5, kind: input, shape index: {}]
  %s6 = inlined_call_operand.vmem [shape: f32[1024,128], index: 6, kind: input, shape index: {}]
  %s7 = inlined_call_operand.vmem [shape: bf16[2,128], index: 7, kind: input, shape index: {}]
  %s8 = inlined_call_operand.vmem [shape: f32[8,36], index: 8, kind: input, shape index: {}]
  %s9 = inlined_call_operand.vmem [shape: f32[8,36], index: 9, kind: input, shape index: {}]
  %s10 = inlined_call_operand.vmem [shape: f32[8,36], index: 10, kind: input, shape index: {}]
  %s11 = inlined_call_operand.vmem [shape: f32[3,8,36], index: 11, kind: input, shape index: {}]
  %s12 = inlined_call_operand.vmem [shape: f32[8,1], index: 12, kind: input, shape index: {}]
  %s13 = inlined_call_operand.vmem [shape: f32[9,16,8], index: 13, kind: input, shape index: {}]
  %s14 = inlined_call_operand.vmem [shape: f32[9,16,8], index: 14, kind: input, shape index: {}]
  %s15 = inlined_call_operand.vmem [shape: f32[9,16,8], index: 15, kind: input, shape index: {}]
  %s16 = inlined_call_operand.vmem [shape: f32[3,9,16,8], index: 16, kind: input, shape index: {}]
  %s17 = inlined_call_operand.vmem [shape: f32[16,1], index: 17, kind: input, shape index: {}]
  %s18 = inlined_call_operand.vmem [shape: f32[32,1024], index: 18, kind: input, shape index: {}]
  %s19 = inlined_call_operand.vmem [shape: f32[32,1024], index: 19, kind: input, shape index: {}]
  %s20 = inlined_call_operand.vmem [shape: f32[32,1024], index: 20, kind: input, shape index: {}]
  %s21 = inlined_call_operand.vmem [shape: f32[3,32,1024], index: 21, kind: input, shape index: {}]
  %s22 = inlined_call_operand.vmem [shape: f32[1,32], index: 22, kind: input, shape index: {}]
  %s23 = inlined_call_operand.hbm [shape: f32[20,32], index: 23, kind: input, shape index: {}]
  %s24 = inlined_call_operand.vmem [shape: f32[1,20], index: 24, kind: input, shape index: {}]
  %s25 = inlined_call_operand.hbm [shape: f32[2,20], index: 25, kind: output, shape index: {}]
  %s26 = sld [smem:[#allocation0]]
  $region126: #{weit_cnn_forward.1} parent=0
    _
  %s28 = ssub.s32 1, %s26
  %s29 = scalar_select 0, %s28, %s26
  $region1: #{weit_cnn_forward.1} parent=0
    #allocation2 [shape = 'u8[512]{0}', space=smem, size = 0x200, scoped, tag = 'input window, operand 0, single buffered']
    #allocation3 [shape = 's32[1]{0}', space=sflag, size = 0x4, scoped, tag = 'scoped memory for weit_cnn_forward.1']
    #allocation4 [shape = 's32[1]{0}', space=sflag, size = 0x4, scoped, tag = 'scoped memory for weit_cnn_forward.1']
    #allocation5 [shape = 's32[1]{0}', space=sflag, size = 0x4, scoped, tag = 'scoped memory for weit_cnn_forward.1']
    #allocation6 [shape = 'u8[512]{0}', space=smem, size = 0x200, scoped, tag = 'input window, operand 1, single buffered']
    #allocation7 [shape = 's32[1]{0}', space=sflag, size = 0x4, scoped, tag = 'scoped memory for weit_cnn_forward.1']
    #allocation8 [shape = 'u8[512]{0}', space=smem, size = 0x200, scoped, tag = 'input window, operand 2, single buffered']
    #allocation9 [shape = 'u8[12288]{0}', space=vmem, size = 0x3000, scoped, tag = 'input window, operand 23, single buffered']
    #allocation10 [shape = 'u8[1024]{0}', space=vmem, size = 0x400, scoped, tag = 'output window, operand 0, single buffered']
    %30 = vsyncpa [#allocation5], 0
    %31 = vsyncpa [#allocation7], 0
    %32 = vsyncpa [#allocation3], 0
    %33 = vsyncpa [#allocation4], 0
    // Predicated region
    $region2: #{weit_cnn_forward.1} parent=1 // pred_check
      _
    $region3: #{weit_cnn_forward.1} parent=1 // pred_check_branch
      %35 = sbr.rel (0) target = $region5
    $region4: #{weit_cnn_forward.1} parent=1 // pred_region
      %s37 = ssub.s32 16, 16
      %38 = vsyncadd [#allocation5], %s37
      %s40 = sshll.u32 %s0, 4
      %s41 = int_to_ptr.vmem [resolvable:$true] %s40
      %43 = dma.vmem_to_smem %s41, 16, [#allocation2], [#allocation5]
    $region5: #{weit_cnn_forward.1} parent=1 // pred_fallthru
      _
    // Predicated region
    $region6: #{weit_cnn_forward.1} parent=1 // pred_check
      _
    $region7: #{weit_cnn_forward.1} parent=1 // pred_check_branch
      %45 = sbr.rel (0) target = $region9
    $region8: #{weit_cnn_forward.1} parent=1 // pred_region
      %s47 = ssub.s32 16, 16
      %48 = vsyncadd [#allocation7], %s47
      %s50 = sshll.u32 %s1, 4
      %s51 = int_to_ptr.vmem [resolvable:$true] %s50
      %53 = dma.vmem_to_smem %s51, 16, [#allocation6], [#allocation7]
    $region9: #{weit_cnn_forward.1} parent=1 // pred_fallthru
      _
    // Predicated region
    $region10: #{weit_cnn_forward.1} parent=1 // pred_check
      _
    $region11: #{weit_cnn_forward.1} parent=1 // pred_check_branch
      %55 = sbr.rel (0) target = $region13
    $region12: #{weit_cnn_forward.1} parent=1 // pred_region
      %s57 = ssub.s32 16, 16
      %58 = vsyncadd [#allocation7], %s57
      %s60 = sshll.u32 %s2, 4
      %s61 = int_to_ptr.vmem [resolvable:$true] %s60
      %63 = dma.vmem_to_smem %s61, 16, [#allocation8], [#allocation7]
    $region13: #{weit_cnn_forward.1} parent=1 // pred_fallthru
      _
    // Predicated region
    $region14: #{weit_cnn_forward.1} parent=1 // pred_check
      _
    $region15: #{weit_cnn_forward.1} parent=1 // pred_check_branch
      %65 = sbr.rel (0) target = $region17
    $region16: #{weit_cnn_forward.1} parent=1 // pred_region
      _
    $region17: #{weit_cnn_forward.1} parent=1 // pred_fallthru
      _
    // Predicated region
    $region18: #{weit_cnn_forward.1} parent=1 // pred_check
      _
    $region19: #{weit_cnn_forward.1} parent=1 // pred_check_branch
      %67 = sbr.rel (0) target = $region21
    $region20: #{weit_cnn_forward.1} parent=1 // pred_region
      _
    $region21: #{weit_cnn_forward.1} parent=1 // pred_fallthru
      _
    // Predicated region
    $region22: #{weit_cnn_forward.1} parent=1 // pred_check
      _
    $region23: #{weit_cnn_forward.1} parent=1 // pred_check_branch
      %69 = sbr.rel (0) target = $region25
    $region24: #{weit_cnn_forward.1} parent=1 // pred_region
      _
    $region25: #{weit_cnn_forward.1} parent=1 // pred_fallthru
      _
    // Predicated region
    $region26: #{weit_cnn_forward.1} parent=1 // pred_check
      _
    $region27: #{weit_cnn_forward.1} parent=1 // pred_check_branch
      %71 = sbr.rel (0) target = $region29
    $region28: #{weit_cnn_forward.1} parent=1 // pred_region
      _
    $region29: #{weit_cnn_forward.1} parent=1 // pred_fallthru
      _
    // Predicated region
    $region30: #{weit_cnn_forward.1} parent=1 // pred_check
      _
    $region31: #{weit_cnn_forward.1} parent=1 // pred_check_branch
      %73 = sbr.rel (0) target = $region33
    $region32: #{weit_cnn_forward.1} parent=1 // pred_region
      _
    $region33: #{weit_cnn_forward.1} parent=1 // pred_fallthru
      _
    // Predicated region
    $region34: #{weit_cnn_forward.1} parent=1 // pred_check
      _
    $region35: #{weit_cnn_forward.1} parent=1 // pred_check_branch
      %75 = sbr.rel (0) target = $region37
    $region36: #{weit_cnn_forward.1} parent=1 // pred_region
      _
    $region37: #{weit_cnn_forward.1} parent=1 // pred_fallthru
      _
    // Predicated region
    $region38: #{weit_cnn_forward.1} parent=1 // pred_check
      _
    $region39: #{weit_cnn_forward.1} parent=1 // pred_check_branch
      %77 = sbr.rel (0) target = $region41
    $region40: #{weit_cnn_forward.1} parent=1 // pred_region
      _
    $region41: #{weit_cnn_forward.1} parent=1 // pred_fallthru
      _
    // Predicated region
    $region42: #{weit_cnn_forward.1} parent=1 // pred_check
      _
    $region43: #{weit_cnn_forward.1} parent=1 // pred_check_branch
      %79 = sbr.rel (0) target = $region45
    $region44: #{weit_cnn_forward.1} parent=1 // pred_region
      _
    $region45: #{weit_cnn_forward.1} parent=1 // pred_fallthru
      _
    // Predicated region
    $region46: #{weit_cnn_forward.1} parent=1 // pred_check
      _
    $region47: #{weit_cnn_forward.1} parent=1 // pred_check_branch
      %81 = sbr.rel (0) target = $region49
    $region48: #{weit_cnn_forward.1} parent=1 // pred_region
      _
    $region49: #{weit_cnn_forward.1} parent=1 // pred_fallthru
      _
    // Predicated region
    $region50: #{weit_cnn_forward.1} parent=1 // pred_check
      _
    $region51: #{weit_cnn_forward.1} parent=1 // pred_check_branch
      %83 = sbr.rel (0) target = $region53
    $region52: #{weit_cnn_forward.1} parent=1 // pred_region
      _
    $region53: #{weit_cnn_forward.1} parent=1 // pred_fallthru
      _
    // Predicated region
    $region54: #{weit_cnn_forward.1} parent=1 // pred_check
      _
    $region55: #{weit_cnn_forward.1} parent=1 // pred_check_branch
      %85 = sbr.rel (0) target = $region57
    $region56: #{weit_cnn_forward.1} parent=1 // pred_region
      _
    $region57: #{weit_cnn_forward.1} parent=1 // pred_fallthru
      _
    // Predicated region
    $region58: #{weit_cnn_forward.1} parent=1 // pred_check
      _
    $region59: #{weit_cnn_forward.1} parent=1 // pred_check_branch
      %87 = sbr.rel (0) target = $region61
    $region60: #{weit_cnn_forward.1} parent=1 // pred_region
      _
    $region61: #{weit_cnn_forward.1} parent=1 // pred_fallthru
      _
    // Predicated region
    $region62: #{weit_cnn_forward.1} parent=1 // pred_check
      _
    $region63: #{weit_cnn_forward.1} parent=1 // pred_check_branch
      %89 = sbr.rel (0) target = $region65
    $region64: #{weit_cnn_forward.1} parent=1 // pred_region
      _
    $region65: #{weit_cnn_forward.1} parent=1 // pred_fallthru
      _
    // Predicated region
    $region66: #{weit_cnn_forward.1} parent=1 // pred_check
      _
    $region67: #{weit_cnn_forward.1} parent=1 // pred_check_branch
      %91 = sbr.rel (0) target = $region69
    $region68: #{weit_cnn_forward.1} parent=1 // pred_region
      _
    $region69: #{weit_cnn_forward.1} parent=1 // pred_fallthru
      _
    // Predicated region
    $region70: #{weit_cnn_forward.1} parent=1 // pred_check
      _
    $region71: #{weit_cnn_forward.1} parent=1 // pred_check_branch
      %93 = sbr.rel (0) target = $region73
    $region72: #{weit_cnn_forward.1} parent=1 // pred_region
      _
    $region73: #{weit_cnn_forward.1} parent=1 // pred_fallthru
      _
    // Predicated region
    $region74: #{weit_cnn_forward.1} parent=1 // pred_check
      _
    $region75: #{weit_cnn_forward.1} parent=1 // pred_check_branch
      %95 = sbr.rel (0) target = $region77
    $region76: #{weit_cnn_forward.1} parent=1 // pred_region
      _
    $region77: #{weit_cnn_forward.1} parent=1 // pred_fallthru
      _
    // Predicated region
    $region78: #{weit_cnn_forward.1} parent=1 // pred_check
      _
    $region79: #{weit_cnn_forward.1} parent=1 // pred_check_branch
      %97 = sbr.rel (0) target = $region81
    $region80: #{weit_cnn_forward.1} parent=1 // pred_region
      _
    $region81: #{weit_cnn_forward.1} parent=1 // pred_fallthru
      _
    // Predicated region
    $region82: #{weit_cnn_forward.1} parent=1 // pred_check
      _
    $region83: #{weit_cnn_forward.1} parent=1 // pred_check_branch
      %99 = sbr.rel (0) target = $region85
    $region84: #{weit_cnn_forward.1} parent=1 // pred_region
      _
    $region85: #{weit_cnn_forward.1} parent=1 // pred_fallthru
      _
    // Predicated region
    $region86: #{weit_cnn_forward.1} parent=1 // pred_check
      _
    $region87: #{weit_cnn_forward.1} parent=1 // pred_check_branch
      %101 = sbr.rel (0) target = $region89
    $region88: #{weit_cnn_forward.1} parent=1 // pred_region
      _
    $region89: #{weit_cnn_forward.1} parent=1 // pred_fallthru
      _
    // Predicated region
    $region90: #{weit_cnn_forward.1} parent=1 // pred_check
      _
    $region91: #{weit_cnn_forward.1} parent=1 // pred_check_branch
      %103 = sbr.rel (0) target = $region93
    $region92: #{weit_cnn_forward.1} parent=1 // pred_region
      _
    $region93: #{weit_cnn_forward.1} parent=1 // pred_fallthru
      _
    // Predicated region
    $region94: #{weit_cnn_forward.1} parent=1 // pred_check
      _
    $region95: #{weit_cnn_forward.1} parent=1 // pred_check_branch
      %105 = sbr.rel (0) target = $region97
    $region96: #{weit_cnn_forward.1} parent=1 // pred_region
      %s107 = ssub.s32 384, 384
      %108 = vsyncadd [#allocation3], %s107
      %s109 = sshll.u32 [#allocation9], 4
      %s110 = int_to_ptr.vmem [resolvable:$true] %s109
      %115 = dma.hbm_to_vmem [thread:$0]  %s23, 384, %s110, [#allocation3], 128, 128, 8
    $region97: #{weit_cnn_forward.1} parent=1 // pred_fallthru
      _
    // Predicated region
    $region98: #{weit_cnn_forward.1} parent=1 // pred_check
      _
    $region99: #{weit_cnn_forward.1} parent=1 // pred_check_branch
      %117 = sbr.rel (0) target = $region101
    $region100: #{weit_cnn_forward.1} parent=1 // pred_region
      _
    $region101: #{weit_cnn_forward.1} parent=1 // pred_fallthru
      _
    // Predicated region
    $region102: #{weit_cnn_forward.1} parent=1 // pred_check
      _
    $region103: #{weit_cnn_forward.1} parent=1 // pred_check_branch
      %119 = sbr.rel (0) target = $region105
    $region104: #{weit_cnn_forward.1} parent=1 // pred_region
      %120 = dma.done [#allocation5], 16
    $region105: #{weit_cnn_forward.1} parent=1 // pred_fallthru
      _
    // Predicated region
    $region106: #{weit_cnn_forward.1} parent=1 // pred_check
      _
    $region107: #{weit_cnn_forward.1} parent=1 // pred_check_branch
      %122 = sbr.rel (0) target = $region109
    $region108: #{weit_cnn_forward.1} parent=1 // pred_region
      %123 = dma.done [#allocation7], 16
    $region109: #{weit_cnn_forward.1} parent=1 // pred_fallthru
      _
    // Predicated region
    $region110: #{weit_cnn_forward.1} parent=1 // pred_check
      _
    $region111: #{weit_cnn_forward.1} parent=1 // pred_check_branch
      %125 = sbr.rel (0) target = $region113
    $region112: #{weit_cnn_forward.1} parent=1 // pred_region
      %126 = dma.done [#allocation7], 16
    $region113: #{weit_cnn_forward.1} parent=1 // pred_fallthru
      _
    // Predicated region
    $region114: #{weit_cnn_forward.1} parent=1 // pred_check
      _
    $region115: #{weit_cnn_forward.1} parent=1 // pred_check_branch
      %128 = sbr.rel (0) target = $region117
    $region116: #{weit_cnn_forward.1} parent=1 // pred_region
      %129 = dma.done [#allocation3], 384
    $region117: #{weit_cnn_forward.1} parent=1 // pred_fallthru
      _
    %130 = sfence
    %v132 = vld [vmem:[%s8] sm:$0xff]
    %v133 = vld [vmem:[%s9] sm:$0xff]
    %v134 = vsub.f32 0.0, %v133
    %v135 = vmul.f32 %v134, 1.442695
    %v136 = vpow.pop %v135
    %v137 = vadd.f32 %v136, 1.0
    %v138 = vrcp.pop %v137
    %v139 = vmul.f32 1.0, %v138
    %v140 = vmul.f32 %v132, %v139
    %v141 = vld [vmem:[%s10] sm:$0xff]
    %v142 = vadd.f32 %v140, %v141
    %s143 = sld [smem:[#allocation2]]
    %v144 = vld [vmem:[%s11] sm:$0xff]
    %v145 = vstv %s143
    %v146 = vmul.f32 %v145, %v144
    %v147 = vadd.f32 %v142, %v146
    %s148 = sld [smem:[#allocation2 + $0x1]]
    %s149 = scalar_lea.vmem %s11, 8
    %v150 = vld [vmem:[%s149] sm:$0xff]
    %v151 = vstv %s148
    %v152 = vmul.f32 %v151, %v150
    %v153 = vadd.f32 %v147, %v152
    %s154 = sld [smem:[#allocation2 + $0x2]]
    %s155 = scalar_lea.vmem %s11, 16
    %v156 = vld [vmem:[%s155] sm:$0xff]
    %v157 = vstv %s154
    %v158 = vmul.f32 %v157, %v156
    %v159 = vadd.f32 %v153, %v158
    %v160 = vpack.c.bf16 %v159, %v159
    %v161 = vld [vmem:[%s3] sm:$0xff]
    %v162 = vld [vmem:[%s3 + $0x8] sm:$0xff]
    %v163 = vld [vmem:[%s3 + $0x10] sm:$0xff]
    %v164 = vld [vmem:[%s3 + $0x18] sm:$0xff]
    %v165 = vld [vmem:[%s3 + $0x20] sm:$0xff]
    %v166 = vld [vmem:[%s3 + $0x28] sm:$0xff]
    %v167 = vld [vmem:[%s3 + $0x30] sm:$0xff]
    %v168 = vld [vmem:[%s3 + $0x38] sm:$0xff]
    %v169 = vld [vmem:[%s3 + $0x40] sm:$0x33]
    %v170 = vld [vmem:[%s3 + $0x48] sm:$0x33]
    %v171 = vld [vmem:[%s12] sm:$0xff]
    %173 = vset.pattern.permute.xlu0 0
    %174 = vperm.xlu0 %173, %v171
    %v175 = vpop.permute.xlu0 %174
    %v187 = vunpack.c.l.b16 %v161
    %v188 = vunpack.c.h.b16 %v161
    %v189 = vunpack.c.l.b16 %v162
    %v190 = vunpack.c.h.b16 %v162
    %v191 = vunpack.c.l.b16 %v163
    %v192 = vunpack.c.h.b16 %v163
    %v193 = vunpack.c.l.b16 %v164
    %v194 = vunpack.c.h.b16 %v164
    %v195 = vunpack.c.l.b16 %v165
    %v196 = vunpack.c.h.b16 %v165
    %v197 = vunpack.c.l.b16 %v166
    %v198 = vunpack.c.h.b16 %v166
    %v199 = vunpack.c.l.b16 %v167
    %v200 = vunpack.c.h.b16 %v167
    %v201 = vunpack.c.l.b16 %v168
    %v202 = vunpack.c.h.b16 %v168
    %v203 = vunpack.c.l.b16 %v169
    %v204 = vunpack.c.h.b16 %v169
    %v205 = vunpack.c.l.b16 %v170
    %v206 = vunpack.c.h.b16 %v170
    %v207 = vpack.c.b16 %v191, %v187
    %v208 = vpack.c.b16 %v192, %v188
    %v209 = vpack.c.b16 %v193, %v189
    %v210 = vpack.c.b16 %v194, %v190
    %v211 = vpack.c.b16 %v199, %v195
    %v212 = vpack.c.b16 %v200, %v196
    %v213 = vpack.c.b16 %v201, %v197
    %v214 = vpack.c.b16 %v202, %v198
    %v215 = vpack.c.b16 %v203, %v203
    %v216 = vpack.c.b16 %v204, %v204
    %v217 = vpack.c.b16 %v205, %v205
    %v218 = vpack.c.b16 %v206, %v206
    %vm227 = vcmask 293888
    %v229 = vsel %vm227, %v160, 0
    %vm231 = vcmask 1041408
    %v233 = vsel %vm231, %v215, 0
    %v236 = vsel %vm231, %v216, 0
    %v239 = vsel %vm231, %v217, 0
    %v242 = vsel %vm231, %v218, 0
    %244 = vmatprep.subr.bf16.mxu0 %v208
    %245 = vmatpush1.bf16.msra.mxu0 %v207
    %246 = vmatprep.subr.bf16.mxu0 %v212
    %247 = vmatpush1.bf16.msra.mxu0 %v211
    %248 = vmatprep.subr.bf16.mxu0 %v236
    %249 = vmatpush1.bf16.msra.mxu0 %v233
    %250 = vmatprep.subr.bf16.mxu0 0
    %251 = vmatpush1.bf16.msra.mxu0 0
    %252 = vmatprep.subr.bf16.mxu0 0
    %253 = vmatpush1.bf16.msra.mxu0 0
    %254 = vmatprep.subr.bf16.mxu0 0
    %255 = vmatpush1.bf16.msra.mxu0 0
    %256 = vmatprep.subr.bf16.mxu0 0
    %257 = vmatpush1.bf16.msra.mxu0 0
    %258 = vmatprep.subr.bf16.mxu0 0
    %259 = vmatpush1.bf16.msra.mxu0 0
    %260 = vmatprep.subr.bf16.mxu0 0
    %261 = vmatpush1.bf16.msra.mxu0 0
    %262 = vmatprep.subr.bf16.mxu0 0
    %263 = vmatpush1.bf16.msra.mxu0 0
    %264 = vmatprep.subr.bf16.mxu0 0
    %265 = vmatpush1.bf16.msra.mxu0 0
    %266 = vmatprep.subr.bf16.mxu0 0
    %267 = vmatpush1.bf16.msra.mxu0 0
    %268 = vmatprep.subr.bf16.mxu0 0
    %269 = vmatpush1.bf16.msra.mxu0 0
    %270 = vmatprep.subr.bf16.mxu0 0
    %271 = vmatpush1.bf16.msra.mxu0 0
    %272 = vmatprep.subr.bf16.mxu0 0
    %273 = vmatpush1.bf16.msra.mxu0 0
    %274 = vmatprep.subr.bf16.mxu0 0
    %275 = vmatpush1.bf16.msra.mxu0 0
    %276 = vmatprep.mubr.bf16.mxu0 0
    %277 = vmatmul.mubr.bf16.gmra.mrb[0].mxu0 %v229
    %v278 = vpop.f32.mrb[0].mxu0
    %v279 = vadd.f32 %v175, %v278
    %v280 = vpop.f32.mrb[0].mxu0
    %v281 = vadd.f32 %v175, %v280
    %v282 = vpop.f32.mrb[0].mxu0
    %v283 = vpop.f32.mrb[0].mxu0
    %284 = vdwg.mxu0
    %285 = vmatprep.subr.bf16.mxu0 %v210
    %286 = vmatpush1.bf16.msra.mxu0 %v209
    %287 = vmatprep.subr.bf16.mxu0 %v214
    %288 = vmatpush1.bf16.msra.mxu0 %v213
    %289 = vmatprep.subr.bf16.mxu0 %v242
    %290 = vmatpush1.bf16.msra.mxu0 %v239
    %291 = vmatprep.subr.bf16.mxu0 0
    %292 = vmatpush1.bf16.msra.mxu0 0
    %293 = vmatprep.subr.bf16.mxu0 0
    %294 = vmatpush1.bf16.msra.mxu0 0
    %295 = vmatprep.subr.bf16.mxu0 0
    %296 = vmatpush1.bf16.msra.mxu0 0
    %297 = vmatprep.subr.bf16.mxu0 0
    %298 = vmatpush1.bf16.msra.mxu0 0
    %299 = vmatprep.subr.bf16.mxu0 0
    %300 = vmatpush1.bf16.msra.mxu0 0
    %301 = vmatprep.subr.bf16.mxu0 0
    %302 = vmatpush1.bf16.msra.mxu0 0
    %303 = vmatprep.subr.bf16.mxu0 0
    %304 = vmatpush1.bf16.msra.mxu0 0
    %305 = vmatprep.subr.bf16.mxu0 0
    %306 = vmatpush1.bf16.msra.mxu0 0
    %307 = vmatprep.subr.bf16.mxu0 0
    %308 = vmatpush1.bf16.msra.mxu0 0
    %309 = vmatprep.subr.bf16.mxu0 0
    %310 = vmatpush1.bf16.msra.mxu0 0
    %311 = vmatprep.subr.bf16.mxu0 0
    %312 = vmatpush1.bf16.msra.mxu0 0
    %313 = vmatprep.subr.bf16.mxu0 0
    %314 = vmatpush1.bf16.msra.mxu0 0
    %315 = vmatprep.subr.bf16.mxu0 0
    %316 = vmatpush1.bf16.msra.mxu0 0
    %317 = vmatprep.mubr.bf16.mxu0 0
    %318 = vmatmul.mubr.bf16.gmra.mrb[0].mxu0 %v229
    %v319 = vpop.f32.mrb[0].mxu0
    %v320 = vadd.f32 %v175, %v319
    %v321 = vpop.f32.mrb[0].mxu0
    %v322 = vadd.f32 %v175, %v321
    %v323 = vpop.f32.mrb[0].mxu0
    %v324 = vpop.f32.mrb[0].mxu0
    %325 = vdwg.mxu0
    %v326 = vmax.f32 %v279, 0.0
    %v327 = vmax.f32 %v281, 0.0
    %v328 = vmax.f32 %v320, 0.0
    %v329 = vmax.f32 %v322, 0.0
    %v330 = vpack.c.bf16 %v326, %v326
    %v331 = vpack.c.bf16 %v327, %v327
    %v332 = vpack.c.bf16 %v328, %v328
    %v333 = vpack.c.bf16 %v329, %v329
    %v334 = vld [vmem:[%s13] sm:$0xff]
    %v335 = vld [vmem:[%s13 + $0x8] sm:$0xff]
    %v336 = vld [vmem:[%s13 + $0x10] sm:$0xff]
    %v337 = vld [vmem:[%s13 + $0x18] sm:$0xff]
    %v338 = vld [vmem:[%s13 + $0x20] sm:$0xff]
    %v339 = vld [vmem:[%s13 + $0x28] sm:$0xff]
    %v340 = vld [vmem:[%s13 + $0x30] sm:$0xff]
    %v341 = vld [vmem:[%s13 + $0x38] sm:$0xff]
    %v342 = vld [vmem:[%s13 + $0x40] sm:$0xff]
    %v343 = vld [vmem:[%s13 + $0x48] sm:$0xff]
    %v344 = vld [vmem:[%s13 + $0x50] sm:$0xff]
    %v345 = vld [vmem:[%s13 + $0x58] sm:$0xff]
    %v346 = vld [vmem:[%s13 + $0x60] sm:$0xff]
    %v347 = vld [vmem:[%s13 + $0x68] sm:$0xff]
    %v348 = vld [vmem:[%s13 + $0x70] sm:$0xff]
    %v349 = vld [vmem:[%s13 + $0x78] sm:$0xff]
    %v350 = vld [vmem:[%s13 + $0x80] sm:$0xff]
    %v351 = vld [vmem:[%s13 + $0x88] sm:$0xff]
    %v352 = vld [vmem:[%s14] sm:$0xff]
    %v353 = vld [vmem:[%s14 + $0x8] sm:$0xff]
    %v354 = vld [vmem:[%s14 + $0x10] sm:$0xff]
    %v355 = vld [vmem:[%s14 + $0x18] sm:$0xff]
    %v356 = vld [vmem:[%s14 + $0x20] sm:$0xff]
    %v357 = vld [vmem:[%s14 + $0x28] sm:$0xff]
    %v358 = vld [vmem:[%s14 + $0x30] sm:$0xff]
    %v359 = vld [vmem:[%s14 + $0x38] sm:$0xff]
    %v360 = vld [vmem:[%s14 + $0x40] sm:$0xff]
    %v361 = vld [vmem:[%s14 + $0x48] sm:$0xff]
    %v362 = vld [vmem:[%s14 + $0x50] sm:$0xff]
    %v363 = vld [vmem:[%s14 + $0x58] sm:$0xff]
    %v364 = vld [vmem:[%s14 + $0x60] sm:$0xff]
    %v365 = vld [vmem:[%s14 + $0x68] sm:$0xff]
    %v366 = vld [vmem:[%s14 + $0x70] sm:$0xff]
    %v367 = vld [vmem:[%s14 + $0x78] sm:$0xff]
    %v368 = vld [vmem:[%s14 + $0x80] sm:$0xff]
    %v369 = vld [vmem:[%s14 + $0x88] sm:$0xff]
    %v370 = vsub.f32 0.0, %v352
    %v371 = vsub.f32 0.0, %v353
    %v372 = vsub.f32 0.0, %v354
    %v373 = vsub.f32 0.0, %v355
    %v374 = vsub.f32 0.0, %v356
    %v375 = vsub.f32 0.0, %v357
    %v376 = vsub.f32 0.0, %v358
    %v377 = vsub.f32 0.0, %v359
    %v378 = vsub.f32 0.0, %v360
    %v379 = vsub.f32 0.0, %v361
    %v380 = vsub.f32 0.0, %v362
    %v381 = vsub.f32 0.0, %v363
    %v382 = vsub.f32 0.0, %v364
    %v383 = vsub.f32 0.0, %v365
    %v384 = vsub.f32 0.0, %v366
    %v385 = vsub.f32 0.0, %v367
    %v386 = vsub.f32 0.0, %v368
    %v387 = vsub.f32 0.0, %v369
    %v388 = vmul.f32 %v370, 1.442695
    %v389 = vpow.pop %v388
    %v390 = vmul.f32 %v371, 1.442695
    %v391 = vpow.pop %v390
    %v392 = vmul.f32 %v372, 1.442695
    %v393 = vpow.pop %v392
    %v394 = vmul.f32 %v373, 1.442695
    %v395 = vpow.pop %v394
    %v396 = vmul.f32 %v374, 1.442695
    %v397 = vpow.pop %v396
    %v398 = vmul.f32 %v375, 1.442695
    %v399 = vpow.pop %v398
    %v400 = vmul.f32 %v376, 1.442695
    %v401 = vpow.pop %v400
    %v402 = vmul.f32 %v377, 1.442695
    %v403 = vpow.pop %v402
    %v404 = vmul.f32 %v378, 1.442695
    %v405 = vpow.pop %v404
    %v406 = vmul.f32 %v379, 1.442695
    %v407 = vpow.pop %v406
    %v408 = vmul.f32 %v380, 1.442695
    %v409 = vpow.pop %v408
    %v410 = vmul.f32 %v381, 1.442695
    %v411 = vpow.pop %v410
    %v412 = vmul.f32 %v382, 1.442695
    %v413 = vpow.pop %v412
    %v414 = vmul.f32 %v383, 1.442695
    %v415 = vpow.pop %v414
    %v416 = vmul.f32 %v384, 1.442695
    %v417 = vpow.pop %v416
    %v418 = vmul.f32 %v385, 1.442695
    %v419 = vpow.pop %v418
    %v420 = vmul.f32 %v386, 1.442695
    %v421 = vpow.pop %v420
    %v422 = vmul.f32 %v387, 1.442695
    %v423 = vpow.pop %v422
    %v424 = vadd.f32 %v389, 1.0
    %v425 = vadd.f32 %v391, 1.0
    %v426 = vadd.f32 %v393, 1.0
    %v427 = vadd.f32 %v395, 1.0
    %v428 = vadd.f32 %v397, 1.0
    %v429 = vadd.f32 %v399, 1.0
    %v430 = vadd.f32 %v401, 1.0
    %v431 = vadd.f32 %v403, 1.0
    %v432 = vadd.f32 %v405, 1.0
    %v433 = vadd.f32 %v407, 1.0
    %v434 = vadd.f32 %v409, 1.0
    %v435 = vadd.f32 %v411, 1.0
    %v436 = vadd.f32 %v413, 1.0
    %v437 = vadd.f32 %v415, 1.0
    %v438 = vadd.f32 %v417, 1.0
    %v439 = vadd.f32 %v419, 1.0
    %v440 = vadd.f32 %v421, 1.0
    %v441 = vadd.f32 %v423, 1.0
    %v442 = vrcp.pop %v424
    %v443 = vmul.f32 1.0, %v442
    %v444 = vrcp.pop %v425
    %v445 = vmul.f32 1.0, %v444
    %v446 = vrcp.pop %v426
    %v447 = vmul.f32 1.0, %v446
    %v448 = vrcp.pop %v427
    %v449 = vmul.f32 1.0, %v448
    %v450 = vrcp.pop %v428
    %v451 = vmul.f32 1.0, %v450
    %v452 = vrcp.pop %v429
    %v453 = vmul.f32 1.0, %v452
    %v454 = vrcp.pop %v430
    %v455 = vmul.f32 1.0, %v454
    %v456 = vrcp.pop %v431
    %v457 = vmul.f32 1.0, %v456
    %v458 = vrcp.pop %v432
    %v459 = vmul.f32 1.0, %v458
    %v460 = vrcp.pop %v433
    %v461 = vmul.f32 1.0, %v460
    %v462 = vrcp.pop %v434
    %v463 = vmul.f32 1.0, %v462
    %v464 = vrcp.pop %v435
    %v465 = vmul.f32 1.0, %v464
    %v466 = vrcp.pop %v436
    %v467 = vmul.f32 1.0, %v466
    %v468 = vrcp.pop %v437
    %v469 = vmul.f32 1.0, %v468
    %v470 = vrcp.pop %v438
    %v471 = vmul.f32 1.0, %v470
    %v472 = vrcp.pop %v439
    %v473 = vmul.f32 1.0, %v472
    %v474 = vrcp.pop %v440
    %v475 = vmul.f32 1.0, %v474
    %v476 = vrcp.pop %v441
    %v477 = vmul.f32 1.0, %v476
    %v478 = vmul.f32 %v334, %v443
    %v479 = vmul.f32 %v335, %v445
    %v480 = vmul.f32 %v336, %v447
    %v481 = vmul.f32 %v337, %v449
    %v482 = vmul.f32 %v338, %v451
    %v483 = vmul.f32 %v339, %v453
    %v484 = vmul.f32 %v340, %v455
    %v485 = vmul.f32 %v341, %v457
    %v486 = vmul.f32 %v342, %v459
    %v487 = vmul.f32 %v343, %v461
    %v488 = vmul.f32 %v344, %v463
    %v489 = vmul.f32 %v345, %v465
    %v490 = vmul.f32 %v346, %v467
    %v491 = vmul.f32 %v347, %v469
    %v492 = vmul.f32 %v348, %v471
    %v493 = vmul.f32 %v349, %v473
    %v494 = vmul.f32 %v350, %v475
    %v495 = vmul.f32 %v351, %v477
    %v496 = vld [vmem:[%s15] sm:$0xff]
    %v497 = vld [vmem:[%s15 + $0x8] sm:$0xff]
    %v498 = vld [vmem:[%s15 + $0x10] sm:$0xff]
    %v499 = vld [vmem:[%s15 + $0x18] sm:$0xff]
    %v500 = vld [vmem:[%s15 + $0x20] sm:$0xff]
    %v501 = vld [vmem:[%s15 + $0x28] sm:$0xff]
    %v502 = vld [vmem:[%s15 + $0x30] sm:$0xff]
    %v503 = vld [vmem:[%s15 + $0x38] sm:$0xff]
    %v504 = vld [vmem:[%s15 + $0x40] sm:$0xff]
    %v505 = vld [vmem:[%s15 + $0x48] sm:$0xff]
    %v506 = vld [vmem:[%s15 + $0x50] sm:$0xff]
    %v507 = vld [vmem:[%s15 + $0x58] sm:$0xff]
    %v508 = vld [vmem:[%s15 + $0x60] sm:$0xff]
    %v509 = vld [vmem:[%s15 + $0x68] sm:$0xff]
    %v510 = vld [vmem:[%s15 + $0x70] sm:$0xff]
    %v511 = vld [vmem:[%s15 + $0x78] sm:$0xff]
    %v512 = vld [vmem:[%s15 + $0x80] sm:$0xff]
    %v513 = vld [vmem:[%s15 + $0x88] sm:$0xff]
    %v514 = vadd.f32 %v478, %v496
    %v515 = vadd.f32 %v479, %v497
    %v516 = vadd.f32 %v480, %v498
    %v517 = vadd.f32 %v481, %v499
    %v518 = vadd.f32 %v482, %v500
    %v519 = vadd.f32 %v483, %v501
    %v520 = vadd.f32 %v484, %v502
    %v521 = vadd.f32 %v485, %v503
    %v522 = vadd.f32 %v486, %v504
    %v523 = vadd.f32 %v487, %v505
    %v524 = vadd.f32 %v488, %v506
    %v525 = vadd.f32 %v489, %v507
    %v526 = vadd.f32 %v490, %v508
    %v527 = vadd.f32 %v491, %v509
    %v528 = vadd.f32 %v492, %v510
    %v529 = vadd.f32 %v493, %v511
    %v530 = vadd.f32 %v494, %v512
    %v531 = vadd.f32 %v495, %v513
    %s532 = sld [smem:[#allocation6]]
    %v533 = vld [vmem:[%s16] sm:$0xff]
    %v534 = vld [vmem:[%s16 + $0x8] sm:$0xff]
    %v535 = vld [vmem:[%s16 + $0x10] sm:$0xff]
    %v536 = vld [vmem:[%s16 + $0x18] sm:$0xff]
    %v537 = vld [vmem:[%s16 + $0x20] sm:$0xff]
    %v538 = vld [vmem:[%s16 + $0x28] sm:$0xff]
    %v539 = vld [vmem:[%s16 + $0x30] sm:$0xff]
    %v540 = vld [vmem:[%s16 + $0x38] sm:$0xff]
    %v541 = vld [vmem:[%s16 + $0x40] sm:$0xff]
    %v542 = vld [vmem:[%s16 + $0x48] sm:$0xff]
    %v543 = vld [vmem:[%s16 + $0x50] sm:$0xff]
    %v544 = vld [vmem:[%s16 + $0x58] sm:$0xff]
    %v545 = vld [vmem:[%s16 + $0x60] sm:$0xff]
    %v546 = vld [vmem:[%s16 + $0x68] sm:$0xff]
    %v547 = vld [vmem:[%s16 + $0x70] sm:$0xff]
    %v548 = vld [vmem:[%s16 + $0x78] sm:$0xff]
    %v549 = vld [vmem:[%s16 + $0x80] sm:$0xff]
    %v550 = vld [vmem:[%s16 + $0x88] sm:$0xff]
    %v551 = vstv %s532
    %v552 = vmul.f32 %v551, %v533
    %v553 = vmul.f32 %v551, %v534
    %v554 = vmul.f32 %v551, %v535
    %v555 = vmul.f32 %v551, %v536
    %v556 = vmul.f32 %v551, %v537
    %v557 = vmul.f32 %v551, %v538
    %v558 = vmul.f32 %v551, %v539
    %v559 = vmul.f32 %v551, %v540
    %v560 = vmul.f32 %v551, %v541
    %v561 = vmul.f32 %v551, %v542
    %v562 = vmul.f32 %v551, %v543
    %v563 = vmul.f32 %v551, %v544
    %v564 = vmul.f32 %v551, %v545
    %v565 = vmul.f32 %v551, %v546
    %v566 = vmul.f32 %v551, %v547
    %v567 = vmul.f32 %v551, %v548
    %v568 = vmul.f32 %v551, %v549
    %v569 = vmul.f32 %v551, %v550
    %v570 = vadd.f32 %v514, %v552
    %v571 = vadd.f32 %v515, %v553
    %v572 = vadd.f32 %v516, %v554
    %v573 = vadd.f32 %v517, %v555
    %v574 = vadd.f32 %v518, %v556
    %v575 = vadd.f32 %v519, %v557
    %v576 = vadd.f32 %v520, %v558
    %v577 = vadd.f32 %v521, %v559
    %v578 = vadd.f32 %v522, %v560
    %v579 = vadd.f32 %v523, %v561
    %v580 = vadd.f32 %v524, %v562
    %v581 = vadd.f32 %v525, %v563
    %v582 = vadd.f32 %v526, %v564
    %v583 = vadd.f32 %v527, %v565
    %v584 = vadd.f32 %v528, %v566
    %v585 = vadd.f32 %v529, %v567
    %v586 = vadd.f32 %v530, %v568
    %v587 = vadd.f32 %v531, %v569
    %s588 = sld [smem:[#allocation6 + $0x1]]
    %s589 = scalar_lea.vmem %s16, 144
    %v590 = vld [vmem:[%s589] sm:$0xff]
    %v591 = vld [vmem:[%s589 + $0x8] sm:$0xff]
    %v592 = vld [vmem:[%s589 + $0x10] sm:$0xff]
    %v593 = vld [vmem:[%s589 + $0x18] sm:$0xff]
    %v594 = vld [vmem:[%s589 + $0x20] sm:$0xff]
    %v595 = vld [vmem:[%s589 + $0x28] sm:$0xff]
    %v596 = vld [vmem:[%s589 + $0x30] sm:$0xff]
    %v597 = vld [vmem:[%s589 + $0x38] sm:$0xff]
    %v598 = vld [vmem:[%s589 + $0x40] sm:$0xff]
    %v599 = vld [vmem:[%s589 + $0x48] sm:$0xff]
    %v600 = vld [vmem:[%s589 + $0x50] sm:$0xff]
    %v601 = vld [vmem:[%s589 + $0x58] sm:$0xff]
    %v602 = vld [vmem:[%s589 + $0x60] sm:$0xff]
    %v603 = vld [vmem:[%s589 + $0x68] sm:$0xff]
    %v604 = vld [vmem:[%s589 + $0x70] sm:$0xff]
    %v605 = vld [vmem:[%s589 + $0x78] sm:$0xff]
    %v606 = vld [vmem:[%s589 + $0x80] sm:$0xff]
    %v607 = vld [vmem:[%s589 + $0x88] sm:$0xff]
    %v608 = vstv %s588
    %v609 = vmul.f32 %v608, %v590
    %v610 = vmul.f32 %v608, %v591
    %v611 = vmul.f32 %v608, %v592
    %v612 = vmul.f32 %v608, %v593
    %v613 = vmul.f32 %v608, %v594
    %v614 = vmul.f32 %v608, %v595
    %v615 = vmul.f32 %v608, %v596
    %v616 = vmul.f32 %v608, %v597
    %v617 = vmul.f32 %v608, %v598
    %v618 = vmul.f32 %v608, %v599
    %v619 = vmul.f32 %v608, %v600
    %v620 = vmul.f32 %v608, %v601
    %v621 = vmul.f32 %v608, %v602
    %v622 = vmul.f32 %v608, %v603
    %v623 = vmul.f32 %v608, %v604
    %v624 = vmul.f32 %v608, %v605
    %v625 = vmul.f32 %v608, %v606
    %v626 = vmul.f32 %v608, %v607
    %v627 = vadd.f32 %v570, %v609
    %v628 = vadd.f32 %v571, %v610
    %v629 = vadd.f32 %v572, %v611
    %v630 = vadd.f32 %v573, %v612
    %v631 = vadd.f32 %v574, %v613
    %v632 = vadd.f32 %v575, %v614
    %v633 = vadd.f32 %v576, %v615
    %v634 = vadd.f32 %v577, %v616
    %v635 = vadd.f32 %v578, %v617
    %v636 = vadd.f32 %v579, %v618
    %v637 = vadd.f32 %v580, %v619
    %v638 = vadd.f32 %v581, %v620
    %v639 = vadd.f32 %v582, %v621
    %v640 = vadd.f32 %v583, %v622
    %v641 = vadd.f32 %v584, %v623
    %v642 = vadd.f32 %v585, %v624
    %v643 = vadd.f32 %v586, %v625
    %v644 = vadd.f32 %v587, %v626
    %s645 = sld [smem:[#allocation6 + $0x2]]
    %s646 = scalar_lea.vmem %s16, 288
    %v647 = vld [vmem:[%s646] sm:$0xff]
    %v648 = vld [vmem:[%s646 + $0x8] sm:$0xff]
    %v649 = vld [vmem:[%s646 + $0x10] sm:$0xff]
    %v650 = vld [vmem:[%s646 + $0x18] sm:$0xff]
    %v651 = vld [vmem:[%s646 + $0x20] sm:$0xff]
    %v652 = vld [vmem:[%s646 + $0x28] sm:$0xff]
    %v653 = vld [vmem:[%s646 + $0x30] sm:$0xff]
    %v654 = vld [vmem:[%s646 + $0x38] sm:$0xff]
    %v655 = vld [vmem:[%s646 + $0x40] sm:$0xff]
    %v656 = vld [vmem:[%s646 + $0x48] sm:$0xff]
    %v657 = vld [vmem:[%s646 + $0x50] sm:$0xff]
    %v658 = vld [vmem:[%s646 + $0x58] sm:$0xff]
    %v659 = vld [vmem:[%s646 + $0x60] sm:$0xff]
    %v660 = vld [vmem:[%s646 + $0x68] sm:$0xff]
    %v661 = vld [vmem:[%s646 + $0x70] sm:$0xff]
    %v662 = vld [vmem:[%s646 + $0x78] sm:$0xff]
    %v663 = vld [vmem:[%s646 + $0x80] sm:$0xff]
    %v664 = vld [vmem:[%s646 + $0x88] sm:$0xff]
    %v665 = vstv %s645
    %v666 = vmul.f32 %v665, %v647
    %v667 = vmul.f32 %v665, %v648
    %v668 = vmul.f32 %v665, %v649
    %v669 = vmul.f32 %v665, %v650
    %v670 = vmul.f32 %v665, %v651
    %v671 = vmul.f32 %v665, %v652
    %v672 = vmul.f32 %v665, %v653
    %v673 = vmul.f32 %v665, %v654
    %v674 = vmul.f32 %v665, %v655
    %v675 = vmul.f32 %v665, %v656
    %v676 = vmul.f32 %v665, %v657
    %v677 = vmul.f32 %v665, %v658
    %v678 = vmul.f32 %v665, %v659
    %v679 = vmul.f32 %v665, %v660
    %v680 = vmul.f32 %v665, %v661
    %v681 = vmul.f32 %v665, %v662
    %v682 = vmul.f32 %v665, %v663
    %v683 = vmul.f32 %v665, %v664
    %v684 = vadd.f32 %v627, %v666
    %v685 = vadd.f32 %v628, %v667
    %v686 = vadd.f32 %v629, %v668
    %v687 = vadd.f32 %v630, %v669
    %v688 = vadd.f32 %v631, %v670
    %v689 = vadd.f32 %v632, %v671
    %v690 = vadd.f32 %v633, %v672
    %v691 = vadd.f32 %v634, %v673
    %v692 = vadd.f32 %v635, %v674
    %v693 = vadd.f32 %v636, %v675
    %v694 = vadd.f32 %v637, %v676
    %v695 = vadd.f32 %v638, %v677
    %v696 = vadd.f32 %v639, %v678
    %v697 = vadd.f32 %v640, %v679
    %v698 = vadd.f32 %v641, %v680
    %v699 = vadd.f32 %v642, %v681
    %v700 = vadd.f32 %v643, %v682
    %v701 = vadd.f32 %v644, %v683
    %v702 = vld [vmem:[%s4] sm:$0xf]
    %v703 = vld [vmem:[%s4 + $0x4] sm:$0xf]
    %v704 = vld [vmem:[%s4 + $0x8] sm:$0xf]
    %v705 = vld [vmem:[%s4 + $0xc] sm:$0xf]
    %v706 = vld [vmem:[%s4 + $0x10] sm:$0xf]
    %v707 = vld [vmem:[%s4 + $0x14] sm:$0xf]
    %v708 = vld [vmem:[%s4 + $0x18] sm:$0xf]
    %v709 = vld [vmem:[%s4 + $0x1c] sm:$0xf]
    %v710 = vld [vmem:[%s4 + $0x20] sm:$0xf]
    %v711 = vld [vmem:[%s4 + $0x24] sm:$0xf]
    %v712 = vld [vmem:[%s4 + $0x28] sm:$0xf]
    %v713 = vld [vmem:[%s4 + $0x2c] sm:$0xf]
    %v714 = vld [vmem:[%s4 + $0x30] sm:$0xf]
    %v715 = vld [vmem:[%s4 + $0x34] sm:$0xf]
    %v716 = vld [vmem:[%s4 + $0x38] sm:$0xf]
    %v717 = vld [vmem:[%s4 + $0x3c] sm:$0xf]
    %v718 = vld [vmem:[%s4 + $0x40] sm:$0xf]
    %v719 = vld [vmem:[%s4 + $0x44] sm:$0xf]
    %v720 = vld [vmem:[%s4 + $0x48] sm:$0xf]
    %v721 = vld [vmem:[%s4 + $0x4c] sm:$0xf]
    %v722 = vld [vmem:[%s4 + $0x50] sm:$0xf]
    %v723 = vld [vmem:[%s4 + $0x54] sm:$0xf]
    %v724 = vld [vmem:[%s4 + $0x58] sm:$0xf]
    %v725 = vld [vmem:[%s4 + $0x5c] sm:$0xf]
    %v726 = vld [vmem:[%s4 + $0x60] sm:$0xf]
    %v727 = vld [vmem:[%s4 + $0x64] sm:$0xf]
    %v728 = vld [vmem:[%s4 + $0x68] sm:$0xf]
    %v729 = vld [vmem:[%s4 + $0x6c] sm:$0xf]
    %v730 = vld [vmem:[%s4 + $0x70] sm:$0xf]
    %v731 = vld [vmem:[%s4 + $0x74] sm:$0xf]
    %v732 = vld [vmem:[%s4 + $0x78] sm:$0xf]
    %v733 = vld [vmem:[%s4 + $0x7c] sm:$0xf]
    %v734 = vld [vmem:[%s4 + $0x80] sm:$0xf]
    %v735 = vld [vmem:[%s4 + $0x84] sm:$0xf]
    %v736 = vld [vmem:[%s4 + $0x88] sm:$0xf]
    %v737 = vld [vmem:[%s4 + $0x8c] sm:$0xf]
    %v738 = vld [vmem:[%s4 + $0x90] sm:$0xf]
    %v739 = vld [vmem:[%s4 + $0x94] sm:$0xf]
    %v740 = vld [vmem:[%s4 + $0x98] sm:$0xf]
    %v741 = vld [vmem:[%s4 + $0x9c] sm:$0xf]
    %v742 = vld [vmem:[%s4 + $0xa0] sm:$0xf]
    %v743 = vld [vmem:[%s4 + $0xa4] sm:$0xf]
    %v744 = vld [vmem:[%s4 + $0xa8] sm:$0xf]
    %v745 = vld [vmem:[%s4 + $0xac] sm:$0xf]
    %v746 = vld [vmem:[%s4 + $0xb0] sm:$0xf]
    %v747 = vld [vmem:[%s4 + $0xb4] sm:$0xf]
    %v748 = vld [vmem:[%s4 + $0xb8] sm:$0xf]
    %v749 = vld [vmem:[%s4 + $0xbc] sm:$0xf]
    %v750 = vld [vmem:[%s4 + $0xc0] sm:$0xf]
    %v751 = vld [vmem:[%s4 + $0xc4] sm:$0xf]
    %v752 = vld [vmem:[%s4 + $0xc8] sm:$0xf]
    %v753 = vld [vmem:[%s4 + $0xcc] sm:$0xf]
    %v754 = vld [vmem:[%s4 + $0xd0] sm:$0xf]
    %v755 = vld [vmem:[%s4 + $0xd4] sm:$0xf]
    %v756 = vld [vmem:[%s4 + $0xd8] sm:$0xf]
    %v757 = vld [vmem:[%s4 + $0xdc] sm:$0xf]
    %v758 = vld [vmem:[%s4 + $0xe0] sm:$0xf]
    %v759 = vld [vmem:[%s4 + $0xe4] sm:$0xf]
    %v760 = vld [vmem:[%s4 + $0xe8] sm:$0xf]
    %v761 = vld [vmem:[%s4 + $0xec] sm:$0xf]
    %v762 = vld [vmem:[%s4 + $0xf0] sm:$0xf]
    %v763 = vld [vmem:[%s4 + $0xf4] sm:$0xf]
    %v764 = vld [vmem:[%s4 + $0xf8] sm:$0xf]
    %v765 = vld [vmem:[%s4 + $0xfc] sm:$0xf]
    %v830 = vunpack.c.l.b16 %v702
    %v831 = vunpack.c.l.b16 %v703
    %v832 = vunpack.c.l.b16 %v704
    %v833 = vunpack.c.l.b16 %v705
    %v834 = vunpack.c.l.b16 %v706
    %v835 = vunpack.c.l.b16 %v707
    %v836 = vunpack.c.l.b16 %v708
    %v837 = vunpack.c.l.b16 %v709
    %v838 = vunpack.c.l.b16 %v710
    %v839 = vunpack.c.l.b16 %v711
    %v840 = vunpack.c.l.b16 %v712
    %v841 = vunpack.c.l.b16 %v713
    %v842 = vunpack.c.l.b16 %v714
    %v843 = vunpack.c.l.b16 %v715
    %v844 = vunpack.c.l.b16 %v716
    %v845 = vunpack.c.l.b16 %v717
    %v846 = vunpack.c.l.b16 %v718
    %v847 = vunpack.c.l.b16 %v719
    %v848 = vunpack.c.l.b16 %v720
    %v849 = vunpack.c.l.b16 %v721
    %v850 = vunpack.c.l.b16 %v722
    %v851 = vunpack.c.l.b16 %v723
    %v852 = vunpack.c.l.b16 %v724
    %v853 = vunpack.c.l.b16 %v725
    %v854 = vunpack.c.l.b16 %v726
    %v855 = vunpack.c.l.b16 %v727
    %v856 = vunpack.c.l.b16 %v728
    %v857 = vunpack.c.l.b16 %v729
    %v858 = vunpack.c.l.b16 %v730
    %v859 = vunpack.c.l.b16 %v731
    %v860 = vunpack.c.l.b16 %v732
    %v861 = vunpack.c.l.b16 %v733
    %v862 = vunpack.c.l.b16 %v734
    %v863 = vunpack.c.l.b16 %v735
    %v864 = vunpack.c.l.b16 %v736
    %v865 = vunpack.c.l.b16 %v737
    %v866 = vunpack.c.l.b16 %v738
    %v867 = vunpack.c.l.b16 %v739
    %v868 = vunpack.c.l.b16 %v740
    %v869 = vunpack.c.l.b16 %v741
    %v870 = vunpack.c.l.b16 %v742
    %v871 = vunpack.c.l.b16 %v743
    %v872 = vunpack.c.l.b16 %v744
    %v873 = vunpack.c.l.b16 %v745
    %v874 = vunpack.c.l.b16 %v746
    %v875 = vunpack.c.l.b16 %v747
    %v876 = vunpack.c.l.b16 %v748
    %v877 = vunpack.c.l.b16 %v749
    %v878 = vunpack.c.l.b16 %v750
    %v879 = vunpack.c.l.b16 %v751
    %v880 = vunpack.c.l.b16 %v752
    %v881 = vunpack.c.l.b16 %v753
    %v882 = vunpack.c.l.b16 %v754
    %v883 = vunpack.c.l.b16 %v755
    %v884 = vunpack.c.l.b16 %v756
    %v885 = vunpack.c.l.b16 %v757
    %v886 = vunpack.c.l.b16 %v758
    %v887 = vunpack.c.l.b16 %v759
    %v888 = vunpack.c.l.b16 %v760
    %v889 = vunpack.c.l.b16 %v761
    %v890 = vunpack.c.l.b16 %v762
    %v891 = vunpack.c.l.b16 %v763
    %v892 = vunpack.c.l.b16 %v764
    %v893 = vunpack.c.l.b16 %v765
    %v894 = vpack.c.b16 %v831, %v830
    %v895 = vpack.c.b16 %v833, %v832
    %v896 = vpack.c.b16 %v835, %v834
    %v897 = vpack.c.b16 %v837, %v836
    %v898 = vpack.c.b16 %v839, %v838
    %v899 = vpack.c.b16 %v841, %v840
    %v900 = vpack.c.b16 %v843, %v842
    %v901 = vpack.c.b16 %v845, %v844
    %v902 = vpack.c.b16 %v847, %v846
    %v903 = vpack.c.b16 %v849, %v848
    %v904 = vpack.c.b16 %v851, %v850
    %v905 = vpack.c.b16 %v853, %v852
    %v906 = vpack.c.b16 %v855, %v854
    %v907 = vpack.c.b16 %v857, %v856
    %v908 = vpack.c.b16 %v859, %v858
    %v909 = vpack.c.b16 %v861, %v860
    %v910 = vpack.c.b16 %v863, %v862
    %v911 = vpack.c.b16 %v865, %v864
    %v912 = vpack.c.b16 %v867, %v866
    %v913 = vpack.c.b16 %v869, %v868
    %v914 = vpack.c.b16 %v871, %v870
    %v915 = vpack.c.b16 %v873, %v872
    %v916 = vpack.c.b16 %v875, %v874
    %v917 = vpack.c.b16 %v877, %v876
    %v918 = vpack.c.b16 %v879, %v878
    %v919 = vpack.c.b16 %v881, %v880
    %v920 = vpack.c.b16 %v883, %v882
    %v921 = vpack.c.b16 %v885, %v884
    %v922 = vpack.c.b16 %v887, %v886
    %v923 = vpack.c.b16 %v889, %v888
    %v924 = vpack.c.b16 %v891, %v890
    %v925 = vpack.c.b16 %v893, %v892
    %958 = vmatprep.subr.bf16.mxu0 0
    %959 = vmatpush1.bf16.msra.mxu0 %v894
    %960 = vmatprep.subr.bf16.mxu0 0
    %961 = vmatpush1.bf16.msra.mxu0 %v895
    %962 = vmatprep.subr.bf16.mxu0 0
    %963 = vmatpush1.bf16.msra.mxu0 %v896
    %964 = vmatprep.subr.bf16.mxu0 0
    %965 = vmatpush1.bf16.msra.mxu0 %v897
    %966 = vmatprep.subr.bf16.mxu0 0
    %967 = vmatpush1.bf16.msra.mxu0 %v898
    %968 = vmatprep.subr.bf16.mxu0 0
    %969 = vmatpush1.bf16.msra.mxu0 %v899
    %970 = vmatprep.subr.bf16.mxu0 0
    %971 = vmatpush1.bf16.msra.mxu0 %v900
    %972 = vmatprep.subr.bf16.mxu0 0
    %973 = vmatpush1.bf16.msra.mxu0 %v901
    %974 = vmatprep.subr.bf16.mxu0 0
    %975 = vmatpush1.bf16.msra.mxu0 %v902
    %976 = vmatprep.subr.bf16.mxu0 0
    %977 = vmatpush1.bf16.msra.mxu0 %v903
    %978 = vmatprep.subr.bf16.mxu0 0
    %979 = vmatpush1.bf16.msra.mxu0 %v904
    %980 = vmatprep.subr.bf16.mxu0 0
    %981 = vmatpush1.bf16.msra.mxu0 %v905
    %982 = vmatprep.subr.bf16.mxu0 0
    %983 = vmatpush1.bf16.msra.mxu0 %v906
    %984 = vmatprep.subr.bf16.mxu0 0
    %985 = vmatpush1.bf16.msra.mxu0 %v907
    %986 = vmatprep.subr.bf16.mxu0 0
    %987 = vmatpush1.bf16.msra.mxu0 %v908
    %988 = vmatprep.subr.bf16.mxu0 0
    %989 = vmatpush1.bf16.msra.mxu0 %v909
    %990 = vmatprep.mubr.bf16.mxu0 %v331
    %991 = vmatmul.mubr.bf16.gmra.mrb[0].mxu0 %v330
    %v992 = vpop.f32.mrb[0].mxu0
    %v993 = vadd.f32 0.0, %v992
    %v994 = vpop.f32.mrb[0].mxu0
    %v995 = vpop.f32.mrb[0].mxu0
    %v996 = vpop.f32.mrb[0].mxu0
    %997 = vdwg.mxu0
    %998 = vmatprep.subr.bf16.mxu0 0
    %999 = vmatpush1.bf16.msra.mxu0 %v910
    %1000 = vmatprep.subr.bf16.mxu0 0
    %1001 = vmatpush1.bf16.msra.mxu0 %v911
    %1002 = vmatprep.subr.bf16.mxu0 0
    %1003 = vmatpush1.bf16.msra.mxu0 %v912
    %1004 = vmatprep.subr.bf16.mxu0 0
    %1005 = vmatpush1.bf16.msra.mxu0 %v913
    %1006 = vmatprep.subr.bf16.mxu0 0
    %1007 = vmatpush1.bf16.msra.mxu0 %v914
    %1008 = vmatprep.subr.bf16.mxu0 0
    %1009 = vmatpush1.bf16.msra.mxu0 %v915
    %1010 = vmatprep.subr.bf16.mxu0 0
    %1011 = vmatpush1.bf16.msra.mxu0 %v916
    %1012 = vmatprep.subr.bf16.mxu0 0
    %1013 = vmatpush1.bf16.msra.mxu0 %v917
    %1014 = vmatprep.subr.bf16.mxu0 0
    %1015 = vmatpush1.bf16.msra.mxu0 %v918
    %1016 = vmatprep.subr.bf16.mxu0 0
    %1017 = vmatpush1.bf16.msra.mxu0 %v919
    %1018 = vmatprep.subr.bf16.mxu0 0
    %1019 = vmatpush1.bf16.msra.mxu0 %v920
    %1020 = vmatprep.subr.bf16.mxu0 0
    %1021 = vmatpush1.bf16.msra.mxu0 %v921
    %1022 = vmatprep.subr.bf16.mxu0 0
    %1023 = vmatpush1.bf16.msra.mxu0 %v922
    %1024 = vmatprep.subr.bf16.mxu0 0
    %1025 = vmatpush1.bf16.msra.mxu0 %v923
    %1026 = vmatprep.subr.bf16.mxu0 0
    %1027 = vmatpush1.bf16.msra.mxu0 %v924
    %1028 = vmatprep.subr.bf16.mxu0 0
    %1029 = vmatpush1.bf16.msra.mxu0 %v925
    %1030 = vmatprep.mubr.bf16.mxu0 %v333
    %1031 = vmatmul.mubr.bf16.gmra.mrb[0].mxu0 %v332
    %v1032 = vpop.f32.mrb[0].mxu0
    %v1033 = vadd.f32 %v993, %v1032
    %v1034 = vpop.f32.mrb[0].mxu0
    %v1035 = vpop.f32.mrb[0].mxu0
    %v1036 = vpop.f32.mrb[0].mxu0
    %1037 = vdwg.mxu0
    %v1038 = vpack.c.bf16 %v1033, %v1033
    %v1039 = vpack.c.bf16 %v685, %v684
    %s1040 = scalar_lea.vmem %s4, 256
    %v1041 = vld [vmem:[%s1040] sm:$0xf]
    %v1042 = vld [vmem:[%s1040 + $0x4] sm:$0xf]
    %v1043 = vld [vmem:[%s1040 + $0x8] sm:$0xf]
    %v1044 = vld [vmem:[%s1040 + $0xc] sm:$0xf]
    %v1045 = vld [vmem:[%s1040 + $0x10] sm:$0xf]
    %v1046 = vld [vmem:[%s1040 + $0x14] sm:$0xf]
    %v1047 = vld [vmem:[%s1040 + $0x18] sm:$0xf]
    %v1048 = vld [vmem:[%s1040 + $0x1c] sm:$0xf]
    %v1049 = vld [vmem:[%s1040 + $0x20] sm:$0xf]
    %v1050 = vld [vmem:[%s1040 + $0x24] sm:$0xf]
    %v1051 = vld [vmem:[%s1040 + $0x28] sm:$0xf]
    %v1052 = vld [vmem:[%s1040 + $0x2c] sm:$0xf]
    %v1053 = vld [vmem:[%s1040 + $0x30] sm:$0xf]
    %v1054 = vld [vmem:[%s1040 + $0x34] sm:$0xf]
    %v1055 = vld [vmem:[%s1040 + $0x38] sm:$0xf]
    %v1056 = vld [vmem:[%s1040 + $0x3c] sm:$0xf]
    %v1057 = vld [vmem:[%s1040 + $0x40] sm:$0xf]
    %v1058 = vld [vmem:[%s1040 + $0x44] sm:$0xf]
    %v1059 = vld [vmem:[%s1040 + $0x48] sm:$0xf]
    %v1060 = vld [vmem:[%s1040 + $0x4c] sm:$0xf]
    %v1061 = vld [vmem:[%s1040 + $0x50] sm:$0xf]
    %v1062 = vld [vmem:[%s1040 + $0x54] sm:$0xf]
    %v1063 = vld [vmem:[%s1040 + $0x58] sm:$0xf]
    %v1064 = vld [vmem:[%s1040 + $0x5c] sm:$0xf]
    %v1065 = vld [vmem:[%s1040 + $0x60] sm:$0xf]
    %v1066 = vld [vmem:[%s1040 + $0x64] sm:$0xf]
    %v1067 = vld [vmem:[%s1040 + $0x68] sm:$0xf]
    %v1068 = vld [vmem:[%s1040 + $0x6c] sm:$0xf]
    %v1069 = vld [vmem:[%s1040 + $0x70] sm:$0xf]
    %v1070 = vld [vmem:[%s1040 + $0x74] sm:$0xf]
    %v1071 = vld [vmem:[%s1040 + $0x78] sm:$0xf]
    %v1072 = vld [vmem:[%s1040 + $0x7c] sm:$0xf]
    %v1073 = vld [vmem:[%s1040 + $0x80] sm:$0xf]
    %v1074 = vld [vmem:[%s1040 + $0x84] sm:$0xf]
    %v1075 = vld [vmem:[%s1040 + $0x88] sm:$0xf]
    %v1076 = vld [vmem:[%s1040 + $0x8c] sm:$0xf]
    %v1077 = vld [vmem:[%s1040 + $0x90] sm:$0xf]
    %v1078 = vld [vmem:[%s1040 + $0x94] sm:$0xf]
    %v1079 = vld [vmem:[%s1040 + $0x98] sm:$0xf]
    %v1080 = vld [vmem:[%s1040 + $0x9c] sm:$0xf]
    %v1081 = vld [vmem:[%s1040 + $0xa0] sm:$0xf]
    %v1082 = vld [vmem:[%s1040 + $0xa4] sm:$0xf]
    %v1083 = vld [vmem:[%s1040 + $0xa8] sm:$0xf]
    %v1084 = vld [vmem:[%s1040 + $0xac] sm:$0xf]
    %v1085 = vld [vmem:[%s1040 + $0xb0] sm:$0xf]
    %v1086 = vld [vmem:[%s1040 + $0xb4] sm:$0xf]
    %v1087 = vld [vmem:[%s1040 + $0xb8] sm:$0xf]
    %v1088 = vld [vmem:[%s1040 + $0xbc] sm:$0xf]
    %v1089 = vld [vmem:[%s1040 + $0xc0] sm:$0xf]
    %v1090 = vld [vmem:[%s1040 + $0xc4] sm:$0xf]
    %v1091 = vld [vmem:[%s1040 + $0xc8] sm:$0xf]
    %v1092 = vld [vmem:[%s1040 + $0xcc] sm:$0xf]
    %v1093 = vld [vmem:[%s1040 + $0xd0] sm:$0xf]
    %v1094 = vld [vmem:[%s1040 + $0xd4] sm:$0xf]
    %v1095 = vld [vmem:[%s1040 + $0xd8] sm:$0xf]
    %v1096 = vld [vmem:[%s1040 + $0xdc] sm:$0xf]
    %v1097 = vld [vmem:[%s1040 + $0xe0] sm:$0xf]
    %v1098 = vld [vmem:[%s1040 + $0xe4] sm:$0xf]
    %v1099 = vld [vmem:[%s1040 + $0xe8] sm:$0xf]
    %v1100 = vld [vmem:[%s1040 + $0xec] sm:$0xf]
    %v1101 = vld [vmem:[%s1040 + $0xf0] sm:$0xf]
    %v1102 = vld [vmem:[%s1040 + $0xf4] sm:$0xf]
    %v1103 = vld [vmem:[%s1040 + $0xf8] sm:$0xf]
    %v1104 = vld [vmem:[%s1040 + $0xfc] sm:$0xf]
    %v1169 = vunpack.c.l.b16 %v1041
    %v1170 = vunpack.c.l.b16 %v1042
    %v1171 = vunpack.c.l.b16 %v1043
    %v1172 = vunpack.c.l.b16 %v1044
    %v1173 = vunpack.c.l.b16 %v1045
    %v1174 = vunpack.c.l.b16 %v1046
    %v1175 = vunpack.c.l.b16 %v1047
    %v1176 = vunpack.c.l.b16 %v1048
    %v1177 = vunpack.c.l.b16 %v1049
    %v1178 = vunpack.c.l.b16 %v1050
    %v1179 = vunpack.c.l.b16 %v1051
    %v1180 = vunpack.c.l.b16 %v1052
    %v1181 = vunpack.c.l.b16 %v1053
    %v1182 = vunpack.c.l.b16 %v1054
    %v1183 = vunpack.c.l.b16 %v1055
    %v1184 = vunpack.c.l.b16 %v1056
    %v1185 = vunpack.c.l.b16 %v1057
    %v1186 = vunpack.c.l.b16 %v1058
    %v1187 = vunpack.c.l.b16 %v1059
    %v1188 = vunpack.c.l.b16 %v1060
    %v1189 = vunpack.c.l.b16 %v1061
    %v1190 = vunpack.c.l.b16 %v1062
    %v1191 = vunpack.c.l.b16 %v1063
    %v1192 = vunpack.c.l.b16 %v1064
    %v1193 = vunpack.c.l.b16 %v1065
    %v1194 = vunpack.c.l.b16 %v1066
    %v1195 = vunpack.c.l.b16 %v1067
    %v1196 = vunpack.c.l.b16 %v1068
    %v1197 = vunpack.c.l.b16 %v1069
    %v1198 = vunpack.c.l.b16 %v1070
    %v1199 = vunpack.c.l.b16 %v1071
    %v1200 = vunpack.c.l.b16 %v1072
    %v1201 = vunpack.c.l.b16 %v1073
    %v1202 = vunpack.c.l.b16 %v1074
    %v1203 = vunpack.c.l.b16 %v1075
    %v1204 = vunpack.c.l.b16 %v1076
    %v1205 = vunpack.c.l.b16 %v1077
    %v1206 = vunpack.c.l.b16 %v1078
    %v1207 = vunpack.c.l.b16 %v1079
    %v1208 = vunpack.c.l.b16 %v1080
    %v1209 = vunpack.c.l.b16 %v1081
    %v1210 = vunpack.c.l.b16 %v1082
    %v1211 = vunpack.c.l.b16 %v1083
    %v1212 = vunpack.c.l.b16 %v1084
    %v1213 = vunpack.c.l.b16 %v1085
    %v1214 = vunpack.c.l.b16 %v1086
    %v1215 = vunpack.c.l.b16 %v1087
    %v1216 = vunpack.c.l.b16 %v1088
    %v1217 = vunpack.c.l.b16 %v1089
    %v1218 = vunpack.c.l.b16 %v1090
    %v1219 = vunpack.c.l.b16 %v1091
    %v1220 = vunpack.c.l.b16 %v1092
    %v1221 = vunpack.c.l.b16 %v1093
    %v1222 = vunpack.c.l.b16 %v1094
    %v1223 = vunpack.c.l.b16 %v1095
    %v1224 = vunpack.c.l.b16 %v1096
    %v1225 = vunpack.c.l.b16 %v1097
    %v1226 = vunpack.c.l.b16 %v1098
    %v1227 = vunpack.c.l.b16 %v1099
    %v1228 = vunpack.c.l.b16 %v1100
    %v1229 = vunpack.c.l.b16 %v1101
    %v1230 = vunpack.c.l.b16 %v1102
    %v1231 = vunpack.c.l.b16 %v1103
    %v1232 = vunpack.c.l.b16 %v1104
    %v1233 = vpack.c.b16 %v1170, %v1169
    %v1234 = vpack.c.b16 %v1172, %v1171
    %v1235 = vpack.c.b16 %v1174, %v1173
    %v1236 = vpack.c.b16 %v1176, %v1175
    %v1237 = vpack.c.b16 %v1178, %v1177
    %v1238 = vpack.c.b16 %v1180, %v1179
    %v1239 = vpack.c.b16 %v1182, %v1181
    %v1240 = vpack.c.b16 %v1184, %v1183
    %v1241 = vpack.c.b16 %v1186, %v1185
    %v1242 = vpack.c.b16 %v1188, %v1187
    %v1243 = vpack.c.b16 %v1190, %v1189
    %v1244 = vpack.c.b16 %v1192, %v1191
    %v1245 = vpack.c.b16 %v1194, %v1193
    %v1246 = vpack.c.b16 %v1196, %v1195
    %v1247 = vpack.c.b16 %v1198, %v1197
    %v1248 = vpack.c.b16 %v1200, %v1199
    %v1249 = vpack.c.b16 %v1202, %v1201
    %v1250 = vpack.c.b16 %v1204, %v1203
    %v1251 = vpack.c.b16 %v1206, %v1205
    %v1252 = vpack.c.b16 %v1208, %v1207
    %v1253 = vpack.c.b16 %v1210, %v1209
    %v1254 = vpack.c.b16 %v1212, %v1211
    %v1255 = vpack.c.b16 %v1214, %v1213
    %v1256 = vpack.c.b16 %v1216, %v1215
    %v1257 = vpack.c.b16 %v1218, %v1217
    %v1258 = vpack.c.b16 %v1220, %v1219
    %v1259 = vpack.c.b16 %v1222, %v1221
    %v1260 = vpack.c.b16 %v1224, %v1223
    %v1261 = vpack.c.b16 %v1226, %v1225
    %v1262 = vpack.c.b16 %v1228, %v1227
    %v1263 = vpack.c.b16 %v1230, %v1229
    %v1264 = vpack.c.b16 %v1232, %v1231
    %1297 = vmatprep.subr.bf16.mxu0 0
    %1298 = vmatpush1.bf16.msra.mxu0 %v1233
    %1299 = vmatprep.subr.bf16.mxu0 0
    %1300 = vmatpush1.bf16.msra.mxu0 %v1234
    %1301 = vmatprep.subr.bf16.mxu0 0
    %1302 = vmatpush1.bf16.msra.mxu0 %v1235
    %1303 = vmatprep.subr.bf16.mxu0 0
    %1304 = vmatpush1.bf16.msra.mxu0 %v1236
    %1305 = vmatprep.subr.bf16.mxu0 0
    %1306 = vmatpush1.bf16.msra.mxu0 %v1237
    %1307 = vmatprep.subr.bf16.mxu0 0
    %1308 = vmatpush1.bf16.msra.mxu0 %v1238
    %1309 = vmatprep.subr.bf16.mxu0 0
    %1310 = vmatpush1.bf16.msra.mxu0 %v1239
    %1311 = vmatprep.subr.bf16.mxu0 0
    %1312 = vmatpush1.bf16.msra.mxu0 %v1240
    %1313 = vmatprep.subr.bf16.mxu0 0
    %1314 = vmatpush1.bf16.msra.mxu0 %v1241
    %1315 = vmatprep.subr.bf16.mxu0 0
    %1316 = vmatpush1.bf16.msra.mxu0 %v1242
    %1317 = vmatprep.subr.bf16.mxu0 0
    %1318 = vmatpush1.bf16.msra.mxu0 %v1243
    %1319 = vmatprep.subr.bf16.mxu0 0
    %1320 = vmatpush1.bf16.msra.mxu0 %v1244
    %1321 = vmatprep.subr.bf16.mxu0 0
    %1322 = vmatpush1.bf16.msra.mxu0 %v1245
    %1323 = vmatprep.subr.bf16.mxu0 0
    %1324 = vmatpush1.bf16.msra.mxu0 %v1246
    %1325 = vmatprep.subr.bf16.mxu0 0
    %1326 = vmatpush1.bf16.msra.mxu0 %v1247
    %1327 = vmatprep.subr.bf16.mxu0 0
    %1328 = vmatpush1.bf16.msra.mxu0 %v1248
    %1329 = vmatprep.mubr.bf16.mxu0 %v331
    %1330 = vmatmul.mubr.bf16.gmra.mrb[0].mxu0 %v330
    %v1331 = vpop.f32.mrb[0].mxu0
    %v1332 = vadd.f32 0.0, %v1331
    %v1333 = vpop.f32.mrb[0].mxu0
    %v1334 = vpop.f32.mrb[0].mxu0
    %v1335 = vpop.f32.mrb[0].mxu0
    %1336 = vdwg.mxu0
    %1337 = vmatprep.subr.bf16.mxu0 0
    %1338 = vmatpush1.bf16.msra.mxu0 %v1249
    %1339 = vmatprep.subr.bf16.mxu0 0
    %1340 = vmatpush1.bf16.msra.mxu0 %v1250
    %1341 = vmatprep.subr.bf16.mxu0 0
    %1342 = vmatpush1.bf16.msra.mxu0 %v1251
    %1343 = vmatprep.subr.bf16.mxu0 0
    %1344 = vmatpush1.bf16.msra.mxu0 %v1252
    %1345 = vmatprep.subr.bf16.mxu0 0
    %1346 = vmatpush1.bf16.msra.mxu0 %v1253
    %1347 = vmatprep.subr.bf16.mxu0 0
    %1348 = vmatpush1.bf16.msra.mxu0 %v1254
    %1349 = vmatprep.subr.bf16.mxu0 0
    %1350 = vmatpush1.bf16.msra.mxu0 %v1255
    %1351 = vmatprep.subr.bf16.mxu0 0
    %1352 = vmatpush1.bf16.msra.mxu0 %v1256
    %1353 = vmatprep.subr.bf16.mxu0 0
    %1354 = vmatpush1.bf16.msra.mxu0 %v1257
    %1355 = vmatprep.subr.bf16.mxu0 0
    %1356 = vmatpush1.bf16.msra.mxu0 %v1258
    %1357 = vmatprep.subr.bf16.mxu0 0
    %1358 = vmatpush1.bf16.msra.mxu0 %v1259
    %1359 = vmatprep.subr.bf16.mxu0 0
    %1360 = vmatpush1.bf16.msra.mxu0 %v1260
    %1361 = vmatprep.subr.bf16.mxu0 0
    %1362 = vmatpush1.bf16.msra.mxu0 %v1261
    %1363 = vmatprep.subr.bf16.mxu0 0
    %1364 = vmatpush1.bf16.msra.mxu0 %v1262
    %1365 = vmatprep.subr.bf16.mxu0 0
    %1366 = vmatpush1.bf16.msra.mxu0 %v1263
    %1367 = vmatprep.subr.bf16.mxu0 0
    %1368 = vmatpush1.bf16.msra.mxu0 %v1264
    %1369 = vmatprep.mubr.bf16.mxu0 %v333
    %1370 = vmatmul.mubr.bf16.gmra.mrb[0].mxu0 %v332
    %v1371 = vpop.f32.mrb[0].mxu0
    %v1372 = vadd.f32 %v1332, %v1371
    %v1373 = vpop.f32.mrb[0].mxu0
    %v1374 = vpop.f32.mrb[0].mxu0
    %v1375 = vpop.f32.mrb[0].mxu0
    %1376 = vdwg.mxu0
    %v1377 = vpack.c.bf16 %v1372, %v1372
    %v1378 = vpack.c.bf16 %v687, %v686
    %vm1379 = vcmask 64512
    %v1381 = vsel %vm1379, %v1378, 0
    %vm1383 = vcmask 1043456
    %v1385 = vsel %vm1383, %v1377, 0
    %1387 = vmatprep.subr.bf16.mxu0 0
    %1388 = vmatpush1.bf16.msra.mxu0 %v1385
    %1389 = vmatprep.subr.bf16.mxu0 0
    %1390 = vmatpush1.bf16.msra.mxu0 0
    %1391 = vmatprep.subr.bf16.mxu0 0
    %1392 = vmatpush1.bf16.msra.mxu0 0
    %1393 = vmatprep.subr.bf16.mxu0 0
    %1394 = vmatpush1.bf16.msra.mxu0 0
    %1395 = vmatprep.subr.bf16.mxu0 0
    %1396 = vmatpush1.bf16.msra.mxu0 0
    %1397 = vmatprep.subr.bf16.mxu0 0
    %1398 = vmatpush1.bf16.msra.mxu0 0
    %1399 = vmatprep.subr.bf16.mxu0 0
    %1400 = vmatpush1.bf16.msra.mxu0 0
    %1401 = vmatprep.subr.bf16.mxu0 0
    %1402 = vmatpush1.bf16.msra.mxu0 0
    %1403 = vmatprep.subr.bf16.mxu0 0
    %1404 = vmatpush1.bf16.msra.mxu0 0
    %1405 = vmatprep.subr.bf16.mxu0 0
    %1406 = vmatpush1.bf16.msra.mxu0 0
    %1407 = vmatprep.subr.bf16.mxu0 0
    %1408 = vmatpush1.bf16.msra.mxu0 0
    %1409 = vmatprep.subr.bf16.mxu0 0
    %1410 = vmatpush1.bf16.msra.mxu0 0
    %1411 = vmatprep.subr.bf16.mxu0 0
    %1412 = vmatpush1.bf16.msra.mxu0 0
    %1413 = vmatprep.subr.bf16.mxu0 0
    %1414 = vmatpush1.bf16.msra.mxu0 0
    %1415 = vmatprep.subr.bf16.mxu0 0
    %1416 = vmatpush1.bf16.msra.mxu0 0
    %1417 = vmatprep.subr.bf16.mxu0 0
    %1418 = vmatpush1.bf16.msra.mxu0 0
    %1419 = vmatprep.mubr.bf16.mxu0 0
    %1420 = vmatmul.mubr.bf16.gmra.mrb[0].mxu0 %v1381
    %v1421 = vpop.f32.mrb[0].mxu0
    %v1422 = vadd.f32 0.0, %v1421
    %v1423 = vpop.f32.mrb[0].mxu0
    %v1424 = vpop.f32.mrb[0].mxu0
    %v1425 = vadd.f32 0.0, %v1424
    %v1426 = vpop.f32.mrb[0].mxu0
    %1427 = vdwg.mxu0
    %v1429 = vsel %vm1379, %v1039, 0
    %v1432 = vsel %vm1383, %v1038, 0
    %1434 = vmatprep.subr.bf16.mxu0 0
    %1435 = vmatpush1.bf16.msra.mxu0 %v1432
    %1436 = vmatprep.subr.bf16.mxu0 0
    %1437 = vmatpush1.bf16.msra.mxu0 0
    %1438 = vmatprep.subr.bf16.mxu0 0
    %1439 = vmatpush1.bf16.msra.mxu0 0
    %1440 = vmatprep.subr.bf16.mxu0 0
    %1441 = vmatpush1.bf16.msra.mxu0 0
    %1442 = vmatprep.subr.bf16.mxu0 0
    %1443 = vmatpush1.bf16.msra.mxu0 0
    %1444 = vmatprep.subr.bf16.mxu0 0
    %1445 = vmatpush1.bf16.msra.mxu0 0
    %1446 = vmatprep.subr.bf16.mxu0 0
    %1447 = vmatpush1.bf16.msra.mxu0 0
    %1448 = vmatprep.subr.bf16.mxu0 0
    %1449 = vmatpush1.bf16.msra.mxu0 0
    %1450 = vmatprep.subr.bf16.mxu0 0
    %1451 = vmatpush1.bf16.msra.mxu0 0
    %1452 = vmatprep.subr.bf16.mxu0 0
    %1453 = vmatpush1.bf16.msra.mxu0 0
    %1454 = vmatprep.subr.bf16.mxu0 0
    %1455 = vmatpush1.bf16.msra.mxu0 0
    %1456 = vmatprep.subr.bf16.mxu0 0
    %1457 = vmatpush1.bf16.msra.mxu0 0
    %1458 = vmatprep.subr.bf16.mxu0 0
    %1459 = vmatpush1.bf16.msra.mxu0 0
    %1460 = vmatprep.subr.bf16.mxu0 0
    %1461 = vmatpush1.bf16.msra.mxu0 0
    %1462 = vmatprep.subr.bf16.mxu0 0
    %1463 = vmatpush1.bf16.msra.mxu0 0
    %1464 = vmatprep.subr.bf16.mxu0 0
    %1465 = vmatpush1.bf16.msra.mxu0 0
    %1466 = vmatprep.mubr.bf16.mxu0 0
    %1467 = vmatmul.mubr.bf16.gmra.mrb[0].mxu0 %v1429
    %v1468 = vpop.f32.mrb[0].mxu0
    %v1469 = vadd.f32 %v1422, %v1468
    %v1470 = vpop.f32.mrb[0].mxu0
    %v1471 = vpop.f32.mrb[0].mxu0
    %v1472 = vadd.f32 %v1425, %v1471
    %v1473 = vpop.f32.mrb[0].mxu0
    %1474 = vdwg.mxu0
    %s1475 = scalar_lea.vmem %s4, 512
    %v1476 = vld [vmem:[%s1475] sm:$0xf]
    %v1477 = vld [vmem:[%s1475 + $0x4] sm:$0xf]
    %v1478 = vld [vmem:[%s1475 + $0x8] sm:$0xf]
    %v1479 = vld [vmem:[%s1475 + $0xc] sm:$0xf]
    %v1480 = vld [vmem:[%s1475 + $0x10] sm:$0xf]
    %v1481 = vld [vmem:[%s1475 + $0x14] sm:$0xf]
    %v1482 = vld [vmem:[%s1475 + $0x18] sm:$0xf]
    %v1483 = vld [vmem:[%s1475 + $0x1c] sm:$0xf]
    %v1484 = vld [vmem:[%s1475 + $0x20] sm:$0xf]
    %v1485 = vld [vmem:[%s1475 + $0x24] sm:$0xf]
    %v1486 = vld [vmem:[%s1475 + $0x28] sm:$0xf]
    %v1487 = vld [vmem:[%s1475 + $0x2c] sm:$0xf]
    %v1488 = vld [vmem:[%s1475 + $0x30] sm:$0xf]
    %v1489 = vld [vmem:[%s1475 + $0x34] sm:$0xf]
    %v1490 = vld [vmem:[%s1475 + $0x38] sm:$0xf]
    %v1491 = vld [vmem:[%s1475 + $0x3c] sm:$0xf]
    %v1492 = vld [vmem:[%s1475 + $0x40] sm:$0xf]
    %v1493 = vld [vmem:[%s1475 + $0x44] sm:$0xf]
    %v1494 = vld [vmem:[%s1475 + $0x48] sm:$0xf]
    %v1495 = vld [vmem:[%s1475 + $0x4c] sm:$0xf]
    %v1496 = vld [vmem:[%s1475 + $0x50] sm:$0xf]
    %v1497 = vld [vmem:[%s1475 + $0x54] sm:$0xf]
    %v1498 = vld [vmem:[%s1475 + $0x58] sm:$0xf]
    %v1499 = vld [vmem:[%s1475 + $0x5c] sm:$0xf]
    %v1500 = vld [vmem:[%s1475 + $0x60] sm:$0xf]
    %v1501 = vld [vmem:[%s1475 + $0x64] sm:$0xf]
    %v1502 = vld [vmem:[%s1475 + $0x68] sm:$0xf]
    %v1503 = vld [vmem:[%s1475 + $0x6c] sm:$0xf]
    %v1504 = vld [vmem:[%s1475 + $0x70] sm:$0xf]
    %v1505 = vld [vmem:[%s1475 + $0x74] sm:$0xf]
    %v1506 = vld [vmem:[%s1475 + $0x78] sm:$0xf]
    %v1507 = vld [vmem:[%s1475 + $0x7c] sm:$0xf]
    %v1508 = vld [vmem:[%s1475 + $0x80] sm:$0xf]
    %v1509 = vld [vmem:[%s1475 + $0x84] sm:$0xf]
    %v1510 = vld [vmem:[%s1475 + $0x88] sm:$0xf]
    %v1511 = vld [vmem:[%s1475 + $0x8c] sm:$0xf]
    %v1512 = vld [vmem:[%s1475 + $0x90] sm:$0xf]
    %v1513 = vld [vmem:[%s1475 + $0x94] sm:$0xf]
    %v1514 = vld [vmem:[%s1475 + $0x98] sm:$0xf]
    %v1515 = vld [vmem:[%s1475 + $0x9c] sm:$0xf]
    %v1516 = vld [vmem:[%s1475 + $0xa0] sm:$0xf]
    %v1517 = vld [vmem:[%s1475 + $0xa4] sm:$0xf]
    %v1518 = vld [vmem:[%s1475 + $0xa8] sm:$0xf]
    %v1519 = vld [vmem:[%s1475 + $0xac] sm:$0xf]
    %v1520 = vld [vmem:[%s1475 + $0xb0] sm:$0xf]
    %v1521 = vld [vmem:[%s1475 + $0xb4] sm:$0xf]
    %v1522 = vld [vmem:[%s1475 + $0xb8] sm:$0xf]
    %v1523 = vld [vmem:[%s1475 + $0xbc] sm:$0xf]
    %v1524 = vld [vmem:[%s1475 + $0xc0] sm:$0xf]
    %v1525 = vld [vmem:[%s1475 + $0xc4] sm:$0xf]
    %v1526 = vld [vmem:[%s1475 + $0xc8] sm:$0xf]
    %v1527 = vld [vmem:[%s1475 + $0xcc] sm:$0xf]
    %v1528 = vld [vmem:[%s1475 + $0xd0] sm:$0xf]
    %v1529 = vld [vmem:[%s1475 + $0xd4] sm:$0xf]
    %v1530 = vld [vmem:[%s1475 + $0xd8] sm:$0xf]
    %v1531 = vld [vmem:[%s1475 + $0xdc] sm:$0xf]
    %v1532 = vld [vmem:[%s1475 + $0xe0] sm:$0xf]
    %v1533 = vld [vmem:[%s1475 + $0xe4] sm:$0xf]
    %v1534 = vld [vmem:[%s1475 + $0xe8] sm:$0xf]
    %v1535 = vld [vmem:[%s1475 + $0xec] sm:$0xf]
    %v1536 = vld [vmem:[%s1475 + $0xf0] sm:$0xf]
    %v1537 = vld [vmem:[%s1475 + $0xf4] sm:$0xf]
    %v1538 = vld [vmem:[%s1475 + $0xf8] sm:$0xf]
    %v1539 = vld [vmem:[%s1475 + $0xfc] sm:$0xf]
    %v1604 = vunpack.c.l.b16 %v1476
    %v1605 = vunpack.c.l.b16 %v1477
    %v1606 = vunpack.c.l.b16 %v1478
    %v1607 = vunpack.c.l.b16 %v1479
    %v1608 = vunpack.c.l.b16 %v1480
    %v1609 = vunpack.c.l.b16 %v1481
    %v1610 = vunpack.c.l.b16 %v1482
    %v1611 = vunpack.c.l.b16 %v1483
    %v1612 = vunpack.c.l.b16 %v1484
    %v1613 = vunpack.c.l.b16 %v1485
    %v1614 = vunpack.c.l.b16 %v1486
    %v1615 = vunpack.c.l.b16 %v1487
    %v1616 = vunpack.c.l.b16 %v1488
    %v1617 = vunpack.c.l.b16 %v1489
    %v1618 = vunpack.c.l.b16 %v1490
    %v1619 = vunpack.c.l.b16 %v1491
    %v1620 = vunpack.c.l.b16 %v1492
    %v1621 = vunpack.c.l.b16 %v1493
    %v1622 = vunpack.c.l.b16 %v1494
    %v1623 = vunpack.c.l.b16 %v1495
    %v1624 = vunpack.c.l.b16 %v1496
    %v1625 = vunpack.c.l.b16 %v1497
    %v1626 = vunpack.c.l.b16 %v1498
    %v1627 = vunpack.c.l.b16 %v1499
    %v1628 = vunpack.c.l.b16 %v1500
    %v1629 = vunpack.c.l.b16 %v1501
    %v1630 = vunpack.c.l.b16 %v1502
    %v1631 = vunpack.c.l.b16 %v1503
    %v1632 = vunpack.c.l.b16 %v1504
    %v1633 = vunpack.c.l.b16 %v1505
    %v1634 = vunpack.c.l.b16 %v1506
    %v1635 = vunpack.c.l.b16 %v1507
    %v1636 = vunpack.c.l.b16 %v1508
    %v1637 = vunpack.c.l.b16 %v1509
    %v1638 = vunpack.c.l.b16 %v1510
    %v1639 = vunpack.c.l.b16 %v1511
    %v1640 = vunpack.c.l.b16 %v1512
    %v1641 = vunpack.c.l.b16 %v1513
    %v1642 = vunpack.c.l.b16 %v1514
    %v1643 = vunpack.c.l.b16 %v1515
    %v1644 = vunpack.c.l.b16 %v1516
    %v1645 = vunpack.c.l.b16 %v1517
    %v1646 = vunpack.c.l.b16 %v1518
    %v1647 = vunpack.c.l.b16 %v1519
    %v1648 = vunpack.c.l.b16 %v1520
    %v1649 = vunpack.c.l.b16 %v1521
    %v1650 = vunpack.c.l.b16 %v1522
    %v1651 = vunpack.c.l.b16 %v1523
    %v1652 = vunpack.c.l.b16 %v1524
    %v1653 = vunpack.c.l.b16 %v1525
    %v1654 = vunpack.c.l.b16 %v1526
    %v1655 = vunpack.c.l.b16 %v1527
    %v1656 = vunpack.c.l.b16 %v1528
    %v1657 = vunpack.c.l.b16 %v1529
    %v1658 = vunpack.c.l.b16 %v1530
    %v1659 = vunpack.c.l.b16 %v1531
    %v1660 = vunpack.c.l.b16 %v1532
    %v1661 = vunpack.c.l.b16 %v1533
    %v1662 = vunpack.c.l.b16 %v1534
    %v1663 = vunpack.c.l.b16 %v1535
    %v1664 = vunpack.c.l.b16 %v1536
    %v1665 = vunpack.c.l.b16 %v1537
    %v1666 = vunpack.c.l.b16 %v1538
    %v1667 = vunpack.c.l.b16 %v1539
    %v1668 = vpack.c.b16 %v1605, %v1604
    %v1669 = vpack.c.b16 %v1607, %v1606
    %v1670 = vpack.c.b16 %v1609, %v1608
    %v1671 = vpack.c.b16 %v1611, %v1610
    %v1672 = vpack.c.b16 %v1613, %v1612
    %v1673 = vpack.c.b16 %v1615, %v1614
    %v1674 = vpack.c.b16 %v1617, %v1616
    %v1675 = vpack.c.b16 %v1619, %v1618
    %v1676 = vpack.c.b16 %v1621, %v1620
    %v1677 = vpack.c.b16 %v1623, %v1622
    %v1678 = vpack.c.b16 %v1625, %v1624
    %v1679 = vpack.c.b16 %v1627, %v1626
    %v1680 = vpack.c.b16 %v1629, %v1628
    %v1681 = vpack.c.b16 %v1631, %v1630
    %v1682 = vpack.c.b16 %v1633, %v1632
    %v1683 = vpack.c.b16 %v1635, %v1634
    %v1684 = vpack.c.b16 %v1637, %v1636
    %v1685 = vpack.c.b16 %v1639, %v1638
    %v1686 = vpack.c.b16 %v1641, %v1640
    %v1687 = vpack.c.b16 %v1643, %v1642
    %v1688 = vpack.c.b16 %v1645, %v1644
    %v1689 = vpack.c.b16 %v1647, %v1646
    %v1690 = vpack.c.b16 %v1649, %v1648
    %v1691 = vpack.c.b16 %v1651, %v1650
    %v1692 = vpack.c.b16 %v1653, %v1652
    %v1693 = vpack.c.b16 %v1655, %v1654
    %v1694 = vpack.c.b16 %v1657, %v1656
    %v1695 = vpack.c.b16 %v1659, %v1658
    %v1696 = vpack.c.b16 %v1661, %v1660
    %v1697 = vpack.c.b16 %v1663, %v1662
    %v1698 = vpack.c.b16 %v1665, %v1664
    %v1699 = vpack.c.b16 %v1667, %v1666
    %1732 = vmatprep.subr.bf16.mxu0 0
    %1733 = vmatpush1.bf16.msra.mxu0 %v1668
    %1734 = vmatprep.subr.bf16.mxu0 0
    %1735 = vmatpush1.bf16.msra.mxu0 %v1669
    %1736 = vmatprep.subr.bf16.mxu0 0
    %1737 = vmatpush1.bf16.msra.mxu0 %v1670
    %1738 = vmatprep.subr.bf16.mxu0 0
    %1739 = vmatpush1.bf16.msra.mxu0 %v1671
    %1740 = vmatprep.subr.bf16.mxu0 0
    %1741 = vmatpush1.bf16.msra.mxu0 %v1672
    %1742 = vmatprep.subr.bf16.mxu0 0
    %1743 = vmatpush1.bf16.msra.mxu0 %v1673
    %1744 = vmatprep.subr.bf16.mxu0 0
    %1745 = vmatpush1.bf16.msra.mxu0 %v1674
    %1746 = vmatprep.subr.bf16.mxu0 0
    %1747 = vmatpush1.bf16.msra.mxu0 %v1675
    %1748 = vmatprep.subr.bf16.mxu0 0
    %1749 = vmatpush1.bf16.msra.mxu0 %v1676
    %1750 = vmatprep.subr.bf16.mxu0 0
    %1751 = vmatpush1.bf16.msra.mxu0 %v1677
    %1752 = vmatprep.subr.bf16.mxu0 0
    %1753 = vmatpush1.bf16.msra.mxu0 %v1678
    %1754 = vmatprep.subr.bf16.mxu0 0
    %1755 = vmatpush1.bf16.msra.mxu0 %v1679
    %1756 = vmatprep.subr.bf16.mxu0 0
    %1757 = vmatpush1.bf16.msra.mxu0 %v1680
    %1758 = vmatprep.subr.bf16.mxu0 0
    %1759 = vmatpush1.bf16.msra.mxu0 %v1681
    %1760 = vmatprep.subr.bf16.mxu0 0
    %1761 = vmatpush1.bf16.msra.mxu0 %v1682
    %1762 = vmatprep.subr.bf16.mxu0 0
    %1763 = vmatpush1.bf16.msra.mxu0 %v1683
    %1764 = vmatprep.mubr.bf16.mxu0 %v331
    %1765 = vmatmul.mubr.bf16.gmra.mrb[0].mxu0 %v330
    %v1766 = vpop.f32.mrb[0].mxu0
    %v1767 = vadd.f32 0.0, %v1766
    %v1768 = vpop.f32.mrb[0].mxu0
    %v1769 = vpop.f32.mrb[0].mxu0
    %v1770 = vpop.f32.mrb[0].mxu0
    %1771 = vdwg.mxu0
    %1772 = vmatprep.subr.bf16.mxu0 0
    %1773 = vmatpush1.bf16.msra.mxu0 %v1684
    %1774 = vmatprep.subr.bf16.mxu0 0
    %1775 = vmatpush1.bf16.msra.mxu0 %v1685
    %1776 = vmatprep.subr.bf16.mxu0 0
    %1777 = vmatpush1.bf16.msra.mxu0 %v1686
    %1778 = vmatprep.subr.bf16.mxu0 0
    %1779 = vmatpush1.bf16.msra.mxu0 %v1687
    %1780 = vmatprep.subr.bf16.mxu0 0
    %1781 = vmatpush1.bf16.msra.mxu0 %v1688
    %1782 = vmatprep.subr.bf16.mxu0 0
    %1783 = vmatpush1.bf16.msra.mxu0 %v1689
    %1784 = vmatprep.subr.bf16.mxu0 0
    %1785 = vmatpush1.bf16.msra.mxu0 %v1690
    %1786 = vmatprep.subr.bf16.mxu0 0
    %1787 = vmatpush1.bf16.msra.mxu0 %v1691
    %1788 = vmatprep.subr.bf16.mxu0 0
    %1789 = vmatpush1.bf16.msra.mxu0 %v1692
    %1790 = vmatprep.subr.bf16.mxu0 0
    %1791 = vmatpush1.bf16.msra.mxu0 %v1693
    %1792 = vmatprep.subr.bf16.mxu0 0
    %1793 = vmatpush1.bf16.msra.mxu0 %v1694
    %1794 = vmatprep.subr.bf16.mxu0 0
    %1795 = vmatpush1.bf16.msra.mxu0 %v1695
    %1796 = vmatprep.subr.bf16.mxu0 0
    %1797 = vmatpush1.bf16.msra.mxu0 %v1696
    %1798 = vmatprep.subr.bf16.mxu0 0
    %1799 = vmatpush1.bf16.msra.mxu0 %v1697
    %1800 = vmatprep.subr.bf16.mxu0 0
    %1801 = vmatpush1.bf16.msra.mxu0 %v1698
    %1802 = vmatprep.subr.bf16.mxu0 0
    %1803 = vmatpush1.bf16.msra.mxu0 %v1699
    %1804 = vmatprep.mubr.bf16.mxu0 %v333
    %1805 = vmatmul.mubr.bf16.gmra.mrb[0].mxu0 %v332
    %v1806 = vpop.f32.mrb[0].mxu0
    %v1807 = vadd.f32 %v1767, %v1806
    %v1808 = vpop.f32.mrb[0].mxu0
    %v1809 = vpop.f32.mrb[0].mxu0
    %v1810 = vpop.f32.mrb[0].mxu0
    %1811 = vdwg.mxu0
    %v1812 = vpack.c.bf16 %v1807, %v1807
    %v1813 = vpack.c.bf16 %v689, %v688
    %v1815 = vsel %vm1379, %v1813, 0
    %v1818 = vsel %vm1383, %v1812, 0
    %1820 = vmatprep.subr.bf16.mxu0 0
    %1821 = vmatpush1.bf16.msra.mxu0 %v1818
    %1822 = vmatprep.subr.bf16.mxu0 0
    %1823 = vmatpush1.bf16.msra.mxu0 0
    %1824 = vmatprep.subr.bf16.mxu0 0
    %1825 = vmatpush1.bf16.msra.mxu0 0
    %1826 = vmatprep.subr.bf16.mxu0 0
    %1827 = vmatpush1.bf16.msra.mxu0 0
    %1828 = vmatprep.subr.bf16.mxu0 0
    %1829 = vmatpush1.bf16.msra.mxu0 0
    %1830 = vmatprep.subr.bf16.mxu0 0
    %1831 = vmatpush1.bf16.msra.mxu0 0
    %1832 = vmatprep.subr.bf16.mxu0 0
    %1833 = vmatpush1.bf16.msra.mxu0 0
    %1834 = vmatprep.subr.bf16.mxu0 0
    %1835 = vmatpush1.bf16.msra.mxu0 0
    %1836 = vmatprep.subr.bf16.mxu0 0
    %1837 = vmatpush1.bf16.msra.mxu0 0
    %1838 = vmatprep.subr.bf16.mxu0 0
    %1839 = vmatpush1.bf16.msra.mxu0 0
    %1840 = vmatprep.subr.bf16.mxu0 0
    %1841 = vmatpush1.bf16.msra.mxu0 0
    %1842 = vmatprep.subr.bf16.mxu0 0
    %1843 = vmatpush1.bf16.msra.mxu0 0
    %1844 = vmatprep.subr.bf16.mxu0 0
    %1845 = vmatpush1.bf16.msra.mxu0 0
    %1846 = vmatprep.subr.bf16.mxu0 0
    %1847 = vmatpush1.bf16.msra.mxu0 0
    %1848 = vmatprep.subr.bf16.mxu0 0
    %1849 = vmatpush1.bf16.msra.mxu0 0
    %1850 = vmatprep.subr.bf16.mxu0 0
    %1851 = vmatpush1.bf16.msra.mxu0 0
    %1852 = vmatprep.mubr.bf16.mxu0 0
    %1853 = vmatmul.mubr.bf16.gmra.mrb[0].mxu0 %v1815
    %v1854 = vpop.f32.mrb[0].mxu0
    %v1855 = vadd.f32 0.0, %v1854
    %v1856 = vpop.f32.mrb[0].mxu0
    %v1857 = vpop.f32.mrb[0].mxu0
    %v1858 = vadd.f32 0.0, %v1857
    %v1859 = vpop.f32.mrb[0].mxu0
    %1860 = vdwg.mxu0
    %v1861 = vadd.f32 %v1469, %v1855
    %v1862 = vadd.f32 %v1472, %v1858
    %s1863 = scalar_lea.vmem %s4, 768
    %v1864 = vld [vmem:[%s1863] sm:$0xf]
    %v1865 = vld [vmem:[%s1863 + $0x4] sm:$0xf]
    %v1866 = vld [vmem:[%s1863 + $0x8] sm:$0xf]
    %v1867 = vld [vmem:[%s1863 + $0xc] sm:$0xf]
    %v1868 = vld [vmem:[%s1863 + $0x10] sm:$0xf]
    %v1869 = vld [vmem:[%s1863 + $0x14] sm:$0xf]
    %v1870 = vld [vmem:[%s1863 + $0x18] sm:$0xf]
    %v1871 = vld [vmem:[%s1863 + $0x1c] sm:$0xf]
    %v1872 = vld [vmem:[%s1863 + $0x20] sm:$0xf]
    %v1873 = vld [vmem:[%s1863 + $0x24] sm:$0xf]
    %v1874 = vld [vmem:[%s1863 + $0x28] sm:$0xf]
    %v1875 = vld [vmem:[%s1863 + $0x2c] sm:$0xf]
    %v1876 = vld [vmem:[%s1863 + $0x30] sm:$0xf]
    %v1877 = vld [vmem:[%s1863 + $0x34] sm:$0xf]
    %v1878 = vld [vmem:[%s1863 + $0x38] sm:$0xf]
    %v1879 = vld [vmem:[%s1863 + $0x3c] sm:$0xf]
    %v1880 = vld [vmem:[%s1863 + $0x40] sm:$0xf]
    %v1881 = vld [vmem:[%s1863 + $0x44] sm:$0xf]
    %v1882 = vld [vmem:[%s1863 + $0x48] sm:$0xf]
    %v1883 = vld [vmem:[%s1863 + $0x4c] sm:$0xf]
    %v1884 = vld [vmem:[%s1863 + $0x50] sm:$0xf]
    %v1885 = vld [vmem:[%s1863 + $0x54] sm:$0xf]
    %v1886 = vld [vmem:[%s1863 + $0x58] sm:$0xf]
    %v1887 = vld [vmem:[%s1863 + $0x5c] sm:$0xf]
    %v1888 = vld [vmem:[%s1863 + $0x60] sm:$0xf]
    %v1889 = vld [vmem:[%s1863 + $0x64] sm:$0xf]
    %v1890 = vld [vmem:[%s1863 + $0x68] sm:$0xf]
    %v1891 = vld [vmem:[%s1863 + $0x6c] sm:$0xf]
    %v1892 = vld [vmem:[%s1863 + $0x70] sm:$0xf]
    %v1893 = vld [vmem:[%s1863 + $0x74] sm:$0xf]
    %v1894 = vld [vmem:[%s1863 + $0x78] sm:$0xf]
    %v1895 = vld [vmem:[%s1863 + $0x7c] sm:$0xf]
    %v1896 = vld [vmem:[%s1863 + $0x80] sm:$0xf]
    %v1897 = vld [vmem:[%s1863 + $0x84] sm:$0xf]
    %v1898 = vld [vmem:[%s1863 + $0x88] sm:$0xf]
    %v1899 = vld [vmem:[%s1863 + $0x8c] sm:$0xf]
    %v1900 = vld [vmem:[%s1863 + $0x90] sm:$0xf]
    %v1901 = vld [vmem:[%s1863 + $0x94] sm:$0xf]
    %v1902 = vld [vmem:[%s1863 + $0x98] sm:$0xf]
    %v1903 = vld [vmem:[%s1863 + $0x9c] sm:$0xf]
    %v1904 = vld [vmem:[%s1863 + $0xa0] sm:$0xf]
    %v1905 = vld [vmem:[%s1863 + $0xa4] sm:$0xf]
    %v1906 = vld [vmem:[%s1863 + $0xa8] sm:$0xf]
    %v1907 = vld [vmem:[%s1863 + $0xac] sm:$0xf]
    %v1908 = vld [vmem:[%s1863 + $0xb0] sm:$0xf]
    %v1909 = vld [vmem:[%s1863 + $0xb4] sm:$0xf]
    %v1910 = vld [vmem:[%s1863 + $0xb8] sm:$0xf]
    %v1911 = vld [vmem:[%s1863 + $0xbc] sm:$0xf]
    %v1912 = vld [vmem:[%s1863 + $0xc0] sm:$0xf]
    %v1913 = vld [vmem:[%s1863 + $0xc4] sm:$0xf]
    %v1914 = vld [vmem:[%s1863 + $0xc8] sm:$0xf]
    %v1915 = vld [vmem:[%s1863 + $0xcc] sm:$0xf]
    %v1916 = vld [vmem:[%s1863 + $0xd0] sm:$0xf]
    %v1917 = vld [vmem:[%s1863 + $0xd4] sm:$0xf]
    %v1918 = vld [vmem:[%s1863 + $0xd8] sm:$0xf]
    %v1919 = vld [vmem:[%s1863 + $0xdc] sm:$0xf]
    %v1920 = vld [vmem:[%s1863 + $0xe0] sm:$0xf]
    %v1921 = vld [vmem:[%s1863 + $0xe4] sm:$0xf]
    %v1922 = vld [vmem:[%s1863 + $0xe8] sm:$0xf]
    %v1923 = vld [vmem:[%s1863 + $0xec] sm:$0xf]
    %v1924 = vld [vmem:[%s1863 + $0xf0] sm:$0xf]
    %v1925 = vld [vmem:[%s1863 + $0xf4] sm:$0xf]
    %v1926 = vld [vmem:[%s1863 + $0xf8] sm:$0xf]
    %v1927 = vld [vmem:[%s1863 + $0xfc] sm:$0xf]
    %v1992 = vunpack.c.l.b16 %v1864
    %v1993 = vunpack.c.l.b16 %v1865
    %v1994 = vunpack.c.l.b16 %v1866
    %v1995 = vunpack.c.l.b16 %v1867
    %v1996 = vunpack.c.l.b16 %v1868
    %v1997 = vunpack.c.l.b16 %v1869
    %v1998 = vunpack.c.l.b16 %v1870
    %v1999 = vunpack.c.l.b16 %v1871
    %v2000 = vunpack.c.l.b16 %v1872
    %v2001 = vunpack.c.l.b16 %v1873
    %v2002 = vunpack.c.l.b16 %v1874
    %v2003 = vunpack.c.l.b16 %v1875
    %v2004 = vunpack.c.l.b16 %v1876
    %v2005 = vunpack.c.l.b16 %v1877
    %v2006 = vunpack.c.l.b16 %v1878
    %v2007 = vunpack.c.l.b16 %v1879
    %v2008 = vunpack.c.l.b16 %v1880
    %v2009 = vunpack.c.l.b16 %v1881
    %v2010 = vunpack.c.l.b16 %v1882
    %v2011 = vunpack.c.l.b16 %v1883
    %v2012 = vunpack.c.l.b16 %v1884
    %v2013 = vunpack.c.l.b16 %v1885
    %v2014 = vunpack.c.l.b16 %v1886
    %v2015 = vunpack.c.l.b16 %v1887
    %v2016 = vunpack.c.l.b16 %v1888
    %v2017 = vunpack.c.l.b16 %v1889
    %v2018 = vunpack.c.l.b16 %v1890
    %v2019 = vunpack.c.l.b16 %v1891
    %v2020 = vunpack.c.l.b16 %v1892
    %v2021 = vunpack.c.l.b16 %v1893
    %v2022 = vunpack.c.l.b16 %v1894
    %v2023 = vunpack.c.l.b16 %v1895
    %v2024 = vunpack.c.l.b16 %v1896
    %v2025 = vunpack.c.l.b16 %v1897
    %v2026 = vunpack.c.l.b16 %v1898
    %v2027 = vunpack.c.l.b16 %v1899
    %v2028 = vunpack.c.l.b16 %v1900
    %v2029 = vunpack.c.l.b16 %v1901
    %v2030 = vunpack.c.l.b16 %v1902
    %v2031 = vunpack.c.l.b16 %v1903
    %v2032 = vunpack.c.l.b16 %v1904
    %v2033 = vunpack.c.l.b16 %v1905
    %v2034 = vunpack.c.l.b16 %v1906
    %v2035 = vunpack.c.l.b16 %v1907
    %v2036 = vunpack.c.l.b16 %v1908
    %v2037 = vunpack.c.l.b16 %v1909
    %v2038 = vunpack.c.l.b16 %v1910
    %v2039 = vunpack.c.l.b16 %v1911
    %v2040 = vunpack.c.l.b16 %v1912
    %v2041 = vunpack.c.l.b16 %v1913
    %v2042 = vunpack.c.l.b16 %v1914
    %v2043 = vunpack.c.l.b16 %v1915
    %v2044 = vunpack.c.l.b16 %v1916
    %v2045 = vunpack.c.l.b16 %v1917
    %v2046 = vunpack.c.l.b16 %v1918
    %v2047 = vunpack.c.l.b16 %v1919
    %v2048 = vunpack.c.l.b16 %v1920
    %v2049 = vunpack.c.l.b16 %v1921
    %v2050 = vunpack.c.l.b16 %v1922
    %v2051 = vunpack.c.l.b16 %v1923
    %v2052 = vunpack.c.l.b16 %v1924
    %v2053 = vunpack.c.l.b16 %v1925
    %v2054 = vunpack.c.l.b16 %v1926
    %v2055 = vunpack.c.l.b16 %v1927
    %v2056 = vpack.c.b16 %v1993, %v1992
    %v2057 = vpack.c.b16 %v1995, %v1994
    %v2058 = vpack.c.b16 %v1997, %v1996
    %v2059 = vpack.c.b16 %v1999, %v1998
    %v2060 = vpack.c.b16 %v2001, %v2000
    %v2061 = vpack.c.b16 %v2003, %v2002
    %v2062 = vpack.c.b16 %v2005, %v2004
    %v2063 = vpack.c.b16 %v2007, %v2006
    %v2064 = vpack.c.b16 %v2009, %v2008
    %v2065 = vpack.c.b16 %v2011, %v2010
    %v2066 = vpack.c.b16 %v2013, %v2012
    %v2067 = vpack.c.b16 %v2015, %v2014
    %v2068 = vpack.c.b16 %v2017, %v2016
    %v2069 = vpack.c.b16 %v2019, %v2018
    %v2070 = vpack.c.b16 %v2021, %v2020
    %v2071 = vpack.c.b16 %v2023, %v2022
    %v2072 = vpack.c.b16 %v2025, %v2024
    %v2073 = vpack.c.b16 %v2027, %v2026
    %v2074 = vpack.c.b16 %v2029, %v2028
    %v2075 = vpack.c.b16 %v2031, %v2030
    %v2076 = vpack.c.b16 %v2033, %v2032
    %v2077 = vpack.c.b16 %v2035, %v2034
    %v2078 = vpack.c.b16 %v2037, %v2036
    %v2079 = vpack.c.b16 %v2039, %v2038
    %v2080 = vpack.c.b16 %v2041, %v2040
    %v2081 = vpack.c.b16 %v2043, %v2042
    %v2082 = vpack.c.b16 %v2045, %v2044
    %v2083 = vpack.c.b16 %v2047, %v2046
    %v2084 = vpack.c.b16 %v2049, %v2048
    %v2085 = vpack.c.b16 %v2051, %v2050
    %v2086 = vpack.c.b16 %v2053, %v2052
    %v2087 = vpack.c.b16 %v2055, %v2054
    %2120 = vmatprep.subr.bf16.mxu0 0
    %2121 = vmatpush1.bf16.msra.mxu0 %v2056
    %2122 = vmatprep.subr.bf16.mxu0 0
    %2123 = vmatpush1.bf16.msra.mxu0 %v2057
    %2124 = vmatprep.subr.bf16.mxu0 0
    %2125 = vmatpush1.bf16.msra.mxu0 %v2058
    %2126 = vmatprep.subr.bf16.mxu0 0
    %2127 = vmatpush1.bf16.msra.mxu0 %v2059
    %2128 = vmatprep.subr.bf16.mxu0 0
    %2129 = vmatpush1.bf16.msra.mxu0 %v2060
    %2130 = vmatprep.subr.bf16.mxu0 0
    %2131 = vmatpush1.bf16.msra.mxu0 %v2061
    %2132 = vmatprep.subr.bf16.mxu0 0
    %2133 = vmatpush1.bf16.msra.mxu0 %v2062
    %2134 = vmatprep.subr.bf16.mxu0 0
    %2135 = vmatpush1.bf16.msra.mxu0 %v2063
    %2136 = vmatprep.subr.bf16.mxu0 0
    %2137 = vmatpush1.bf16.msra.mxu0 %v2064
    %2138 = vmatprep.subr.bf16.mxu0 0
    %2139 = vmatpush1.bf16.msra.mxu0 %v2065
    %2140 = vmatprep.subr.bf16.mxu0 0
    %2141 = vmatpush1.bf16.msra.mxu0 %v2066
    %2142 = vmatprep.subr.bf16.mxu0 0
    %2143 = vmatpush1.bf16.msra.mxu0 %v2067
    %2144 = vmatprep.subr.bf16.mxu0 0
    %2145 = vmatpush1.bf16.msra.mxu0 %v2068
    %2146 = vmatprep.subr.bf16.mxu0 0
    %2147 = vmatpush1.bf16.msra.mxu0 %v2069
    %2148 = vmatprep.subr.bf16.mxu0 0
    %2149 = vmatpush1.bf16.msra.mxu0 %v2070
    %2150 = vmatprep.subr.bf16.mxu0 0
    %2151 = vmatpush1.bf16.msra.mxu0 %v2071
    %2152 = vmatprep.mubr.bf16.mxu0 %v331
    %2153 = vmatmul.mubr.bf16.gmra.mrb[0].mxu0 %v330
    %v2154 = vpop.f32.mrb[0].mxu0
    %v2155 = vadd.f32 0.0, %v2154
    %v2156 = vpop.f32.mrb[0].mxu0
    %v2157 = vpop.f32.mrb[0].mxu0
    %v2158 = vpop.f32.mrb[0].mxu0
    %2159 = vdwg.mxu0
    %2160 = vmatprep.subr.bf16.mxu0 0
    %2161 = vmatpush1.bf16.msra.mxu0 %v2072
    %2162 = vmatprep.subr.bf16.mxu0 0
    %2163 = vmatpush1.bf16.msra.mxu0 %v2073
    %2164 = vmatprep.subr.bf16.mxu0 0
    %2165 = vmatpush1.bf16.msra.mxu0 %v2074
    %2166 = vmatprep.subr.bf16.mxu0 0
    %2167 = vmatpush1.bf16.msra.mxu0 %v2075
    %2168 = vmatprep.subr.bf16.mxu0 0
    %2169 = vmatpush1.bf16.msra.mxu0 %v2076
    %2170 = vmatprep.subr.bf16.mxu0 0
    %2171 = vmatpush1.bf16.msra.mxu0 %v2077
    %2172 = vmatprep.subr.bf16.mxu0 0
    %2173 = vmatpush1.bf16.msra.mxu0 %v2078
    %2174 = vmatprep.subr.bf16.mxu0 0
    %2175 = vmatpush1.bf16.msra.mxu0 %v2079
    %2176 = vmatprep.subr.bf16.mxu0 0
    %2177 = vmatpush1.bf16.msra.mxu0 %v2080
    %2178 = vmatprep.subr.bf16.mxu0 0
    %2179 = vmatpush1.bf16.msra.mxu0 %v2081
    %2180 = vmatprep.subr.bf16.mxu0 0
    %2181 = vmatpush1.bf16.msra.mxu0 %v2082
    %2182 = vmatprep.subr.bf16.mxu0 0
    %2183 = vmatpush1.bf16.msra.mxu0 %v2083
    %2184 = vmatprep.subr.bf16.mxu0 0
    %2185 = vmatpush1.bf16.msra.mxu0 %v2084
    %2186 = vmatprep.subr.bf16.mxu0 0
    %2187 = vmatpush1.bf16.msra.mxu0 %v2085
    %2188 = vmatprep.subr.bf16.mxu0 0
    %2189 = vmatpush1.bf16.msra.mxu0 %v2086
    %2190 = vmatprep.subr.bf16.mxu0 0
    %2191 = vmatpush1.bf16.msra.mxu0 %v2087
    %2192 = vmatprep.mubr.bf16.mxu0 %v333
    %2193 = vmatmul.mubr.bf16.gmra.mrb[0].mxu0 %v332
    %v2194 = vpop.f32.mrb[0].mxu0
    %v2195 = vadd.f32 %v2155, %v2194
    %v2196 = vpop.f32.mrb[0].mxu0
    %v2197 = vpop.f32.mrb[0].mxu0
    %v2198 = vpop.f32.mrb[0].mxu0
    %2199 = vdwg.mxu0
    %v2200 = vpack.c.bf16 %v2195, %v2195
    %v2201 = vpack.c.bf16 %v691, %v690
    %v2203 = vsel %vm1379, %v2201, 0
    %v2206 = vsel %vm1383, %v2200, 0
    %2208 = vmatprep.subr.bf16.mxu0 0
    %2209 = vmatpush1.bf16.msra.mxu0 %v2206
    %2210 = vmatprep.subr.bf16.mxu0 0
    %2211 = vmatpush1.bf16.msra.mxu0 0
    %2212 = vmatprep.subr.bf16.mxu0 0
    %2213 = vmatpush1.bf16.msra.mxu0 0
    %2214 = vmatprep.subr.bf16.mxu0 0
    %2215 = vmatpush1.bf16.msra.mxu0 0
    %2216 = vmatprep.subr.bf16.mxu0 0
    %2217 = vmatpush1.bf16.msra.mxu0 0
    %2218 = vmatprep.subr.bf16.mxu0 0
    %2219 = vmatpush1.bf16.msra.mxu0 0
    %2220 = vmatprep.subr.bf16.mxu0 0
    %2221 = vmatpush1.bf16.msra.mxu0 0
    %2222 = vmatprep.subr.bf16.mxu0 0
    %2223 = vmatpush1.bf16.msra.mxu0 0
    %2224 = vmatprep.subr.bf16.mxu0 0
    %2225 = vmatpush1.bf16.msra.mxu0 0
    %2226 = vmatprep.subr.bf16.mxu0 0
    %2227 = vmatpush1.bf16.msra.mxu0 0
    %2228 = vmatprep.subr.bf16.mxu0 0
    %2229 = vmatpush1.bf16.msra.mxu0 0
    %2230 = vmatprep.subr.bf16.mxu0 0
    %2231 = vmatpush1.bf16.msra.mxu0 0
    %2232 = vmatprep.subr.bf16.mxu0 0
    %2233 = vmatpush1.bf16.msra.mxu0 0
    %2234 = vmatprep.subr.bf16.mxu0 0
    %2235 = vmatpush1.bf16.msra.mxu0 0
    %2236 = vmatprep.subr.bf16.mxu0 0
    %2237 = vmatpush1.bf16.msra.mxu0 0
    %2238 = vmatprep.subr.bf16.mxu0 0
    %2239 = vmatpush1.bf16.msra.mxu0 0
    %2240 = vmatprep.mubr.bf16.mxu0 0
    %2241 = vmatmul.mubr.bf16.gmra.mrb[0].mxu0 %v2203
    %v2242 = vpop.f32.mrb[0].mxu0
    %v2243 = vadd.f32 0.0, %v2242
    %v2244 = vpop.f32.mrb[0].mxu0
    %v2245 = vpop.f32.mrb[0].mxu0
    %v2246 = vadd.f32 0.0, %v2245
    %v2247 = vpop.f32.mrb[0].mxu0
    %2248 = vdwg.mxu0
    %v2249 = vadd.f32 %v1861, %v2243
    %v2250 = vadd.f32 %v1862, %v2246
    %s2251 = scalar_lea.vmem %s4, 1024
    %v2252 = vld [vmem:[%s2251] sm:$0xf]
    %v2253 = vld [vmem:[%s2251 + $0x4] sm:$0xf]
    %v2254 = vld [vmem:[%s2251 + $0x8] sm:$0xf]
    %v2255 = vld [vmem:[%s2251 + $0xc] sm:$0xf]
    %v2256 = vld [vmem:[%s2251 + $0x10] sm:$0xf]
    %v2257 = vld [vmem:[%s2251 + $0x14] sm:$0xf]
    %v2258 = vld [vmem:[%s2251 + $0x18] sm:$0xf]
    %v2259 = vld [vmem:[%s2251 + $0x1c] sm:$0xf]
    %v2260 = vld [vmem:[%s2251 + $0x20] sm:$0xf]
    %v2261 = vld [vmem:[%s2251 + $0x24] sm:$0xf]
    %v2262 = vld [vmem:[%s2251 + $0x28] sm:$0xf]
    %v2263 = vld [vmem:[%s2251 + $0x2c] sm:$0xf]
    %v2264 = vld [vmem:[%s2251 + $0x30] sm:$0xf]
    %v2265 = vld [vmem:[%s2251 + $0x34] sm:$0xf]
    %v2266 = vld [vmem:[%s2251 + $0x38] sm:$0xf]
    %v2267 = vld [vmem:[%s2251 + $0x3c] sm:$0xf]
    %v2268 = vld [vmem:[%s2251 + $0x40] sm:$0xf]
    %v2269 = vld [vmem:[%s2251 + $0x44] sm:$0xf]
    %v2270 = vld [vmem:[%s2251 + $0x48] sm:$0xf]
    %v2271 = vld [vmem:[%s2251 + $0x4c] sm:$0xf]
    %v2272 = vld [vmem:[%s2251 + $0x50] sm:$0xf]
    %v2273 = vld [vmem:[%s2251 + $0x54] sm:$0xf]
    %v2274 = vld [vmem:[%s2251 + $0x58] sm:$0xf]
    %v2275 = vld [vmem:[%s2251 + $0x5c] sm:$0xf]
    %v2276 = vld [vmem:[%s2251 + $0x60] sm:$0xf]
    %v2277 = vld [vmem:[%s2251 + $0x64] sm:$0xf]
    %v2278 = vld [vmem:[%s2251 + $0x68] sm:$0xf]
    %v2279 = vld [vmem:[%s2251 + $0x6c] sm:$0xf]
    %v2280 = vld [vmem:[%s2251 + $0x70] sm:$0xf]
    %v2281 = vld [vmem:[%s2251 + $0x74] sm:$0xf]
    %v2282 = vld [vmem:[%s2251 + $0x78] sm:$0xf]
    %v2283 = vld [vmem:[%s2251 + $0x7c] sm:$0xf]
    %v2284 = vld [vmem:[%s2251 + $0x80] sm:$0xf]
    %v2285 = vld [vmem:[%s2251 + $0x84] sm:$0xf]
    %v2286 = vld [vmem:[%s2251 + $0x88] sm:$0xf]
    %v2287 = vld [vmem:[%s2251 + $0x8c] sm:$0xf]
    %v2288 = vld [vmem:[%s2251 + $0x90] sm:$0xf]
    %v2289 = vld [vmem:[%s2251 + $0x94] sm:$0xf]
    %v2290 = vld [vmem:[%s2251 + $0x98] sm:$0xf]
    %v2291 = vld [vmem:[%s2251 + $0x9c] sm:$0xf]
    %v2292 = vld [vmem:[%s2251 + $0xa0] sm:$0xf]
    %v2293 = vld [vmem:[%s2251 + $0xa4] sm:$0xf]
    %v2294 = vld [vmem:[%s2251 + $0xa8] sm:$0xf]
    %v2295 = vld [vmem:[%s2251 + $0xac] sm:$0xf]
    %v2296 = vld [vmem:[%s2251 + $0xb0] sm:$0xf]
    %v2297 = vld [vmem:[%s2251 + $0xb4] sm:$0xf]
    %v2298 = vld [vmem:[%s2251 + $0xb8] sm:$0xf]
    %v2299 = vld [vmem:[%s2251 + $0xbc] sm:$0xf]
    %v2300 = vld [vmem:[%s2251 + $0xc0] sm:$0xf]
    %v2301 = vld [vmem:[%s2251 + $0xc4] sm:$0xf]
    %v2302 = vld [vmem:[%s2251 + $0xc8] sm:$0xf]
    %v2303 = vld [vmem:[%s2251 + $0xcc] sm:$0xf]
    %v2304 = vld [vmem:[%s2251 + $0xd0] sm:$0xf]
    %v2305 = vld [vmem:[%s2251 + $0xd4] sm:$0xf]
    %v2306 = vld [vmem:[%s2251 + $0xd8] sm:$0xf]
    %v2307 = vld [vmem:[%s2251 + $0xdc] sm:$0xf]
    %v2308 = vld [vmem:[%s2251 + $0xe0] sm:$0xf]
    %v2309 = vld [vmem:[%s2251 + $0xe4] sm:$0xf]
    %v2310 = vld [vmem:[%s2251 + $0xe8] sm:$0xf]
    %v2311 = vld [vmem:[%s2251 + $0xec] sm:$0xf]
    %v2312 = vld [vmem:[%s2251 + $0xf0] sm:$0xf]
    %v2313 = vld [vmem:[%s2251 + $0xf4] sm:$0xf]
    %v2314 = vld [vmem:[%s2251 + $0xf8] sm:$0xf]
    %v2315 = vld [vmem:[%s2251 + $0xfc] sm:$0xf]
    %v2380 = vunpack.c.l.b16 %v2252
    %v2381 = vunpack.c.l.b16 %v2253
    %v2382 = vunpack.c.l.b16 %v2254
    %v2383 = vunpack.c.l.b16 %v2255
    %v2384 = vunpack.c.l.b16 %v2256
    %v2385 = vunpack.c.l.b16 %v2257
    %v2386 = vunpack.c.l.b16 %v2258
    %v2387 = vunpack.c.l.b16 %v2259
    %v2388 = vunpack.c.l.b16 %v2260
    %v2389 = vunpack.c.l.b16 %v2261
    %v2390 = vunpack.c.l.b16 %v2262
    %v2391 = vunpack.c.l.b16 %v2263
    %v2392 = vunpack.c.l.b16 %v2264
    %v2393 = vunpack.c.l.b16 %v2265
    %v2394 = vunpack.c.l.b16 %v2266
    %v2395 = vunpack.c.l.b16 %v2267
    %v2396 = vunpack.c.l.b16 %v2268
    %v2397 = vunpack.c.l.b16 %v2269
    %v2398 = vunpack.c.l.b16 %v2270
    %v2399 = vunpack.c.l.b16 %v2271
    %v2400 = vunpack.c.l.b16 %v2272
    %v2401 = vunpack.c.l.b16 %v2273
    %v2402 = vunpack.c.l.b16 %v2274
    %v2403 = vunpack.c.l.b16 %v2275
    %v2404 = vunpack.c.l.b16 %v2276
    %v2405 = vunpack.c.l.b16 %v2277
    %v2406 = vunpack.c.l.b16 %v2278
    %v2407 = vunpack.c.l.b16 %v2279
    %v2408 = vunpack.c.l.b16 %v2280
    %v2409 = vunpack.c.l.b16 %v2281
    %v2410 = vunpack.c.l.b16 %v2282
    %v2411 = vunpack.c.l.b16 %v2283
    %v2412 = vunpack.c.l.b16 %v2284
    %v2413 = vunpack.c.l.b16 %v2285
    %v2414 = vunpack.c.l.b16 %v2286
    %v2415 = vunpack.c.l.b16 %v2287
    %v2416 = vunpack.c.l.b16 %v2288
    %v2417 = vunpack.c.l.b16 %v2289
    %v2418 = vunpack.c.l.b16 %v2290
    %v2419 = vunpack.c.l.b16 %v2291
    %v2420 = vunpack.c.l.b16 %v2292
    %v2421 = vunpack.c.l.b16 %v2293
    %v2422 = vunpack.c.l.b16 %v2294
    %v2423 = vunpack.c.l.b16 %v2295
    %v2424 = vunpack.c.l.b16 %v2296
    %v2425 = vunpack.c.l.b16 %v2297
    %v2426 = vunpack.c.l.b16 %v2298
    %v2427 = vunpack.c.l.b16 %v2299
    %v2428 = vunpack.c.l.b16 %v2300
    %v2429 = vunpack.c.l.b16 %v2301
    %v2430 = vunpack.c.l.b16 %v2302
    %v2431 = vunpack.c.l.b16 %v2303
    %v2432 = vunpack.c.l.b16 %v2304
    %v2433 = vunpack.c.l.b16 %v2305
    %v2434 = vunpack.c.l.b16 %v2306
    %v2435 = vunpack.c.l.b16 %v2307
    %v2436 = vunpack.c.l.b16 %v2308
    %v2437 = vunpack.c.l.b16 %v2309
    %v2438 = vunpack.c.l.b16 %v2310
    %v2439 = vunpack.c.l.b16 %v2311
    %v2440 = vunpack.c.l.b16 %v2312
    %v2441 = vunpack.c.l.b16 %v2313
    %v2442 = vunpack.c.l.b16 %v2314
    %v2443 = vunpack.c.l.b16 %v2315
    %v2444 = vpack.c.b16 %v2381, %v2380
    %v2445 = vpack.c.b16 %v2383, %v2382
    %v2446 = vpack.c.b16 %v2385, %v2384
    %v2447 = vpack.c.b16 %v2387, %v2386
    %v2448 = vpack.c.b16 %v2389, %v2388
    %v2449 = vpack.c.b16 %v2391, %v2390
    %v2450 = vpack.c.b16 %v2393, %v2392
    %v2451 = vpack.c.b16 %v2395, %v2394
    %v2452 = vpack.c.b16 %v2397, %v2396
    %v2453 = vpack.c.b16 %v2399, %v2398
    %v2454 = vpack.c.b16 %v2401, %v2400
    %v2455 = vpack.c.b16 %v2403, %v2402
    %v2456 = vpack.c.b16 %v2405, %v2404
    %v2457 = vpack.c.b16 %v2407, %v2406
    %v2458 = vpack.c.b16 %v2409, %v2408
    %v2459 = vpack.c.b16 %v2411, %v2410
    %v2460 = vpack.c.b16 %v2413, %v2412
    %v2461 = vpack.c.b16 %v2415, %v2414
    %v2462 = vpack.c.b16 %v2417, %v2416
    %v2463 = vpack.c.b16 %v2419, %v2418
    %v2464 = vpack.c.b16 %v2421, %v2420
    %v2465 = vpack.c.b16 %v2423, %v2422
    %v2466 = vpack.c.b16 %v2425, %v2424
    %v2467 = vpack.c.b16 %v2427, %v2426
    %v2468 = vpack.c.b16 %v2429, %v2428
    %v2469 = vpack.c.b16 %v2431, %v2430
    %v2470 = vpack.c.b16 %v2433, %v2432
    %v2471 = vpack.c.b16 %v2435, %v2434
    %v2472 = vpack.c.b16 %v2437, %v2436
    %v2473 = vpack.c.b16 %v2439, %v2438
    %v2474 = vpack.c.b16 %v2441, %v2440
    %v2475 = vpack.c.b16 %v2443, %v2442
    %2508 = vmatprep.subr.bf16.mxu0 0
    %2509 = vmatpush1.bf16.msra.mxu0 %v2444
    %2510 = vmatprep.subr.bf16.mxu0 0
    %2511 = vmatpush1.bf16.msra.mxu0 %v2445
    %2512 = vmatprep.subr.bf16.mxu0 0
    %2513 = vmatpush1.bf16.msra.mxu0 %v2446
    %2514 = vmatprep.subr.bf16.mxu0 0
    %2515 = vmatpush1.bf16.msra.mxu0 %v2447
    %2516 = vmatprep.subr.bf16.mxu0 0
    %2517 = vmatpush1.bf16.msra.mxu0 %v2448
    %2518 = vmatprep.subr.bf16.mxu0 0
    %2519 = vmatpush1.bf16.msra.mxu0 %v2449
    %2520 = vmatprep.subr.bf16.mxu0 0
    %2521 = vmatpush1.bf16.msra.mxu0 %v2450
    %2522 = vmatprep.subr.bf16.mxu0 0
    %2523 = vmatpush1.bf16.msra.mxu0 %v2451
    %2524 = vmatprep.subr.bf16.mxu0 0
    %2525 = vmatpush1.bf16.msra.mxu0 %v2452
    %2526 = vmatprep.subr.bf16.mxu0 0
    %2527 = vmatpush1.bf16.msra.mxu0 %v2453
    %2528 = vmatprep.subr.bf16.mxu0 0
    %2529 = vmatpush1.bf16.msra.mxu0 %v2454
    %2530 = vmatprep.subr.bf16.mxu0 0
    %2531 = vmatpush1.bf16.msra.mxu0 %v2455
    %2532 = vmatprep.subr.bf16.mxu0 0
    %2533 = vmatpush1.bf16.msra.mxu0 %v2456
    %2534 = vmatprep.subr.bf16.mxu0 0
    %2535 = vmatpush1.bf16.msra.mxu0 %v2457
    %2536 = vmatprep.subr.bf16.mxu0 0
    %2537 = vmatpush1.bf16.msra.mxu0 %v2458
    %2538 = vmatprep.subr.bf16.mxu0 0
    %2539 = vmatpush1.bf16.msra.mxu0 %v2459
    %2540 = vmatprep.mubr.bf16.mxu0 %v331
    %2541 = vmatmul.mubr.bf16.gmra.mrb[0].mxu0 %v330
    %v2542 = vpop.f32.mrb[0].mxu0
    %v2543 = vadd.f32 0.0, %v2542
    %v2544 = vpop.f32.mrb[0].mxu0
    %v2545 = vpop.f32.mrb[0].mxu0
    %v2546 = vpop.f32.mrb[0].mxu0
    %2547 = vdwg.mxu0
    %2548 = vmatprep.subr.bf16.mxu0 0
    %2549 = vmatpush1.bf16.msra.mxu0 %v2460
    %2550 = vmatprep.subr.bf16.mxu0 0
    %2551 = vmatpush1.bf16.msra.mxu0 %v2461
    %2552 = vmatprep.subr.bf16.mxu0 0
    %2553 = vmatpush1.bf16.msra.mxu0 %v2462
    %2554 = vmatprep.subr.bf16.mxu0 0
    %2555 = vmatpush1.bf16.msra.mxu0 %v2463
    %2556 = vmatprep.subr.bf16.mxu0 0
    %2557 = vmatpush1.bf16.msra.mxu0 %v2464
    %2558 = vmatprep.subr.bf16.mxu0 0
    %2559 = vmatpush1.bf16.msra.mxu0 %v2465
    %2560 = vmatprep.subr.bf16.mxu0 0
    %2561 = vmatpush1.bf16.msra.mxu0 %v2466
    %2562 = vmatprep.subr.bf16.mxu0 0
    %2563 = vmatpush1.bf16.msra.mxu0 %v2467
    %2564 = vmatprep.subr.bf16.mxu0 0
    %2565 = vmatpush1.bf16.msra.mxu0 %v2468
    %2566 = vmatprep.subr.bf16.mxu0 0
    %2567 = vmatpush1.bf16.msra.mxu0 %v2469
    %2568 = vmatprep.subr.bf16.mxu0 0
    %2569 = vmatpush1.bf16.msra.mxu0 %v2470
    %2570 = vmatprep.subr.bf16.mxu0 0
    %2571 = vmatpush1.bf16.msra.mxu0 %v2471
    %2572 = vmatprep.subr.bf16.mxu0 0
    %2573 = vmatpush1.bf16.msra.mxu0 %v2472
    %2574 = vmatprep.subr.bf16.mxu0 0
    %2575 = vmatpush1.bf16.msra.mxu0 %v2473
    %2576 = vmatprep.subr.bf16.mxu0 0
    %2577 = vmatpush1.bf16.msra.mxu0 %v2474
    %2578 = vmatprep.subr.bf16.mxu0 0
    %2579 = vmatpush1.bf16.msra.mxu0 %v2475
    %2580 = vmatprep.mubr.bf16.mxu0 %v333
    %2581 = vmatmul.mubr.bf16.gmra.mrb[0].mxu0 %v332
    %v2582 = vpop.f32.mrb[0].mxu0
    %v2583 = vadd.f32 %v2543, %v2582
    %v2584 = vpop.f32.mrb[0].mxu0
    %v2585 = vpop.f32.mrb[0].mxu0
    %v2586 = vpop.f32.mrb[0].mxu0
    %2587 = vdwg.mxu0
    %v2588 = vpack.c.bf16 %v2583, %v2583
    %v2589 = vpack.c.bf16 %v693, %v692
    %v2591 = vsel %vm1379, %v2589, 0
    %v2594 = vsel %vm1383, %v2588, 0
    %2596 = vmatprep.subr.bf16.mxu0 0
    %2597 = vmatpush1.bf16.msra.mxu0 %v2594
    %2598 = vmatprep.subr.bf16.mxu0 0
    %2599 = vmatpush1.bf16.msra.mxu0 0
    %2600 = vmatprep.subr.bf16.mxu0 0
    %2601 = vmatpush1.bf16.msra.mxu0 0
    %2602 = vmatprep.subr.bf16.mxu0 0
    %2603 = vmatpush1.bf16.msra.mxu0 0
    %2604 = vmatprep.subr.bf16.mxu0 0
    %2605 = vmatpush1.bf16.msra.mxu0 0
    %2606 = vmatprep.subr.bf16.mxu0 0
    %2607 = vmatpush1.bf16.msra.mxu0 0
    %2608 = vmatprep.subr.bf16.mxu0 0
    %2609 = vmatpush1.bf16.msra.mxu0 0
    %2610 = vmatprep.subr.bf16.mxu0 0
    %2611 = vmatpush1.bf16.msra.mxu0 0
    %2612 = vmatprep.subr.bf16.mxu0 0
    %2613 = vmatpush1.bf16.msra.mxu0 0
    %2614 = vmatprep.subr.bf16.mxu0 0
    %2615 = vmatpush1.bf16.msra.mxu0 0
    %2616 = vmatprep.subr.bf16.mxu0 0
    %2617 = vmatpush1.bf16.msra.mxu0 0
    %2618 = vmatprep.subr.bf16.mxu0 0
    %2619 = vmatpush1.bf16.msra.mxu0 0
    %2620 = vmatprep.subr.bf16.mxu0 0
    %2621 = vmatpush1.bf16.msra.mxu0 0
    %2622 = vmatprep.subr.bf16.mxu0 0
    %2623 = vmatpush1.bf16.msra.mxu0 0
    %2624 = vmatprep.subr.bf16.mxu0 0
    %2625 = vmatpush1.bf16.msra.mxu0 0
    %2626 = vmatprep.subr.bf16.mxu0 0
    %2627 = vmatpush1.bf16.msra.mxu0 0
    %2628 = vmatprep.mubr.bf16.mxu0 0
    %2629 = vmatmul.mubr.bf16.gmra.mrb[0].mxu0 %v2591
    %v2630 = vpop.f32.mrb[0].mxu0
    %v2631 = vadd.f32 0.0, %v2630
    %v2632 = vpop.f32.mrb[0].mxu0
    %v2633 = vpop.f32.mrb[0].mxu0
    %v2634 = vadd.f32 0.0, %v2633
    %v2635 = vpop.f32.mrb[0].mxu0
    %2636 = vdwg.mxu0
    %v2637 = vadd.f32 %v2249, %v2631
    %v2638 = vadd.f32 %v2250, %v2634
    %s2639 = scalar_lea.vmem %s4, 1280
    %v2640 = vld [vmem:[%s2639] sm:$0xf]
    %v2641 = vld [vmem:[%s2639 + $0x4] sm:$0xf]
    %v2642 = vld [vmem:[%s2639 + $0x8] sm:$0xf]
    %v2643 = vld [vmem:[%s2639 + $0xc] sm:$0xf]
    %v2644 = vld [vmem:[%s2639 + $0x10] sm:$0xf]
    %v2645 = vld [vmem:[%s2639 + $0x14] sm:$0xf]
    %v2646 = vld [vmem:[%s2639 + $0x18] sm:$0xf]
    %v2647 = vld [vmem:[%s2639 + $0x1c] sm:$0xf]
    %v2648 = vld [vmem:[%s2639 + $0x20] sm:$0xf]
    %v2649 = vld [vmem:[%s2639 + $0x24] sm:$0xf]
    %v2650 = vld [vmem:[%s2639 + $0x28] sm:$0xf]
    %v2651 = vld [vmem:[%s2639 + $0x2c] sm:$0xf]
    %v2652 = vld [vmem:[%s2639 + $0x30] sm:$0xf]
    %v2653 = vld [vmem:[%s2639 + $0x34] sm:$0xf]
    %v2654 = vld [vmem:[%s2639 + $0x38] sm:$0xf]
    %v2655 = vld [vmem:[%s2639 + $0x3c] sm:$0xf]
    %v2656 = vld [vmem:[%s2639 + $0x40] sm:$0xf]
    %v2657 = vld [vmem:[%s2639 + $0x44] sm:$0xf]
    %v2658 = vld [vmem:[%s2639 + $0x48] sm:$0xf]
    %v2659 = vld [vmem:[%s2639 + $0x4c] sm:$0xf]
    %v2660 = vld [vmem:[%s2639 + $0x50] sm:$0xf]
    %v2661 = vld [vmem:[%s2639 + $0x54] sm:$0xf]
    %v2662 = vld [vmem:[%s2639 + $0x58] sm:$0xf]
    %v2663 = vld [vmem:[%s2639 + $0x5c] sm:$0xf]
    %v2664 = vld [vmem:[%s2639 + $0x60] sm:$0xf]
    %v2665 = vld [vmem:[%s2639 + $0x64] sm:$0xf]
    %v2666 = vld [vmem:[%s2639 + $0x68] sm:$0xf]
    %v2667 = vld [vmem:[%s2639 + $0x6c] sm:$0xf]
    %v2668 = vld [vmem:[%s2639 + $0x70] sm:$0xf]
    %v2669 = vld [vmem:[%s2639 + $0x74] sm:$0xf]
    %v2670 = vld [vmem:[%s2639 + $0x78] sm:$0xf]
    %v2671 = vld [vmem:[%s2639 + $0x7c] sm:$0xf]
    %v2672 = vld [vmem:[%s2639 + $0x80] sm:$0xf]
    %v2673 = vld [vmem:[%s2639 + $0x84] sm:$0xf]
    %v2674 = vld [vmem:[%s2639 + $0x88] sm:$0xf]
    %v2675 = vld [vmem:[%s2639 + $0x8c] sm:$0xf]
    %v2676 = vld [vmem:[%s2639 + $0x90] sm:$0xf]
    %v2677 = vld [vmem:[%s2639 + $0x94] sm:$0xf]
    %v2678 = vld [vmem:[%s2639 + $0x98] sm:$0xf]
    %v2679 = vld [vmem:[%s2639 + $0x9c] sm:$0xf]
    %v2680 = vld [vmem:[%s2639 + $0xa0] sm:$0xf]
    %v2681 = vld [vmem:[%s2639 + $0xa4] sm:$0xf]
    %v2682 = vld [vmem:[%s2639 + $0xa8] sm:$0xf]
    %v2683 = vld [vmem:[%s2639 + $0xac] sm:$0xf]
    %v2684 = vld [vmem:[%s2639 + $0xb0] sm:$0xf]
    %v2685 = vld [vmem:[%s2639 + $0xb4] sm:$0xf]
    %v2686 = vld [vmem:[%s2639 + $0xb8] sm:$0xf]
    %v2687 = vld [vmem:[%s2639 + $0xbc] sm:$0xf]
    %v2688 = vld [vmem:[%s2639 + $0xc0] sm:$0xf]
    %v2689 = vld [vmem:[%s2639 + $0xc4] sm:$0xf]
    %v2690 = vld [vmem:[%s2639 + $0xc8] sm:$0xf]
    %v2691 = vld [vmem:[%s2639 + $0xcc] sm:$0xf]
    %v2692 = vld [vmem:[%s2639 + $0xd0] sm:$0xf]
    %v2693 = vld [vmem:[%s2639 + $0xd4] sm:$0xf]
    %v2694 = vld [vmem:[%s2639 + $0xd8] sm:$0xf]
    %v2695 = vld [vmem:[%s2639 + $0xdc] sm:$0xf]
    %v2696 = vld [vmem:[%s2639 + $0xe0] sm:$0xf]
    %v2697 = vld [vmem:[%s2639 + $0xe4] sm:$0xf]
    %v2698 = vld [vmem:[%s2639 + $0xe8] sm:$0xf]
    %v2699 = vld [vmem:[%s2639 + $0xec] sm:$0xf]
    %v2700 = vld [vmem:[%s2639 + $0xf0] sm:$0xf]
    %v2701 = vld [vmem:[%s2639 + $0xf4] sm:$0xf]
    %v2702 = vld [vmem:[%s2639 + $0xf8] sm:$0xf]
    %v2703 = vld [vmem:[%s2639 + $0xfc] sm:$0xf]
    %v2768 = vunpack.c.l.b16 %v2640
    %v2769 = vunpack.c.l.b16 %v2641
    %v2770 = vunpack.c.l.b16 %v2642
    %v2771 = vunpack.c.l.b16 %v2643
    %v2772 = vunpack.c.l.b16 %v2644
    %v2773 = vunpack.c.l.b16 %v2645
    %v2774 = vunpack.c.l.b16 %v2646
    %v2775 = vunpack.c.l.b16 %v2647
    %v2776 = vunpack.c.l.b16 %v2648
    %v2777 = vunpack.c.l.b16 %v2649
    %v2778 = vunpack.c.l.b16 %v2650
    %v2779 = vunpack.c.l.b16 %v2651
    %v2780 = vunpack.c.l.b16 %v2652
    %v2781 = vunpack.c.l.b16 %v2653
    %v2782 = vunpack.c.l.b16 %v2654
    %v2783 = vunpack.c.l.b16 %v2655
    %v2784 = vunpack.c.l.b16 %v2656
    %v2785 = vunpack.c.l.b16 %v2657
    %v2786 = vunpack.c.l.b16 %v2658
    %v2787 = vunpack.c.l.b16 %v2659
    %v2788 = vunpack.c.l.b16 %v2660
    %v2789 = vunpack.c.l.b16 %v2661
    %v2790 = vunpack.c.l.b16 %v2662
    %v2791 = vunpack.c.l.b16 %v2663
    %v2792 = vunpack.c.l.b16 %v2664
    %v2793 = vunpack.c.l.b16 %v2665
    %v2794 = vunpack.c.l.b16 %v2666
    %v2795 = vunpack.c.l.b16 %v2667
    %v2796 = vunpack.c.l.b16 %v2668
    %v2797 = vunpack.c.l.b16 %v2669
    %v2798 = vunpack.c.l.b16 %v2670
    %v2799 = vunpack.c.l.b16 %v2671
    %v2800 = vunpack.c.l.b16 %v2672
    %v2801 = vunpack.c.l.b16 %v2673
    %v2802 = vunpack.c.l.b16 %v2674
    %v2803 = vunpack.c.l.b16 %v2675
    %v2804 = vunpack.c.l.b16 %v2676
    %v2805 = vunpack.c.l.b16 %v2677
    %v2806 = vunpack.c.l.b16 %v2678
    %v2807 = vunpack.c.l.b16 %v2679
    %v2808 = vunpack.c.l.b16 %v2680
    %v2809 = vunpack.c.l.b16 %v2681
    %v2810 = vunpack.c.l.b16 %v2682
    %v2811 = vunpack.c.l.b16 %v2683
    %v2812 = vunpack.c.l.b16 %v2684
    %v2813 = vunpack.c.l.b16 %v2685
    %v2814 = vunpack.c.l.b16 %v2686
    %v2815 = vunpack.c.l.b16 %v2687
    %v2816 = vunpack.c.l.b16 %v2688
    %v2817 = vunpack.c.l.b16 %v2689
    %v2818 = vunpack.c.l.b16 %v2690
    %v2819 = vunpack.c.l.b16 %v2691
    %v2820 = vunpack.c.l.b16 %v2692
    %v2821 = vunpack.c.l.b16 %v2693
    %v2822 = vunpack.c.l.b16 %v2694
    %v2823 = vunpack.c.l.b16 %v2695
    %v2824 = vunpack.c.l.b16 %v2696
    %v2825 = vunpack.c.l.b16 %v2697
    %v2826 = vunpack.c.l.b16 %v2698
    %v2827 = vunpack.c.l.b16 %v2699
    %v2828 = vunpack.c.l.b16 %v2700
    %v2829 = vunpack.c.l.b16 %v2701
    %v2830 = vunpack.c.l.b16 %v2702
    %v2831 = vunpack.c.l.b16 %v2703
    %v2832 = vpack.c.b16 %v2769, %v2768
    %v2833 = vpack.c.b16 %v2771, %v2770
    %v2834 = vpack.c.b16 %v2773, %v2772
    %v2835 = vpack.c.b16 %v2775, %v2774
    %v2836 = vpack.c.b16 %v2777, %v2776
    %v2837 = vpack.c.b16 %v2779, %v2778
    %v2838 = vpack.c.b16 %v2781, %v2780
    %v2839 = vpack.c.b16 %v2783, %v2782
    %v2840 = vpack.c.b16 %v2785, %v2784
    %v2841 = vpack.c.b16 %v2787, %v2786
    %v2842 = vpack.c.b16 %v2789, %v2788
    %v2843 = vpack.c.b16 %v2791, %v2790
    %v2844 = vpack.c.b16 %v2793, %v2792
    %v2845 = vpack.c.b16 %v2795, %v2794
    %v2846 = vpack.c.b16 %v2797, %v2796
    %v2847 = vpack.c.b16 %v2799, %v2798
    %v2848 = vpack.c.b16 %v2801, %v2800
    %v2849 = vpack.c.b16 %v2803, %v2802
    %v2850 = vpack.c.b16 %v2805, %v2804
    %v2851 = vpack.c.b16 %v2807, %v2806
    %v2852 = vpack.c.b16 %v2809, %v2808
    %v2853 = vpack.c.b16 %v2811, %v2810
    %v2854 = vpack.c.b16 %v2813, %v2812
    %v2855 = vpack.c.b16 %v2815, %v2814
    %v2856 = vpack.c.b16 %v2817, %v2816
    %v2857 = vpack.c.b16 %v2819, %v2818
    %v2858 = vpack.c.b16 %v2821, %v2820
    %v2859 = vpack.c.b16 %v2823, %v2822
    %v2860 = vpack.c.b16 %v2825, %v2824
    %v2861 = vpack.c.b16 %v2827, %v2826
    %v2862 = vpack.c.b16 %v2829, %v2828
    %v2863 = vpack.c.b16 %v2831, %v2830
    %2896 = vmatprep.subr.bf16.mxu0 0
    %2897 = vmatpush1.bf16.msra.mxu0 %v2832
    %2898 = vmatprep.subr.bf16.mxu0 0
    %2899 = vmatpush1.bf16.msra.mxu0 %v2833
    %2900 = vmatprep.subr.bf16.mxu0 0
    %2901 = vmatpush1.bf16.msra.mxu0 %v2834
    %2902 = vmatprep.subr.bf16.mxu0 0
    %2903 = vmatpush1.bf16.msra.mxu0 %v2835
    %2904 = vmatprep.subr.bf16.mxu0 0
    %2905 = vmatpush1.bf16.msra.mxu0 %v2836
    %2906 = vmatprep.subr.bf16.mxu0 0
    %2907 = vmatpush1.bf16.msra.mxu0 %v2837
    %2908 = vmatprep.subr.bf16.mxu0 0
    %2909 = vmatpush1.bf16.msra.mxu0 %v2838
    %2910 = vmatprep.subr.bf16.mxu0 0
    %2911 = vmatpush1.bf16.msra.mxu0 %v2839
    %2912 = vmatprep.subr.bf16.mxu0 0
    %2913 = vmatpush1.bf16.msra.mxu0 %v2840
    %2914 = vmatprep.subr.bf16.mxu0 0
    %2915 = vmatpush1.bf16.msra.mxu0 %v2841
    %2916 = vmatprep.subr.bf16.mxu0 0
    %2917 = vmatpush1.bf16.msra.mxu0 %v2842
    %2918 = vmatprep.subr.bf16.mxu0 0
    %2919 = vmatpush1.bf16.msra.mxu0 %v2843
    %2920 = vmatprep.subr.bf16.mxu0 0
    %2921 = vmatpush1.bf16.msra.mxu0 %v2844
    %2922 = vmatprep.subr.bf16.mxu0 0
    %2923 = vmatpush1.bf16.msra.mxu0 %v2845
    %2924 = vmatprep.subr.bf16.mxu0 0
    %2925 = vmatpush1.bf16.msra.mxu0 %v2846
    %2926 = vmatprep.subr.bf16.mxu0 0
    %2927 = vmatpush1.bf16.msra.mxu0 %v2847
    %2928 = vmatprep.mubr.bf16.mxu0 %v331
    %2929 = vmatmul.mubr.bf16.gmra.mrb[0].mxu0 %v330
    %v2930 = vpop.f32.mrb[0].mxu0
    %v2931 = vadd.f32 0.0, %v2930
    %v2932 = vpop.f32.mrb[0].mxu0
    %v2933 = vpop.f32.mrb[0].mxu0
    %v2934 = vpop.f32.mrb[0].mxu0
    %2935 = vdwg.mxu0
    %2936 = vmatprep.subr.bf16.mxu0 0
    %2937 = vmatpush1.bf16.msra.mxu0 %v2848
    %2938 = vmatprep.subr.bf16.mxu0 0
    %2939 = vmatpush1.bf16.msra.mxu0 %v2849
    %2940 = vmatprep.subr.bf16.mxu0 0
    %2941 = vmatpush1.bf16.msra.mxu0 %v2850
    %2942 = vmatprep.subr.bf16.mxu0 0
    %2943 = vmatpush1.bf16.msra.mxu0 %v2851
    %2944 = vmatprep.subr.bf16.mxu0 0
    %2945 = vmatpush1.bf16.msra.mxu0 %v2852
    %2946 = vmatprep.subr.bf16.mxu0 0
    %2947 = vmatpush1.bf16.msra.mxu0 %v2853
    %2948 = vmatprep.subr.bf16.mxu0 0
    %2949 = vmatpush1.bf16.msra.mxu0 %v2854
    %2950 = vmatprep.subr.bf16.mxu0 0
    %2951 = vmatpush1.bf16.msra.mxu0 %v2855
    %2952 = vmatprep.subr.bf16.mxu0 0
    %2953 = vmatpush1.bf16.msra.mxu0 %v2856
    %2954 = vmatprep.subr.bf16.mxu0 0
    %2955 = vmatpush1.bf16.msra.mxu0 %v2857
    %2956 = vmatprep.subr.bf16.mxu0 0
    %2957 = vmatpush1.bf16.msra.mxu0 %v2858
    %2958 = vmatprep.subr.bf16.mxu0 0
    %2959 = vmatpush1.bf16.msra.mxu0 %v2859
    %2960 = vmatprep.subr.bf16.mxu0 0
    %2961 = vmatpush1.bf16.msra.mxu0 %v2860
    %2962 = vmatprep.subr.bf16.mxu0 0
    %2963 = vmatpush1.bf16.msra.mxu0 %v2861
    %2964 = vmatprep.subr.bf16.mxu0 0
    %2965 = vmatpush1.bf16.msra.mxu0 %v2862
    %2966 = vmatprep.subr.bf16.mxu0 0
    %2967 = vmatpush1.bf16.msra.mxu0 %v2863
    %2968 = vmatprep.mubr.bf16.mxu0 %v333
    %2969 = vmatmul.mubr.bf16.gmra.mrb[0].mxu0 %v332
    %v2970 = vpop.f32.mrb[0].mxu0
    %v2971 = vadd.f32 %v2931, %v2970
    %v2972 = vpop.f32.mrb[0].mxu0
    %v2973 = vpop.f32.mrb[0].mxu0
    %v2974 = vpop.f32.mrb[0].mxu0
    %2975 = vdwg.mxu0
    %v2976 = vpack.c.bf16 %v2971, %v2971
    %v2977 = vpack.c.bf16 %v695, %v694
    %v2979 = vsel %vm1379, %v2977, 0
    %v2982 = vsel %vm1383, %v2976, 0
    %2984 = vmatprep.subr.bf16.mxu0 0
    %2985 = vmatpush1.bf16.msra.mxu0 %v2982
    %2986 = vmatprep.subr.bf16.mxu0 0
    %2987 = vmatpush1.bf16.msra.mxu0 0
    %2988 = vmatprep.subr.bf16.mxu0 0
    %2989 = vmatpush1.bf16.msra.mxu0 0
    %2990 = vmatprep.subr.bf16.mxu0 0
    %2991 = vmatpush1.bf16.msra.mxu0 0
    %2992 = vmatprep.subr.bf16.mxu0 0
    %2993 = vmatpush1.bf16.msra.mxu0 0
    %2994 = vmatprep.subr.bf16.mxu0 0
    %2995 = vmatpush1.bf16.msra.mxu0 0
    %2996 = vmatprep.subr.bf16.mxu0 0
    %2997 = vmatpush1.bf16.msra.mxu0 0
    %2998 = vmatprep.subr.bf16.mxu0 0
    %2999 = vmatpush1.bf16.msra.mxu0 0
    %3000 = vmatprep.subr.bf16.mxu0 0
    %3001 = vmatpush1.bf16.msra.mxu0 0
    %3002 = vmatprep.subr.bf16.mxu0 0
    %3003 = vmatpush1.bf16.msra.mxu0 0
    %3004 = vmatprep.subr.bf16.mxu0 0
    %3005 = vmatpush1.bf16.msra.mxu0 0
    %3006 = vmatprep.subr.bf16.mxu0 0
    %3007 = vmatpush1.bf16.msra.mxu0 0
    %3008 = vmatprep.subr.bf16.mxu0 0
    %3009 = vmatpush1.bf16.msra.mxu0 0
    %3010 = vmatprep.subr.bf16.mxu0 0
    %3011 = vmatpush1.bf16.msra.mxu0 0
    %3012 = vmatprep.subr.bf16.mxu0 0
    %3013 = vmatpush1.bf16.msra.mxu0 0
    %3014 = vmatprep.subr.bf16.mxu0 0
    %3015 = vmatpush1.bf16.msra.mxu0 0
    %3016 = vmatprep.mubr.bf16.mxu0 0
    %3017 = vmatmul.mubr.bf16.gmra.mrb[0].mxu0 %v2979
    %v3018 = vpop.f32.mrb[0].mxu0
    %v3019 = vadd.f32 0.0, %v3018
    %v3020 = vpop.f32.mrb[0].mxu0
    %v3021 = vpop.f32.mrb[0].mxu0
    %v3022 = vadd.f32 0.0, %v3021
    %v3023 = vpop.f32.mrb[0].mxu0
    %3024 = vdwg.mxu0
    %v3025 = vadd.f32 %v2637, %v3019
    %v3026 = vadd.f32 %v2638, %v3022
    %s3027 = scalar_lea.vmem %s4, 1536
    %v3028 = vld [vmem:[%s3027] sm:$0xf]
    %v3029 = vld [vmem:[%s3027 + $0x4] sm:$0xf]
    %v3030 = vld [vmem:[%s3027 + $0x8] sm:$0xf]
    %v3031 = vld [vmem:[%s3027 + $0xc] sm:$0xf]
    %v3032 = vld [vmem:[%s3027 + $0x10] sm:$0xf]
    %v3033 = vld [vmem:[%s3027 + $0x14] sm:$0xf]
    %v3034 = vld [vmem:[%s3027 + $0x18] sm:$0xf]
    %v3035 = vld [vmem:[%s3027 + $0x1c] sm:$0xf]
    %v3036 = vld [vmem:[%s3027 + $0x20] sm:$0xf]
    %v3037 = vld [vmem:[%s3027 + $0x24] sm:$0xf]
    %v3038 = vld [vmem:[%s3027 + $0x28] sm:$0xf]
    %v3039 = vld [vmem:[%s3027 + $0x2c] sm:$0xf]
    %v3040 = vld [vmem:[%s3027 + $0x30] sm:$0xf]
    %v3041 = vld [vmem:[%s3027 + $0x34] sm:$0xf]
    %v3042 = vld [vmem:[%s3027 + $0x38] sm:$0xf]
    %v3043 = vld [vmem:[%s3027 + $0x3c] sm:$0xf]
    %v3044 = vld [vmem:[%s3027 + $0x40] sm:$0xf]
    %v3045 = vld [vmem:[%s3027 + $0x44] sm:$0xf]
    %v3046 = vld [vmem:[%s3027 + $0x48] sm:$0xf]
    %v3047 = vld [vmem:[%s3027 + $0x4c] sm:$0xf]
    %v3048 = vld [vmem:[%s3027 + $0x50] sm:$0xf]
    %v3049 = vld [vmem:[%s3027 + $0x54] sm:$0xf]
    %v3050 = vld [vmem:[%s3027 + $0x58] sm:$0xf]
    %v3051 = vld [vmem:[%s3027 + $0x5c] sm:$0xf]
    %v3052 = vld [vmem:[%s3027 + $0x60] sm:$0xf]
    %v3053 = vld [vmem:[%s3027 + $0x64] sm:$0xf]
    %v3054 = vld [vmem:[%s3027 + $0x68] sm:$0xf]
    %v3055 = vld [vmem:[%s3027 + $0x6c] sm:$0xf]
    %v3056 = vld [vmem:[%s3027 + $0x70] sm:$0xf]
    %v3057 = vld [vmem:[%s3027 + $0x74] sm:$0xf]
    %v3058 = vld [vmem:[%s3027 + $0x78] sm:$0xf]
    %v3059 = vld [vmem:[%s3027 + $0x7c] sm:$0xf]
    %v3060 = vld [vmem:[%s3027 + $0x80] sm:$0xf]
    %v3061 = vld [vmem:[%s3027 + $0x84] sm:$0xf]
    %v3062 = vld [vmem:[%s3027 + $0x88] sm:$0xf]
    %v3063 = vld [vmem:[%s3027 + $0x8c] sm:$0xf]
    %v3064 = vld [vmem:[%s3027 + $0x90] sm:$0xf]
    %v3065 = vld [vmem:[%s3027 + $0x94] sm:$0xf]
    %v3066 = vld [vmem:[%s3027 + $0x98] sm:$0xf]
    %v3067 = vld [vmem:[%s3027 + $0x9c] sm:$0xf]
    %v3068 = vld [vmem:[%s3027 + $0xa0] sm:$0xf]
    %v3069 = vld [vmem:[%s3027 + $0xa4] sm:$0xf]
    %v3070 = vld [vmem:[%s3027 + $0xa8] sm:$0xf]
    %v3071 = vld [vmem:[%s3027 + $0xac] sm:$0xf]
    %v3072 = vld [vmem:[%s3027 + $0xb0] sm:$0xf]
    %v3073 = vld [vmem:[%s3027 + $0xb4] sm:$0xf]
    %v3074 = vld [vmem:[%s3027 + $0xb8] sm:$0xf]
    %v3075 = vld [vmem:[%s3027 + $0xbc] sm:$0xf]
    %v3076 = vld [vmem:[%s3027 + $0xc0] sm:$0xf]
    %v3077 = vld [vmem:[%s3027 + $0xc4] sm:$0xf]
    %v3078 = vld [vmem:[%s3027 + $0xc8] sm:$0xf]
    %v3079 = vld [vmem:[%s3027 + $0xcc] sm:$0xf]
    %v3080 = vld [vmem:[%s3027 + $0xd0] sm:$0xf]
    %v3081 = vld [vmem:[%s3027 + $0xd4] sm:$0xf]
    %v3082 = vld [vmem:[%s3027 + $0xd8] sm:$0xf]
    %v3083 = vld [vmem:[%s3027 + $0xdc] sm:$0xf]
    %v3084 = vld [vmem:[%s3027 + $0xe0] sm:$0xf]
    %v3085 = vld [vmem:[%s3027 + $0xe4] sm:$0xf]
    %v3086 = vld [vmem:[%s3027 + $0xe8] sm:$0xf]
    %v3087 = vld [vmem:[%s3027 + $0xec] sm:$0xf]
    %v3088 = vld [vmem:[%s3027 + $0xf0] sm:$0xf]
    %v3089 = vld [vmem:[%s3027 + $0xf4] sm:$0xf]
    %v3090 = vld [vmem:[%s3027 + $0xf8] sm:$0xf]
    %v3091 = vld [vmem:[%s3027 + $0xfc] sm:$0xf]
    %v3156 = vunpack.c.l.b16 %v3028
    %v3157 = vunpack.c.l.b16 %v3029
    %v3158 = vunpack.c.l.b16 %v3030
    %v3159 = vunpack.c.l.b16 %v3031
    %v3160 = vunpack.c.l.b16 %v3032
    %v3161 = vunpack.c.l.b16 %v3033
    %v3162 = vunpack.c.l.b16 %v3034
    %v3163 = vunpack.c.l.b16 %v3035
    %v3164 = vunpack.c.l.b16 %v3036
    %v3165 = vunpack.c.l.b16 %v3037
    %v3166 = vunpack.c.l.b16 %v3038
    %v3167 = vunpack.c.l.b16 %v3039
    %v3168 = vunpack.c.l.b16 %v3040
    %v3169 = vunpack.c.l.b16 %v3041
    %v3170 = vunpack.c.l.b16 %v3042
    %v3171 = vunpack.c.l.b16 %v3043
    %v3172 = vunpack.c.l.b16 %v3044
    %v3173 = vunpack.c.l.b16 %v3045
    %v3174 = vunpack.c.l.b16 %v3046
    %v3175 = vunpack.c.l.b16 %v3047
    %v3176 = vunpack.c.l.b16 %v3048
    %v3177 = vunpack.c.l.b16 %v3049
    %v3178 = vunpack.c.l.b16 %v3050
    %v3179 = vunpack.c.l.b16 %v3051
    %v3180 = vunpack.c.l.b16 %v3052
    %v3181 = vunpack.c.l.b16 %v3053
    %v3182 = vunpack.c.l.b16 %v3054
    %v3183 = vunpack.c.l.b16 %v3055
    %v3184 = vunpack.c.l.b16 %v3056
    %v3185 = vunpack.c.l.b16 %v3057
    %v3186 = vunpack.c.l.b16 %v3058
    %v3187 = vunpack.c.l.b16 %v3059
    %v3188 = vunpack.c.l.b16 %v3060
    %v3189 = vunpack.c.l.b16 %v3061
    %v3190 = vunpack.c.l.b16 %v3062
    %v3191 = vunpack.c.l.b16 %v3063
    %v3192 = vunpack.c.l.b16 %v3064
    %v3193 = vunpack.c.l.b16 %v3065
    %v3194 = vunpack.c.l.b16 %v3066
    %v3195 = vunpack.c.l.b16 %v3067
    %v3196 = vunpack.c.l.b16 %v3068
    %v3197 = vunpack.c.l.b16 %v3069
    %v3198 = vunpack.c.l.b16 %v3070
    %v3199 = vunpack.c.l.b16 %v3071
    %v3200 = vunpack.c.l.b16 %v3072
    %v3201 = vunpack.c.l.b16 %v3073
    %v3202 = vunpack.c.l.b16 %v3074
    %v3203 = vunpack.c.l.b16 %v3075
    %v3204 = vunpack.c.l.b16 %v3076
    %v3205 = vunpack.c.l.b16 %v3077
    %v3206 = vunpack.c.l.b16 %v3078
    %v3207 = vunpack.c.l.b16 %v3079
    %v3208 = vunpack.c.l.b16 %v3080
    %v3209 = vunpack.c.l.b16 %v3081
    %v3210 = vunpack.c.l.b16 %v3082
    %v3211 = vunpack.c.l.b16 %v3083
    %v3212 = vunpack.c.l.b16 %v3084
    %v3213 = vunpack.c.l.b16 %v3085
    %v3214 = vunpack.c.l.b16 %v3086
    %v3215 = vunpack.c.l.b16 %v3087
    %v3216 = vunpack.c.l.b16 %v3088
    %v3217 = vunpack.c.l.b16 %v3089
    %v3218 = vunpack.c.l.b16 %v3090
    %v3219 = vunpack.c.l.b16 %v3091
    %v3220 = vpack.c.b16 %v3157, %v3156
    %v3221 = vpack.c.b16 %v3159, %v3158
    %v3222 = vpack.c.b16 %v3161, %v3160
    %v3223 = vpack.c.b16 %v3163, %v3162
    %v3224 = vpack.c.b16 %v3165, %v3164
    %v3225 = vpack.c.b16 %v3167, %v3166
    %v3226 = vpack.c.b16 %v3169, %v3168
    %v3227 = vpack.c.b16 %v3171, %v3170
    %v3228 = vpack.c.b16 %v3173, %v3172
    %v3229 = vpack.c.b16 %v3175, %v3174
    %v3230 = vpack.c.b16 %v3177, %v3176
    %v3231 = vpack.c.b16 %v3179, %v3178
    %v3232 = vpack.c.b16 %v3181, %v3180
    %v3233 = vpack.c.b16 %v3183, %v3182
    %v3234 = vpack.c.b16 %v3185, %v3184
    %v3235 = vpack.c.b16 %v3187, %v3186
    %v3236 = vpack.c.b16 %v3189, %v3188
    %v3237 = vpack.c.b16 %v3191, %v3190
    %v3238 = vpack.c.b16 %v3193, %v3192
    %v3239 = vpack.c.b16 %v3195, %v3194
    %v3240 = vpack.c.b16 %v3197, %v3196
    %v3241 = vpack.c.b16 %v3199, %v3198
    %v3242 = vpack.c.b16 %v3201, %v3200
    %v3243 = vpack.c.b16 %v3203, %v3202
    %v3244 = vpack.c.b16 %v3205, %v3204
    %v3245 = vpack.c.b16 %v3207, %v3206
    %v3246 = vpack.c.b16 %v3209, %v3208
    %v3247 = vpack.c.b16 %v3211, %v3210
    %v3248 = vpack.c.b16 %v3213, %v3212
    %v3249 = vpack.c.b16 %v3215, %v3214
    %v3250 = vpack.c.b16 %v3217, %v3216
    %v3251 = vpack.c.b16 %v3219, %v3218
    %3284 = vmatprep.subr.bf16.mxu0 0
    %3285 = vmatpush1.bf16.msra.mxu0 %v3220
    %3286 = vmatprep.subr.bf16.mxu0 0
    %3287 = vmatpush1.bf16.msra.mxu0 %v3221
    %3288 = vmatprep.subr.bf16.mxu0 0
    %3289 = vmatpush1.bf16.msra.mxu0 %v3222
    %3290 = vmatprep.subr.bf16.mxu0 0
    %3291 = vmatpush1.bf16.msra.mxu0 %v3223
    %3292 = vmatprep.subr.bf16.mxu0 0
    %3293 = vmatpush1.bf16.msra.mxu0 %v3224
    %3294 = vmatprep.subr.bf16.mxu0 0
    %3295 = vmatpush1.bf16.msra.mxu0 %v3225
    %3296 = vmatprep.subr.bf16.mxu0 0
    %3297 = vmatpush1.bf16.msra.mxu0 %v3226
    %3298 = vmatprep.subr.bf16.mxu0 0
    %3299 = vmatpush1.bf16.msra.mxu0 %v3227
    %3300 = vmatprep.subr.bf16.mxu0 0
    %3301 = vmatpush1.bf16.msra.mxu0 %v3228
    %3302 = vmatprep.subr.bf16.mxu0 0
    %3303 = vmatpush1.bf16.msra.mxu0 %v3229
    %3304 = vmatprep.subr.bf16.mxu0 0
    %3305 = vmatpush1.bf16.msra.mxu0 %v3230
    %3306 = vmatprep.subr.bf16.mxu0 0
    %3307 = vmatpush1.bf16.msra.mxu0 %v3231
    %3308 = vmatprep.subr.bf16.mxu0 0
    %3309 = vmatpush1.bf16.msra.mxu0 %v3232
    %3310 = vmatprep.subr.bf16.mxu0 0
    %3311 = vmatpush1.bf16.msra.mxu0 %v3233
    %3312 = vmatprep.subr.bf16.mxu0 0
    %3313 = vmatpush1.bf16.msra.mxu0 %v3234
    %3314 = vmatprep.subr.bf16.mxu0 0
    %3315 = vmatpush1.bf16.msra.mxu0 %v3235
    %3316 = vmatprep.mubr.bf16.mxu0 %v331
    %3317 = vmatmul.mubr.bf16.gmra.mrb[0].mxu0 %v330
    %v3318 = vpop.f32.mrb[0].mxu0
    %v3319 = vadd.f32 0.0, %v3318
    %v3320 = vpop.f32.mrb[0].mxu0
    %v3321 = vpop.f32.mrb[0].mxu0
    %v3322 = vpop.f32.mrb[0].mxu0
    %3323 = vdwg.mxu0
    %3324 = vmatprep.subr.bf16.mxu0 0
    %3325 = vmatpush1.bf16.msra.mxu0 %v3236
    %3326 = vmatprep.subr.bf16.mxu0 0
    %3327 = vmatpush1.bf16.msra.mxu0 %v3237
    %3328 = vmatprep.subr.bf16.mxu0 0
    %3329 = vmatpush1.bf16.msra.mxu0 %v3238
    %3330 = vmatprep.subr.bf16.mxu0 0
    %3331 = vmatpush1.bf16.msra.mxu0 %v3239
    %3332 = vmatprep.subr.bf16.mxu0 0
    %3333 = vmatpush1.bf16.msra.mxu0 %v3240
    %3334 = vmatprep.subr.bf16.mxu0 0
    %3335 = vmatpush1.bf16.msra.mxu0 %v3241
    %3336 = vmatprep.subr.bf16.mxu0 0
    %3337 = vmatpush1.bf16.msra.mxu0 %v3242
    %3338 = vmatprep.subr.bf16.mxu0 0
    %3339 = vmatpush1.bf16.msra.mxu0 %v3243
    %3340 = vmatprep.subr.bf16.mxu0 0
    %3341 = vmatpush1.bf16.msra.mxu0 %v3244
    %3342 = vmatprep.subr.bf16.mxu0 0
    %3343 = vmatpush1.bf16.msra.mxu0 %v3245
    %3344 = vmatprep.subr.bf16.mxu0 0
    %3345 = vmatpush1.bf16.msra.mxu0 %v3246
    %3346 = vmatprep.subr.bf16.mxu0 0
    %3347 = vmatpush1.bf16.msra.mxu0 %v3247
    %3348 = vmatprep.subr.bf16.mxu0 0
    %3349 = vmatpush1.bf16.msra.mxu0 %v3248
    %3350 = vmatprep.subr.bf16.mxu0 0
    %3351 = vmatpush1.bf16.msra.mxu0 %v3249
    %3352 = vmatprep.subr.bf16.mxu0 0
    %3353 = vmatpush1.bf16.msra.mxu0 %v3250
    %3354 = vmatprep.subr.bf16.mxu0 0
    %3355 = vmatpush1.bf16.msra.mxu0 %v3251
    %3356 = vmatprep.mubr.bf16.mxu0 %v333
    %3357 = vmatmul.mubr.bf16.gmra.mrb[0].mxu0 %v332
    %v3358 = vpop.f32.mrb[0].mxu0
    %v3359 = vadd.f32 %v3319, %v3358
    %v3360 = vpop.f32.mrb[0].mxu0
    %v3361 = vpop.f32.mrb[0].mxu0
    %v3362 = vpop.f32.mrb[0].mxu0
    %3363 = vdwg.mxu0
    %v3364 = vpack.c.bf16 %v3359, %v3359
    %v3365 = vpack.c.bf16 %v697, %v696
    %v3367 = vsel %vm1379, %v3365, 0
    %v3370 = vsel %vm1383, %v3364, 0
    %3372 = vmatprep.subr.bf16.mxu0 0
    %3373 = vmatpush1.bf16.msra.mxu0 %v3370
    %3374 = vmatprep.subr.bf16.mxu0 0
    %3375 = vmatpush1.bf16.msra.mxu0 0
    %3376 = vmatprep.subr.bf16.mxu0 0
    %3377 = vmatpush1.bf16.msra.mxu0 0
    %3378 = vmatprep.subr.bf16.mxu0 0
    %3379 = vmatpush1.bf16.msra.mxu0 0
    %3380 = vmatprep.subr.bf16.mxu0 0
    %3381 = vmatpush1.bf16.msra.mxu0 0
    %3382 = vmatprep.subr.bf16.mxu0 0
    %3383 = vmatpush1.bf16.msra.mxu0 0
    %3384 = vmatprep.subr.bf16.mxu0 0
    %3385 = vmatpush1.bf16.msra.mxu0 0
    %3386 = vmatprep.subr.bf16.mxu0 0
    %3387 = vmatpush1.bf16.msra.mxu0 0
    %3388 = vmatprep.subr.bf16.mxu0 0
    %3389 = vmatpush1.bf16.msra.mxu0 0
    %3390 = vmatprep.subr.bf16.mxu0 0
    %3391 = vmatpush1.bf16.msra.mxu0 0
    %3392 = vmatprep.subr.bf16.mxu0 0
    %3393 = vmatpush1.bf16.msra.mxu0 0
    %3394 = vmatprep.subr.bf16.mxu0 0
    %3395 = vmatpush1.bf16.msra.mxu0 0
    %3396 = vmatprep.subr.bf16.mxu0 0
    %3397 = vmatpush1.bf16.msra.mxu0 0
    %3398 = vmatprep.subr.bf16.mxu0 0
    %3399 = vmatpush1.bf16.msra.mxu0 0
    %3400 = vmatprep.subr.bf16.mxu0 0
    %3401 = vmatpush1.bf16.msra.mxu0 0
    %3402 = vmatprep.subr.bf16.mxu0 0
    %3403 = vmatpush1.bf16.msra.mxu0 0
    %3404 = vmatprep.mubr.bf16.mxu0 0
    %3405 = vmatmul.mubr.bf16.gmra.mrb[0].mxu0 %v3367
    %v3406 = vpop.f32.mrb[0].mxu0
    %v3407 = vadd.f32 0.0, %v3406
    %v3408 = vpop.f32.mrb[0].mxu0
    %v3409 = vpop.f32.mrb[0].mxu0
    %v3410 = vadd.f32 0.0, %v3409
    %v3411 = vpop.f32.mrb[0].mxu0
    %3412 = vdwg.mxu0
    %v3413 = vadd.f32 %v3025, %v3407
    %v3414 = vadd.f32 %v3026, %v3410
    %s3415 = scalar_lea.vmem %s4, 1792
    %v3416 = vld [vmem:[%s3415] sm:$0xf]
    %v3417 = vld [vmem:[%s3415 + $0x4] sm:$0xf]
    %v3418 = vld [vmem:[%s3415 + $0x8] sm:$0xf]
    %v3419 = vld [vmem:[%s3415 + $0xc] sm:$0xf]
    %v3420 = vld [vmem:[%s3415 + $0x10] sm:$0xf]
    %v3421 = vld [vmem:[%s3415 + $0x14] sm:$0xf]
    %v3422 = vld [vmem:[%s3415 + $0x18] sm:$0xf]
    %v3423 = vld [vmem:[%s3415 + $0x1c] sm:$0xf]
    %v3424 = vld [vmem:[%s3415 + $0x20] sm:$0xf]
    %v3425 = vld [vmem:[%s3415 + $0x24] sm:$0xf]
    %v3426 = vld [vmem:[%s3415 + $0x28] sm:$0xf]
    %v3427 = vld [vmem:[%s3415 + $0x2c] sm:$0xf]
    %v3428 = vld [vmem:[%s3415 + $0x30] sm:$0xf]
    %v3429 = vld [vmem:[%s3415 + $0x34] sm:$0xf]
    %v3430 = vld [vmem:[%s3415 + $0x38] sm:$0xf]
    %v3431 = vld [vmem:[%s3415 + $0x3c] sm:$0xf]
    %v3432 = vld [vmem:[%s3415 + $0x40] sm:$0xf]
    %v3433 = vld [vmem:[%s3415 + $0x44] sm:$0xf]
    %v3434 = vld [vmem:[%s3415 + $0x48] sm:$0xf]
    %v3435 = vld [vmem:[%s3415 + $0x4c] sm:$0xf]
    %v3436 = vld [vmem:[%s3415 + $0x50] sm:$0xf]
    %v3437 = vld [vmem:[%s3415 + $0x54] sm:$0xf]
    %v3438 = vld [vmem:[%s3415 + $0x58] sm:$0xf]
    %v3439 = vld [vmem:[%s3415 + $0x5c] sm:$0xf]
    %v3440 = vld [vmem:[%s3415 + $0x60] sm:$0xf]
    %v3441 = vld [vmem:[%s3415 + $0x64] sm:$0xf]
    %v3442 = vld [vmem:[%s3415 + $0x68] sm:$0xf]
    %v3443 = vld [vmem:[%s3415 + $0x6c] sm:$0xf]
    %v3444 = vld [vmem:[%s3415 + $0x70] sm:$0xf]
    %v3445 = vld [vmem:[%s3415 + $0x74] sm:$0xf]
    %v3446 = vld [vmem:[%s3415 + $0x78] sm:$0xf]
    %v3447 = vld [vmem:[%s3415 + $0x7c] sm:$0xf]
    %v3448 = vld [vmem:[%s3415 + $0x80] sm:$0xf]
    %v3449 = vld [vmem:[%s3415 + $0x84] sm:$0xf]
    %v3450 = vld [vmem:[%s3415 + $0x88] sm:$0xf]
    %v3451 = vld [vmem:[%s3415 + $0x8c] sm:$0xf]
    %v3452 = vld [vmem:[%s3415 + $0x90] sm:$0xf]
    %v3453 = vld [vmem:[%s3415 + $0x94] sm:$0xf]
    %v3454 = vld [vmem:[%s3415 + $0x98] sm:$0xf]
    %v3455 = vld [vmem:[%s3415 + $0x9c] sm:$0xf]
    %v3456 = vld [vmem:[%s3415 + $0xa0] sm:$0xf]
    %v3457 = vld [vmem:[%s3415 + $0xa4] sm:$0xf]
    %v3458 = vld [vmem:[%s3415 + $0xa8] sm:$0xf]
    %v3459 = vld [vmem:[%s3415 + $0xac] sm:$0xf]
    %v3460 = vld [vmem:[%s3415 + $0xb0] sm:$0xf]
    %v3461 = vld [vmem:[%s3415 + $0xb4] sm:$0xf]
    %v3462 = vld [vmem:[%s3415 + $0xb8] sm:$0xf]
    %v3463 = vld [vmem:[%s3415 + $0xbc] sm:$0xf]
    %v3464 = vld [vmem:[%s3415 + $0xc0] sm:$0xf]
    %v3465 = vld [vmem:[%s3415 + $0xc4] sm:$0xf]
    %v3466 = vld [vmem:[%s3415 + $0xc8] sm:$0xf]
    %v3467 = vld [vmem:[%s3415 + $0xcc] sm:$0xf]
    %v3468 = vld [vmem:[%s3415 + $0xd0] sm:$0xf]
    %v3469 = vld [vmem:[%s3415 + $0xd4] sm:$0xf]
    %v3470 = vld [vmem:[%s3415 + $0xd8] sm:$0xf]
    %v3471 = vld [vmem:[%s3415 + $0xdc] sm:$0xf]
    %v3472 = vld [vmem:[%s3415 + $0xe0] sm:$0xf]
    %v3473 = vld [vmem:[%s3415 + $0xe4] sm:$0xf]
    %v3474 = vld [vmem:[%s3415 + $0xe8] sm:$0xf]
    %v3475 = vld [vmem:[%s3415 + $0xec] sm:$0xf]
    %v3476 = vld [vmem:[%s3415 + $0xf0] sm:$0xf]
    %v3477 = vld [vmem:[%s3415 + $0xf4] sm:$0xf]
    %v3478 = vld [vmem:[%s3415 + $0xf8] sm:$0xf]
    %v3479 = vld [vmem:[%s3415 + $0xfc] sm:$0xf]
    %v3544 = vunpack.c.l.b16 %v3416
    %v3545 = vunpack.c.l.b16 %v3417
    %v3546 = vunpack.c.l.b16 %v3418
    %v3547 = vunpack.c.l.b16 %v3419
    %v3548 = vunpack.c.l.b16 %v3420
    %v3549 = vunpack.c.l.b16 %v3421
    %v3550 = vunpack.c.l.b16 %v3422
    %v3551 = vunpack.c.l.b16 %v3423
    %v3552 = vunpack.c.l.b16 %v3424
    %v3553 = vunpack.c.l.b16 %v3425
    %v3554 = vunpack.c.l.b16 %v3426
    %v3555 = vunpack.c.l.b16 %v3427
    %v3556 = vunpack.c.l.b16 %v3428
    %v3557 = vunpack.c.l.b16 %v3429
    %v3558 = vunpack.c.l.b16 %v3430
    %v3559 = vunpack.c.l.b16 %v3431
    %v3560 = vunpack.c.l.b16 %v3432
    %v3561 = vunpack.c.l.b16 %v3433
    %v3562 = vunpack.c.l.b16 %v3434
    %v3563 = vunpack.c.l.b16 %v3435
    %v3564 = vunpack.c.l.b16 %v3436
    %v3565 = vunpack.c.l.b16 %v3437
    %v3566 = vunpack.c.l.b16 %v3438
    %v3567 = vunpack.c.l.b16 %v3439
    %v3568 = vunpack.c.l.b16 %v3440
    %v3569 = vunpack.c.l.b16 %v3441
    %v3570 = vunpack.c.l.b16 %v3442
    %v3571 = vunpack.c.l.b16 %v3443
    %v3572 = vunpack.c.l.b16 %v3444
    %v3573 = vunpack.c.l.b16 %v3445
    %v3574 = vunpack.c.l.b16 %v3446
    %v3575 = vunpack.c.l.b16 %v3447
    %v3576 = vunpack.c.l.b16 %v3448
    %v3577 = vunpack.c.l.b16 %v3449
    %v3578 = vunpack.c.l.b16 %v3450
    %v3579 = vunpack.c.l.b16 %v3451
    %v3580 = vunpack.c.l.b16 %v3452
    %v3581 = vunpack.c.l.b16 %v3453
    %v3582 = vunpack.c.l.b16 %v3454
    %v3583 = vunpack.c.l.b16 %v3455
    %v3584 = vunpack.c.l.b16 %v3456
    %v3585 = vunpack.c.l.b16 %v3457
    %v3586 = vunpack.c.l.b16 %v3458
    %v3587 = vunpack.c.l.b16 %v3459
    %v3588 = vunpack.c.l.b16 %v3460
    %v3589 = vunpack.c.l.b16 %v3461
    %v3590 = vunpack.c.l.b16 %v3462
    %v3591 = vunpack.c.l.b16 %v3463
    %v3592 = vunpack.c.l.b16 %v3464
    %v3593 = vunpack.c.l.b16 %v3465
    %v3594 = vunpack.c.l.b16 %v3466
    %v3595 = vunpack.c.l.b16 %v3467
    %v3596 = vunpack.c.l.b16 %v3468
    %v3597 = vunpack.c.l.b16 %v3469
    %v3598 = vunpack.c.l.b16 %v3470
    %v3599 = vunpack.c.l.b16 %v3471
    %v3600 = vunpack.c.l.b16 %v3472
    %v3601 = vunpack.c.l.b16 %v3473
    %v3602 = vunpack.c.l.b16 %v3474
    %v3603 = vunpack.c.l.b16 %v3475
    %v3604 = vunpack.c.l.b16 %v3476
    %v3605 = vunpack.c.l.b16 %v3477
    %v3606 = vunpack.c.l.b16 %v3478
    %v3607 = vunpack.c.l.b16 %v3479
    %v3608 = vpack.c.b16 %v3545, %v3544
    %v3609 = vpack.c.b16 %v3547, %v3546
    %v3610 = vpack.c.b16 %v3549, %v3548
    %v3611 = vpack.c.b16 %v3551, %v3550
    %v3612 = vpack.c.b16 %v3553, %v3552
    %v3613 = vpack.c.b16 %v3555, %v3554
    %v3614 = vpack.c.b16 %v3557, %v3556
    %v3615 = vpack.c.b16 %v3559, %v3558
    %v3616 = vpack.c.b16 %v3561, %v3560
    %v3617 = vpack.c.b16 %v3563, %v3562
    %v3618 = vpack.c.b16 %v3565, %v3564
    %v3619 = vpack.c.b16 %v3567, %v3566
    %v3620 = vpack.c.b16 %v3569, %v3568
    %v3621 = vpack.c.b16 %v3571, %v3570
    %v3622 = vpack.c.b16 %v3573, %v3572
    %v3623 = vpack.c.b16 %v3575, %v3574
    %v3624 = vpack.c.b16 %v3577, %v3576
    %v3625 = vpack.c.b16 %v3579, %v3578
    %v3626 = vpack.c.b16 %v3581, %v3580
    %v3627 = vpack.c.b16 %v3583, %v3582
    %v3628 = vpack.c.b16 %v3585, %v3584
    %v3629 = vpack.c.b16 %v3587, %v3586
    %v3630 = vpack.c.b16 %v3589, %v3588
    %v3631 = vpack.c.b16 %v3591, %v3590
    %v3632 = vpack.c.b16 %v3593, %v3592
    %v3633 = vpack.c.b16 %v3595, %v3594
    %v3634 = vpack.c.b16 %v3597, %v3596
    %v3635 = vpack.c.b16 %v3599, %v3598
    %v3636 = vpack.c.b16 %v3601, %v3600
    %v3637 = vpack.c.b16 %v3603, %v3602
    %v3638 = vpack.c.b16 %v3605, %v3604
    %v3639 = vpack.c.b16 %v3607, %v3606
    %3672 = vmatprep.subr.bf16.mxu0 0
    %3673 = vmatpush1.bf16.msra.mxu0 %v3608
    %3674 = vmatprep.subr.bf16.mxu0 0
    %3675 = vmatpush1.bf16.msra.mxu0 %v3609
    %3676 = vmatprep.subr.bf16.mxu0 0
    %3677 = vmatpush1.bf16.msra.mxu0 %v3610
    %3678 = vmatprep.subr.bf16.mxu0 0
    %3679 = vmatpush1.bf16.msra.mxu0 %v3611
    %3680 = vmatprep.subr.bf16.mxu0 0
    %3681 = vmatpush1.bf16.msra.mxu0 %v3612
    %3682 = vmatprep.subr.bf16.mxu0 0
    %3683 = vmatpush1.bf16.msra.mxu0 %v3613
    %3684 = vmatprep.subr.bf16.mxu0 0
    %3685 = vmatpush1.bf16.msra.mxu0 %v3614
    %3686 = vmatprep.subr.bf16.mxu0 0
    %3687 = vmatpush1.bf16.msra.mxu0 %v3615
    %3688 = vmatprep.subr.bf16.mxu0 0
    %3689 = vmatpush1.bf16.msra.mxu0 %v3616
    %3690 = vmatprep.subr.bf16.mxu0 0
    %3691 = vmatpush1.bf16.msra.mxu0 %v3617
    %3692 = vmatprep.subr.bf16.mxu0 0
    %3693 = vmatpush1.bf16.msra.mxu0 %v3618
    %3694 = vmatprep.subr.bf16.mxu0 0
    %3695 = vmatpush1.bf16.msra.mxu0 %v3619
    %3696 = vmatprep.subr.bf16.mxu0 0
    %3697 = vmatpush1.bf16.msra.mxu0 %v3620
    %3698 = vmatprep.subr.bf16.mxu0 0
    %3699 = vmatpush1.bf16.msra.mxu0 %v3621
    %3700 = vmatprep.subr.bf16.mxu0 0
    %3701 = vmatpush1.bf16.msra.mxu0 %v3622
    %3702 = vmatprep.subr.bf16.mxu0 0
    %3703 = vmatpush1.bf16.msra.mxu0 %v3623
    %3704 = vmatprep.mubr.bf16.mxu0 %v331
    %3705 = vmatmul.mubr.bf16.gmra.mrb[0].mxu0 %v330
    %v3706 = vpop.f32.mrb[0].mxu0
    %v3707 = vadd.f32 0.0, %v3706
    %v3708 = vpop.f32.mrb[0].mxu0
    %v3709 = vpop.f32.mrb[0].mxu0
    %v3710 = vpop.f32.mrb[0].mxu0
    %3711 = vdwg.mxu0
    %3712 = vmatprep.subr.bf16.mxu0 0
    %3713 = vmatpush1.bf16.msra.mxu0 %v3624
    %3714 = vmatprep.subr.bf16.mxu0 0
    %3715 = vmatpush1.bf16.msra.mxu0 %v3625
    %3716 = vmatprep.subr.bf16.mxu0 0
    %3717 = vmatpush1.bf16.msra.mxu0 %v3626
    %3718 = vmatprep.subr.bf16.mxu0 0
    %3719 = vmatpush1.bf16.msra.mxu0 %v3627
    %3720 = vmatprep.subr.bf16.mxu0 0
    %3721 = vmatpush1.bf16.msra.mxu0 %v3628
    %3722 = vmatprep.subr.bf16.mxu0 0
    %3723 = vmatpush1.bf16.msra.mxu0 %v3629
    %3724 = vmatprep.subr.bf16.mxu0 0
    %3725 = vmatpush1.bf16.msra.mxu0 %v3630
    %3726 = vmatprep.subr.bf16.mxu0 0
    %3727 = vmatpush1.bf16.msra.mxu0 %v3631
    %3728 = vmatprep.subr.bf16.mxu0 0
    %3729 = vmatpush1.bf16.msra.mxu0 %v3632
    %3730 = vmatprep.subr.bf16.mxu0 0
    %3731 = vmatpush1.bf16.msra.mxu0 %v3633
    %3732 = vmatprep.subr.bf16.mxu0 0
    %3733 = vmatpush1.bf16.msra.mxu0 %v3634
    %3734 = vmatprep.subr.bf16.mxu0 0
    %3735 = vmatpush1.bf16.msra.mxu0 %v3635
    %3736 = vmatprep.subr.bf16.mxu0 0
    %3737 = vmatpush1.bf16.msra.mxu0 %v3636
    %3738 = vmatprep.subr.bf16.mxu0 0
    %3739 = vmatpush1.bf16.msra.mxu0 %v3637
    %3740 = vmatprep.subr.bf16.mxu0 0
    %3741 = vmatpush1.bf16.msra.mxu0 %v3638
    %3742 = vmatprep.subr.bf16.mxu0 0
    %3743 = vmatpush1.bf16.msra.mxu0 %v3639
    %3744 = vmatprep.mubr.bf16.mxu0 %v333
    %3745 = vmatmul.mubr.bf16.gmra.mrb[0].mxu0 %v332
    %v3746 = vpop.f32.mrb[0].mxu0
    %v3747 = vadd.f32 %v3707, %v3746
    %v3748 = vpop.f32.mrb[0].mxu0
    %v3749 = vpop.f32.mrb[0].mxu0
    %v3750 = vpop.f32.mrb[0].mxu0
    %3751 = vdwg.mxu0
    %v3752 = vpack.c.bf16 %v3747, %v3747
    %v3753 = vpack.c.bf16 %v699, %v698
    %v3755 = vsel %vm1379, %v3753, 0
    %v3758 = vsel %vm1383, %v3752, 0
    %3760 = vmatprep.subr.bf16.mxu0 0
    %3761 = vmatpush1.bf16.msra.mxu0 %v3758
    %3762 = vmatprep.subr.bf16.mxu0 0
    %3763 = vmatpush1.bf16.msra.mxu0 0
    %3764 = vmatprep.subr.bf16.mxu0 0
    %3765 = vmatpush1.bf16.msra.mxu0 0
    %3766 = vmatprep.subr.bf16.mxu0 0
    %3767 = vmatpush1.bf16.msra.mxu0 0
    %3768 = vmatprep.subr.bf16.mxu0 0
    %3769 = vmatpush1.bf16.msra.mxu0 0
    %3770 = vmatprep.subr.bf16.mxu0 0
    %3771 = vmatpush1.bf16.msra.mxu0 0
    %3772 = vmatprep.subr.bf16.mxu0 0
    %3773 = vmatpush1.bf16.msra.mxu0 0
    %3774 = vmatprep.subr.bf16.mxu0 0
    %3775 = vmatpush1.bf16.msra.mxu0 0
    %3776 = vmatprep.subr.bf16.mxu0 0
    %3777 = vmatpush1.bf16.msra.mxu0 0
    %3778 = vmatprep.subr.bf16.mxu0 0
    %3779 = vmatpush1.bf16.msra.mxu0 0
    %3780 = vmatprep.subr.bf16.mxu0 0
    %3781 = vmatpush1.bf16.msra.mxu0 0
    %3782 = vmatprep.subr.bf16.mxu0 0
    %3783 = vmatpush1.bf16.msra.mxu0 0
    %3784 = vmatprep.subr.bf16.mxu0 0
    %3785 = vmatpush1.bf16.msra.mxu0 0
    %3786 = vmatprep.subr.bf16.mxu0 0
    %3787 = vmatpush1.bf16.msra.mxu0 0
    %3788 = vmatprep.subr.bf16.mxu0 0
    %3789 = vmatpush1.bf16.msra.mxu0 0
    %3790 = vmatprep.subr.bf16.mxu0 0
    %3791 = vmatpush1.bf16.msra.mxu0 0
    %3792 = vmatprep.mubr.bf16.mxu0 0
    %3793 = vmatmul.mubr.bf16.gmra.mrb[0].mxu0 %v3755
    %v3794 = vpop.f32.mrb[0].mxu0
    %v3795 = vadd.f32 0.0, %v3794
    %v3796 = vpop.f32.mrb[0].mxu0
    %v3797 = vpop.f32.mrb[0].mxu0
    %v3798 = vadd.f32 0.0, %v3797
    %v3799 = vpop.f32.mrb[0].mxu0
    %3800 = vdwg.mxu0
    %v3801 = vadd.f32 %v3413, %v3795
    %v3802 = vadd.f32 %v3414, %v3798
    %s3803 = scalar_lea.vmem %s4, 2048
    %v3804 = vld [vmem:[%s3803] sm:$0xf]
    %v3805 = vld [vmem:[%s3803 + $0x4] sm:$0xf]
    %v3806 = vld [vmem:[%s3803 + $0x8] sm:$0xf]
    %v3807 = vld [vmem:[%s3803 + $0xc] sm:$0xf]
    %v3808 = vld [vmem:[%s3803 + $0x10] sm:$0xf]
    %v3809 = vld [vmem:[%s3803 + $0x14] sm:$0xf]
    %v3810 = vld [vmem:[%s3803 + $0x18] sm:$0xf]
    %v3811 = vld [vmem:[%s3803 + $0x1c] sm:$0xf]
    %v3812 = vld [vmem:[%s3803 + $0x20] sm:$0xf]
    %v3813 = vld [vmem:[%s3803 + $0x24] sm:$0xf]
    %v3814 = vld [vmem:[%s3803 + $0x28] sm:$0xf]
    %v3815 = vld [vmem:[%s3803 + $0x2c] sm:$0xf]
    %v3816 = vld [vmem:[%s3803 + $0x30] sm:$0xf]
    %v3817 = vld [vmem:[%s3803 + $0x34] sm:$0xf]
    %v3818 = vld [vmem:[%s3803 + $0x38] sm:$0xf]
    %v3819 = vld [vmem:[%s3803 + $0x3c] sm:$0xf]
    %v3820 = vld [vmem:[%s3803 + $0x40] sm:$0xf]
    %v3821 = vld [vmem:[%s3803 + $0x44] sm:$0xf]
    %v3822 = vld [vmem:[%s3803 + $0x48] sm:$0xf]
    %v3823 = vld [vmem:[%s3803 + $0x4c] sm:$0xf]
    %v3824 = vld [vmem:[%s3803 + $0x50] sm:$0xf]
    %v3825 = vld [vmem:[%s3803 + $0x54] sm:$0xf]
    %v3826 = vld [vmem:[%s3803 + $0x58] sm:$0xf]
    %v3827 = vld [vmem:[%s3803 + $0x5c] sm:$0xf]
    %v3828 = vld [vmem:[%s3803 + $0x60] sm:$0xf]
    %v3829 = vld [vmem:[%s3803 + $0x64] sm:$0xf]
    %v3830 = vld [vmem:[%s3803 + $0x68] sm:$0xf]
    %v3831 = vld [vmem:[%s3803 + $0x6c] sm:$0xf]
    %v3832 = vld [vmem:[%s3803 + $0x70] sm:$0xf]
    %v3833 = vld [vmem:[%s3803 + $0x74] sm:$0xf]
    %v3834 = vld [vmem:[%s3803 + $0x78] sm:$0xf]
    %v3835 = vld [vmem:[%s3803 + $0x7c] sm:$0xf]
    %v3836 = vld [vmem:[%s3803 + $0x80] sm:$0xf]
    %v3837 = vld [vmem:[%s3803 + $0x84] sm:$0xf]
    %v3838 = vld [vmem:[%s3803 + $0x88] sm:$0xf]
    %v3839 = vld [vmem:[%s3803 + $0x8c] sm:$0xf]
    %v3840 = vld [vmem:[%s3803 + $0x90] sm:$0xf]
    %v3841 = vld [vmem:[%s3803 + $0x94] sm:$0xf]
    %v3842 = vld [vmem:[%s3803 + $0x98] sm:$0xf]
    %v3843 = vld [vmem:[%s3803 + $0x9c] sm:$0xf]
    %v3844 = vld [vmem:[%s3803 + $0xa0] sm:$0xf]
    %v3845 = vld [vmem:[%s3803 + $0xa4] sm:$0xf]
    %v3846 = vld [vmem:[%s3803 + $0xa8] sm:$0xf]
    %v3847 = vld [vmem:[%s3803 + $0xac] sm:$0xf]
    %v3848 = vld [vmem:[%s3803 + $0xb0] sm:$0xf]
    %v3849 = vld [vmem:[%s3803 + $0xb4] sm:$0xf]
    %v3850 = vld [vmem:[%s3803 + $0xb8] sm:$0xf]
    %v3851 = vld [vmem:[%s3803 + $0xbc] sm:$0xf]
    %v3852 = vld [vmem:[%s3803 + $0xc0] sm:$0xf]
    %v3853 = vld [vmem:[%s3803 + $0xc4] sm:$0xf]
    %v3854 = vld [vmem:[%s3803 + $0xc8] sm:$0xf]
    %v3855 = vld [vmem:[%s3803 + $0xcc] sm:$0xf]
    %v3856 = vld [vmem:[%s3803 + $0xd0] sm:$0xf]
    %v3857 = vld [vmem:[%s3803 + $0xd4] sm:$0xf]
    %v3858 = vld [vmem:[%s3803 + $0xd8] sm:$0xf]
    %v3859 = vld [vmem:[%s3803 + $0xdc] sm:$0xf]
    %v3860 = vld [vmem:[%s3803 + $0xe0] sm:$0xf]
    %v3861 = vld [vmem:[%s3803 + $0xe4] sm:$0xf]
    %v3862 = vld [vmem:[%s3803 + $0xe8] sm:$0xf]
    %v3863 = vld [vmem:[%s3803 + $0xec] sm:$0xf]
    %v3864 = vld [vmem:[%s3803 + $0xf0] sm:$0xf]
    %v3865 = vld [vmem:[%s3803 + $0xf4] sm:$0xf]
    %v3866 = vld [vmem:[%s3803 + $0xf8] sm:$0xf]
    %v3867 = vld [vmem:[%s3803 + $0xfc] sm:$0xf]
    %v3932 = vunpack.c.l.b16 %v3804
    %v3933 = vunpack.c.l.b16 %v3805
    %v3934 = vunpack.c.l.b16 %v3806
    %v3935 = vunpack.c.l.b16 %v3807
    %v3936 = vunpack.c.l.b16 %v3808
    %v3937 = vunpack.c.l.b16 %v3809
    %v3938 = vunpack.c.l.b16 %v3810
    %v3939 = vunpack.c.l.b16 %v3811
    %v3940 = vunpack.c.l.b16 %v3812
    %v3941 = vunpack.c.l.b16 %v3813
    %v3942 = vunpack.c.l.b16 %v3814
    %v3943 = vunpack.c.l.b16 %v3815
    %v3944 = vunpack.c.l.b16 %v3816
    %v3945 = vunpack.c.l.b16 %v3817
    %v3946 = vunpack.c.l.b16 %v3818
    %v3947 = vunpack.c.l.b16 %v3819
    %v3948 = vunpack.c.l.b16 %v3820
    %v3949 = vunpack.c.l.b16 %v3821
    %v3950 = vunpack.c.l.b16 %v3822
    %v3951 = vunpack.c.l.b16 %v3823
    %v3952 = vunpack.c.l.b16 %v3824
    %v3953 = vunpack.c.l.b16 %v3825
    %v3954 = vunpack.c.l.b16 %v3826
    %v3955 = vunpack.c.l.b16 %v3827
    %v3956 = vunpack.c.l.b16 %v3828
    %v3957 = vunpack.c.l.b16 %v3829
    %v3958 = vunpack.c.l.b16 %v3830
    %v3959 = vunpack.c.l.b16 %v3831
    %v3960 = vunpack.c.l.b16 %v3832
    %v3961 = vunpack.c.l.b16 %v3833
    %v3962 = vunpack.c.l.b16 %v3834
    %v3963 = vunpack.c.l.b16 %v3835
    %v3964 = vunpack.c.l.b16 %v3836
    %v3965 = vunpack.c.l.b16 %v3837
    %v3966 = vunpack.c.l.b16 %v3838
    %v3967 = vunpack.c.l.b16 %v3839
    %v3968 = vunpack.c.l.b16 %v3840
    %v3969 = vunpack.c.l.b16 %v3841
    %v3970 = vunpack.c.l.b16 %v3842
    %v3971 = vunpack.c.l.b16 %v3843
    %v3972 = vunpack.c.l.b16 %v3844
    %v3973 = vunpack.c.l.b16 %v3845
    %v3974 = vunpack.c.l.b16 %v3846
    %v3975 = vunpack.c.l.b16 %v3847
    %v3976 = vunpack.c.l.b16 %v3848
    %v3977 = vunpack.c.l.b16 %v3849
    %v3978 = vunpack.c.l.b16 %v3850
    %v3979 = vunpack.c.l.b16 %v3851
    %v3980 = vunpack.c.l.b16 %v3852
    %v3981 = vunpack.c.l.b16 %v3853
    %v3982 = vunpack.c.l.b16 %v3854
    %v3983 = vunpack.c.l.b16 %v3855
    %v3984 = vunpack.c.l.b16 %v3856
    %v3985 = vunpack.c.l.b16 %v3857
    %v3986 = vunpack.c.l.b16 %v3858
    %v3987 = vunpack.c.l.b16 %v3859
    %v3988 = vunpack.c.l.b16 %v3860
    %v3989 = vunpack.c.l.b16 %v3861
    %v3990 = vunpack.c.l.b16 %v3862
    %v3991 = vunpack.c.l.b16 %v3863
    %v3992 = vunpack.c.l.b16 %v3864
    %v3993 = vunpack.c.l.b16 %v3865
    %v3994 = vunpack.c.l.b16 %v3866
    %v3995 = vunpack.c.l.b16 %v3867
    %v3996 = vpack.c.b16 %v3933, %v3932
    %v3997 = vpack.c.b16 %v3935, %v3934
    %v3998 = vpack.c.b16 %v3937, %v3936
    %v3999 = vpack.c.b16 %v3939, %v3938
    %v4000 = vpack.c.b16 %v3941, %v3940
    %v4001 = vpack.c.b16 %v3943, %v3942
    %v4002 = vpack.c.b16 %v3945, %v3944
    %v4003 = vpack.c.b16 %v3947, %v3946
    %v4004 = vpack.c.b16 %v3949, %v3948
    %v4005 = vpack.c.b16 %v3951, %v3950
    %v4006 = vpack.c.b16 %v3953, %v3952
    %v4007 = vpack.c.b16 %v3955, %v3954
    %v4008 = vpack.c.b16 %v3957, %v3956
    %v4009 = vpack.c.b16 %v3959, %v3958
    %v4010 = vpack.c.b16 %v3961, %v3960
    %v4011 = vpack.c.b16 %v3963, %v3962
    %v4012 = vpack.c.b16 %v3965, %v3964
    %v4013 = vpack.c.b16 %v3967, %v3966
    %v4014 = vpack.c.b16 %v3969, %v3968
    %v4015 = vpack.c.b16 %v3971, %v3970
    %v4016 = vpack.c.b16 %v3973, %v3972
    %v4017 = vpack.c.b16 %v3975, %v3974
    %v4018 = vpack.c.b16 %v3977, %v3976
    %v4019 = vpack.c.b16 %v3979, %v3978
    %v4020 = vpack.c.b16 %v3981, %v3980
    %v4021 = vpack.c.b16 %v3983, %v3982
    %v4022 = vpack.c.b16 %v3985, %v3984
    %v4023 = vpack.c.b16 %v3987, %v3986
    %v4024 = vpack.c.b16 %v3989, %v3988
    %v4025 = vpack.c.b16 %v3991, %v3990
    %v4026 = vpack.c.b16 %v3993, %v3992
    %v4027 = vpack.c.b16 %v3995, %v3994
    %4060 = vmatprep.subr.bf16.mxu0 0
    %4061 = vmatpush1.bf16.msra.mxu0 %v3996
    %4062 = vmatprep.subr.bf16.mxu0 0
    %4063 = vmatpush1.bf16.msra.mxu0 %v3997
    %4064 = vmatprep.subr.bf16.mxu0 0
    %4065 = vmatpush1.bf16.msra.mxu0 %v3998
    %4066 = vmatprep.subr.bf16.mxu0 0
    %4067 = vmatpush1.bf16.msra.mxu0 %v3999
    %4068 = vmatprep.subr.bf16.mxu0 0
    %4069 = vmatpush1.bf16.msra.mxu0 %v4000
    %4070 = vmatprep.subr.bf16.mxu0 0
    %4071 = vmatpush1.bf16.msra.mxu0 %v4001
    %4072 = vmatprep.subr.bf16.mxu0 0
    %4073 = vmatpush1.bf16.msra.mxu0 %v4002
    %4074 = vmatprep.subr.bf16.mxu0 0
    %4075 = vmatpush1.bf16.msra.mxu0 %v4003
    %4076 = vmatprep.subr.bf16.mxu0 0
    %4077 = vmatpush1.bf16.msra.mxu0 %v4004
    %4078 = vmatprep.subr.bf16.mxu0 0
    %4079 = vmatpush1.bf16.msra.mxu0 %v4005
    %4080 = vmatprep.subr.bf16.mxu0 0
    %4081 = vmatpush1.bf16.msra.mxu0 %v4006
    %4082 = vmatprep.subr.bf16.mxu0 0
    %4083 = vmatpush1.bf16.msra.mxu0 %v4007
    %4084 = vmatprep.subr.bf16.mxu0 0
    %4085 = vmatpush1.bf16.msra.mxu0 %v4008
    %4086 = vmatprep.subr.bf16.mxu0 0
    %4087 = vmatpush1.bf16.msra.mxu0 %v4009
    %4088 = vmatprep.subr.bf16.mxu0 0
    %4089 = vmatpush1.bf16.msra.mxu0 %v4010
    %4090 = vmatprep.subr.bf16.mxu0 0
    %4091 = vmatpush1.bf16.msra.mxu0 %v4011
    %4092 = vmatprep.mubr.bf16.mxu0 %v331
    %4093 = vmatmul.mubr.bf16.gmra.mrb[0].mxu0 %v330
    %v4094 = vpop.f32.mrb[0].mxu0
    %v4095 = vadd.f32 0.0, %v4094
    %v4096 = vpop.f32.mrb[0].mxu0
    %v4097 = vpop.f32.mrb[0].mxu0
    %v4098 = vpop.f32.mrb[0].mxu0
    %4099 = vdwg.mxu0
    %4100 = vmatprep.subr.bf16.mxu0 0
    %4101 = vmatpush1.bf16.msra.mxu0 %v4012
    %4102 = vmatprep.subr.bf16.mxu0 0
    %4103 = vmatpush1.bf16.msra.mxu0 %v4013
    %4104 = vmatprep.subr.bf16.mxu0 0
    %4105 = vmatpush1.bf16.msra.mxu0 %v4014
    %4106 = vmatprep.subr.bf16.mxu0 0
    %4107 = vmatpush1.bf16.msra.mxu0 %v4015
    %4108 = vmatprep.subr.bf16.mxu0 0
    %4109 = vmatpush1.bf16.msra.mxu0 %v4016
    %4110 = vmatprep.subr.bf16.mxu0 0
    %4111 = vmatpush1.bf16.msra.mxu0 %v4017
    %4112 = vmatprep.subr.bf16.mxu0 0
    %4113 = vmatpush1.bf16.msra.mxu0 %v4018
    %4114 = vmatprep.subr.bf16.mxu0 0
    %4115 = vmatpush1.bf16.msra.mxu0 %v4019
    %4116 = vmatprep.subr.bf16.mxu0 0
    %4117 = vmatpush1.bf16.msra.mxu0 %v4020
    %4118 = vmatprep.subr.bf16.mxu0 0
    %4119 = vmatpush1.bf16.msra.mxu0 %v4021
    %4120 = vmatprep.subr.bf16.mxu0 0
    %4121 = vmatpush1.bf16.msra.mxu0 %v4022
    %4122 = vmatprep.subr.bf16.mxu0 0
    %4123 = vmatpush1.bf16.msra.mxu0 %v4023
    %4124 = vmatprep.subr.bf16.mxu0 0
    %4125 = vmatpush1.bf16.msra.mxu0 %v4024
    %4126 = vmatprep.subr.bf16.mxu0 0
    %4127 = vmatpush1.bf16.msra.mxu0 %v4025
    %4128 = vmatprep.subr.bf16.mxu0 0
    %4129 = vmatpush1.bf16.msra.mxu0 %v4026
    %4130 = vmatprep.subr.bf16.mxu0 0
    %4131 = vmatpush1.bf16.msra.mxu0 %v4027
    %4132 = vmatprep.mubr.bf16.mxu0 %v333
    %4133 = vmatmul.mubr.bf16.gmra.mrb[0].mxu0 %v332
    %v4134 = vpop.f32.mrb[0].mxu0
    %v4135 = vadd.f32 %v4095, %v4134
    %v4136 = vpop.f32.mrb[0].mxu0
    %v4137 = vpop.f32.mrb[0].mxu0
    %v4138 = vpop.f32.mrb[0].mxu0
    %4139 = vdwg.mxu0
    %v4140 = vpack.c.bf16 %v4135, %v4135
    %v4141 = vpack.c.bf16 %v701, %v700
    %v4143 = vsel %vm1379, %v4141, 0
    %v4146 = vsel %vm1383, %v4140, 0
    %4148 = vmatprep.subr.bf16.mxu0 0
    %4149 = vmatpush1.bf16.msra.mxu0 %v4146
    %4150 = vmatprep.subr.bf16.mxu0 0
    %4151 = vmatpush1.bf16.msra.mxu0 0
    %4152 = vmatprep.subr.bf16.mxu0 0
    %4153 = vmatpush1.bf16.msra.mxu0 0
    %4154 = vmatprep.subr.bf16.mxu0 0
    %4155 = vmatpush1.bf16.msra.mxu0 0
    %4156 = vmatprep.subr.bf16.mxu0 0
    %4157 = vmatpush1.bf16.msra.mxu0 0
    %4158 = vmatprep.subr.bf16.mxu0 0
    %4159 = vmatpush1.bf16.msra.mxu0 0
    %4160 = vmatprep.subr.bf16.mxu0 0
    %4161 = vmatpush1.bf16.msra.mxu0 0
    %4162 = vmatprep.subr.bf16.mxu0 0
    %4163 = vmatpush1.bf16.msra.mxu0 0
    %4164 = vmatprep.subr.bf16.mxu0 0
    %4165 = vmatpush1.bf16.msra.mxu0 0
    %4166 = vmatprep.subr.bf16.mxu0 0
    %4167 = vmatpush1.bf16.msra.mxu0 0
    %4168 = vmatprep.subr.bf16.mxu0 0
    %4169 = vmatpush1.bf16.msra.mxu0 0
    %4170 = vmatprep.subr.bf16.mxu0 0
    %4171 = vmatpush1.bf16.msra.mxu0 0
    %4172 = vmatprep.subr.bf16.mxu0 0
    %4173 = vmatpush1.bf16.msra.mxu0 0
    %4174 = vmatprep.subr.bf16.mxu0 0
    %4175 = vmatpush1.bf16.msra.mxu0 0
    %4176 = vmatprep.subr.bf16.mxu0 0
    %4177 = vmatpush1.bf16.msra.mxu0 0
    %4178 = vmatprep.subr.bf16.mxu0 0
    %4179 = vmatpush1.bf16.msra.mxu0 0
    %4180 = vmatprep.mubr.bf16.mxu0 0
    %4181 = vmatmul.mubr.bf16.gmra.mrb[0].mxu0 %v4143
    %v4182 = vpop.f32.mrb[0].mxu0
    %v4183 = vadd.f32 0.0, %v4182
    %v4184 = vpop.f32.mrb[0].mxu0
    %v4185 = vpop.f32.mrb[0].mxu0
    %v4186 = vadd.f32 0.0, %v4185
    %v4187 = vpop.f32.mrb[0].mxu0
    %4188 = vdwg.mxu0
    %v4189 = vadd.f32 %v3801, %v4183
    %v4190 = vadd.f32 %v3802, %v4186
    %v4191 = vld [vmem:[%s17] sm:$0xff]
    %v4192 = vld [vmem:[%s17 + $0x8] sm:$0xff]
    %4194 = vset.pattern.permute.xlu0 0
    %4195 = vperm.xlu0 %4194, %v4191
    %v4196 = vpop.permute.xlu0 %4195
    %4199 = vset.pattern.permute.xlu0 0
    %4200 = vperm.xlu0 %4199, %v4192
    %v4201 = vpop.permute.xlu0 %4200
    %v4203 = vadd.f32 %v4189, %v4196
    %v4204 = vadd.f32 %v4190, %v4201
    %v4205 = vmax.f32 %v4203, 0.0
    %v4206 = vmax.f32 %v4204, 0.0
    %v4207 = vld [vmem:[%s5] sm:$0xf]
    %v4208 = vld [vmem:[%s5 + $0x4] sm:$0xf]
    %v4209 = vld [vmem:[%s5 + $0x8] sm:$0xf]
    %v4210 = vld [vmem:[%s5 + $0xc] sm:$0xf]
    %v4211 = vld [vmem:[%s5 + $0x10] sm:$0xf]
    %v4212 = vld [vmem:[%s5 + $0x14] sm:$0xf]
    %v4213 = vld [vmem:[%s5 + $0x18] sm:$0xf]
    %v4214 = vld [vmem:[%s5 + $0x1c] sm:$0xf]
    %v4215 = vld [vmem:[%s5 + $0x20] sm:$0xf]
    %v4216 = vld [vmem:[%s5 + $0x24] sm:$0xf]
    %v4217 = vld [vmem:[%s5 + $0x28] sm:$0xf]
    %v4218 = vld [vmem:[%s5 + $0x2c] sm:$0xf]
    %v4219 = vld [vmem:[%s5 + $0x30] sm:$0xf]
    %v4220 = vld [vmem:[%s5 + $0x34] sm:$0xf]
    %v4221 = vld [vmem:[%s5 + $0x38] sm:$0xf]
    %v4222 = vld [vmem:[%s5 + $0x3c] sm:$0xf]
    %v4223 = vld [vmem:[%s5 + $0x40] sm:$0xf]
    %v4224 = vld [vmem:[%s5 + $0x44] sm:$0xf]
    %v4225 = vld [vmem:[%s5 + $0x48] sm:$0xf]
    %v4226 = vld [vmem:[%s5 + $0x4c] sm:$0xf]
    %v4227 = vld [vmem:[%s5 + $0x50] sm:$0xf]
    %v4228 = vld [vmem:[%s5 + $0x54] sm:$0xf]
    %v4229 = vld [vmem:[%s5 + $0x58] sm:$0xf]
    %v4230 = vld [vmem:[%s5 + $0x5c] sm:$0xf]
    %v4231 = vld [vmem:[%s5 + $0x60] sm:$0xf]
    %v4232 = vld [vmem:[%s5 + $0x64] sm:$0xf]
    %v4233 = vld [vmem:[%s5 + $0x68] sm:$0xf]
    %v4234 = vld [vmem:[%s5 + $0x6c] sm:$0xf]
    %v4235 = vld [vmem:[%s5 + $0x70] sm:$0xf]
    %v4236 = vld [vmem:[%s5 + $0x74] sm:$0xf]
    %v4237 = vld [vmem:[%s5 + $0x78] sm:$0xf]
    %v4238 = vld [vmem:[%s5 + $0x7c] sm:$0xf]
    %v4239 = vld [vmem:[%s5 + $0x80] sm:$0xf]
    %v4240 = vld [vmem:[%s5 + $0x84] sm:$0xf]
    %v4241 = vld [vmem:[%s5 + $0x88] sm:$0xf]
    %v4242 = vld [vmem:[%s5 + $0x8c] sm:$0xf]
    %v4243 = vld [vmem:[%s5 + $0x90] sm:$0xf]
    %v4244 = vld [vmem:[%s5 + $0x94] sm:$0xf]
    %v4245 = vld [vmem:[%s5 + $0x98] sm:$0xf]
    %v4246 = vld [vmem:[%s5 + $0x9c] sm:$0xf]
    %v4247 = vld [vmem:[%s5 + $0xa0] sm:$0xf]
    %v4248 = vld [vmem:[%s5 + $0xa4] sm:$0xf]
    %v4249 = vld [vmem:[%s5 + $0xa8] sm:$0xf]
    %v4250 = vld [vmem:[%s5 + $0xac] sm:$0xf]
    %v4251 = vld [vmem:[%s5 + $0xb0] sm:$0xf]
    %v4252 = vld [vmem:[%s5 + $0xb4] sm:$0xf]
    %v4253 = vld [vmem:[%s5 + $0xb8] sm:$0xf]
    %v4254 = vld [vmem:[%s5 + $0xbc] sm:$0xf]
    %v4255 = vld [vmem:[%s5 + $0xc0] sm:$0xf]
    %v4256 = vld [vmem:[%s5 + $0xc4] sm:$0xf]
    %v4257 = vld [vmem:[%s5 + $0xc8] sm:$0xf]
    %v4258 = vld [vmem:[%s5 + $0xcc] sm:$0xf]
    %v4259 = vld [vmem:[%s5 + $0xd0] sm:$0xf]
    %v4260 = vld [vmem:[%s5 + $0xd4] sm:$0xf]
    %v4261 = vld [vmem:[%s5 + $0xd8] sm:$0xf]
    %v4262 = vld [vmem:[%s5 + $0xdc] sm:$0xf]
    %v4263 = vld [vmem:[%s5 + $0xe0] sm:$0xf]
    %v4264 = vld [vmem:[%s5 + $0xe4] sm:$0xf]
    %v4265 = vld [vmem:[%s5 + $0xe8] sm:$0xf]
    %v4266 = vld [vmem:[%s5 + $0xec] sm:$0xf]
    %v4267 = vld [vmem:[%s5 + $0xf0] sm:$0xf]
    %v4268 = vld [vmem:[%s5 + $0xf4] sm:$0xf]
    %v4269 = vld [vmem:[%s5 + $0xf8] sm:$0xf]
    %v4270 = vld [vmem:[%s5 + $0xfc] sm:$0xf]
    %v4271 = vld [vmem:[%s5 + $0x100] sm:$0xf]
    %v4272 = vld [vmem:[%s5 + $0x104] sm:$0xf]
    %v4273 = vld [vmem:[%s5 + $0x108] sm:$0xf]
    %v4274 = vld [vmem:[%s5 + $0x10c] sm:$0xf]
    %v4275 = vld [vmem:[%s5 + $0x110] sm:$0xf]
    %v4276 = vld [vmem:[%s5 + $0x114] sm:$0xf]
    %v4277 = vld [vmem:[%s5 + $0x118] sm:$0xf]
    %v4278 = vld [vmem:[%s5 + $0x11c] sm:$0xf]
    %v4279 = vld [vmem:[%s5 + $0x120] sm:$0xf]
    %v4280 = vld [vmem:[%s5 + $0x124] sm:$0xf]
    %v4281 = vld [vmem:[%s5 + $0x128] sm:$0xf]
    %v4282 = vld [vmem:[%s5 + $0x12c] sm:$0xf]
    %v4283 = vld [vmem:[%s5 + $0x130] sm:$0xf]
    %v4284 = vld [vmem:[%s5 + $0x134] sm:$0xf]
    %v4285 = vld [vmem:[%s5 + $0x138] sm:$0xf]
    %v4286 = vld [vmem:[%s5 + $0x13c] sm:$0xf]
    %v4287 = vld [vmem:[%s5 + $0x140] sm:$0xf]
    %v4288 = vld [vmem:[%s5 + $0x144] sm:$0xf]
    %v4289 = vld [vmem:[%s5 + $0x148] sm:$0xf]
    %v4290 = vld [vmem:[%s5 + $0x14c] sm:$0xf]
    %v4291 = vld [vmem:[%s5 + $0x150] sm:$0xf]
    %v4292 = vld [vmem:[%s5 + $0x154] sm:$0xf]
    %v4293 = vld [vmem:[%s5 + $0x158] sm:$0xf]
    %v4294 = vld [vmem:[%s5 + $0x15c] sm:$0xf]
    %v4295 = vld [vmem:[%s5 + $0x160] sm:$0xf]
    %v4296 = vld [vmem:[%s5 + $0x164] sm:$0xf]
    %v4297 = vld [vmem:[%s5 + $0x168] sm:$0xf]
    %v4298 = vld [vmem:[%s5 + $0x16c] sm:$0xf]
    %v4299 = vld [vmem:[%s5 + $0x170] sm:$0xf]
    %v4300 = vld [vmem:[%s5 + $0x174] sm:$0xf]
    %v4301 = vld [vmem:[%s5 + $0x178] sm:$0xf]
    %v4302 = vld [vmem:[%s5 + $0x17c] sm:$0xf]
    %v4303 = vld [vmem:[%s5 + $0x180] sm:$0xf]
    %v4304 = vld [vmem:[%s5 + $0x184] sm:$0xf]
    %v4305 = vld [vmem:[%s5 + $0x188] sm:$0xf]
    %v4306 = vld [vmem:[%s5 + $0x18c] sm:$0xf]
    %v4307 = vld [vmem:[%s5 + $0x190] sm:$0xf]
    %v4308 = vld [vmem:[%s5 + $0x194] sm:$0xf]
    %v4309 = vld [vmem:[%s5 + $0x198] sm:$0xf]
    %v4310 = vld [vmem:[%s5 + $0x19c] sm:$0xf]
    %v4311 = vld [vmem:[%s5 + $0x1a0] sm:$0xf]
    %v4312 = vld [vmem:[%s5 + $0x1a4] sm:$0xf]
    %v4313 = vld [vmem:[%s5 + $0x1a8] sm:$0xf]
    %v4314 = vld [vmem:[%s5 + $0x1ac] sm:$0xf]
    %v4315 = vld [vmem:[%s5 + $0x1b0] sm:$0xf]
    %v4316 = vld [vmem:[%s5 + $0x1b4] sm:$0xf]
    %v4317 = vld [vmem:[%s5 + $0x1b8] sm:$0xf]
    %v4318 = vld [vmem:[%s5 + $0x1bc] sm:$0xf]
    %v4319 = vld [vmem:[%s5 + $0x1c0] sm:$0xf]
    %v4320 = vld [vmem:[%s5 + $0x1c4] sm:$0xf]
    %v4321 = vld [vmem:[%s5 + $0x1c8] sm:$0xf]
    %v4322 = vld [vmem:[%s5 + $0x1cc] sm:$0xf]
    %v4323 = vld [vmem:[%s5 + $0x1d0] sm:$0xf]
    %v4324 = vld [vmem:[%s5 + $0x1d4] sm:$0xf]
    %v4325 = vld [vmem:[%s5 + $0x1d8] sm:$0xf]
    %v4326 = vld [vmem:[%s5 + $0x1dc] sm:$0xf]
    %v4327 = vld [vmem:[%s5 + $0x1e0] sm:$0xf]
    %v4328 = vld [vmem:[%s5 + $0x1e4] sm:$0xf]
    %v4329 = vld [vmem:[%s5 + $0x1e8] sm:$0xf]
    %v4330 = vld [vmem:[%s5 + $0x1ec] sm:$0xf]
    %v4331 = vld [vmem:[%s5 + $0x1f0] sm:$0xf]
    %v4332 = vld [vmem:[%s5 + $0x1f4] sm:$0xf]
    %v4333 = vld [vmem:[%s5 + $0x1f8] sm:$0xf]
    %v4334 = vld [vmem:[%s5 + $0x1fc] sm:$0xf]
    %v4335 = vpack.c.bf16 %v4206, %v4205
    %v4464 = vunpack.c.l.b16 %v4207
    %v4465 = vunpack.c.l.b16 %v4208
    %v4466 = vunpack.c.l.b16 %v4209
    %v4467 = vunpack.c.l.b16 %v4210
    %v4468 = vunpack.c.l.b16 %v4211
    %v4469 = vunpack.c.l.b16 %v4212
    %v4470 = vunpack.c.l.b16 %v4213
    %v4471 = vunpack.c.l.b16 %v4214
    %v4472 = vunpack.c.l.b16 %v4215
    %v4473 = vunpack.c.l.b16 %v4216
    %v4474 = vunpack.c.l.b16 %v4217
    %v4475 = vunpack.c.l.b16 %v4218
    %v4476 = vunpack.c.l.b16 %v4219
    %v4477 = vunpack.c.l.b16 %v4220
    %v4478 = vunpack.c.l.b16 %v4221
    %v4479 = vunpack.c.l.b16 %v4222
    %v4480 = vunpack.c.l.b16 %v4223
    %v4481 = vunpack.c.l.b16 %v4224
    %v4482 = vunpack.c.l.b16 %v4225
    %v4483 = vunpack.c.l.b16 %v4226
    %v4484 = vunpack.c.l.b16 %v4227
    %v4485 = vunpack.c.l.b16 %v4228
    %v4486 = vunpack.c.l.b16 %v4229
    %v4487 = vunpack.c.l.b16 %v4230
    %v4488 = vunpack.c.l.b16 %v4231
    %v4489 = vunpack.c.l.b16 %v4232
    %v4490 = vunpack.c.l.b16 %v4233
    %v4491 = vunpack.c.l.b16 %v4234
    %v4492 = vunpack.c.l.b16 %v4235
    %v4493 = vunpack.c.l.b16 %v4236
    %v4494 = vunpack.c.l.b16 %v4237
    %v4495 = vunpack.c.l.b16 %v4238
    %v4496 = vunpack.c.l.b16 %v4239
    %v4497 = vunpack.c.l.b16 %v4240
    %v4498 = vunpack.c.l.b16 %v4241
    %v4499 = vunpack.c.l.b16 %v4242
    %v4500 = vunpack.c.l.b16 %v4243
    %v4501 = vunpack.c.l.b16 %v4244
    %v4502 = vunpack.c.l.b16 %v4245
    %v4503 = vunpack.c.l.b16 %v4246
    %v4504 = vunpack.c.l.b16 %v4247
    %v4505 = vunpack.c.l.b16 %v4248
    %v4506 = vunpack.c.l.b16 %v4249
    %v4507 = vunpack.c.l.b16 %v4250
    %v4508 = vunpack.c.l.b16 %v4251
    %v4509 = vunpack.c.l.b16 %v4252
    %v4510 = vunpack.c.l.b16 %v4253
    %v4511 = vunpack.c.l.b16 %v4254
    %v4512 = vunpack.c.l.b16 %v4255
    %v4513 = vunpack.c.l.b16 %v4256
    %v4514 = vunpack.c.l.b16 %v4257
    %v4515 = vunpack.c.l.b16 %v4258
    %v4516 = vunpack.c.l.b16 %v4259
    %v4517 = vunpack.c.l.b16 %v4260
    %v4518 = vunpack.c.l.b16 %v4261
    %v4519 = vunpack.c.l.b16 %v4262
    %v4520 = vunpack.c.l.b16 %v4263
    %v4521 = vunpack.c.l.b16 %v4264
    %v4522 = vunpack.c.l.b16 %v4265
    %v4523 = vunpack.c.l.b16 %v4266
    %v4524 = vunpack.c.l.b16 %v4267
    %v4525 = vunpack.c.l.b16 %v4268
    %v4526 = vunpack.c.l.b16 %v4269
    %v4527 = vunpack.c.l.b16 %v4270
    %v4528 = vunpack.c.l.b16 %v4271
    %v4529 = vunpack.c.l.b16 %v4272
    %v4530 = vunpack.c.l.b16 %v4273
    %v4531 = vunpack.c.l.b16 %v4274
    %v4532 = vunpack.c.l.b16 %v4275
    %v4533 = vunpack.c.l.b16 %v4276
    %v4534 = vunpack.c.l.b16 %v4277
    %v4535 = vunpack.c.l.b16 %v4278
    %v4536 = vunpack.c.l.b16 %v4279
    %v4537 = vunpack.c.l.b16 %v4280
    %v4538 = vunpack.c.l.b16 %v4281
    %v4539 = vunpack.c.l.b16 %v4282
    %v4540 = vunpack.c.l.b16 %v4283
    %v4541 = vunpack.c.l.b16 %v4284
    %v4542 = vunpack.c.l.b16 %v4285
    %v4543 = vunpack.c.l.b16 %v4286
    %v4544 = vunpack.c.l.b16 %v4287
    %v4545 = vunpack.c.l.b16 %v4288
    %v4546 = vunpack.c.l.b16 %v4289
    %v4547 = vunpack.c.l.b16 %v4290
    %v4548 = vunpack.c.l.b16 %v4291
    %v4549 = vunpack.c.l.b16 %v4292
    %v4550 = vunpack.c.l.b16 %v4293
    %v4551 = vunpack.c.l.b16 %v4294
    %v4552 = vunpack.c.l.b16 %v4295
    %v4553 = vunpack.c.l.b16 %v4296
    %v4554 = vunpack.c.l.b16 %v4297
    %v4555 = vunpack.c.l.b16 %v4298
    %v4556 = vunpack.c.l.b16 %v4299
    %v4557 = vunpack.c.l.b16 %v4300
    %v4558 = vunpack.c.l.b16 %v4301
    %v4559 = vunpack.c.l.b16 %v4302
    %v4560 = vunpack.c.l.b16 %v4303
    %v4561 = vunpack.c.l.b16 %v4304
    %v4562 = vunpack.c.l.b16 %v4305
    %v4563 = vunpack.c.l.b16 %v4306
    %v4564 = vunpack.c.l.b16 %v4307
    %v4565 = vunpack.c.l.b16 %v4308
    %v4566 = vunpack.c.l.b16 %v4309
    %v4567 = vunpack.c.l.b16 %v4310
    %v4568 = vunpack.c.l.b16 %v4311
    %v4569 = vunpack.c.l.b16 %v4312
    %v4570 = vunpack.c.l.b16 %v4313
    %v4571 = vunpack.c.l.b16 %v4314
    %v4572 = vunpack.c.l.b16 %v4315
    %v4573 = vunpack.c.l.b16 %v4316
    %v4574 = vunpack.c.l.b16 %v4317
    %v4575 = vunpack.c.l.b16 %v4318
    %v4576 = vunpack.c.l.b16 %v4319
    %v4577 = vunpack.c.l.b16 %v4320
    %v4578 = vunpack.c.l.b16 %v4321
    %v4579 = vunpack.c.l.b16 %v4322
    %v4580 = vunpack.c.l.b16 %v4323
    %v4581 = vunpack.c.l.b16 %v4324
    %v4582 = vunpack.c.l.b16 %v4325
    %v4583 = vunpack.c.l.b16 %v4326
    %v4584 = vunpack.c.l.b16 %v4327
    %v4585 = vunpack.c.l.b16 %v4328
    %v4586 = vunpack.c.l.b16 %v4329
    %v4587 = vunpack.c.l.b16 %v4330
    %v4588 = vunpack.c.l.b16 %v4331
    %v4589 = vunpack.c.l.b16 %v4332
    %v4590 = vunpack.c.l.b16 %v4333
    %v4591 = vunpack.c.l.b16 %v4334
    %v4592 = vpack.c.b16 %v4465, %v4464
    %v4593 = vpack.c.b16 %v4467, %v4466
    %v4594 = vpack.c.b16 %v4469, %v4468
    %v4595 = vpack.c.b16 %v4471, %v4470
    %v4596 = vpack.c.b16 %v4473, %v4472
    %v4597 = vpack.c.b16 %v4475, %v4474
    %v4598 = vpack.c.b16 %v4477, %v4476
    %v4599 = vpack.c.b16 %v4479, %v4478
    %v4600 = vpack.c.b16 %v4481, %v4480
    %v4601 = vpack.c.b16 %v4483, %v4482
    %v4602 = vpack.c.b16 %v4485, %v4484
    %v4603 = vpack.c.b16 %v4487, %v4486
    %v4604 = vpack.c.b16 %v4489, %v4488
    %v4605 = vpack.c.b16 %v4491, %v4490
    %v4606 = vpack.c.b16 %v4493, %v4492
    %v4607 = vpack.c.b16 %v4495, %v4494
    %v4608 = vpack.c.b16 %v4497, %v4496
    %v4609 = vpack.c.b16 %v4499, %v4498
    %v4610 = vpack.c.b16 %v4501, %v4500
    %v4611 = vpack.c.b16 %v4503, %v4502
    %v4612 = vpack.c.b16 %v4505, %v4504
    %v4613 = vpack.c.b16 %v4507, %v4506
    %v4614 = vpack.c.b16 %v4509, %v4508
    %v4615 = vpack.c.b16 %v4511, %v4510
    %v4616 = vpack.c.b16 %v4513, %v4512
    %v4617 = vpack.c.b16 %v4515, %v4514
    %v4618 = vpack.c.b16 %v4517, %v4516
    %v4619 = vpack.c.b16 %v4519, %v4518
    %v4620 = vpack.c.b16 %v4521, %v4520
    %v4621 = vpack.c.b16 %v4523, %v4522
    %v4622 = vpack.c.b16 %v4525, %v4524
    %v4623 = vpack.c.b16 %v4527, %v4526
    %v4624 = vpack.c.b16 %v4529, %v4528
    %v4625 = vpack.c.b16 %v4531, %v4530
    %v4626 = vpack.c.b16 %v4533, %v4532
    %v4627 = vpack.c.b16 %v4535, %v4534
    %v4628 = vpack.c.b16 %v4537, %v4536
    %v4629 = vpack.c.b16 %v4539, %v4538
    %v4630 = vpack.c.b16 %v4541, %v4540
    %v4631 = vpack.c.b16 %v4543, %v4542
    %v4632 = vpack.c.b16 %v4545, %v4544
    %v4633 = vpack.c.b16 %v4547, %v4546
    %v4634 = vpack.c.b16 %v4549, %v4548
    %v4635 = vpack.c.b16 %v4551, %v4550
    %v4636 = vpack.c.b16 %v4553, %v4552
    %v4637 = vpack.c.b16 %v4555, %v4554
    %v4638 = vpack.c.b16 %v4557, %v4556
    %v4639 = vpack.c.b16 %v4559, %v4558
    %v4640 = vpack.c.b16 %v4561, %v4560
    %v4641 = vpack.c.b16 %v4563, %v4562
    %v4642 = vpack.c.b16 %v4565, %v4564
    %v4643 = vpack.c.b16 %v4567, %v4566
    %v4644 = vpack.c.b16 %v4569, %v4568
    %v4645 = vpack.c.b16 %v4571, %v4570
    %v4646 = vpack.c.b16 %v4573, %v4572
    %v4647 = vpack.c.b16 %v4575, %v4574
    %v4648 = vpack.c.b16 %v4577, %v4576
    %v4649 = vpack.c.b16 %v4579, %v4578
    %v4650 = vpack.c.b16 %v4581, %v4580
    %v4651 = vpack.c.b16 %v4583, %v4582
    %v4652 = vpack.c.b16 %v4585, %v4584
    %v4653 = vpack.c.b16 %v4587, %v4586
    %v4654 = vpack.c.b16 %v4589, %v4588
    %v4655 = vpack.c.b16 %v4591, %v4590
    %vm4656 = vcmask 130048
    %v4658 = vsel %vm4656, %v4592, 0
    %v4661 = vsel %vm4656, %v4593, 0
    %v4664 = vsel %vm4656, %v4594, 0
    %v4667 = vsel %vm4656, %v4595, 0
    %v4670 = vsel %vm4656, %v4596, 0
    %v4673 = vsel %vm4656, %v4597, 0
    %v4676 = vsel %vm4656, %v4598, 0
    %v4679 = vsel %vm4656, %v4599, 0
    %v4682 = vsel %vm4656, %v4600, 0
    %v4685 = vsel %vm4656, %v4601, 0
    %v4688 = vsel %vm4656, %v4602, 0
    %v4691 = vsel %vm4656, %v4603, 0
    %v4694 = vsel %vm4656, %v4604, 0
    %v4697 = vsel %vm4656, %v4605, 0
    %v4700 = vsel %vm4656, %v4606, 0
    %v4703 = vsel %vm4656, %v4607, 0
    %v4706 = vsel %vm4656, %v4608, 0
    %v4709 = vsel %vm4656, %v4609, 0
    %v4712 = vsel %vm4656, %v4610, 0
    %v4715 = vsel %vm4656, %v4611, 0
    %v4718 = vsel %vm4656, %v4612, 0
    %v4721 = vsel %vm4656, %v4613, 0
    %v4724 = vsel %vm4656, %v4614, 0
    %v4727 = vsel %vm4656, %v4615, 0
    %v4730 = vsel %vm4656, %v4616, 0
    %v4733 = vsel %vm4656, %v4617, 0
    %v4736 = vsel %vm4656, %v4618, 0
    %v4739 = vsel %vm4656, %v4619, 0
    %v4742 = vsel %vm4656, %v4620, 0
    %v4745 = vsel %vm4656, %v4621, 0
    %v4748 = vsel %vm4656, %v4622, 0
    %v4751 = vsel %vm4656, %v4623, 0
    %v4754 = vsel %vm4656, %v4624, 0
    %v4757 = vsel %vm4656, %v4625, 0
    %v4760 = vsel %vm4656, %v4626, 0
    %v4763 = vsel %vm4656, %v4627, 0
    %v4766 = vsel %vm4656, %v4628, 0
    %v4769 = vsel %vm4656, %v4629, 0
    %v4772 = vsel %vm4656, %v4630, 0
    %v4775 = vsel %vm4656, %v4631, 0
    %v4778 = vsel %vm4656, %v4632, 0
    %v4781 = vsel %vm4656, %v4633, 0
    %v4784 = vsel %vm4656, %v4634, 0
    %v4787 = vsel %vm4656, %v4635, 0
    %v4790 = vsel %vm4656, %v4636, 0
    %v4793 = vsel %vm4656, %v4637, 0
    %v4796 = vsel %vm4656, %v4638, 0
    %v4799 = vsel %vm4656, %v4639, 0
    %v4802 = vsel %vm4656, %v4640, 0
    %v4805 = vsel %vm4656, %v4641, 0
    %v4808 = vsel %vm4656, %v4642, 0
    %v4811 = vsel %vm4656, %v4643, 0
    %v4814 = vsel %vm4656, %v4644, 0
    %v4817 = vsel %vm4656, %v4645, 0
    %v4820 = vsel %vm4656, %v4646, 0
    %v4823 = vsel %vm4656, %v4647, 0
    %v4826 = vsel %vm4656, %v4648, 0
    %v4829 = vsel %vm4656, %v4649, 0
    %v4832 = vsel %vm4656, %v4650, 0
    %v4835 = vsel %vm4656, %v4651, 0
    %v4838 = vsel %vm4656, %v4652, 0
    %v4841 = vsel %vm4656, %v4653, 0
    %v4844 = vsel %vm4656, %v4654, 0
    %v4847 = vsel %vm4656, %v4655, 0
    %4849 = vmatprep.subr.bf16.mxu0 0
    %4850 = vmatpush1.bf16.msra.mxu0 %v4335
    %4851 = vmatprep.subr.bf16.mxu0 0
    %4852 = vmatpush1.bf16.msra.mxu0 0
    %4853 = vmatprep.subr.bf16.mxu0 0
    %4854 = vmatpush1.bf16.msra.mxu0 0
    %4855 = vmatprep.subr.bf16.mxu0 0
    %4856 = vmatpush1.bf16.msra.mxu0 0
    %4857 = vmatprep.subr.bf16.mxu0 0
    %4858 = vmatpush1.bf16.msra.mxu0 0
    %4859 = vmatprep.subr.bf16.mxu0 0
    %4860 = vmatpush1.bf16.msra.mxu0 0
    %4861 = vmatprep.subr.bf16.mxu0 0
    %4862 = vmatpush1.bf16.msra.mxu0 0
    %4863 = vmatprep.subr.bf16.mxu0 0
    %4864 = vmatpush1.bf16.msra.mxu0 0
    %4865 = vmatprep.subr.bf16.mxu0 0
    %4866 = vmatpush1.bf16.msra.mxu0 0
    %4867 = vmatprep.subr.bf16.mxu0 0
    %4868 = vmatpush1.bf16.msra.mxu0 0
    %4869 = vmatprep.subr.bf16.mxu0 0
    %4870 = vmatpush1.bf16.msra.mxu0 0
    %4871 = vmatprep.subr.bf16.mxu0 0
    %4872 = vmatpush1.bf16.msra.mxu0 0
    %4873 = vmatprep.subr.bf16.mxu0 0
    %4874 = vmatpush1.bf16.msra.mxu0 0
    %4875 = vmatprep.subr.bf16.mxu0 0
    %4876 = vmatpush1.bf16.msra.mxu0 0
    %4877 = vmatprep.subr.bf16.mxu0 0
    %4878 = vmatpush1.bf16.msra.mxu0 0
    %4879 = vmatprep.subr.bf16.mxu0 0
    %4880 = vmatpush1.bf16.msra.mxu0 0
    %4881 = vmatprep.mubr.bf16.mxu0 0
    %4882 = vmatmul.mubr.bf16.gmra.mrb[0].mxu0 %v4658
    %v4883 = vpop.f32.mrb[0].mxu0
    %v4884 = vadd.f32 0.0, %v4883
    %v4885 = vpop.f32.mrb[0].mxu0
    %v4886 = vpop.f32.mrb[0].mxu0
    %v4887 = vadd.f32 0.0, %v4886
    %v4888 = vpop.f32.mrb[0].mxu0
    %4889 = vmatprep.mubr.bf16.mxu0 0
    %4890 = vmatmul.mubr.bf16.gmra.mrb[0].mxu0 %v4661
    %v4891 = vpop.f32.mrb[0].mxu0
    %v4892 = vadd.f32 0.0, %v4891
    %v4893 = vpop.f32.mrb[0].mxu0
    %v4894 = vpop.f32.mrb[0].mxu0
    %v4895 = vadd.f32 0.0, %v4894
    %v4896 = vpop.f32.mrb[0].mxu0
    %4897 = vmatprep.mubr.bf16.mxu0 0
    %4898 = vmatmul.mubr.bf16.gmra.mrb[0].mxu0 %v4664
    %v4899 = vpop.f32.mrb[0].mxu0
    %v4900 = vadd.f32 0.0, %v4899
    %v4901 = vpop.f32.mrb[0].mxu0
    %v4902 = vpop.f32.mrb[0].mxu0
    %v4903 = vadd.f32 0.0, %v4902
    %v4904 = vpop.f32.mrb[0].mxu0
    %4905 = vmatprep.mubr.bf16.mxu0 0
    %4906 = vmatmul.mubr.bf16.gmra.mrb[0].mxu0 %v4667
    %v4907 = vpop.f32.mrb[0].mxu0
    %v4908 = vadd.f32 0.0, %v4907
    %v4909 = vpop.f32.mrb[0].mxu0
    %v4910 = vpop.f32.mrb[0].mxu0
    %v4911 = vadd.f32 0.0, %v4910
    %v4912 = vpop.f32.mrb[0].mxu0
    %4913 = vmatprep.mubr.bf16.mxu0 0
    %4914 = vmatmul.mubr.bf16.gmra.mrb[0].mxu0 %v4670
    %v4915 = vpop.f32.mrb[0].mxu0
    %v4916 = vadd.f32 0.0, %v4915
    %v4917 = vpop.f32.mrb[0].mxu0
    %v4918 = vpop.f32.mrb[0].mxu0
    %v4919 = vadd.f32 0.0, %v4918
    %v4920 = vpop.f32.mrb[0].mxu0
    %4921 = vmatprep.mubr.bf16.mxu0 0
    %4922 = vmatmul.mubr.bf16.gmra.mrb[0].mxu0 %v4673
    %v4923 = vpop.f32.mrb[0].mxu0
    %v4924 = vadd.f32 0.0, %v4923
    %v4925 = vpop.f32.mrb[0].mxu0
    %v4926 = vpop.f32.mrb[0].mxu0
    %v4927 = vadd.f32 0.0, %v4926
    %v4928 = vpop.f32.mrb[0].mxu0
    %4929 = vmatprep.mubr.bf16.mxu0 0
    %4930 = vmatmul.mubr.bf16.gmra.mrb[0].mxu0 %v4676
    %v4931 = vpop.f32.mrb[0].mxu0
    %v4932 = vadd.f32 0.0, %v4931
    %v4933 = vpop.f32.mrb[0].mxu0
    %v4934 = vpop.f32.mrb[0].mxu0
    %v4935 = vadd.f32 0.0, %v4934
    %v4936 = vpop.f32.mrb[0].mxu0
    %4937 = vmatprep.mubr.bf16.mxu0 0
    %4938 = vmatmul.mubr.bf16.gmra.mrb[0].mxu0 %v4679
    %v4939 = vpop.f32.mrb[0].mxu0
    %v4940 = vadd.f32 0.0, %v4939
    %v4941 = vpop.f32.mrb[0].mxu0
    %v4942 = vpop.f32.mrb[0].mxu0
    %v4943 = vadd.f32 0.0, %v4942
    %v4944 = vpop.f32.mrb[0].mxu0
    %4945 = vmatprep.mubr.bf16.mxu0 0
    %4946 = vmatmul.mubr.bf16.gmra.mrb[0].mxu0 %v4682
    %v4947 = vpop.f32.mrb[0].mxu0
    %v4948 = vadd.f32 0.0, %v4947
    %v4949 = vpop.f32.mrb[0].mxu0
    %v4950 = vpop.f32.mrb[0].mxu0
    %v4951 = vadd.f32 0.0, %v4950
    %v4952 = vpop.f32.mrb[0].mxu0
    %4953 = vmatprep.mubr.bf16.mxu0 0
    %4954 = vmatmul.mubr.bf16.gmra.mrb[0].mxu0 %v4685
    %v4955 = vpop.f32.mrb[0].mxu0
    %v4956 = vadd.f32 0.0, %v4955
    %v4957 = vpop.f32.mrb[0].mxu0
    %v4958 = vpop.f32.mrb[0].mxu0
    %v4959 = vadd.f32 0.0, %v4958
    %v4960 = vpop.f32.mrb[0].mxu0
    %4961 = vmatprep.mubr.bf16.mxu0 0
    %4962 = vmatmul.mubr.bf16.gmra.mrb[0].mxu0 %v4688
    %v4963 = vpop.f32.mrb[0].mxu0
    %v4964 = vadd.f32 0.0, %v4963
    %v4965 = vpop.f32.mrb[0].mxu0
    %v4966 = vpop.f32.mrb[0].mxu0
    %v4967 = vadd.f32 0.0, %v4966
    %v4968 = vpop.f32.mrb[0].mxu0
    %4969 = vmatprep.mubr.bf16.mxu0 0
    %4970 = vmatmul.mubr.bf16.gmra.mrb[0].mxu0 %v4691
    %v4971 = vpop.f32.mrb[0].mxu0
    %v4972 = vadd.f32 0.0, %v4971
    %v4973 = vpop.f32.mrb[0].mxu0
    %v4974 = vpop.f32.mrb[0].mxu0
    %v4975 = vadd.f32 0.0, %v4974
    %v4976 = vpop.f32.mrb[0].mxu0
    %4977 = vmatprep.mubr.bf16.mxu0 0
    %4978 = vmatmul.mubr.bf16.gmra.mrb[0].mxu0 %v4694
    %v4979 = vpop.f32.mrb[0].mxu0
    %v4980 = vadd.f32 0.0, %v4979
    %v4981 = vpop.f32.mrb[0].mxu0
    %v4982 = vpop.f32.mrb[0].mxu0
    %v4983 = vadd.f32 0.0, %v4982
    %v4984 = vpop.f32.mrb[0].mxu0
    %4985 = vmatprep.mubr.bf16.mxu0 0
    %4986 = vmatmul.mubr.bf16.gmra.mrb[0].mxu0 %v4697
    %v4987 = vpop.f32.mrb[0].mxu0
    %v4988 = vadd.f32 0.0, %v4987
    %v4989 = vpop.f32.mrb[0].mxu0
    %v4990 = vpop.f32.mrb[0].mxu0
    %v4991 = vadd.f32 0.0, %v4990
    %v4992 = vpop.f32.mrb[0].mxu0
    %4993 = vmatprep.mubr.bf16.mxu0 0
    %4994 = vmatmul.mubr.bf16.gmra.mrb[0].mxu0 %v4700
    %v4995 = vpop.f32.mrb[0].mxu0
    %v4996 = vadd.f32 0.0, %v4995
    %v4997 = vpop.f32.mrb[0].mxu0
    %v4998 = vpop.f32.mrb[0].mxu0
    %v4999 = vadd.f32 0.0, %v4998
    %v5000 = vpop.f32.mrb[0].mxu0
    %5001 = vmatprep.mubr.bf16.mxu0 0
    %5002 = vmatmul.mubr.bf16.gmra.mrb[0].mxu0 %v4703
    %v5003 = vpop.f32.mrb[0].mxu0
    %v5004 = vadd.f32 0.0, %v5003
    %v5005 = vpop.f32.mrb[0].mxu0
    %v5006 = vpop.f32.mrb[0].mxu0
    %v5007 = vadd.f32 0.0, %v5006
    %v5008 = vpop.f32.mrb[0].mxu0
    %5009 = vmatprep.mubr.bf16.mxu0 0
    %5010 = vmatmul.mubr.bf16.gmra.mrb[0].mxu0 %v4706
    %v5011 = vpop.f32.mrb[0].mxu0
    %v5012 = vadd.f32 0.0, %v5011
    %v5013 = vpop.f32.mrb[0].mxu0
    %v5014 = vpop.f32.mrb[0].mxu0
    %v5015 = vadd.f32 0.0, %v5014
    %v5016 = vpop.f32.mrb[0].mxu0
    %5017 = vmatprep.mubr.bf16.mxu0 0
    %5018 = vmatmul.mubr.bf16.gmra.mrb[0].mxu0 %v4709
    %v5019 = vpop.f32.mrb[0].mxu0
    %v5020 = vadd.f32 0.0, %v5019
    %v5021 = vpop.f32.mrb[0].mxu0
    %v5022 = vpop.f32.mrb[0].mxu0
    %v5023 = vadd.f32 0.0, %v5022
    %v5024 = vpop.f32.mrb[0].mxu0
    %5025 = vmatprep.mubr.bf16.mxu0 0
    %5026 = vmatmul.mubr.bf16.gmra.mrb[0].mxu0 %v4712
    %v5027 = vpop.f32.mrb[0].mxu0
    %v5028 = vadd.f32 0.0, %v5027
    %v5029 = vpop.f32.mrb[0].mxu0
    %v5030 = vpop.f32.mrb[0].mxu0
    %v5031 = vadd.f32 0.0, %v5030
    %v5032 = vpop.f32.mrb[0].mxu0
    %5033 = vmatprep.mubr.bf16.mxu0 0
    %5034 = vmatmul.mubr.bf16.gmra.mrb[0].mxu0 %v4715
    %v5035 = vpop.f32.mrb[0].mxu0
    %v5036 = vadd.f32 0.0, %v5035
    %v5037 = vpop.f32.mrb[0].mxu0
    %v5038 = vpop.f32.mrb[0].mxu0
    %v5039 = vadd.f32 0.0, %v5038
    %v5040 = vpop.f32.mrb[0].mxu0
    %5041 = vmatprep.mubr.bf16.mxu0 0
    %5042 = vmatmul.mubr.bf16.gmra.mrb[0].mxu0 %v4718
    %v5043 = vpop.f32.mrb[0].mxu0
    %v5044 = vadd.f32 0.0, %v5043
    %v5045 = vpop.f32.mrb[0].mxu0
    %v5046 = vpop.f32.mrb[0].mxu0
    %v5047 = vadd.f32 0.0, %v5046
    %v5048 = vpop.f32.mrb[0].mxu0
    %5049 = vmatprep.mubr.bf16.mxu0 0
    %5050 = vmatmul.mubr.bf16.gmra.mrb[0].mxu0 %v4721
    %v5051 = vpop.f32.mrb[0].mxu0
    %v5052 = vadd.f32 0.0, %v5051
    %v5053 = vpop.f32.mrb[0].mxu0
    %v5054 = vpop.f32.mrb[0].mxu0
    %v5055 = vadd.f32 0.0, %v5054
    %v5056 = vpop.f32.mrb[0].mxu0
    %5057 = vmatprep.mubr.bf16.mxu0 0
    %5058 = vmatmul.mubr.bf16.gmra.mrb[0].mxu0 %v4724
    %v5059 = vpop.f32.mrb[0].mxu0
    %v5060 = vadd.f32 0.0, %v5059
    %v5061 = vpop.f32.mrb[0].mxu0
    %v5062 = vpop.f32.mrb[0].mxu0
    %v5063 = vadd.f32 0.0, %v5062
    %v5064 = vpop.f32.mrb[0].mxu0
    %5065 = vmatprep.mubr.bf16.mxu0 0
    %5066 = vmatmul.mubr.bf16.gmra.mrb[0].mxu0 %v4727
    %v5067 = vpop.f32.mrb[0].mxu0
    %v5068 = vadd.f32 0.0, %v5067
    %v5069 = vpop.f32.mrb[0].mxu0
    %v5070 = vpop.f32.mrb[0].mxu0
    %v5071 = vadd.f32 0.0, %v5070
    %v5072 = vpop.f32.mrb[0].mxu0
    %5073 = vmatprep.mubr.bf16.mxu0 0
    %5074 = vmatmul.mubr.bf16.gmra.mrb[0].mxu0 %v4730
    %v5075 = vpop.f32.mrb[0].mxu0
    %v5076 = vadd.f32 0.0, %v5075
    %v5077 = vpop.f32.mrb[0].mxu0
    %v5078 = vpop.f32.mrb[0].mxu0
    %v5079 = vadd.f32 0.0, %v5078
    %v5080 = vpop.f32.mrb[0].mxu0
    %5081 = vmatprep.mubr.bf16.mxu0 0
    %5082 = vmatmul.mubr.bf16.gmra.mrb[0].mxu0 %v4733
    %v5083 = vpop.f32.mrb[0].mxu0
    %v5084 = vadd.f32 0.0, %v5083
    %v5085 = vpop.f32.mrb[0].mxu0
    %v5086 = vpop.f32.mrb[0].mxu0
    %v5087 = vadd.f32 0.0, %v5086
    %v5088 = vpop.f32.mrb[0].mxu0
    %5089 = vmatprep.mubr.bf16.mxu0 0
    %5090 = vmatmul.mubr.bf16.gmra.mrb[0].mxu0 %v4736
    %v5091 = vpop.f32.mrb[0].mxu0
    %v5092 = vadd.f32 0.0, %v5091
    %v5093 = vpop.f32.mrb[0].mxu0
    %v5094 = vpop.f32.mrb[0].mxu0
    %v5095 = vadd.f32 0.0, %v5094
    %v5096 = vpop.f32.mrb[0].mxu0
    %5097 = vmatprep.mubr.bf16.mxu0 0
    %5098 = vmatmul.mubr.bf16.gmra.mrb[0].mxu0 %v4739
    %v5099 = vpop.f32.mrb[0].mxu0
    %v5100 = vadd.f32 0.0, %v5099
    %v5101 = vpop.f32.mrb[0].mxu0
    %v5102 = vpop.f32.mrb[0].mxu0
    %v5103 = vadd.f32 0.0, %v5102
    %v5104 = vpop.f32.mrb[0].mxu0
    %5105 = vmatprep.mubr.bf16.mxu0 0
    %5106 = vmatmul.mubr.bf16.gmra.mrb[0].mxu0 %v4742
    %v5107 = vpop.f32.mrb[0].mxu0
    %v5108 = vadd.f32 0.0, %v5107
    %v5109 = vpop.f32.mrb[0].mxu0
    %v5110 = vpop.f32.mrb[0].mxu0
    %v5111 = vadd.f32 0.0, %v5110
    %v5112 = vpop.f32.mrb[0].mxu0
    %5113 = vmatprep.mubr.bf16.mxu0 0
    %5114 = vmatmul.mubr.bf16.gmra.mrb[0].mxu0 %v4745
    %v5115 = vpop.f32.mrb[0].mxu0
    %v5116 = vadd.f32 0.0, %v5115
    %v5117 = vpop.f32.mrb[0].mxu0
    %v5118 = vpop.f32.mrb[0].mxu0
    %v5119 = vadd.f32 0.0, %v5118
    %v5120 = vpop.f32.mrb[0].mxu0
    %5121 = vmatprep.mubr.bf16.mxu0 0
    %5122 = vmatmul.mubr.bf16.gmra.mrb[0].mxu0 %v4748
    %v5123 = vpop.f32.mrb[0].mxu0
    %v5124 = vadd.f32 0.0, %v5123
    %v5125 = vpop.f32.mrb[0].mxu0
    %v5126 = vpop.f32.mrb[0].mxu0
    %v5127 = vadd.f32 0.0, %v5126
    %v5128 = vpop.f32.mrb[0].mxu0
    %5129 = vmatprep.mubr.bf16.mxu0 0
    %5130 = vmatmul.mubr.bf16.gmra.mrb[0].mxu0 %v4751
    %v5131 = vpop.f32.mrb[0].mxu0
    %v5132 = vadd.f32 0.0, %v5131
    %v5133 = vpop.f32.mrb[0].mxu0
    %v5134 = vpop.f32.mrb[0].mxu0
    %v5135 = vadd.f32 0.0, %v5134
    %v5136 = vpop.f32.mrb[0].mxu0
    %5137 = vmatprep.mubr.bf16.mxu0 0
    %5138 = vmatmul.mubr.bf16.gmra.mrb[0].mxu0 %v4754
    %v5139 = vpop.f32.mrb[0].mxu0
    %v5140 = vadd.f32 0.0, %v5139
    %v5141 = vpop.f32.mrb[0].mxu0
    %v5142 = vpop.f32.mrb[0].mxu0
    %v5143 = vadd.f32 0.0, %v5142
    %v5144 = vpop.f32.mrb[0].mxu0
    %5145 = vmatprep.mubr.bf16.mxu0 0
    %5146 = vmatmul.mubr.bf16.gmra.mrb[0].mxu0 %v4757
    %v5147 = vpop.f32.mrb[0].mxu0
    %v5148 = vadd.f32 0.0, %v5147
    %v5149 = vpop.f32.mrb[0].mxu0
    %v5150 = vpop.f32.mrb[0].mxu0
    %v5151 = vadd.f32 0.0, %v5150
    %v5152 = vpop.f32.mrb[0].mxu0
    %5153 = vmatprep.mubr.bf16.mxu0 0
    %5154 = vmatmul.mubr.bf16.gmra.mrb[0].mxu0 %v4760
    %v5155 = vpop.f32.mrb[0].mxu0
    %v5156 = vadd.f32 0.0, %v5155
    %v5157 = vpop.f32.mrb[0].mxu0
    %v5158 = vpop.f32.mrb[0].mxu0
    %v5159 = vadd.f32 0.0, %v5158
    %v5160 = vpop.f32.mrb[0].mxu0
    %5161 = vmatprep.mubr.bf16.mxu0 0
    %5162 = vmatmul.mubr.bf16.gmra.mrb[0].mxu0 %v4763
    %v5163 = vpop.f32.mrb[0].mxu0
    %v5164 = vadd.f32 0.0, %v5163
    %v5165 = vpop.f32.mrb[0].mxu0
    %v5166 = vpop.f32.mrb[0].mxu0
    %v5167 = vadd.f32 0.0, %v5166
    %v5168 = vpop.f32.mrb[0].mxu0
    %5169 = vmatprep.mubr.bf16.mxu0 0
    %5170 = vmatmul.mubr.bf16.gmra.mrb[0].mxu0 %v4766
    %v5171 = vpop.f32.mrb[0].mxu0
    %v5172 = vadd.f32 0.0, %v5171
    %v5173 = vpop.f32.mrb[0].mxu0
    %v5174 = vpop.f32.mrb[0].mxu0
    %v5175 = vadd.f32 0.0, %v5174
    %v5176 = vpop.f32.mrb[0].mxu0
    %5177 = vmatprep.mubr.bf16.mxu0 0
    %5178 = vmatmul.mubr.bf16.gmra.mrb[0].mxu0 %v4769
    %v5179 = vpop.f32.mrb[0].mxu0
    %v5180 = vadd.f32 0.0, %v5179
    %v5181 = vpop.f32.mrb[0].mxu0
    %v5182 = vpop.f32.mrb[0].mxu0
    %v5183 = vadd.f32 0.0, %v5182
    %v5184 = vpop.f32.mrb[0].mxu0
    %5185 = vmatprep.mubr.bf16.mxu0 0
    %5186 = vmatmul.mubr.bf16.gmra.mrb[0].mxu0 %v4772
    %v5187 = vpop.f32.mrb[0].mxu0
    %v5188 = vadd.f32 0.0, %v5187
    %v5189 = vpop.f32.mrb[0].mxu0
    %v5190 = vpop.f32.mrb[0].mxu0
    %v5191 = vadd.f32 0.0, %v5190
    %v5192 = vpop.f32.mrb[0].mxu0
    %5193 = vmatprep.mubr.bf16.mxu0 0
    %5194 = vmatmul.mubr.bf16.gmra.mrb[0].mxu0 %v4775
    %v5195 = vpop.f32.mrb[0].mxu0
    %v5196 = vadd.f32 0.0, %v5195
    %v5197 = vpop.f32.mrb[0].mxu0
    %v5198 = vpop.f32.mrb[0].mxu0
    %v5199 = vadd.f32 0.0, %v5198
    %v5200 = vpop.f32.mrb[0].mxu0
    %5201 = vmatprep.mubr.bf16.mxu0 0
    %5202 = vmatmul.mubr.bf16.gmra.mrb[0].mxu0 %v4778
    %v5203 = vpop.f32.mrb[0].mxu0
    %v5204 = vadd.f32 0.0, %v5203
    %v5205 = vpop.f32.mrb[0].mxu0
    %v5206 = vpop.f32.mrb[0].mxu0
    %v5207 = vadd.f32 0.0, %v5206
    %v5208 = vpop.f32.mrb[0].mxu0
    %5209 = vmatprep.mubr.bf16.mxu0 0
    %5210 = vmatmul.mubr.bf16.gmra.mrb[0].mxu0 %v4781
    %v5211 = vpop.f32.mrb[0].mxu0
    %v5212 = vadd.f32 0.0, %v5211
    %v5213 = vpop.f32.mrb[0].mxu0
    %v5214 = vpop.f32.mrb[0].mxu0
    %v5215 = vadd.f32 0.0, %v5214
    %v5216 = vpop.f32.mrb[0].mxu0
    %5217 = vmatprep.mubr.bf16.mxu0 0
    %5218 = vmatmul.mubr.bf16.gmra.mrb[0].mxu0 %v4784
    %v5219 = vpop.f32.mrb[0].mxu0
    %v5220 = vadd.f32 0.0, %v5219
    %v5221 = vpop.f32.mrb[0].mxu0
    %v5222 = vpop.f32.mrb[0].mxu0
    %v5223 = vadd.f32 0.0, %v5222
    %v5224 = vpop.f32.mrb[0].mxu0
    %5225 = vmatprep.mubr.bf16.mxu0 0
    %5226 = vmatmul.mubr.bf16.gmra.mrb[0].mxu0 %v4787
    %v5227 = vpop.f32.mrb[0].mxu0
    %v5228 = vadd.f32 0.0, %v5227
    %v5229 = vpop.f32.mrb[0].mxu0
    %v5230 = vpop.f32.mrb[0].mxu0
    %v5231 = vadd.f32 0.0, %v5230
    %v5232 = vpop.f32.mrb[0].mxu0
    %5233 = vmatprep.mubr.bf16.mxu0 0
    %5234 = vmatmul.mubr.bf16.gmra.mrb[0].mxu0 %v4790
    %v5235 = vpop.f32.mrb[0].mxu0
    %v5236 = vadd.f32 0.0, %v5235
    %v5237 = vpop.f32.mrb[0].mxu0
    %v5238 = vpop.f32.mrb[0].mxu0
    %v5239 = vadd.f32 0.0, %v5238
    %v5240 = vpop.f32.mrb[0].mxu0
    %5241 = vmatprep.mubr.bf16.mxu0 0
    %5242 = vmatmul.mubr.bf16.gmra.mrb[0].mxu0 %v4793
    %v5243 = vpop.f32.mrb[0].mxu0
    %v5244 = vadd.f32 0.0, %v5243
    %v5245 = vpop.f32.mrb[0].mxu0
    %v5246 = vpop.f32.mrb[0].mxu0
    %v5247 = vadd.f32 0.0, %v5246
    %v5248 = vpop.f32.mrb[0].mxu0
    %5249 = vmatprep.mubr.bf16.mxu0 0
    %5250 = vmatmul.mubr.bf16.gmra.mrb[0].mxu0 %v4796
    %v5251 = vpop.f32.mrb[0].mxu0
    %v5252 = vadd.f32 0.0, %v5251
    %v5253 = vpop.f32.mrb[0].mxu0
    %v5254 = vpop.f32.mrb[0].mxu0
    %v5255 = vadd.f32 0.0, %v5254
    %v5256 = vpop.f32.mrb[0].mxu0
    %5257 = vmatprep.mubr.bf16.mxu0 0
    %5258 = vmatmul.mubr.bf16.gmra.mrb[0].mxu0 %v4799
    %v5259 = vpop.f32.mrb[0].mxu0
    %v5260 = vadd.f32 0.0, %v5259
    %v5261 = vpop.f32.mrb[0].mxu0
    %v5262 = vpop.f32.mrb[0].mxu0
    %v5263 = vadd.f32 0.0, %v5262
    %v5264 = vpop.f32.mrb[0].mxu0
    %5265 = vmatprep.mubr.bf16.mxu0 0
    %5266 = vmatmul.mubr.bf16.gmra.mrb[0].mxu0 %v4802
    %v5267 = vpop.f32.mrb[0].mxu0
    %v5268 = vadd.f32 0.0, %v5267
    %v5269 = vpop.f32.mrb[0].mxu0
    %v5270 = vpop.f32.mrb[0].mxu0
    %v5271 = vadd.f32 0.0, %v5270
    %v5272 = vpop.f32.mrb[0].mxu0
    %5273 = vmatprep.mubr.bf16.mxu0 0
    %5274 = vmatmul.mubr.bf16.gmra.mrb[0].mxu0 %v4805
    %v5275 = vpop.f32.mrb[0].mxu0
    %v5276 = vadd.f32 0.0, %v5275
    %v5277 = vpop.f32.mrb[0].mxu0
    %v5278 = vpop.f32.mrb[0].mxu0
    %v5279 = vadd.f32 0.0, %v5278
    %v5280 = vpop.f32.mrb[0].mxu0
    %5281 = vmatprep.mubr.bf16.mxu0 0
    %5282 = vmatmul.mubr.bf16.gmra.mrb[0].mxu0 %v4808
    %v5283 = vpop.f32.mrb[0].mxu0
    %v5284 = vadd.f32 0.0, %v5283
    %v5285 = vpop.f32.mrb[0].mxu0
    %v5286 = vpop.f32.mrb[0].mxu0
    %v5287 = vadd.f32 0.0, %v5286
    %v5288 = vpop.f32.mrb[0].mxu0
    %5289 = vmatprep.mubr.bf16.mxu0 0
    %5290 = vmatmul.mubr.bf16.gmra.mrb[0].mxu0 %v4811
    %v5291 = vpop.f32.mrb[0].mxu0
    %v5292 = vadd.f32 0.0, %v5291
    %v5293 = vpop.f32.mrb[0].mxu0
    %v5294 = vpop.f32.mrb[0].mxu0
    %v5295 = vadd.f32 0.0, %v5294
    %v5296 = vpop.f32.mrb[0].mxu0
    %5297 = vmatprep.mubr.bf16.mxu0 0
    %5298 = vmatmul.mubr.bf16.gmra.mrb[0].mxu0 %v4814
    %v5299 = vpop.f32.mrb[0].mxu0
    %v5300 = vadd.f32 0.0, %v5299
    %v5301 = vpop.f32.mrb[0].mxu0
    %v5302 = vpop.f32.mrb[0].mxu0
    %v5303 = vadd.f32 0.0, %v5302
    %v5304 = vpop.f32.mrb[0].mxu0
    %5305 = vmatprep.mubr.bf16.mxu0 0
    %5306 = vmatmul.mubr.bf16.gmra.mrb[0].mxu0 %v4817
    %v5307 = vpop.f32.mrb[0].mxu0
    %v5308 = vadd.f32 0.0, %v5307
    %v5309 = vpop.f32.mrb[0].mxu0
    %v5310 = vpop.f32.mrb[0].mxu0
    %v5311 = vadd.f32 0.0, %v5310
    %v5312 = vpop.f32.mrb[0].mxu0
    %5313 = vmatprep.mubr.bf16.mxu0 0
    %5314 = vmatmul.mubr.bf16.gmra.mrb[0].mxu0 %v4820
    %v5315 = vpop.f32.mrb[0].mxu0
    %v5316 = vadd.f32 0.0, %v5315
    %v5317 = vpop.f32.mrb[0].mxu0
    %v5318 = vpop.f32.mrb[0].mxu0
    %v5319 = vadd.f32 0.0, %v5318
    %v5320 = vpop.f32.mrb[0].mxu0
    %5321 = vmatprep.mubr.bf16.mxu0 0
    %5322 = vmatmul.mubr.bf16.gmra.mrb[0].mxu0 %v4823
    %v5323 = vpop.f32.mrb[0].mxu0
    %v5324 = vadd.f32 0.0, %v5323
    %v5325 = vpop.f32.mrb[0].mxu0
    %v5326 = vpop.f32.mrb[0].mxu0
    %v5327 = vadd.f32 0.0, %v5326
    %v5328 = vpop.f32.mrb[0].mxu0
    %5329 = vmatprep.mubr.bf16.mxu0 0
    %5330 = vmatmul.mubr.bf16.gmra.mrb[0].mxu0 %v4826
    %v5331 = vpop.f32.mrb[0].mxu0
    %v5332 = vadd.f32 0.0, %v5331
    %v5333 = vpop.f32.mrb[0].mxu0
    %v5334 = vpop.f32.mrb[0].mxu0
    %v5335 = vadd.f32 0.0, %v5334
    %v5336 = vpop.f32.mrb[0].mxu0
    %5337 = vmatprep.mubr.bf16.mxu0 0
    %5338 = vmatmul.mubr.bf16.gmra.mrb[0].mxu0 %v4829
    %v5339 = vpop.f32.mrb[0].mxu0
    %v5340 = vadd.f32 0.0, %v5339
    %v5341 = vpop.f32.mrb[0].mxu0
    %v5342 = vpop.f32.mrb[0].mxu0
    %v5343 = vadd.f32 0.0, %v5342
    %v5344 = vpop.f32.mrb[0].mxu0
    %5345 = vmatprep.mubr.bf16.mxu0 0
    %5346 = vmatmul.mubr.bf16.gmra.mrb[0].mxu0 %v4832
    %v5347 = vpop.f32.mrb[0].mxu0
    %v5348 = vadd.f32 0.0, %v5347
    %v5349 = vpop.f32.mrb[0].mxu0
    %v5350 = vpop.f32.mrb[0].mxu0
    %v5351 = vadd.f32 0.0, %v5350
    %v5352 = vpop.f32.mrb[0].mxu0
    %5353 = vmatprep.mubr.bf16.mxu0 0
    %5354 = vmatmul.mubr.bf16.gmra.mrb[0].mxu0 %v4835
    %v5355 = vpop.f32.mrb[0].mxu0
    %v5356 = vadd.f32 0.0, %v5355
    %v5357 = vpop.f32.mrb[0].mxu0
    %v5358 = vpop.f32.mrb[0].mxu0
    %v5359 = vadd.f32 0.0, %v5358
    %v5360 = vpop.f32.mrb[0].mxu0
    %5361 = vmatprep.mubr.bf16.mxu0 0
    %5362 = vmatmul.mubr.bf16.gmra.mrb[0].mxu0 %v4838
    %v5363 = vpop.f32.mrb[0].mxu0
    %v5364 = vadd.f32 0.0, %v5363
    %v5365 = vpop.f32.mrb[0].mxu0
    %v5366 = vpop.f32.mrb[0].mxu0
    %v5367 = vadd.f32 0.0, %v5366
    %v5368 = vpop.f32.mrb[0].mxu0
    %5369 = vmatprep.mubr.bf16.mxu0 0
    %5370 = vmatmul.mubr.bf16.gmra.mrb[0].mxu0 %v4841
    %v5371 = vpop.f32.mrb[0].mxu0
    %v5372 = vadd.f32 0.0, %v5371
    %v5373 = vpop.f32.mrb[0].mxu0
    %v5374 = vpop.f32.mrb[0].mxu0
    %v5375 = vadd.f32 0.0, %v5374
    %v5376 = vpop.f32.mrb[0].mxu0
    %5377 = vmatprep.mubr.bf16.mxu0 0
    %5378 = vmatmul.mubr.bf16.gmra.mrb[0].mxu0 %v4844
    %v5379 = vpop.f32.mrb[0].mxu0
    %v5380 = vadd.f32 0.0, %v5379
    %v5381 = vpop.f32.mrb[0].mxu0
    %v5382 = vpop.f32.mrb[0].mxu0
    %v5383 = vadd.f32 0.0, %v5382
    %v5384 = vpop.f32.mrb[0].mxu0
    %5385 = vmatprep.mubr.bf16.mxu0 0
    %5386 = vmatmul.mubr.bf16.gmra.mrb[0].mxu0 %v4847
    %v5387 = vpop.f32.mrb[0].mxu0
    %v5388 = vadd.f32 0.0, %v5387
    %v5389 = vpop.f32.mrb[0].mxu0
    %v5390 = vpop.f32.mrb[0].mxu0
    %v5391 = vadd.f32 0.0, %v5390
    %v5392 = vpop.f32.mrb[0].mxu0
    %5393 = vdwg.mxu0
    %v5394 = vld [vmem:[%s6] sm:$0xff]
    %v5395 = vld [vmem:[%s6 + $0x8] sm:$0xff]
    %v5396 = vld [vmem:[%s6 + $0x10] sm:$0xff]
    %v5397 = vld [vmem:[%s6 + $0x18] sm:$0xff]
    %v5398 = vld [vmem:[%s6 + $0x20] sm:$0xff]
    %v5399 = vld [vmem:[%s6 + $0x28] sm:$0xff]
    %v5400 = vld [vmem:[%s6 + $0x30] sm:$0xff]
    %v5401 = vld [vmem:[%s6 + $0x38] sm:$0xff]
    %v5402 = vld [vmem:[%s6 + $0x40] sm:$0xff]
    %v5403 = vld [vmem:[%s6 + $0x48] sm:$0xff]
    %v5404 = vld [vmem:[%s6 + $0x50] sm:$0xff]
    %v5405 = vld [vmem:[%s6 + $0x58] sm:$0xff]
    %v5406 = vld [vmem:[%s6 + $0x60] sm:$0xff]
    %v5407 = vld [vmem:[%s6 + $0x68] sm:$0xff]
    %v5408 = vld [vmem:[%s6 + $0x70] sm:$0xff]
    %v5409 = vld [vmem:[%s6 + $0x78] sm:$0xff]
    %v5410 = vld [vmem:[%s6 + $0x80] sm:$0xff]
    %v5411 = vld [vmem:[%s6 + $0x88] sm:$0xff]
    %v5412 = vld [vmem:[%s6 + $0x90] sm:$0xff]
    %v5413 = vld [vmem:[%s6 + $0x98] sm:$0xff]
    %v5414 = vld [vmem:[%s6 + $0xa0] sm:$0xff]
    %v5415 = vld [vmem:[%s6 + $0xa8] sm:$0xff]
    %v5416 = vld [vmem:[%s6 + $0xb0] sm:$0xff]
    %v5417 = vld [vmem:[%s6 + $0xb8] sm:$0xff]
    %v5418 = vld [vmem:[%s6 + $0xc0] sm:$0xff]
    %v5419 = vld [vmem:[%s6 + $0xc8] sm:$0xff]
    %v5420 = vld [vmem:[%s6 + $0xd0] sm:$0xff]
    %v5421 = vld [vmem:[%s6 + $0xd8] sm:$0xff]
    %v5422 = vld [vmem:[%s6 + $0xe0] sm:$0xff]
    %v5423 = vld [vmem:[%s6 + $0xe8] sm:$0xff]
    %v5424 = vld [vmem:[%s6 + $0xf0] sm:$0xff]
    %v5425 = vld [vmem:[%s6 + $0xf8] sm:$0xff]
    %v5426 = vld [vmem:[%s6 + $0x100] sm:$0xff]
    %v5427 = vld [vmem:[%s6 + $0x108] sm:$0xff]
    %v5428 = vld [vmem:[%s6 + $0x110] sm:$0xff]
    %v5429 = vld [vmem:[%s6 + $0x118] sm:$0xff]
    %v5430 = vld [vmem:[%s6 + $0x120] sm:$0xff]
    %v5431 = vld [vmem:[%s6 + $0x128] sm:$0xff]
    %v5432 = vld [vmem:[%s6 + $0x130] sm:$0xff]
    %v5433 = vld [vmem:[%s6 + $0x138] sm:$0xff]
    %v5434 = vld [vmem:[%s6 + $0x140] sm:$0xff]
    %v5435 = vld [vmem:[%s6 + $0x148] sm:$0xff]
    %v5436 = vld [vmem:[%s6 + $0x150] sm:$0xff]
    %v5437 = vld [vmem:[%s6 + $0x158] sm:$0xff]
    %v5438 = vld [vmem:[%s6 + $0x160] sm:$0xff]
    %v5439 = vld [vmem:[%s6 + $0x168] sm:$0xff]
    %v5440 = vld [vmem:[%s6 + $0x170] sm:$0xff]
    %v5441 = vld [vmem:[%s6 + $0x178] sm:$0xff]
    %v5442 = vld [vmem:[%s6 + $0x180] sm:$0xff]
    %v5443 = vld [vmem:[%s6 + $0x188] sm:$0xff]
    %v5444 = vld [vmem:[%s6 + $0x190] sm:$0xff]
    %v5445 = vld [vmem:[%s6 + $0x198] sm:$0xff]
    %v5446 = vld [vmem:[%s6 + $0x1a0] sm:$0xff]
    %v5447 = vld [vmem:[%s6 + $0x1a8] sm:$0xff]
    %v5448 = vld [vmem:[%s6 + $0x1b0] sm:$0xff]
    %v5449 = vld [vmem:[%s6 + $0x1b8] sm:$0xff]
    %v5450 = vld [vmem:[%s6 + $0x1c0] sm:$0xff]
    %v5451 = vld [vmem:[%s6 + $0x1c8] sm:$0xff]
    %v5452 = vld [vmem:[%s6 + $0x1d0] sm:$0xff]
    %v5453 = vld [vmem:[%s6 + $0x1d8] sm:$0xff]
    %v5454 = vld [vmem:[%s6 + $0x1e0] sm:$0xff]
    %v5455 = vld [vmem:[%s6 + $0x1e8] sm:$0xff]
    %v5456 = vld [vmem:[%s6 + $0x1f0] sm:$0xff]
    %v5457 = vld [vmem:[%s6 + $0x1f8] sm:$0xff]
    %v5458 = vld [vmem:[%s6 + $0x200] sm:$0xff]
    %v5459 = vld [vmem:[%s6 + $0x208] sm:$0xff]
    %v5460 = vld [vmem:[%s6 + $0x210] sm:$0xff]
    %v5461 = vld [vmem:[%s6 + $0x218] sm:$0xff]
    %v5462 = vld [vmem:[%s6 + $0x220] sm:$0xff]
    %v5463 = vld [vmem:[%s6 + $0x228] sm:$0xff]
    %v5464 = vld [vmem:[%s6 + $0x230] sm:$0xff]
    %v5465 = vld [vmem:[%s6 + $0x238] sm:$0xff]
    %v5466 = vld [vmem:[%s6 + $0x240] sm:$0xff]
    %v5467 = vld [vmem:[%s6 + $0x248] sm:$0xff]
    %v5468 = vld [vmem:[%s6 + $0x250] sm:$0xff]
    %v5469 = vld [vmem:[%s6 + $0x258] sm:$0xff]
    %v5470 = vld [vmem:[%s6 + $0x260] sm:$0xff]
    %v5471 = vld [vmem:[%s6 + $0x268] sm:$0xff]
    %v5472 = vld [vmem:[%s6 + $0x270] sm:$0xff]
    %v5473 = vld [vmem:[%s6 + $0x278] sm:$0xff]
    %v5474 = vld [vmem:[%s6 + $0x280] sm:$0xff]
    %v5475 = vld [vmem:[%s6 + $0x288] sm:$0xff]
    %v5476 = vld [vmem:[%s6 + $0x290] sm:$0xff]
    %v5477 = vld [vmem:[%s6 + $0x298] sm:$0xff]
    %v5478 = vld [vmem:[%s6 + $0x2a0] sm:$0xff]
    %v5479 = vld [vmem:[%s6 + $0x2a8] sm:$0xff]
    %v5480 = vld [vmem:[%s6 + $0x2b0] sm:$0xff]
    %v5481 = vld [vmem:[%s6 + $0x2b8] sm:$0xff]
    %v5482 = vld [vmem:[%s6 + $0x2c0] sm:$0xff]
    %v5483 = vld [vmem:[%s6 + $0x2c8] sm:$0xff]
    %v5484 = vld [vmem:[%s6 + $0x2d0] sm:$0xff]
    %v5485 = vld [vmem:[%s6 + $0x2d8] sm:$0xff]
    %v5486 = vld [vmem:[%s6 + $0x2e0] sm:$0xff]
    %v5487 = vld [vmem:[%s6 + $0x2e8] sm:$0xff]
    %v5488 = vld [vmem:[%s6 + $0x2f0] sm:$0xff]
    %v5489 = vld [vmem:[%s6 + $0x2f8] sm:$0xff]
    %v5490 = vld [vmem:[%s6 + $0x300] sm:$0xff]
    %v5491 = vld [vmem:[%s6 + $0x308] sm:$0xff]
    %v5492 = vld [vmem:[%s6 + $0x310] sm:$0xff]
    %v5493 = vld [vmem:[%s6 + $0x318] sm:$0xff]
    %v5494 = vld [vmem:[%s6 + $0x320] sm:$0xff]
    %v5495 = vld [vmem:[%s6 + $0x328] sm:$0xff]
    %v5496 = vld [vmem:[%s6 + $0x330] sm:$0xff]
    %v5497 = vld [vmem:[%s6 + $0x338] sm:$0xff]
    %v5498 = vld [vmem:[%s6 + $0x340] sm:$0xff]
    %v5499 = vld [vmem:[%s6 + $0x348] sm:$0xff]
    %v5500 = vld [vmem:[%s6 + $0x350] sm:$0xff]
    %v5501 = vld [vmem:[%s6 + $0x358] sm:$0xff]
    %v5502 = vld [vmem:[%s6 + $0x360] sm:$0xff]
    %v5503 = vld [vmem:[%s6 + $0x368] sm:$0xff]
    %v5504 = vld [vmem:[%s6 + $0x370] sm:$0xff]
    %v5505 = vld [vmem:[%s6 + $0x378] sm:$0xff]
    %v5506 = vld [vmem:[%s6 + $0x380] sm:$0xff]
    %v5507 = vld [vmem:[%s6 + $0x388] sm:$0xff]
    %v5508 = vld [vmem:[%s6 + $0x390] sm:$0xff]
    %v5509 = vld [vmem:[%s6 + $0x398] sm:$0xff]
    %v5510 = vld [vmem:[%s6 + $0x3a0] sm:$0xff]
    %v5511 = vld [vmem:[%s6 + $0x3a8] sm:$0xff]
    %v5512 = vld [vmem:[%s6 + $0x3b0] sm:$0xff]
    %v5513 = vld [vmem:[%s6 + $0x3b8] sm:$0xff]
    %v5514 = vld [vmem:[%s6 + $0x3c0] sm:$0xff]
    %v5515 = vld [vmem:[%s6 + $0x3c8] sm:$0xff]
    %v5516 = vld [vmem:[%s6 + $0x3d0] sm:$0xff]
    %v5517 = vld [vmem:[%s6 + $0x3d8] sm:$0xff]
    %v5518 = vld [vmem:[%s6 + $0x3e0] sm:$0xff]
    %v5519 = vld [vmem:[%s6 + $0x3e8] sm:$0xff]
    %v5520 = vld [vmem:[%s6 + $0x3f0] sm:$0xff]
    %v5521 = vld [vmem:[%s6 + $0x3f8] sm:$0xff]
    %v5522 = vmul.f32 %v4884, %v5394
    %v5523 = vmul.f32 %v4887, %v5395
    %v5524 = vmul.f32 %v4892, %v5396
    %v5525 = vmul.f32 %v4895, %v5397
    %v5526 = vmul.f32 %v4900, %v5398
    %v5527 = vmul.f32 %v4903, %v5399
    %v5528 = vmul.f32 %v4908, %v5400
    %v5529 = vmul.f32 %v4911, %v5401
    %v5530 = vmul.f32 %v4916, %v5402
    %v5531 = vmul.f32 %v4919, %v5403
    %v5532 = vmul.f32 %v4924, %v5404
    %v5533 = vmul.f32 %v4927, %v5405
    %v5534 = vmul.f32 %v4932, %v5406
    %v5535 = vmul.f32 %v4935, %v5407
    %v5536 = vmul.f32 %v4940, %v5408
    %v5537 = vmul.f32 %v4943, %v5409
    %v5538 = vmul.f32 %v4948, %v5410
    %v5539 = vmul.f32 %v4951, %v5411
    %v5540 = vmul.f32 %v4956, %v5412
    %v5541 = vmul.f32 %v4959, %v5413
    %v5542 = vmul.f32 %v4964, %v5414
    %v5543 = vmul.f32 %v4967, %v5415
    %v5544 = vmul.f32 %v4972, %v5416
    %v5545 = vmul.f32 %v4975, %v5417
    %v5546 = vmul.f32 %v4980, %v5418
    %v5547 = vmul.f32 %v4983, %v5419
    %v5548 = vmul.f32 %v4988, %v5420
    %v5549 = vmul.f32 %v4991, %v5421
    %v5550 = vmul.f32 %v4996, %v5422
    %v5551 = vmul.f32 %v4999, %v5423
    %v5552 = vmul.f32 %v5004, %v5424
    %v5553 = vmul.f32 %v5007, %v5425
    %v5554 = vmul.f32 %v5012, %v5426
    %v5555 = vmul.f32 %v5015, %v5427
    %v5556 = vmul.f32 %v5020, %v5428
    %v5557 = vmul.f32 %v5023, %v5429
    %v5558 = vmul.f32 %v5028, %v5430
    %v5559 = vmul.f32 %v5031, %v5431
    %v5560 = vmul.f32 %v5036, %v5432
    %v5561 = vmul.f32 %v5039, %v5433
    %v5562 = vmul.f32 %v5044, %v5434
    %v5563 = vmul.f32 %v5047, %v5435
    %v5564 = vmul.f32 %v5052, %v5436
    %v5565 = vmul.f32 %v5055, %v5437
    %v5566 = vmul.f32 %v5060, %v5438
    %v5567 = vmul.f32 %v5063, %v5439
    %v5568 = vmul.f32 %v5068, %v5440
    %v5569 = vmul.f32 %v5071, %v5441
    %v5570 = vmul.f32 %v5076, %v5442
    %v5571 = vmul.f32 %v5079, %v5443
    %v5572 = vmul.f32 %v5084, %v5444
    %v5573 = vmul.f32 %v5087, %v5445
    %v5574 = vmul.f32 %v5092, %v5446
    %v5575 = vmul.f32 %v5095, %v5447
    %v5576 = vmul.f32 %v5100, %v5448
    %v5577 = vmul.f32 %v5103, %v5449
    %v5578 = vmul.f32 %v5108, %v5450
    %v5579 = vmul.f32 %v5111, %v5451
    %v5580 = vmul.f32 %v5116, %v5452
    %v5581 = vmul.f32 %v5119, %v5453
    %v5582 = vmul.f32 %v5124, %v5454
    %v5583 = vmul.f32 %v5127, %v5455
    %v5584 = vmul.f32 %v5132, %v5456
    %v5585 = vmul.f32 %v5135, %v5457
    %v5586 = vmul.f32 %v5140, %v5458
    %v5587 = vmul.f32 %v5143, %v5459
    %v5588 = vmul.f32 %v5148, %v5460
    %v5589 = vmul.f32 %v5151, %v5461
    %v5590 = vmul.f32 %v5156, %v5462
    %v5591 = vmul.f32 %v5159, %v5463
    %v5592 = vmul.f32 %v5164, %v5464
    %v5593 = vmul.f32 %v5167, %v5465
    %v5594 = vmul.f32 %v5172, %v5466
    %v5595 = vmul.f32 %v5175, %v5467
    %v5596 = vmul.f32 %v5180, %v5468
    %v5597 = vmul.f32 %v5183, %v5469
    %v5598 = vmul.f32 %v5188, %v5470
    %v5599 = vmul.f32 %v5191, %v5471
    %v5600 = vmul.f32 %v5196, %v5472
    %v5601 = vmul.f32 %v5199, %v5473
    %v5602 = vmul.f32 %v5204, %v5474
    %v5603 = vmul.f32 %v5207, %v5475
    %v5604 = vmul.f32 %v5212, %v5476
    %v5605 = vmul.f32 %v5215, %v5477
    %v5606 = vmul.f32 %v5220, %v5478
    %v5607 = vmul.f32 %v5223, %v5479
    %v5608 = vmul.f32 %v5228, %v5480
    %v5609 = vmul.f32 %v5231, %v5481
    %v5610 = vmul.f32 %v5236, %v5482
    %v5611 = vmul.f32 %v5239, %v5483
    %v5612 = vmul.f32 %v5244, %v5484
    %v5613 = vmul.f32 %v5247, %v5485
    %v5614 = vmul.f32 %v5252, %v5486
    %v5615 = vmul.f32 %v5255, %v5487
    %v5616 = vmul.f32 %v5260, %v5488
    %v5617 = vmul.f32 %v5263, %v5489
    %v5618 = vmul.f32 %v5268, %v5490
    %v5619 = vmul.f32 %v5271, %v5491
    %v5620 = vmul.f32 %v5276, %v5492
    %v5621 = vmul.f32 %v5279, %v5493
    %v5622 = vmul.f32 %v5284, %v5494
    %v5623 = vmul.f32 %v5287, %v5495
    %v5624 = vmul.f32 %v5292, %v5496
    %v5625 = vmul.f32 %v5295, %v5497
    %v5626 = vmul.f32 %v5300, %v5498
    %v5627 = vmul.f32 %v5303, %v5499
    %v5628 = vmul.f32 %v5308, %v5500
    %v5629 = vmul.f32 %v5311, %v5501
    %v5630 = vmul.f32 %v5316, %v5502
    %v5631 = vmul.f32 %v5319, %v5503
    %v5632 = vmul.f32 %v5324, %v5504
    %v5633 = vmul.f32 %v5327, %v5505
    %v5634 = vmul.f32 %v5332, %v5506
    %v5635 = vmul.f32 %v5335, %v5507
    %v5636 = vmul.f32 %v5340, %v5508
    %v5637 = vmul.f32 %v5343, %v5509
    %v5638 = vmul.f32 %v5348, %v5510
    %v5639 = vmul.f32 %v5351, %v5511
    %v5640 = vmul.f32 %v5356, %v5512
    %v5641 = vmul.f32 %v5359, %v5513
    %v5642 = vmul.f32 %v5364, %v5514
    %v5643 = vmul.f32 %v5367, %v5515
    %v5644 = vmul.f32 %v5372, %v5516
    %v5645 = vmul.f32 %v5375, %v5517
    %v5646 = vmul.f32 %v5380, %v5518
    %v5647 = vmul.f32 %v5383, %v5519
    %v5648 = vmul.f32 %v5388, %v5520
    %v5649 = vmul.f32 %v5391, %v5521
    %v5650 = vpack.c.bf16 %v5523, %v5522
    %v5651 = vpack.c.bf16 %v5525, %v5524
    %v5652 = vpack.c.bf16 %v5527, %v5526
    %v5653 = vpack.c.bf16 %v5529, %v5528
    %v5654 = vpack.c.bf16 %v5531, %v5530
    %v5655 = vpack.c.bf16 %v5533, %v5532
    %v5656 = vpack.c.bf16 %v5535, %v5534
    %v5657 = vpack.c.bf16 %v5537, %v5536
    %v5658 = vpack.c.bf16 %v5539, %v5538
    %v5659 = vpack.c.bf16 %v5541, %v5540
    %v5660 = vpack.c.bf16 %v5543, %v5542
    %v5661 = vpack.c.bf16 %v5545, %v5544
    %v5662 = vpack.c.bf16 %v5547, %v5546
    %v5663 = vpack.c.bf16 %v5549, %v5548
    %v5664 = vpack.c.bf16 %v5551, %v5550
    %v5665 = vpack.c.bf16 %v5553, %v5552
    %v5666 = vpack.c.bf16 %v5555, %v5554
    %v5667 = vpack.c.bf16 %v5557, %v5556
    %v5668 = vpack.c.bf16 %v5559, %v5558
    %v5669 = vpack.c.bf16 %v5561, %v5560
    %v5670 = vpack.c.bf16 %v5563, %v5562
    %v5671 = vpack.c.bf16 %v5565, %v5564
    %v5672 = vpack.c.bf16 %v5567, %v5566
    %v5673 = vpack.c.bf16 %v5569, %v5568
    %v5674 = vpack.c.bf16 %v5571, %v5570
    %v5675 = vpack.c.bf16 %v5573, %v5572
    %v5676 = vpack.c.bf16 %v5575, %v5574
    %v5677 = vpack.c.bf16 %v5577, %v5576
    %v5678 = vpack.c.bf16 %v5579, %v5578
    %v5679 = vpack.c.bf16 %v5581, %v5580
    %v5680 = vpack.c.bf16 %v5583, %v5582
    %v5681 = vpack.c.bf16 %v5585, %v5584
    %v5682 = vpack.c.bf16 %v5587, %v5586
    %v5683 = vpack.c.bf16 %v5589, %v5588
    %v5684 = vpack.c.bf16 %v5591, %v5590
    %v5685 = vpack.c.bf16 %v5593, %v5592
    %v5686 = vpack.c.bf16 %v5595, %v5594
    %v5687 = vpack.c.bf16 %v5597, %v5596
    %v5688 = vpack.c.bf16 %v5599, %v5598
    %v5689 = vpack.c.bf16 %v5601, %v5600
    %v5690 = vpack.c.bf16 %v5603, %v5602
    %v5691 = vpack.c.bf16 %v5605, %v5604
    %v5692 = vpack.c.bf16 %v5607, %v5606
    %v5693 = vpack.c.bf16 %v5609, %v5608
    %v5694 = vpack.c.bf16 %v5611, %v5610
    %v5695 = vpack.c.bf16 %v5613, %v5612
    %v5696 = vpack.c.bf16 %v5615, %v5614
    %v5697 = vpack.c.bf16 %v5617, %v5616
    %v5698 = vpack.c.bf16 %v5619, %v5618
    %v5699 = vpack.c.bf16 %v5621, %v5620
    %v5700 = vpack.c.bf16 %v5623, %v5622
    %v5701 = vpack.c.bf16 %v5625, %v5624
    %v5702 = vpack.c.bf16 %v5627, %v5626
    %v5703 = vpack.c.bf16 %v5629, %v5628
    %v5704 = vpack.c.bf16 %v5631, %v5630
    %v5705 = vpack.c.bf16 %v5633, %v5632
    %v5706 = vpack.c.bf16 %v5635, %v5634
    %v5707 = vpack.c.bf16 %v5637, %v5636
    %v5708 = vpack.c.bf16 %v5639, %v5638
    %v5709 = vpack.c.bf16 %v5641, %v5640
    %v5710 = vpack.c.bf16 %v5643, %v5642
    %v5711 = vpack.c.bf16 %v5645, %v5644
    %v5712 = vpack.c.bf16 %v5647, %v5646
    %v5713 = vpack.c.bf16 %v5649, %v5648
    %v5714 = vld [vmem:[%s7] sm:$0x1]
    %5715 = vmatprep.subr.bf16.mxu0 0
    %5716 = vmatpush1.bf16.xpose.msra.mxu0 %v5650
    %5717 = vmatprep.subr.bf16.mxu0 0
    %5718 = vmatpush1.bf16.xpose.msra.mxu0 %v5651
    %5719 = vmatprep.subr.bf16.mxu0 0
    %5720 = vmatpush1.bf16.xpose.msra.mxu0 %v5652
    %5721 = vmatprep.subr.bf16.mxu0 0
    %5722 = vmatpush1.bf16.xpose.msra.mxu0 %v5653
    %5723 = vmatprep.subr.bf16.mxu0 0
    %5724 = vmatpush1.bf16.xpose.msra.mxu0 %v5654
    %5725 = vmatprep.subr.bf16.mxu0 0
    %5726 = vmatpush1.bf16.xpose.msra.mxu0 %v5655
    %5727 = vmatprep.subr.bf16.mxu0 0
    %5728 = vmatpush1.bf16.xpose.msra.mxu0 %v5656
    %5729 = vmatprep.subr.bf16.mxu0 0
    %5730 = vmatpush1.bf16.xpose.msra.mxu0 %v5657
    %5731 = vmatprep.subr.bf16.mxu0 0
    %5732 = vmatpush1.bf16.xpose.msra.mxu0 %v5658
    %5733 = vmatprep.subr.bf16.mxu0 0
    %5734 = vmatpush1.bf16.xpose.msra.mxu0 %v5659
    %5735 = vmatprep.subr.bf16.mxu0 0
    %5736 = vmatpush1.bf16.xpose.msra.mxu0 %v5660
    %5737 = vmatprep.subr.bf16.mxu0 0
    %5738 = vmatpush1.bf16.xpose.msra.mxu0 %v5661
    %5739 = vmatprep.subr.bf16.mxu0 0
    %5740 = vmatpush1.bf16.xpose.msra.mxu0 %v5662
    %5741 = vmatprep.subr.bf16.mxu0 0
    %5742 = vmatpush1.bf16.xpose.msra.mxu0 %v5663
    %5743 = vmatprep.subr.bf16.mxu0 0
    %5744 = vmatpush1.bf16.xpose.msra.mxu0 %v5664
    %5745 = vmatprep.subr.bf16.mxu0 0
    %5746 = vmatpush1.bf16.xpose.msra.mxu0 %v5665
    %5747 = vmatprep.mubr.bf16.mxu0 0
    %5748 = vmatmul.mubr.bf16.gmra.mrb[0].mxu0 %v5714
    %v5749 = vpop.f32.mrb[0].mxu0
    %v5750 = vadd.f32 0.0, %v5749
    %v5751 = vpop.f32.mrb[0].mxu0
    %v5752 = vadd.f32 0.0, %v5751
    %v5753 = vpop.f32.mrb[0].mxu0
    %v5754 = vpop.f32.mrb[0].mxu0
    %5755 = vdwg.mxu0
    %5756 = vmatprep.subr.bf16.mxu0 0
    %5757 = vmatpush1.bf16.xpose.msra.mxu0 %v5666
    %5758 = vmatprep.subr.bf16.mxu0 0
    %5759 = vmatpush1.bf16.xpose.msra.mxu0 %v5667
    %5760 = vmatprep.subr.bf16.mxu0 0
    %5761 = vmatpush1.bf16.xpose.msra.mxu0 %v5668
    %5762 = vmatprep.subr.bf16.mxu0 0
    %5763 = vmatpush1.bf16.xpose.msra.mxu0 %v5669
    %5764 = vmatprep.subr.bf16.mxu0 0
    %5765 = vmatpush1.bf16.xpose.msra.mxu0 %v5670
    %5766 = vmatprep.subr.bf16.mxu0 0
    %5767 = vmatpush1.bf16.xpose.msra.mxu0 %v5671
    %5768 = vmatprep.subr.bf16.mxu0 0
    %5769 = vmatpush1.bf16.xpose.msra.mxu0 %v5672
    %5770 = vmatprep.subr.bf16.mxu0 0
    %5771 = vmatpush1.bf16.xpose.msra.mxu0 %v5673
    %5772 = vmatprep.subr.bf16.mxu0 0
    %5773 = vmatpush1.bf16.xpose.msra.mxu0 %v5674
    %5774 = vmatprep.subr.bf16.mxu0 0
    %5775 = vmatpush1.bf16.xpose.msra.mxu0 %v5675
    %5776 = vmatprep.subr.bf16.mxu0 0
    %5777 = vmatpush1.bf16.xpose.msra.mxu0 %v5676
    %5778 = vmatprep.subr.bf16.mxu0 0
    %5779 = vmatpush1.bf16.xpose.msra.mxu0 %v5677
    %5780 = vmatprep.subr.bf16.mxu0 0
    %5781 = vmatpush1.bf16.xpose.msra.mxu0 %v5678
    %5782 = vmatprep.subr.bf16.mxu0 0
    %5783 = vmatpush1.bf16.xpose.msra.mxu0 %v5679
    %5784 = vmatprep.subr.bf16.mxu0 0
    %5785 = vmatpush1.bf16.xpose.msra.mxu0 %v5680
    %5786 = vmatprep.subr.bf16.mxu0 0
    %5787 = vmatpush1.bf16.xpose.msra.mxu0 %v5681
    %5788 = vmatprep.mubr.bf16.mxu0 0
    %5789 = vmatmul.mubr.bf16.gmra.mrb[0].mxu0 %v5714
    %v5790 = vpop.f32.mrb[0].mxu0
    %v5791 = vadd.f32 0.0, %v5790
    %v5792 = vpop.f32.mrb[0].mxu0
    %v5793 = vadd.f32 0.0, %v5792
    %v5794 = vpop.f32.mrb[0].mxu0
    %v5795 = vpop.f32.mrb[0].mxu0
    %5796 = vdwg.mxu0
    %5797 = vmatprep.subr.bf16.mxu0 0
    %5798 = vmatpush1.bf16.xpose.msra.mxu0 %v5682
    %5799 = vmatprep.subr.bf16.mxu0 0
    %5800 = vmatpush1.bf16.xpose.msra.mxu0 %v5683
    %5801 = vmatprep.subr.bf16.mxu0 0
    %5802 = vmatpush1.bf16.xpose.msra.mxu0 %v5684
    %5803 = vmatprep.subr.bf16.mxu0 0
    %5804 = vmatpush1.bf16.xpose.msra.mxu0 %v5685
    %5805 = vmatprep.subr.bf16.mxu0 0
    %5806 = vmatpush1.bf16.xpose.msra.mxu0 %v5686
    %5807 = vmatprep.subr.bf16.mxu0 0
    %5808 = vmatpush1.bf16.xpose.msra.mxu0 %v5687
    %5809 = vmatprep.subr.bf16.mxu0 0
    %5810 = vmatpush1.bf16.xpose.msra.mxu0 %v5688
    %5811 = vmatprep.subr.bf16.mxu0 0
    %5812 = vmatpush1.bf16.xpose.msra.mxu0 %v5689
    %5813 = vmatprep.subr.bf16.mxu0 0
    %5814 = vmatpush1.bf16.xpose.msra.mxu0 %v5690
    %5815 = vmatprep.subr.bf16.mxu0 0
    %5816 = vmatpush1.bf16.xpose.msra.mxu0 %v5691
    %5817 = vmatprep.subr.bf16.mxu0 0
    %5818 = vmatpush1.bf16.xpose.msra.mxu0 %v5692
    %5819 = vmatprep.subr.bf16.mxu0 0
    %5820 = vmatpush1.bf16.xpose.msra.mxu0 %v5693
    %5821 = vmatprep.subr.bf16.mxu0 0
    %5822 = vmatpush1.bf16.xpose.msra.mxu0 %v5694
    %5823 = vmatprep.subr.bf16.mxu0 0
    %5824 = vmatpush1.bf16.xpose.msra.mxu0 %v5695
    %5825 = vmatprep.subr.bf16.mxu0 0
    %5826 = vmatpush1.bf16.xpose.msra.mxu0 %v5696
    %5827 = vmatprep.subr.bf16.mxu0 0
    %5828 = vmatpush1.bf16.xpose.msra.mxu0 %v5697
    %5829 = vmatprep.mubr.bf16.mxu0 0
    %5830 = vmatmul.mubr.bf16.gmra.mrb[0].mxu0 %v5714
    %v5831 = vpop.f32.mrb[0].mxu0
    %v5832 = vadd.f32 0.0, %v5831
    %v5833 = vpop.f32.mrb[0].mxu0
    %v5834 = vadd.f32 0.0, %v5833
    %v5835 = vpop.f32.mrb[0].mxu0
    %v5836 = vpop.f32.mrb[0].mxu0
    %5837 = vdwg.mxu0
    %5838 = vmatprep.subr.bf16.mxu0 0
    %5839 = vmatpush1.bf16.xpose.msra.mxu0 %v5698
    %5840 = vmatprep.subr.bf16.mxu0 0
    %5841 = vmatpush1.bf16.xpose.msra.mxu0 %v5699
    %5842 = vmatprep.subr.bf16.mxu0 0
    %5843 = vmatpush1.bf16.xpose.msra.mxu0 %v5700
    %5844 = vmatprep.subr.bf16.mxu0 0
    %5845 = vmatpush1.bf16.xpose.msra.mxu0 %v5701
    %5846 = vmatprep.subr.bf16.mxu0 0
    %5847 = vmatpush1.bf16.xpose.msra.mxu0 %v5702
    %5848 = vmatprep.subr.bf16.mxu0 0
    %5849 = vmatpush1.bf16.xpose.msra.mxu0 %v5703
    %5850 = vmatprep.subr.bf16.mxu0 0
    %5851 = vmatpush1.bf16.xpose.msra.mxu0 %v5704
    %5852 = vmatprep.subr.bf16.mxu0 0
    %5853 = vmatpush1.bf16.xpose.msra.mxu0 %v5705
    %5854 = vmatprep.subr.bf16.mxu0 0
    %5855 = vmatpush1.bf16.xpose.msra.mxu0 %v5706
    %5856 = vmatprep.subr.bf16.mxu0 0
    %5857 = vmatpush1.bf16.xpose.msra.mxu0 %v5707
    %5858 = vmatprep.subr.bf16.mxu0 0
    %5859 = vmatpush1.bf16.xpose.msra.mxu0 %v5708
    %5860 = vmatprep.subr.bf16.mxu0 0
    %5861 = vmatpush1.bf16.xpose.msra.mxu0 %v5709
    %5862 = vmatprep.subr.bf16.mxu0 0
    %5863 = vmatpush1.bf16.xpose.msra.mxu0 %v5710
    %5864 = vmatprep.subr.bf16.mxu0 0
    %5865 = vmatpush1.bf16.xpose.msra.mxu0 %v5711
    %5866 = vmatprep.subr.bf16.mxu0 0
    %5867 = vmatpush1.bf16.xpose.msra.mxu0 %v5712
    %5868 = vmatprep.subr.bf16.mxu0 0
    %5869 = vmatpush1.bf16.xpose.msra.mxu0 %v5713
    %5870 = vmatprep.mubr.bf16.mxu0 0
    %5871 = vmatmul.mubr.bf16.gmra.mrb[0].mxu0 %v5714
    %v5872 = vpop.f32.mrb[0].mxu0
    %v5873 = vadd.f32 0.0, %v5872
    %v5874 = vpop.f32.mrb[0].mxu0
    %v5875 = vadd.f32 0.0, %v5874
    %v5876 = vpop.f32.mrb[0].mxu0
    %v5877 = vpop.f32.mrb[0].mxu0
    %5878 = vdwg.mxu0
    %v5879 = vld [vmem:[%s18] sm:$0xff]
    %v5880 = vld [vmem:[%s18 + $0x8] sm:$0xff]
    %v5881 = vld [vmem:[%s18 + $0x10] sm:$0xff]
    %v5882 = vld [vmem:[%s18 + $0x18] sm:$0xff]
    %v5883 = vld [vmem:[%s18 + $0x20] sm:$0xff]
    %v5884 = vld [vmem:[%s18 + $0x28] sm:$0xff]
    %v5885 = vld [vmem:[%s18 + $0x30] sm:$0xff]
    %v5886 = vld [vmem:[%s18 + $0x38] sm:$0xff]
    %v5887 = vld [vmem:[%s18 + $0x40] sm:$0xff]
    %v5888 = vld [vmem:[%s18 + $0x48] sm:$0xff]
    %v5889 = vld [vmem:[%s18 + $0x50] sm:$0xff]
    %v5890 = vld [vmem:[%s18 + $0x58] sm:$0xff]
    %v5891 = vld [vmem:[%s18 + $0x60] sm:$0xff]
    %v5892 = vld [vmem:[%s18 + $0x68] sm:$0xff]
    %v5893 = vld [vmem:[%s18 + $0x70] sm:$0xff]
    %v5894 = vld [vmem:[%s18 + $0x78] sm:$0xff]
    %v5895 = vld [vmem:[%s18 + $0x80] sm:$0xff]
    %v5896 = vld [vmem:[%s18 + $0x88] sm:$0xff]
    %v5897 = vld [vmem:[%s18 + $0x90] sm:$0xff]
    %v5898 = vld [vmem:[%s18 + $0x98] sm:$0xff]
    %v5899 = vld [vmem:[%s18 + $0xa0] sm:$0xff]
    %v5900 = vld [vmem:[%s18 + $0xa8] sm:$0xff]
    %v5901 = vld [vmem:[%s18 + $0xb0] sm:$0xff]
    %v5902 = vld [vmem:[%s18 + $0xb8] sm:$0xff]
    %v5903 = vld [vmem:[%s18 + $0xc0] sm:$0xff]
    %v5904 = vld [vmem:[%s18 + $0xc8] sm:$0xff]
    %v5905 = vld [vmem:[%s18 + $0xd0] sm:$0xff]
    %v5906 = vld [vmem:[%s18 + $0xd8] sm:$0xff]
    %v5907 = vld [vmem:[%s18 + $0xe0] sm:$0xff]
    %v5908 = vld [vmem:[%s18 + $0xe8] sm:$0xff]
    %v5909 = vld [vmem:[%s18 + $0xf0] sm:$0xff]
    %v5910 = vld [vmem:[%s18 + $0xf8] sm:$0xff]
    %v5911 = vld [vmem:[%s19] sm:$0xff]
    %v5912 = vld [vmem:[%s19 + $0x8] sm:$0xff]
    %v5913 = vld [vmem:[%s19 + $0x10] sm:$0xff]
    %v5914 = vld [vmem:[%s19 + $0x18] sm:$0xff]
    %v5915 = vld [vmem:[%s19 + $0x20] sm:$0xff]
    %v5916 = vld [vmem:[%s19 + $0x28] sm:$0xff]
    %v5917 = vld [vmem:[%s19 + $0x30] sm:$0xff]
    %v5918 = vld [vmem:[%s19 + $0x38] sm:$0xff]
    %v5919 = vld [vmem:[%s19 + $0x40] sm:$0xff]
    %v5920 = vld [vmem:[%s19 + $0x48] sm:$0xff]
    %v5921 = vld [vmem:[%s19 + $0x50] sm:$0xff]
    %v5922 = vld [vmem:[%s19 + $0x58] sm:$0xff]
    %v5923 = vld [vmem:[%s19 + $0x60] sm:$0xff]
    %v5924 = vld [vmem:[%s19 + $0x68] sm:$0xff]
    %v5925 = vld [vmem:[%s19 + $0x70] sm:$0xff]
    %v5926 = vld [vmem:[%s19 + $0x78] sm:$0xff]
    %v5927 = vld [vmem:[%s19 + $0x80] sm:$0xff]
    %v5928 = vld [vmem:[%s19 + $0x88] sm:$0xff]
    %v5929 = vld [vmem:[%s19 + $0x90] sm:$0xff]
    %v5930 = vld [vmem:[%s19 + $0x98] sm:$0xff]
    %v5931 = vld [vmem:[%s19 + $0xa0] sm:$0xff]
    %v5932 = vld [vmem:[%s19 + $0xa8] sm:$0xff]
    %v5933 = vld [vmem:[%s19 + $0xb0] sm:$0xff]
    %v5934 = vld [vmem:[%s19 + $0xb8] sm:$0xff]
    %v5935 = vld [vmem:[%s19 + $0xc0] sm:$0xff]
    %v5936 = vld [vmem:[%s19 + $0xc8] sm:$0xff]
    %v5937 = vld [vmem:[%s19 + $0xd0] sm:$0xff]
    %v5938 = vld [vmem:[%s19 + $0xd8] sm:$0xff]
    %v5939 = vld [vmem:[%s19 + $0xe0] sm:$0xff]
    %v5940 = vld [vmem:[%s19 + $0xe8] sm:$0xff]
    %v5941 = vld [vmem:[%s19 + $0xf0] sm:$0xff]
    %v5942 = vld [vmem:[%s19 + $0xf8] sm:$0xff]
    %v5943 = vsub.f32 0.0, %v5911
    %v5944 = vsub.f32 0.0, %v5912
    %v5945 = vsub.f32 0.0, %v5913
    %v5946 = vsub.f32 0.0, %v5914
    %v5947 = vsub.f32 0.0, %v5915
    %v5948 = vsub.f32 0.0, %v5916
    %v5949 = vsub.f32 0.0, %v5917
    %v5950 = vsub.f32 0.0, %v5918
    %v5951 = vsub.f32 0.0, %v5919
    %v5952 = vsub.f32 0.0, %v5920
    %v5953 = vsub.f32 0.0, %v5921
    %v5954 = vsub.f32 0.0, %v5922
    %v5955 = vsub.f32 0.0, %v5923
    %v5956 = vsub.f32 0.0, %v5924
    %v5957 = vsub.f32 0.0, %v5925
    %v5958 = vsub.f32 0.0, %v5926
    %v5959 = vsub.f32 0.0, %v5927
    %v5960 = vsub.f32 0.0, %v5928
    %v5961 = vsub.f32 0.0, %v5929
    %v5962 = vsub.f32 0.0, %v5930
    %v5963 = vsub.f32 0.0, %v5931
    %v5964 = vsub.f32 0.0, %v5932
    %v5965 = vsub.f32 0.0, %v5933
    %v5966 = vsub.f32 0.0, %v5934
    %v5967 = vsub.f32 0.0, %v5935
    %v5968 = vsub.f32 0.0, %v5936
    %v5969 = vsub.f32 0.0, %v5937
    %v5970 = vsub.f32 0.0, %v5938
    %v5971 = vsub.f32 0.0, %v5939
    %v5972 = vsub.f32 0.0, %v5940
    %v5973 = vsub.f32 0.0, %v5941
    %v5974 = vsub.f32 0.0, %v5942
    %v5975 = vmul.f32 %v5943, 1.442695
    %v5976 = vpow.pop %v5975
    %v5977 = vmul.f32 %v5944, 1.442695
    %v5978 = vpow.pop %v5977
    %v5979 = vmul.f32 %v5945, 1.442695
    %v5980 = vpow.pop %v5979
    %v5981 = vmul.f32 %v5946, 1.442695
    %v5982 = vpow.pop %v5981
    %v5983 = vmul.f32 %v5947, 1.442695
    %v5984 = vpow.pop %v5983
    %v5985 = vmul.f32 %v5948, 1.442695
    %v5986 = vpow.pop %v5985
    %v5987 = vmul.f32 %v5949, 1.442695
    %v5988 = vpow.pop %v5987
    %v5989 = vmul.f32 %v5950, 1.442695
    %v5990 = vpow.pop %v5989
    %v5991 = vmul.f32 %v5951, 1.442695
    %v5992 = vpow.pop %v5991
    %v5993 = vmul.f32 %v5952, 1.442695
    %v5994 = vpow.pop %v5993
    %v5995 = vmul.f32 %v5953, 1.442695
    %v5996 = vpow.pop %v5995
    %v5997 = vmul.f32 %v5954, 1.442695
    %v5998 = vpow.pop %v5997
    %v5999 = vmul.f32 %v5955, 1.442695
    %v6000 = vpow.pop %v5999
    %v6001 = vmul.f32 %v5956, 1.442695
    %v6002 = vpow.pop %v6001
    %v6003 = vmul.f32 %v5957, 1.442695
    %v6004 = vpow.pop %v6003
    %v6005 = vmul.f32 %v5958, 1.442695
    %v6006 = vpow.pop %v6005
    %v6007 = vmul.f32 %v5959, 1.442695
    %v6008 = vpow.pop %v6007
    %v6009 = vmul.f32 %v5960, 1.442695
    %v6010 = vpow.pop %v6009
    %v6011 = vmul.f32 %v5961, 1.442695
    %v6012 = vpow.pop %v6011
    %v6013 = vmul.f32 %v5962, 1.442695
    %v6014 = vpow.pop %v6013
    %v6015 = vmul.f32 %v5963, 1.442695
    %v6016 = vpow.pop %v6015
    %v6017 = vmul.f32 %v5964, 1.442695
    %v6018 = vpow.pop %v6017
    %v6019 = vmul.f32 %v5965, 1.442695
    %v6020 = vpow.pop %v6019
    %v6021 = vmul.f32 %v5966, 1.442695
    %v6022 = vpow.pop %v6021
    %v6023 = vmul.f32 %v5967, 1.442695
    %v6024 = vpow.pop %v6023
    %v6025 = vmul.f32 %v5968, 1.442695
    %v6026 = vpow.pop %v6025
    %v6027 = vmul.f32 %v5969, 1.442695
    %v6028 = vpow.pop %v6027
    %v6029 = vmul.f32 %v5970, 1.442695
    %v6030 = vpow.pop %v6029
    %v6031 = vmul.f32 %v5971, 1.442695
    %v6032 = vpow.pop %v6031
    %v6033 = vmul.f32 %v5972, 1.442695
    %v6034 = vpow.pop %v6033
    %v6035 = vmul.f32 %v5973, 1.442695
    %v6036 = vpow.pop %v6035
    %v6037 = vmul.f32 %v5974, 1.442695
    %v6038 = vpow.pop %v6037
    %v6039 = vadd.f32 %v5976, 1.0
    %v6040 = vadd.f32 %v5978, 1.0
    %v6041 = vadd.f32 %v5980, 1.0
    %v6042 = vadd.f32 %v5982, 1.0
    %v6043 = vadd.f32 %v5984, 1.0
    %v6044 = vadd.f32 %v5986, 1.0
    %v6045 = vadd.f32 %v5988, 1.0
    %v6046 = vadd.f32 %v5990, 1.0
    %v6047 = vadd.f32 %v5992, 1.0
    %v6048 = vadd.f32 %v5994, 1.0
    %v6049 = vadd.f32 %v5996, 1.0
    %v6050 = vadd.f32 %v5998, 1.0
    %v6051 = vadd.f32 %v6000, 1.0
    %v6052 = vadd.f32 %v6002, 1.0
    %v6053 = vadd.f32 %v6004, 1.0
    %v6054 = vadd.f32 %v6006, 1.0
    %v6055 = vadd.f32 %v6008, 1.0
    %v6056 = vadd.f32 %v6010, 1.0
    %v6057 = vadd.f32 %v6012, 1.0
    %v6058 = vadd.f32 %v6014, 1.0
    %v6059 = vadd.f32 %v6016, 1.0
    %v6060 = vadd.f32 %v6018, 1.0
    %v6061 = vadd.f32 %v6020, 1.0
    %v6062 = vadd.f32 %v6022, 1.0
    %v6063 = vadd.f32 %v6024, 1.0
    %v6064 = vadd.f32 %v6026, 1.0
    %v6065 = vadd.f32 %v6028, 1.0
    %v6066 = vadd.f32 %v6030, 1.0
    %v6067 = vadd.f32 %v6032, 1.0
    %v6068 = vadd.f32 %v6034, 1.0
    %v6069 = vadd.f32 %v6036, 1.0
    %v6070 = vadd.f32 %v6038, 1.0
    %v6071 = vrcp.pop %v6039
    %v6072 = vmul.f32 1.0, %v6071
    %v6073 = vrcp.pop %v6040
    %v6074 = vmul.f32 1.0, %v6073
    %v6075 = vrcp.pop %v6041
    %v6076 = vmul.f32 1.0, %v6075
    %v6077 = vrcp.pop %v6042
    %v6078 = vmul.f32 1.0, %v6077
    %v6079 = vrcp.pop %v6043
    %v6080 = vmul.f32 1.0, %v6079
    %v6081 = vrcp.pop %v6044
    %v6082 = vmul.f32 1.0, %v6081
    %v6083 = vrcp.pop %v6045
    %v6084 = vmul.f32 1.0, %v6083
    %v6085 = vrcp.pop %v6046
    %v6086 = vmul.f32 1.0, %v6085
    %v6087 = vrcp.pop %v6047
    %v6088 = vmul.f32 1.0, %v6087
    %v6089 = vrcp.pop %v6048
    %v6090 = vmul.f32 1.0, %v6089
    %v6091 = vrcp.pop %v6049
    %v6092 = vmul.f32 1.0, %v6091
    %v6093 = vrcp.pop %v6050
    %v6094 = vmul.f32 1.0, %v6093
    %v6095 = vrcp.pop %v6051
    %v6096 = vmul.f32 1.0, %v6095
    %v6097 = vrcp.pop %v6052
    %v6098 = vmul.f32 1.0, %v6097
    %v6099 = vrcp.pop %v6053
    %v6100 = vmul.f32 1.0, %v6099
    %v6101 = vrcp.pop %v6054
    %v6102 = vmul.f32 1.0, %v6101
    %v6103 = vrcp.pop %v6055
    %v6104 = vmul.f32 1.0, %v6103
    %v6105 = vrcp.pop %v6056
    %v6106 = vmul.f32 1.0, %v6105
    %v6107 = vrcp.pop %v6057
    %v6108 = vmul.f32 1.0, %v6107
    %v6109 = vrcp.pop %v6058
    %v6110 = vmul.f32 1.0, %v6109
    %v6111 = vrcp.pop %v6059
    %v6112 = vmul.f32 1.0, %v6111
    %v6113 = vrcp.pop %v6060
    %v6114 = vmul.f32 1.0, %v6113
    %v6115 = vrcp.pop %v6061
    %v6116 = vmul.f32 1.0, %v6115
    %v6117 = vrcp.pop %v6062
    %v6118 = vmul.f32 1.0, %v6117
    %v6119 = vrcp.pop %v6063
    %v6120 = vmul.f32 1.0, %v6119
    %v6121 = vrcp.pop %v6064
    %v6122 = vmul.f32 1.0, %v6121
    %v6123 = vrcp.pop %v6065
    %v6124 = vmul.f32 1.0, %v6123
    %v6125 = vrcp.pop %v6066
    %v6126 = vmul.f32 1.0, %v6125
    %v6127 = vrcp.pop %v6067
    %v6128 = vmul.f32 1.0, %v6127
    %v6129 = vrcp.pop %v6068
    %v6130 = vmul.f32 1.0, %v6129
    %v6131 = vrcp.pop %v6069
    %v6132 = vmul.f32 1.0, %v6131
    %v6133 = vrcp.pop %v6070
    %v6134 = vmul.f32 1.0, %v6133
    %v6135 = vmul.f32 %v5879, %v6072
    %v6136 = vmul.f32 %v5880, %v6074
    %v6137 = vmul.f32 %v5881, %v6076
    %v6138 = vmul.f32 %v5882, %v6078
    %v6139 = vmul.f32 %v5883, %v6080
    %v6140 = vmul.f32 %v5884, %v6082
    %v6141 = vmul.f32 %v5885, %v6084
    %v6142 = vmul.f32 %v5886, %v6086
    %v6143 = vmul.f32 %v5887, %v6088
    %v6144 = vmul.f32 %v5888, %v6090
    %v6145 = vmul.f32 %v5889, %v6092
    %v6146 = vmul.f32 %v5890, %v6094
    %v6147 = vmul.f32 %v5891, %v6096
    %v6148 = vmul.f32 %v5892, %v6098
    %v6149 = vmul.f32 %v5893, %v6100
    %v6150 = vmul.f32 %v5894, %v6102
    %v6151 = vmul.f32 %v5895, %v6104
    %v6152 = vmul.f32 %v5896, %v6106
    %v6153 = vmul.f32 %v5897, %v6108
    %v6154 = vmul.f32 %v5898, %v6110
    %v6155 = vmul.f32 %v5899, %v6112
    %v6156 = vmul.f32 %v5900, %v6114
    %v6157 = vmul.f32 %v5901, %v6116
    %v6158 = vmul.f32 %v5902, %v6118
    %v6159 = vmul.f32 %v5903, %v6120
    %v6160 = vmul.f32 %v5904, %v6122
    %v6161 = vmul.f32 %v5905, %v6124
    %v6162 = vmul.f32 %v5906, %v6126
    %v6163 = vmul.f32 %v5907, %v6128
    %v6164 = vmul.f32 %v5908, %v6130
    %v6165 = vmul.f32 %v5909, %v6132
    %v6166 = vmul.f32 %v5910, %v6134
    %v6167 = vld [vmem:[%s20] sm:$0xff]
    %v6168 = vld [vmem:[%s20 + $0x8] sm:$0xff]
    %v6169 = vld [vmem:[%s20 + $0x10] sm:$0xff]
    %v6170 = vld [vmem:[%s20 + $0x18] sm:$0xff]
    %v6171 = vld [vmem:[%s20 + $0x20] sm:$0xff]
    %v6172 = vld [vmem:[%s20 + $0x28] sm:$0xff]
    %v6173 = vld [vmem:[%s20 + $0x30] sm:$0xff]
    %v6174 = vld [vmem:[%s20 + $0x38] sm:$0xff]
    %v6175 = vld [vmem:[%s20 + $0x40] sm:$0xff]
    %v6176 = vld [vmem:[%s20 + $0x48] sm:$0xff]
    %v6177 = vld [vmem:[%s20 + $0x50] sm:$0xff]
    %v6178 = vld [vmem:[%s20 + $0x58] sm:$0xff]
    %v6179 = vld [vmem:[%s20 + $0x60] sm:$0xff]
    %v6180 = vld [vmem:[%s20 + $0x68] sm:$0xff]
    %v6181 = vld [vmem:[%s20 + $0x70] sm:$0xff]
    %v6182 = vld [vmem:[%s20 + $0x78] sm:$0xff]
    %v6183 = vld [vmem:[%s20 + $0x80] sm:$0xff]
    %v6184 = vld [vmem:[%s20 + $0x88] sm:$0xff]
    %v6185 = vld [vmem:[%s20 + $0x90] sm:$0xff]
    %v6186 = vld [vmem:[%s20 + $0x98] sm:$0xff]
    %v6187 = vld [vmem:[%s20 + $0xa0] sm:$0xff]
    %v6188 = vld [vmem:[%s20 + $0xa8] sm:$0xff]
    %v6189 = vld [vmem:[%s20 + $0xb0] sm:$0xff]
    %v6190 = vld [vmem:[%s20 + $0xb8] sm:$0xff]
    %v6191 = vld [vmem:[%s20 + $0xc0] sm:$0xff]
    %v6192 = vld [vmem:[%s20 + $0xc8] sm:$0xff]
    %v6193 = vld [vmem:[%s20 + $0xd0] sm:$0xff]
    %v6194 = vld [vmem:[%s20 + $0xd8] sm:$0xff]
    %v6195 = vld [vmem:[%s20 + $0xe0] sm:$0xff]
    %v6196 = vld [vmem:[%s20 + $0xe8] sm:$0xff]
    %v6197 = vld [vmem:[%s20 + $0xf0] sm:$0xff]
    %v6198 = vld [vmem:[%s20 + $0xf8] sm:$0xff]
    %v6199 = vadd.f32 %v6135, %v6167
    %v6200 = vadd.f32 %v6136, %v6168
    %v6201 = vadd.f32 %v6137, %v6169
    %v6202 = vadd.f32 %v6138, %v6170
    %v6203 = vadd.f32 %v6139, %v6171
    %v6204 = vadd.f32 %v6140, %v6172
    %v6205 = vadd.f32 %v6141, %v6173
    %v6206 = vadd.f32 %v6142, %v6174
    %v6207 = vadd.f32 %v6143, %v6175
    %v6208 = vadd.f32 %v6144, %v6176
    %v6209 = vadd.f32 %v6145, %v6177
    %v6210 = vadd.f32 %v6146, %v6178
    %v6211 = vadd.f32 %v6147, %v6179
    %v6212 = vadd.f32 %v6148, %v6180
    %v6213 = vadd.f32 %v6149, %v6181
    %v6214 = vadd.f32 %v6150, %v6182
    %v6215 = vadd.f32 %v6151, %v6183
    %v6216 = vadd.f32 %v6152, %v6184
    %v6217 = vadd.f32 %v6153, %v6185
    %v6218 = vadd.f32 %v6154, %v6186
    %v6219 = vadd.f32 %v6155, %v6187
    %v6220 = vadd.f32 %v6156, %v6188
    %v6221 = vadd.f32 %v6157, %v6189
    %v6222 = vadd.f32 %v6158, %v6190
    %v6223 = vadd.f32 %v6159, %v6191
    %v6224 = vadd.f32 %v6160, %v6192
    %v6225 = vadd.f32 %v6161, %v6193
    %v6226 = vadd.f32 %v6162, %v6194
    %v6227 = vadd.f32 %v6163, %v6195
    %v6228 = vadd.f32 %v6164, %v6196
    %v6229 = vadd.f32 %v6165, %v6197
    %v6230 = vadd.f32 %v6166, %v6198
    %s6231 = sld [smem:[#allocation8]]
    %v6232 = vld [vmem:[%s21] sm:$0xff]
    %v6233 = vld [vmem:[%s21 + $0x8] sm:$0xff]
    %v6234 = vld [vmem:[%s21 + $0x10] sm:$0xff]
    %v6235 = vld [vmem:[%s21 + $0x18] sm:$0xff]
    %v6236 = vld [vmem:[%s21 + $0x20] sm:$0xff]
    %v6237 = vld [vmem:[%s21 + $0x28] sm:$0xff]
    %v6238 = vld [vmem:[%s21 + $0x30] sm:$0xff]
    %v6239 = vld [vmem:[%s21 + $0x38] sm:$0xff]
    %v6240 = vld [vmem:[%s21 + $0x40] sm:$0xff]
    %v6241 = vld [vmem:[%s21 + $0x48] sm:$0xff]
    %v6242 = vld [vmem:[%s21 + $0x50] sm:$0xff]
    %v6243 = vld [vmem:[%s21 + $0x58] sm:$0xff]
    %v6244 = vld [vmem:[%s21 + $0x60] sm:$0xff]
    %v6245 = vld [vmem:[%s21 + $0x68] sm:$0xff]
    %v6246 = vld [vmem:[%s21 + $0x70] sm:$0xff]
    %v6247 = vld [vmem:[%s21 + $0x78] sm:$0xff]
    %v6248 = vld [vmem:[%s21 + $0x80] sm:$0xff]
    %v6249 = vld [vmem:[%s21 + $0x88] sm:$0xff]
    %v6250 = vld [vmem:[%s21 + $0x90] sm:$0xff]
    %v6251 = vld [vmem:[%s21 + $0x98] sm:$0xff]
    %v6252 = vld [vmem:[%s21 + $0xa0] sm:$0xff]
    %v6253 = vld [vmem:[%s21 + $0xa8] sm:$0xff]
    %v6254 = vld [vmem:[%s21 + $0xb0] sm:$0xff]
    %v6255 = vld [vmem:[%s21 + $0xb8] sm:$0xff]
    %v6256 = vld [vmem:[%s21 + $0xc0] sm:$0xff]
    %v6257 = vld [vmem:[%s21 + $0xc8] sm:$0xff]
    %v6258 = vld [vmem:[%s21 + $0xd0] sm:$0xff]
    %v6259 = vld [vmem:[%s21 + $0xd8] sm:$0xff]
    %v6260 = vld [vmem:[%s21 + $0xe0] sm:$0xff]
    %v6261 = vld [vmem:[%s21 + $0xe8] sm:$0xff]
    %v6262 = vld [vmem:[%s21 + $0xf0] sm:$0xff]
    %v6263 = vld [vmem:[%s21 + $0xf8] sm:$0xff]
    %v6264 = vstv %s6231
    %v6265 = vmul.f32 %v6264, %v6232
    %v6266 = vmul.f32 %v6264, %v6233
    %v6267 = vmul.f32 %v6264, %v6234
    %v6268 = vmul.f32 %v6264, %v6235
    %v6269 = vmul.f32 %v6264, %v6236
    %v6270 = vmul.f32 %v6264, %v6237
    %v6271 = vmul.f32 %v6264, %v6238
    %v6272 = vmul.f32 %v6264, %v6239
    %v6273 = vmul.f32 %v6264, %v6240
    %v6274 = vmul.f32 %v6264, %v6241
    %v6275 = vmul.f32 %v6264, %v6242
    %v6276 = vmul.f32 %v6264, %v6243
    %v6277 = vmul.f32 %v6264, %v6244
    %v6278 = vmul.f32 %v6264, %v6245
    %v6279 = vmul.f32 %v6264, %v6246
    %v6280 = vmul.f32 %v6264, %v6247
    %v6281 = vmul.f32 %v6264, %v6248
    %v6282 = vmul.f32 %v6264, %v6249
    %v6283 = vmul.f32 %v6264, %v6250
    %v6284 = vmul.f32 %v6264, %v6251
    %v6285 = vmul.f32 %v6264, %v6252
    %v6286 = vmul.f32 %v6264, %v6253
    %v6287 = vmul.f32 %v6264, %v6254
    %v6288 = vmul.f32 %v6264, %v6255
    %v6289 = vmul.f32 %v6264, %v6256
    %v6290 = vmul.f32 %v6264, %v6257
    %v6291 = vmul.f32 %v6264, %v6258
    %v6292 = vmul.f32 %v6264, %v6259
    %v6293 = vmul.f32 %v6264, %v6260
    %v6294 = vmul.f32 %v6264, %v6261
    %v6295 = vmul.f32 %v6264, %v6262
    %v6296 = vmul.f32 %v6264, %v6263
    %v6297 = vadd.f32 %v6199, %v6265
    %v6298 = vadd.f32 %v6200, %v6266
    %v6299 = vadd.f32 %v6201, %v6267
    %v6300 = vadd.f32 %v6202, %v6268
    %v6301 = vadd.f32 %v6203, %v6269
    %v6302 = vadd.f32 %v6204, %v6270
    %v6303 = vadd.f32 %v6205, %v6271
    %v6304 = vadd.f32 %v6206, %v6272
    %v6305 = vadd.f32 %v6207, %v6273
    %v6306 = vadd.f32 %v6208, %v6274
    %v6307 = vadd.f32 %v6209, %v6275
    %v6308 = vadd.f32 %v6210, %v6276
    %v6309 = vadd.f32 %v6211, %v6277
    %v6310 = vadd.f32 %v6212, %v6278
    %v6311 = vadd.f32 %v6213, %v6279
    %v6312 = vadd.f32 %v6214, %v6280
    %v6313 = vadd.f32 %v6215, %v6281
    %v6314 = vadd.f32 %v6216, %v6282
    %v6315 = vadd.f32 %v6217, %v6283
    %v6316 = vadd.f32 %v6218, %v6284
    %v6317 = vadd.f32 %v6219, %v6285
    %v6318 = vadd.f32 %v6220, %v6286
    %v6319 = vadd.f32 %v6221, %v6287
    %v6320 = vadd.f32 %v6222, %v6288
    %v6321 = vadd.f32 %v6223, %v6289
    %v6322 = vadd.f32 %v6224, %v6290
    %v6323 = vadd.f32 %v6225, %v6291
    %v6324 = vadd.f32 %v6226, %v6292
    %v6325 = vadd.f32 %v6227, %v6293
    %v6326 = vadd.f32 %v6228, %v6294
    %v6327 = vadd.f32 %v6229, %v6295
    %v6328 = vadd.f32 %v6230, %v6296
    %s6329 = sld [smem:[#allocation8 + $0x1]]
    %s6330 = scalar_lea.vmem %s21, 256
    %v6331 = vld [vmem:[%s6330] sm:$0xff]
    %v6332 = vld [vmem:[%s6330 + $0x8] sm:$0xff]
    %v6333 = vld [vmem:[%s6330 + $0x10] sm:$0xff]
    %v6334 = vld [vmem:[%s6330 + $0x18] sm:$0xff]
    %v6335 = vld [vmem:[%s6330 + $0x20] sm:$0xff]
    %v6336 = vld [vmem:[%s6330 + $0x28] sm:$0xff]
    %v6337 = vld [vmem:[%s6330 + $0x30] sm:$0xff]
    %v6338 = vld [vmem:[%s6330 + $0x38] sm:$0xff]
    %v6339 = vld [vmem:[%s6330 + $0x40] sm:$0xff]
    %v6340 = vld [vmem:[%s6330 + $0x48] sm:$0xff]
    %v6341 = vld [vmem:[%s6330 + $0x50] sm:$0xff]
    %v6342 = vld [vmem:[%s6330 + $0x58] sm:$0xff]
    %v6343 = vld [vmem:[%s6330 + $0x60] sm:$0xff]
    %v6344 = vld [vmem:[%s6330 + $0x68] sm:$0xff]
    %v6345 = vld [vmem:[%s6330 + $0x70] sm:$0xff]
    %v6346 = vld [vmem:[%s6330 + $0x78] sm:$0xff]
    %v6347 = vld [vmem:[%s6330 + $0x80] sm:$0xff]
    %v6348 = vld [vmem:[%s6330 + $0x88] sm:$0xff]
    %v6349 = vld [vmem:[%s6330 + $0x90] sm:$0xff]
    %v6350 = vld [vmem:[%s6330 + $0x98] sm:$0xff]
    %v6351 = vld [vmem:[%s6330 + $0xa0] sm:$0xff]
    %v6352 = vld [vmem:[%s6330 + $0xa8] sm:$0xff]
    %v6353 = vld [vmem:[%s6330 + $0xb0] sm:$0xff]
    %v6354 = vld [vmem:[%s6330 + $0xb8] sm:$0xff]
    %v6355 = vld [vmem:[%s6330 + $0xc0] sm:$0xff]
    %v6356 = vld [vmem:[%s6330 + $0xc8] sm:$0xff]
    %v6357 = vld [vmem:[%s6330 + $0xd0] sm:$0xff]
    %v6358 = vld [vmem:[%s6330 + $0xd8] sm:$0xff]
    %v6359 = vld [vmem:[%s6330 + $0xe0] sm:$0xff]
    %v6360 = vld [vmem:[%s6330 + $0xe8] sm:$0xff]
    %v6361 = vld [vmem:[%s6330 + $0xf0] sm:$0xff]
    %v6362 = vld [vmem:[%s6330 + $0xf8] sm:$0xff]
    %v6363 = vstv %s6329
    %v6364 = vmul.f32 %v6363, %v6331
    %v6365 = vmul.f32 %v6363, %v6332
    %v6366 = vmul.f32 %v6363, %v6333
    %v6367 = vmul.f32 %v6363, %v6334
    %v6368 = vmul.f32 %v6363, %v6335
    %v6369 = vmul.f32 %v6363, %v6336
    %v6370 = vmul.f32 %v6363, %v6337
    %v6371 = vmul.f32 %v6363, %v6338
    %v6372 = vmul.f32 %v6363, %v6339
    %v6373 = vmul.f32 %v6363, %v6340
    %v6374 = vmul.f32 %v6363, %v6341
    %v6375 = vmul.f32 %v6363, %v6342
    %v6376 = vmul.f32 %v6363, %v6343
    %v6377 = vmul.f32 %v6363, %v6344
    %v6378 = vmul.f32 %v6363, %v6345
    %v6379 = vmul.f32 %v6363, %v6346
    %v6380 = vmul.f32 %v6363, %v6347
    %v6381 = vmul.f32 %v6363, %v6348
    %v6382 = vmul.f32 %v6363, %v6349
    %v6383 = vmul.f32 %v6363, %v6350
    %v6384 = vmul.f32 %v6363, %v6351
    %v6385 = vmul.f32 %v6363, %v6352
    %v6386 = vmul.f32 %v6363, %v6353
    %v6387 = vmul.f32 %v6363, %v6354
    %v6388 = vmul.f32 %v6363, %v6355
    %v6389 = vmul.f32 %v6363, %v6356
    %v6390 = vmul.f32 %v6363, %v6357
    %v6391 = vmul.f32 %v6363, %v6358
    %v6392 = vmul.f32 %v6363, %v6359
    %v6393 = vmul.f32 %v6363, %v6360
    %v6394 = vmul.f32 %v6363, %v6361
    %v6395 = vmul.f32 %v6363, %v6362
    %v6396 = vadd.f32 %v6297, %v6364
    %v6397 = vadd.f32 %v6298, %v6365
    %v6398 = vadd.f32 %v6299, %v6366
    %v6399 = vadd.f32 %v6300, %v6367
    %v6400 = vadd.f32 %v6301, %v6368
    %v6401 = vadd.f32 %v6302, %v6369
    %v6402 = vadd.f32 %v6303, %v6370
    %v6403 = vadd.f32 %v6304, %v6371
    %v6404 = vadd.f32 %v6305, %v6372
    %v6405 = vadd.f32 %v6306, %v6373
    %v6406 = vadd.f32 %v6307, %v6374
    %v6407 = vadd.f32 %v6308, %v6375
    %v6408 = vadd.f32 %v6309, %v6376
    %v6409 = vadd.f32 %v6310, %v6377
    %v6410 = vadd.f32 %v6311, %v6378
    %v6411 = vadd.f32 %v6312, %v6379
    %v6412 = vadd.f32 %v6313, %v6380
    %v6413 = vadd.f32 %v6314, %v6381
    %v6414 = vadd.f32 %v6315, %v6382
    %v6415 = vadd.f32 %v6316, %v6383
    %v6416 = vadd.f32 %v6317, %v6384
    %v6417 = vadd.f32 %v6318, %v6385
    %v6418 = vadd.f32 %v6319, %v6386
    %v6419 = vadd.f32 %v6320, %v6387
    %v6420 = vadd.f32 %v6321, %v6388
    %v6421 = vadd.f32 %v6322, %v6389
    %v6422 = vadd.f32 %v6323, %v6390
    %v6423 = vadd.f32 %v6324, %v6391
    %v6424 = vadd.f32 %v6325, %v6392
    %v6425 = vadd.f32 %v6326, %v6393
    %v6426 = vadd.f32 %v6327, %v6394
    %v6427 = vadd.f32 %v6328, %v6395
    %s6428 = sld [smem:[#allocation8 + $0x2]]
    %s6429 = scalar_lea.vmem %s21, 512
    %v6430 = vld [vmem:[%s6429] sm:$0xff]
    %v6431 = vld [vmem:[%s6429 + $0x8] sm:$0xff]
    %v6432 = vld [vmem:[%s6429 + $0x10] sm:$0xff]
    %v6433 = vld [vmem:[%s6429 + $0x18] sm:$0xff]
    %v6434 = vld [vmem:[%s6429 + $0x20] sm:$0xff]
    %v6435 = vld [vmem:[%s6429 + $0x28] sm:$0xff]
    %v6436 = vld [vmem:[%s6429 + $0x30] sm:$0xff]
    %v6437 = vld [vmem:[%s6429 + $0x38] sm:$0xff]
    %v6438 = vld [vmem:[%s6429 + $0x40] sm:$0xff]
    %v6439 = vld [vmem:[%s6429 + $0x48] sm:$0xff]
    %v6440 = vld [vmem:[%s6429 + $0x50] sm:$0xff]
    %v6441 = vld [vmem:[%s6429 + $0x58] sm:$0xff]
    %v6442 = vld [vmem:[%s6429 + $0x60] sm:$0xff]
    %v6443 = vld [vmem:[%s6429 + $0x68] sm:$0xff]
    %v6444 = vld [vmem:[%s6429 + $0x70] sm:$0xff]
    %v6445 = vld [vmem:[%s6429 + $0x78] sm:$0xff]
    %v6446 = vld [vmem:[%s6429 + $0x80] sm:$0xff]
    %v6447 = vld [vmem:[%s6429 + $0x88] sm:$0xff]
    %v6448 = vld [vmem:[%s6429 + $0x90] sm:$0xff]
    %v6449 = vld [vmem:[%s6429 + $0x98] sm:$0xff]
    %v6450 = vld [vmem:[%s6429 + $0xa0] sm:$0xff]
    %v6451 = vld [vmem:[%s6429 + $0xa8] sm:$0xff]
    %v6452 = vld [vmem:[%s6429 + $0xb0] sm:$0xff]
    %v6453 = vld [vmem:[%s6429 + $0xb8] sm:$0xff]
    %v6454 = vld [vmem:[%s6429 + $0xc0] sm:$0xff]
    %v6455 = vld [vmem:[%s6429 + $0xc8] sm:$0xff]
    %v6456 = vld [vmem:[%s6429 + $0xd0] sm:$0xff]
    %v6457 = vld [vmem:[%s6429 + $0xd8] sm:$0xff]
    %v6458 = vld [vmem:[%s6429 + $0xe0] sm:$0xff]
    %v6459 = vld [vmem:[%s6429 + $0xe8] sm:$0xff]
    %v6460 = vld [vmem:[%s6429 + $0xf0] sm:$0xff]
    %v6461 = vld [vmem:[%s6429 + $0xf8] sm:$0xff]
    %v6462 = vstv %s6428
    %v6463 = vmul.f32 %v6462, %v6430
    %v6464 = vmul.f32 %v6462, %v6431
    %v6465 = vmul.f32 %v6462, %v6432
    %v6466 = vmul.f32 %v6462, %v6433
    %v6467 = vmul.f32 %v6462, %v6434
    %v6468 = vmul.f32 %v6462, %v6435
    %v6469 = vmul.f32 %v6462, %v6436
    %v6470 = vmul.f32 %v6462, %v6437
    %v6471 = vmul.f32 %v6462, %v6438
    %v6472 = vmul.f32 %v6462, %v6439
    %v6473 = vmul.f32 %v6462, %v6440
    %v6474 = vmul.f32 %v6462, %v6441
    %v6475 = vmul.f32 %v6462, %v6442
    %v6476 = vmul.f32 %v6462, %v6443
    %v6477 = vmul.f32 %v6462, %v6444
    %v6478 = vmul.f32 %v6462, %v6445
    %v6479 = vmul.f32 %v6462, %v6446
    %v6480 = vmul.f32 %v6462, %v6447
    %v6481 = vmul.f32 %v6462, %v6448
    %v6482 = vmul.f32 %v6462, %v6449
    %v6483 = vmul.f32 %v6462, %v6450
    %v6484 = vmul.f32 %v6462, %v6451
    %v6485 = vmul.f32 %v6462, %v6452
    %v6486 = vmul.f32 %v6462, %v6453
    %v6487 = vmul.f32 %v6462, %v6454
    %v6488 = vmul.f32 %v6462, %v6455
    %v6489 = vmul.f32 %v6462, %v6456
    %v6490 = vmul.f32 %v6462, %v6457
    %v6491 = vmul.f32 %v6462, %v6458
    %v6492 = vmul.f32 %v6462, %v6459
    %v6493 = vmul.f32 %v6462, %v6460
    %v6494 = vmul.f32 %v6462, %v6461
    %v6495 = vadd.f32 %v6396, %v6463
    %v6496 = vadd.f32 %v6397, %v6464
    %v6497 = vadd.f32 %v6398, %v6465
    %v6498 = vadd.f32 %v6399, %v6466
    %v6499 = vadd.f32 %v6400, %v6467
    %v6500 = vadd.f32 %v6401, %v6468
    %v6501 = vadd.f32 %v6402, %v6469
    %v6502 = vadd.f32 %v6403, %v6470
    %v6503 = vadd.f32 %v6404, %v6471
    %v6504 = vadd.f32 %v6405, %v6472
    %v6505 = vadd.f32 %v6406, %v6473
    %v6506 = vadd.f32 %v6407, %v6474
    %v6507 = vadd.f32 %v6408, %v6475
    %v6508 = vadd.f32 %v6409, %v6476
    %v6509 = vadd.f32 %v6410, %v6477
    %v6510 = vadd.f32 %v6411, %v6478
    %v6511 = vadd.f32 %v6412, %v6479
    %v6512 = vadd.f32 %v6413, %v6480
    %v6513 = vadd.f32 %v6414, %v6481
    %v6514 = vadd.f32 %v6415, %v6482
    %v6515 = vadd.f32 %v6416, %v6483
    %v6516 = vadd.f32 %v6417, %v6484
    %v6517 = vadd.f32 %v6418, %v6485
    %v6518 = vadd.f32 %v6419, %v6486
    %v6519 = vadd.f32 %v6420, %v6487
    %v6520 = vadd.f32 %v6421, %v6488
    %v6521 = vadd.f32 %v6422, %v6489
    %v6522 = vadd.f32 %v6423, %v6490
    %v6523 = vadd.f32 %v6424, %v6491
    %v6524 = vadd.f32 %v6425, %v6492
    %v6525 = vadd.f32 %v6426, %v6493
    %v6526 = vadd.f32 %v6427, %v6494
    %v6527 = vpack.c.bf16 %v5750, %v5750
    %v6528 = vpack.c.bf16 %v5752, %v5752
    %v6529 = vpack.c.bf16 %v5791, %v5791
    %v6530 = vpack.c.bf16 %v5793, %v5793
    %v6531 = vpack.c.bf16 %v5832, %v5832
    %v6532 = vpack.c.bf16 %v5834, %v5834
    %v6533 = vpack.c.bf16 %v5873, %v5873
    %v6534 = vpack.c.bf16 %v5875, %v5875
    %v6535 = vpack.c.bf16 %v6503, %v6495
    %v6536 = vpack.c.bf16 %v6504, %v6496
    %v6537 = vpack.c.bf16 %v6505, %v6497
    %v6538 = vpack.c.bf16 %v6506, %v6498
    %v6539 = vpack.c.bf16 %v6507, %v6499
    %v6540 = vpack.c.bf16 %v6508, %v6500
    %v6541 = vpack.c.bf16 %v6509, %v6501
    %v6542 = vpack.c.bf16 %v6510, %v6502
    %v6543 = vpack.c.bf16 %v6519, %v6511
    %v6544 = vpack.c.bf16 %v6520, %v6512
    %v6545 = vpack.c.bf16 %v6521, %v6513
    %v6546 = vpack.c.bf16 %v6522, %v6514
    %v6547 = vpack.c.bf16 %v6523, %v6515
    %v6548 = vpack.c.bf16 %v6524, %v6516
    %v6549 = vpack.c.bf16 %v6525, %v6517
    %v6550 = vpack.c.bf16 %v6526, %v6518
    %v6551 = vld [vmem:[%s22] sm:$0x1]
    %v6553 = vlaneseq
    %v6554 = vshrl.u32 %v6553, 7
    %v6555 = vsub.s32 0, %v6554
    %v6556 = vrot.slane %v6551, %v6555
    %6558 = vmatprep.subr.bf16.mxu0 %v6536
    %6559 = vmatpush1.bf16.xpose.msra.mxu0 %v6535
    %6560 = vmatprep.subr.bf16.mxu0 %v6544
    %6561 = vmatpush1.bf16.xpose.msra.mxu0 %v6543
    %6562 = vmatprep.subr.bf16.mxu0 0
    %6563 = vmatpush1.bf16.xpose.msra.mxu0 0
    %6564 = vmatprep.subr.bf16.mxu0 0
    %6565 = vmatpush1.bf16.xpose.msra.mxu0 0
    %6566 = vmatprep.subr.bf16.mxu0 0
    %6567 = vmatpush1.bf16.xpose.msra.mxu0 0
    %6568 = vmatprep.subr.bf16.mxu0 0
    %6569 = vmatpush1.bf16.xpose.msra.mxu0 0
    %6570 = vmatprep.subr.bf16.mxu0 0
    %6571 = vmatpush1.bf16.xpose.msra.mxu0 0
    %6572 = vmatprep.subr.bf16.mxu0 0
    %6573 = vmatpush1.bf16.xpose.msra.mxu0 0
    %6574 = vmatprep.subr.bf16.mxu0 0
    %6575 = vmatpush1.bf16.xpose.msra.mxu0 0
    %6576 = vmatprep.subr.bf16.mxu0 0
    %6577 = vmatpush1.bf16.xpose.msra.mxu0 0
    %6578 = vmatprep.subr.bf16.mxu0 0
    %6579 = vmatpush1.bf16.xpose.msra.mxu0 0
    %6580 = vmatprep.subr.bf16.mxu0 0
    %6581 = vmatpush1.bf16.xpose.msra.mxu0 0
    %6582 = vmatprep.subr.bf16.mxu0 0
    %6583 = vmatpush1.bf16.xpose.msra.mxu0 0
    %6584 = vmatprep.subr.bf16.mxu0 0
    %6585 = vmatpush1.bf16.xpose.msra.mxu0 0
    %6586 = vmatprep.subr.bf16.mxu0 0
    %6587 = vmatpush1.bf16.xpose.msra.mxu0 0
    %6588 = vmatprep.subr.bf16.mxu0 0
    %6589 = vmatpush1.bf16.xpose.msra.mxu0 0
    %6590 = vmatprep.mubr.bf16.mxu0 %v6528
    %6591 = vmatmul.mubr.bf16.gmra.mrb[0].mxu0 %v6527
    %v6592 = vpop.f32.mrb[0].mxu0
    %v6593 = vadd.f32 %v6556, %v6592
    %v6594 = vpop.f32.mrb[0].mxu0
    %v6595 = vpop.f32.mrb[0].mxu0
    %v6596 = vpop.f32.mrb[0].mxu0
    %6597 = vdwg.mxu0
    %6598 = vmatprep.subr.bf16.mxu0 %v6538
    %6599 = vmatpush1.bf16.xpose.msra.mxu0 %v6537
    %6600 = vmatprep.subr.bf16.mxu0 %v6546
    %6601 = vmatpush1.bf16.xpose.msra.mxu0 %v6545
    %6602 = vmatprep.subr.bf16.mxu0 0
    %6603 = vmatpush1.bf16.xpose.msra.mxu0 0
    %6604 = vmatprep.subr.bf16.mxu0 0
    %6605 = vmatpush1.bf16.xpose.msra.mxu0 0
    %6606 = vmatprep.subr.bf16.mxu0 0
    %6607 = vmatpush1.bf16.xpose.msra.mxu0 0
    %6608 = vmatprep.subr.bf16.mxu0 0
    %6609 = vmatpush1.bf16.xpose.msra.mxu0 0
    %6610 = vmatprep.subr.bf16.mxu0 0
    %6611 = vmatpush1.bf16.xpose.msra.mxu0 0
    %6612 = vmatprep.subr.bf16.mxu0 0
    %6613 = vmatpush1.bf16.xpose.msra.mxu0 0
    %6614 = vmatprep.subr.bf16.mxu0 0
    %6615 = vmatpush1.bf16.xpose.msra.mxu0 0
    %6616 = vmatprep.subr.bf16.mxu0 0
    %6617 = vmatpush1.bf16.xpose.msra.mxu0 0
    %6618 = vmatprep.subr.bf16.mxu0 0
    %6619 = vmatpush1.bf16.xpose.msra.mxu0 0
    %6620 = vmatprep.subr.bf16.mxu0 0
    %6621 = vmatpush1.bf16.xpose.msra.mxu0 0
    %6622 = vmatprep.subr.bf16.mxu0 0
    %6623 = vmatpush1.bf16.xpose.msra.mxu0 0
    %6624 = vmatprep.subr.bf16.mxu0 0
    %6625 = vmatpush1.bf16.xpose.msra.mxu0 0
    %6626 = vmatprep.subr.bf16.mxu0 0
    %6627 = vmatpush1.bf16.xpose.msra.mxu0 0
    %6628 = vmatprep.subr.bf16.mxu0 0
    %6629 = vmatpush1.bf16.xpose.msra.mxu0 0
    %6630 = vmatprep.mubr.bf16.mxu0 %v6530
    %6631 = vmatmul.mubr.bf16.gmra.mrb[0].mxu0 %v6529
    %v6632 = vpop.f32.mrb[0].mxu0
    %v6633 = vadd.f32 %v6593, %v6632
    %v6634 = vpop.f32.mrb[0].mxu0
    %v6635 = vpop.f32.mrb[0].mxu0
    %v6636 = vpop.f32.mrb[0].mxu0
    %6637 = vdwg.mxu0
    %6638 = vmatprep.subr.bf16.mxu0 %v6540
    %6639 = vmatpush1.bf16.xpose.msra.mxu0 %v6539
    %6640 = vmatprep.subr.bf16.mxu0 %v6548
    %6641 = vmatpush1.bf16.xpose.msra.mxu0 %v6547
    %6642 = vmatprep.subr.bf16.mxu0 0
    %6643 = vmatpush1.bf16.xpose.msra.mxu0 0
    %6644 = vmatprep.subr.bf16.mxu0 0
    %6645 = vmatpush1.bf16.xpose.msra.mxu0 0
    %6646 = vmatprep.subr.bf16.mxu0 0
    %6647 = vmatpush1.bf16.xpose.msra.mxu0 0
    %6648 = vmatprep.subr.bf16.mxu0 0
    %6649 = vmatpush1.bf16.xpose.msra.mxu0 0
    %6650 = vmatprep.subr.bf16.mxu0 0
    %6651 = vmatpush1.bf16.xpose.msra.mxu0 0
    %6652 = vmatprep.subr.bf16.mxu0 0
    %6653 = vmatpush1.bf16.xpose.msra.mxu0 0
    %6654 = vmatprep.subr.bf16.mxu0 0
    %6655 = vmatpush1.bf16.xpose.msra.mxu0 0
    %6656 = vmatprep.subr.bf16.mxu0 0
    %6657 = vmatpush1.bf16.xpose.msra.mxu0 0
    %6658 = vmatprep.subr.bf16.mxu0 0
    %6659 = vmatpush1.bf16.xpose.msra.mxu0 0
    %6660 = vmatprep.subr.bf16.mxu0 0
    %6661 = vmatpush1.bf16.xpose.msra.mxu0 0
    %6662 = vmatprep.subr.bf16.mxu0 0
    %6663 = vmatpush1.bf16.xpose.msra.mxu0 0
    %6664 = vmatprep.subr.bf16.mxu0 0
    %6665 = vmatpush1.bf16.xpose.msra.mxu0 0
    %6666 = vmatprep.subr.bf16.mxu0 0
    %6667 = vmatpush1.bf16.xpose.msra.mxu0 0
    %6668 = vmatprep.subr.bf16.mxu0 0
    %6669 = vmatpush1.bf16.xpose.msra.mxu0 0
    %6670 = vmatprep.mubr.bf16.mxu0 %v6532
    %6671 = vmatmul.mubr.bf16.gmra.mrb[0].mxu0 %v6531
    %v6672 = vpop.f32.mrb[0].mxu0
    %v6673 = vadd.f32 %v6633, %v6672
    %v6674 = vpop.f32.mrb[0].mxu0
    %v6675 = vpop.f32.mrb[0].mxu0
    %v6676 = vpop.f32.mrb[0].mxu0
    %6677 = vdwg.mxu0
    %6678 = vmatprep.subr.bf16.mxu0 %v6542
    %6679 = vmatpush1.bf16.xpose.msra.mxu0 %v6541
    %6680 = vmatprep.subr.bf16.mxu0 %v6550
    %6681 = vmatpush1.bf16.xpose.msra.mxu0 %v6549
    %6682 = vmatprep.subr.bf16.mxu0 0
    %6683 = vmatpush1.bf16.xpose.msra.mxu0 0
    %6684 = vmatprep.subr.bf16.mxu0 0
    %6685 = vmatpush1.bf16.xpose.msra.mxu0 0
    %6686 = vmatprep.subr.bf16.mxu0 0
    %6687 = vmatpush1.bf16.xpose.msra.mxu0 0
    %6688 = vmatprep.subr.bf16.mxu0 0
    %6689 = vmatpush1.bf16.xpose.msra.mxu0 0
    %6690 = vmatprep.subr.bf16.mxu0 0
    %6691 = vmatpush1.bf16.xpose.msra.mxu0 0
    %6692 = vmatprep.subr.bf16.mxu0 0
    %6693 = vmatpush1.bf16.xpose.msra.mxu0 0
    %6694 = vmatprep.subr.bf16.mxu0 0
    %6695 = vmatpush1.bf16.xpose.msra.mxu0 0
    %6696 = vmatprep.subr.bf16.mxu0 0
    %6697 = vmatpush1.bf16.xpose.msra.mxu0 0
    %6698 = vmatprep.subr.bf16.mxu0 0
    %6699 = vmatpush1.bf16.xpose.msra.mxu0 0
    %6700 = vmatprep.subr.bf16.mxu0 0
    %6701 = vmatpush1.bf16.xpose.msra.mxu0 0
    %6702 = vmatprep.subr.bf16.mxu0 0
    %6703 = vmatpush1.bf16.xpose.msra.mxu0 0
    %6704 = vmatprep.subr.bf16.mxu0 0
    %6705 = vmatpush1.bf16.xpose.msra.mxu0 0
    %6706 = vmatprep.subr.bf16.mxu0 0
    %6707 = vmatpush1.bf16.xpose.msra.mxu0 0
    %6708 = vmatprep.subr.bf16.mxu0 0
    %6709 = vmatpush1.bf16.xpose.msra.mxu0 0
    %6710 = vmatprep.mubr.bf16.mxu0 %v6534
    %6711 = vmatmul.mubr.bf16.gmra.mrb[0].mxu0 %v6533
    %v6712 = vpop.f32.mrb[0].mxu0
    %v6713 = vadd.f32 %v6673, %v6712
    %v6714 = vpop.f32.mrb[0].mxu0
    %v6715 = vpop.f32.mrb[0].mxu0
    %v6716 = vpop.f32.mrb[0].mxu0
    %6717 = vdwg.mxu0
    %v6718 = vmax.f32 %v6713, 0.0
    %v6719 = vpack.c.bf16 %v6718, %v6718
    %v6720 = vld [vmem:[#allocation9] sm:$0xff]
    %v6721 = vld [vmem:[#allocation9 + $0x8] sm:$0xff]
    %v6722 = vld [vmem:[#allocation9 + $0x10] sm:$0xf]
    %v6723 = vpack.c.bf16 %v6721, %v6720
    %v6724 = vpack.c.bf16 %v6722, %v6722
    %v6725 = vld [vmem:[%s24] sm:$0x1]
    %v6727 = vlaneseq
    %v6728 = vshrl.u32 %v6727, 7
    %v6729 = vsub.s32 0, %v6728
    %v6730 = vrot.slane %v6725, %v6729
    %vm6732 = vcmask 261120
    %v6734 = vsel %vm6732, %v6719, 0
    %v6737 = vsel %vm6732, %v6723, 0
    %v6740 = vsel %vm6732, %v6724, 0
    %6742 = vmatprep.subr.bf16.mxu0 0
    %6743 = vmatpush1.bf16.xpose.msra.mxu0 %v6737
    %6744 = vmatprep.subr.bf16.mxu0 0
    %6745 = vmatpush1.bf16.xpose.msra.mxu0 %v6740
    %6746 = vmatprep.subr.bf16.mxu0 0
    %6747 = vmatpush1.bf16.xpose.msra.mxu0 0
    %6748 = vmatprep.subr.bf16.mxu0 0
    %6749 = vmatpush1.bf16.xpose.msra.mxu0 0
    %6750 = vmatprep.subr.bf16.mxu0 0
    %6751 = vmatpush1.bf16.xpose.msra.mxu0 0
    %6752 = vmatprep.subr.bf16.mxu0 0
    %6753 = vmatpush1.bf16.xpose.msra.mxu0 0
    %6754 = vmatprep.subr.bf16.mxu0 0
    %6755 = vmatpush1.bf16.xpose.msra.mxu0 0
    %6756 = vmatprep.subr.bf16.mxu0 0
    %6757 = vmatpush1.bf16.xpose.msra.mxu0 0
    %6758 = vmatprep.subr.bf16.mxu0 0
    %6759 = vmatpush1.bf16.xpose.msra.mxu0 0
    %6760 = vmatprep.subr.bf16.mxu0 0
    %6761 = vmatpush1.bf16.xpose.msra.mxu0 0
    %6762 = vmatprep.subr.bf16.mxu0 0
    %6763 = vmatpush1.bf16.xpose.msra.mxu0 0
    %6764 = vmatprep.subr.bf16.mxu0 0
    %6765 = vmatpush1.bf16.xpose.msra.mxu0 0
    %6766 = vmatprep.subr.bf16.mxu0 0
    %6767 = vmatpush1.bf16.xpose.msra.mxu0 0
    %6768 = vmatprep.subr.bf16.mxu0 0
    %6769 = vmatpush1.bf16.xpose.msra.mxu0 0
    %6770 = vmatprep.subr.bf16.mxu0 0
    %6771 = vmatpush1.bf16.xpose.msra.mxu0 0
    %6772 = vmatprep.subr.bf16.mxu0 0
    %6773 = vmatpush1.bf16.xpose.msra.mxu0 0
    %6774 = vmatprep.mubr.bf16.mxu0 0
    %6775 = vmatmul.mubr.bf16.gmra.mrb[0].mxu0 %v6734
    %v6776 = vpop.f32.mrb[0].mxu0
    %v6777 = vadd.f32 %v6730, %v6776
    %v6778 = vpop.f32.mrb[0].mxu0
    %v6779 = vpop.f32.mrb[0].mxu0
    %v6780 = vpop.f32.mrb[0].mxu0
    %6781 = vdwg.mxu0
    %v6782 = vlaneseq
    %v6783 = vand.u32 %v6782, 127
    %vm6784 = vcmp.lt.s32.totalorder %v6783, 5
    %vm6785 = vcmp.ge.s32.totalorder %v6783, 10
    %vm6786 = vmor %vm6784, %vm6785
    %v6787 = vsel %vm6786, -1e+11, %v6777
    %vm6788 = vcmask 156672
    %6789 = vst.msk [vmem:[#allocation10] sm:$0x3] %vm6788, %v6787
    // Predicated region
    $region118: #{weit_cnn_forward.1} parent=1 // pred_check
      _
    $region119: #{weit_cnn_forward.1} parent=1 // pred_check_branch
      %6791 = sbr.rel (0) target = $region121
    $region120: #{weit_cnn_forward.1} parent=1 // pred_region
      %s6793 = ssub.s32 32, 32
      %6794 = vsyncadd [#allocation4], %s6793
      %s6796 = sshll.u32 [#allocation10], 4
      %s6797 = int_to_ptr.vmem [resolvable:$true] %s6796
      %6799 = dma.vmem_to_hbm [thread:$0]  %s6797, 32, %s25, [#allocation4]
    $region121: #{weit_cnn_forward.1} parent=1 // pred_fallthru
      _
    // Predicated region
    $region122: #{weit_cnn_forward.1} parent=1 // pred_check
      _
    $region123: #{weit_cnn_forward.1} parent=1 // pred_check_branch
      %6801 = sbr.rel (0) target = $region125
    $region124: #{weit_cnn_forward.1} parent=1 // pred_region
      %6802 = dma.done [#allocation4], 32
    $region125: #{weit_cnn_forward.1} parent=1 // pred_fallthru
      _
    %6803 = vsyncpa [#allocation3], 1
    %6804 = vsyncpa [#allocation4], 1
    %6805 = vsyncpa [#allocation5], 1
    %6806 = vsyncpa [#allocation7], 1

</llo_original>
